<compile_context>
chip_gen: v7x
topology: tpu7x:2x2x1
jax: 0.10.0
libtpu: 0.0.40
codegen_flags: <defaults>
</compile_context>

<pallas_src>
import functools

import jax
import jax.numpy as jnp
from jax.experimental import pallas as pl
from jax.experimental.pallas import tpu as pltpu

BN_EPS = 1e-5
LRELU_SLOPE = 0.2
LANES = 128
SUBLANES = 8
MAX_TILE_M = 1024                     # rows of cols streamed per grid step
VMEM_LIMIT = 32 * 1024 * 1024         # explicit scoped-VMEM budget (all gens)
RESIDENT_BUDGET = 24 * 1024 * 1024    # resident activation cap (v7x-safe)


def _round_up(x, m):
    return (x + m - 1) // m * m


# ------------------------------ Pallas kernels ------------------------------

def _conv_bn_lrelu_kernel(cols_ref, w_ref, gamma_ref, beta_ref, out_ref,
                          sum_ref, *, m_valid, tm):
    """Fused conv-as-matmul + BatchNorm(batch stats) + LeakyReLU.

    cols_ref : (tm, K) bf16 tile of the im2col matrix (grid over M)
    w_ref    : (K, Cp) bf16 weight, C_out zero-padded to Cp lanes
    out_ref  : (M_pad, Cp) bf16, VMEM-resident across the whole grid
    sum_ref  : (1, Cp) f32 scratch, per-channel column-sum accumulator
    """
    i = pl.program_id(0)
    nt = pl.num_programs(0)

    @pl.when(i == 0)
    def _():
        sum_ref[...] = jnp.zeros_like(sum_ref)

    # MXU matmul in bf16, f32 accumulation.
    y = jnp.dot(cols_ref[...], w_ref[...], preferred_element_type=jnp.float32)
    sum_ref[...] += jnp.sum(y, axis=0, keepdims=True)

    row0 = pl.multiple_of(i * tm, SUBLANES)
    out_ref[pl.ds(row0, tm), :] = y.astype(out_ref.dtype)

    @pl.when(i == nt - 1)
    def _():
        # Finalize: batch-norm statistics over the true M = N*Ho*Wo rows and
        # in-place normalize + LeakyReLU of the resident activation.
        inv_m = 1.0 / jnp.float32(m_valid)
        mean = sum_ref[...] * inv_m                          # (1, Cp) f32
        yf = out_ref[...].astype(jnp.float32)                # (M_pad, Cp)
        rows = jax.lax.broadcasted_iota(jnp.int32, yf.shape, 0)
        diff = jnp.where(rows < m_valid, yf - mean, 0.0)     # mask pad rows
        var = jnp.sum(diff * diff, axis=0, keepdims=True) * inv_m
        scale = gamma_ref[...] * jax.lax.rsqrt(var + BN_EPS)
        shift = beta_ref[...] - mean * scale
        z = yf * scale + shift
        out_ref[...] = jnp.where(z >= 0, z, LRELU_SLOPE * z).astype(out_ref.dtype)


def _head_kernel(x_ref, w_ref, b_ref, o_ref, *, latent):
    # Final 4x4 conv (spatial collapses to 1x1) == matmul + bias; the
    # mean / std = exp(log_var / 2) split happens in-kernel via a lane mask so
    # there is a single lane-dense (N_pad, 128) store.
    y = jnp.dot(x_ref[...], w_ref[...],
                preferred_element_type=jnp.float32) + b_ref[...]
    lane = jax.lax.broadcasted_iota(jnp.int32, y.shape, 1)
    o_ref[...] = jnp.where(lane < latent, y, jnp.exp(y * 0.5))


# ---------------------------- pallas_call wrappers ---------------------------

def _choose_m_tiling(m):
    m8 = _round_up(m, SUBLANES)
    if m8 <= MAX_TILE_M:
        return m8, m8, 1
    tm = MAX_TILE_M
    m_pad = _round_up(m, tm)
    return tm, m_pad, m_pad // tm


def fused_conv_bn_lrelu(cols, w_pad, gamma, beta):
    """cols (M, K) bf16, w_pad (K, Cp) bf16 -> normalized activation (M_pad, Cp) bf16."""
    M, K = cols.shape
    Kw, Cp = w_pad.shape
    assert Kw == K
    tm, m_pad, ntiles = _choose_m_tiling(M)
    # Resident bf16 activation must fit VMEM even on v7x (64 MiB physical).
    assert m_pad * Cp * 2 <= RESIDENT_BUDGET, (
        "resident activation too large for VMEM")  # TODO(synk): streaming fallback
    cols_p = cols if m_pad == M else jnp.pad(cols, ((0, m_pad - M), (0, 0)))

    return pl.pallas_call(
        functools.partial(_conv_bn_lrelu_kernel, m_valid=M, tm=tm),
        out_shape=jax.ShapeDtypeStruct((m_pad, Cp), jnp.bfloat16),
        grid=(ntiles,),
        in_specs=[pl.BlockSpec((tm, K), lambda i: (i, 0)),
                  pl.BlockSpec((K, Cp), lambda i: (0, 0)),
                  pl.BlockSpec((1, Cp), lambda i: (0, 0)),
                  pl.BlockSpec((1, Cp), lambda i: (0, 0))],
        out_specs=pl.BlockSpec((m_pad, Cp), lambda i: (0, 0)),
        scratch_shapes=[pltpu.VMEM((1, Cp), jnp.float32)],
        compiler_params=pltpu.CompilerParams(
            dimension_semantics=("arbitrary",),
            vmem_limit_bytes=VMEM_LIMIT),
    )(cols_p, w_pad, gamma.reshape(1, Cp), beta.reshape(1, Cp))


def head_block(x_cols, w_pad, b_pad, latent):
    N, K = x_cols.shape
    Kw, OUTp = w_pad.shape
    assert Kw == K
    n_pad = _round_up(N, SUBLANES)
    cols_p = jnp.pad(x_cols, ((0, n_pad - N), (0, 0)))
    out = pl.pallas_call(
        functools.partial(_head_kernel, latent=latent),
        out_shape=jax.ShapeDtypeStruct((n_pad, OUTp), jnp.float32),
        in_specs=[pl.BlockSpec(memory_space=pltpu.MemorySpace.VMEM)] * 3,
        out_specs=pl.BlockSpec(memory_space=pltpu.MemorySpace.VMEM),
        compiler_params=pltpu.CompilerParams(vmem_limit_bytes=VMEM_LIMIT),
    )(cols_p, w_pad, b_pad.reshape(1, OUTp))
    return out[:N, :latent], out[:N, latent:2 * latent]


# --------------------------------- JAX glue ---------------------------------

def im2col(x_nhwc, ksize, stride, pad):
    """(kh, kw, c_in)-ordered patches via layout-preserving channel concat."""
    N, H, W, C = x_nhwc.shape
    xp = jnp.pad(x_nhwc, ((0, 0), (pad, pad), (pad, pad), (0, 0)))
    Ho = (H + 2 * pad - ksize) // stride + 1
    Wo = (W + 2 * pad - ksize) // stride + 1
    taps = []
    for i in range(ksize):
        for j in range(ksize):
            taps.append(xp[:, i:i + stride * (Ho - 1) + 1:stride,
                           j:j + stride * (Wo - 1) + 1:stride, :])
    cols = jnp.concatenate(taps, axis=-1)               # (N, Ho, Wo, k*k*C)
    return cols.reshape(N * Ho * Wo, ksize * ksize * C), Ho, Wo


def conv_weight_to_matrix(w_oihw):
    """PyTorch (C_out, C_in, kH, kW) -> (kH*kW*C_in, C_out) matching im2col."""
    c_out, c_in, kh, kw = w_oihw.shape
    return jnp.transpose(w_oihw, (2, 3, 1, 0)).reshape(kh * kw * c_in, c_out)


def _pad_cout(w_mat, c_out):
    """Pad only the output-channel (lane) axis to a multiple of 128."""
    cp = _round_up(c_out, LANES)
    return jnp.pad(w_mat, ((0, 0), (0, cp - c_out))), cp


def init_params(key, num_channels, model_size, latent_size):
    chans = [num_channels, model_size, model_size * 2,
             model_size * 4, model_size * 8]
    strides = [1, 2, 2, 2]
    blocks = []
    for i in range(4):
        key, k1 = jax.random.split(key)
        c_in, c_out = chans[i], chans[i + 1]
        w = jax.random.normal(k1, (c_out, c_in, 3, 3), jnp.float32) * 0.1
        w_pad, cp = _pad_cout(conv_weight_to_matrix(w), c_out)
        gamma = jnp.pad(jnp.ones((c_out,), jnp.float32), (0, cp - c_out))
        beta = jnp.zeros((cp,), jnp.float32)
        blocks.append(dict(w=w_pad.astype(jnp.bfloat16), gamma=gamma, beta=beta,
                           stride=strides[i], c_out=c_out))
    key, k1, k2 = jax.random.split(key, 3)
    w5 = jax.random.normal(
        k1, (latent_size * 2, chans[4], 4, 4), jnp.float32) * 0.1
    b5 = jax.random.normal(k2, (latent_size * 2,), jnp.float32) * 0.1
    w5_pad, outp = _pad_cout(conv_weight_to_matrix(w5), latent_size * 2)
    b5_pad = jnp.pad(b5, (0, outp - latent_size * 2))
    return dict(blocks=blocks,
                head=dict(w=w5_pad.astype(jnp.bfloat16), b=b5_pad))


def conv_bn_lrelu_block(x_nhwc, blk):
    n = x_nhwc.shape[0]
    cols, ho, wo = im2col(x_nhwc, ksize=3, stride=blk["stride"], pad=1)
    M = cols.shape[0]
    out = fused_conv_bn_lrelu(cols, blk["w"], blk["gamma"], blk["beta"])
    c_out = blk["c_out"]
    return out[:M, :c_out].reshape(n, ho, wo, c_out)


def encoder_forward(x_nchw, params, latent_size):
    """Returns (mean, std) parameterizing Normal(mean, std).

    # TODO(synk): torch.distributions.Normal has no Pallas equivalent; the
    # (loc, scale) parameters are returned instead.
    """
    x = jnp.transpose(x_nchw, (0, 2, 3, 1)).astype(jnp.bfloat16)  # NCHW->NHWC
    for blk in params["blocks"]:
        x = conv_bn_lrelu_block(x, blk)
    cols, ho, wo = im2col(x, ksize=4, stride=1, pad=0)
    assert ho == 1 and wo == 1, "final 4x4 conv must collapse spatial to 1x1"
    return head_block(cols, params["head"]["w"], params["head"]["b"],
                      latent_size)


if __name__ == "__main__":
    # 3 stride-2 convs followed by a 4x4 valid conv require 32x32 input.
    batch, num_channels, model_size, latent_size, spatial = 2, 3, 8, 4, 32

    key = jax.random.PRNGKey(0)
    key, kx = jax.random.split(key)
    x = jax.random.normal(
        kx, (batch, num_channels, spatial, spatial), jnp.float32)

    params = init_params(key, num_channels, model_size, latent_size)

    fwd = jax.jit(lambda inp: encoder_forward(inp, params, latent_size))
    mean, std = fwd(x)
    jax.block_until_ready((mean, std))

    assert mean.shape == (batch, latent_size)
    assert std.shape == (batch, latent_size)
    assert bool(jnp.all(jnp.isfinite(mean)))
    assert bool(jnp.all(std > 0))
    print("KERNEL_OK")
</pallas_src>

<mosaic_0001>
module attributes {stable_mosaic.version = 11 : i64} {
  func.func @_conv_bn_lrelu_kernel(%arg0: i32, %arg1: memref<1024x27xbf16, #tpu.memory_space<vmem>>, %arg2: memref<27x128xbf16, #tpu.memory_space<vmem>>, %arg3: memref<1x128xf32, #tpu.memory_space<vmem>>, %arg4: memref<1x128xf32, #tpu.memory_space<vmem>>, %arg5: memref<2048x128xbf16, #tpu.memory_space<vmem>>, %arg6: memref<1x128xf32, #tpu.memory_space<vmem>>) attributes {dimension_semantics = [#tpu.dimension_semantics<arbitrary>], iteration_bounds = array<i64: 2>, scalar_prefetch = 0 : i64, scratch_operands = 1 : i64, tpu.core_type = #tpu.core_type<tc>, window_params = [{transform_indices = @transform_0, window_bounds = array<i64: 1024, 27>}, {pipeline_mode = #tpu.pipeline_mode<synchronous>, transform_indices = @transform_1, window_bounds = array<i64: 27, 128>}, {pipeline_mode = #tpu.pipeline_mode<synchronous>, transform_indices = @transform_2, window_bounds = array<i64: 1, 128>}, {pipeline_mode = #tpu.pipeline_mode<synchronous>, transform_indices = @transform_3, window_bounds = array<i64: 1, 128>}, {pipeline_mode = #tpu.pipeline_mode<synchronous>, transform_indices = @transform_4, window_bounds = array<i64: 2048, 128>}]} {
    %c0_i32 = arith.constant 0 : i32
    %0 = arith.cmpi eq, %arg0, %c0_i32 : i32
    %1 = arith.extui %0 : i1 to i32
    %c0_i32_0 = arith.constant 0 : i32
    %2 = arith.cmpi ne, %1, %c0_i32_0 : i32
    scf.if %2 {
      %cst_11 = arith.constant 0.000000e+00 : f32
      %19 = vector.broadcast %cst_11 : f32 to vector<1x128xf32>
      %c0_12 = arith.constant 0 : index
      %c0_13 = arith.constant 0 : index
      %20 = vector.load %arg6[%c0_12, %c0_13] : memref<1x128xf32, #tpu.memory_space<vmem>>, vector<1x128xf32>
      tpu.vector_store %arg6[%c0_12, %c0_13], %19 {strides = array<i32>} : memref<1x128xf32, #tpu.memory_space<vmem>>, vector<1x128xf32>,
    } else {
    }
    %c0 = arith.constant 0 : index
    %c0_1 = arith.constant 0 : index
    %3 = vector.load %arg1[%c0, %c0_1] : memref<1024x27xbf16, #tpu.memory_space<vmem>>, vector<1024x27xbf16>
    %c0_2 = arith.constant 0 : index
    %c0_3 = arith.constant 0 : index
    %4 = vector.load %arg2[%c0_2, %c0_3] : memref<27x128xbf16, #tpu.memory_space<vmem>>, vector<27x128xbf16>
    %cst = arith.constant dense<0.000000e+00> : vector<1024x128xf32>
    %5 = tpu.matmul %3, %4, %cst {dimension_numbers = #tpu.dot_dimension_numbers<[1], [0], [0], [1], [0, 0, 1, 1], [], []>} : vector<1024x27xbf16>, vector<27x128xbf16>, vector<1024x128xf32> -> vector<1024x128xf32>
    %c0_4 = arith.constant 0 : index
    %c0_5 = arith.constant 0 : index
    %6 = vector.load %arg6[%c0_4, %c0_5] : memref<1x128xf32, #tpu.memory_space<vmem>>, vector<1x128xf32>
    %cst_6 = arith.constant dense<0.000000e+00> : vector<128xf32>
    %7 = vector.multi_reduction <add>, %5, %cst_6 [0] : vector<1024x128xf32> to vector<128xf32>
    %8 = vector.shape_cast %7 : vector<128xf32> to vector<1x128xf32>
    %9 = arith.addf %6, %8 : vector<1x128xf32>
    %c0_7 = arith.constant 0 : index
    %c0_8 = arith.constant 0 : index
    %10 = vector.load %arg6[%c0_7, %c0_8] : memref<1x128xf32, #tpu.memory_space<vmem>>, vector<1x128xf32>
    tpu.vector_store %arg6[%c0_7, %c0_8], %9 {strides = array<i32>} : memref<1x128xf32, #tpu.memory_space<vmem>>, vector<1x128xf32>,
    %c1024_i32 = arith.constant 1024 : i32
    %11 = arith.muli %arg0, %c1024_i32 : i32
    %12 = tpu.assume_multiple %11, 8 : i32
    %13 = arith.truncf %5 : vector<1024x128xf32> to vector<1024x128xbf16>
    %14 = arith.index_cast %12 : i32 to index
    %c0_9 = arith.constant 0 : index
    %15 = vector.load %arg5[%14, %c0_9] : memref<2048x128xbf16, #tpu.memory_space<vmem>>, vector<1024x128xbf16>
    tpu.vector_store %arg5[%14, %c0_9], %13 {strides = array<i32>} : memref<2048x128xbf16, #tpu.memory_space<vmem>>, vector<1024x128xbf16>,
    %c1_i32 = arith.constant 1 : i32
    %16 = arith.cmpi eq, %arg0, %c1_i32 : i32
    %17 = arith.extui %16 : i1 to i32
    %c0_i32_10 = arith.constant 0 : i32
    %18 = arith.cmpi ne, %17, %c0_i32_10 : i32
    scf.if %18 {
      %cst_11 = arith.constant 1.000000e+00 : f32
      %cst_12 = arith.constant 2.048000e+03 : f32
      %19 = arith.divf %cst_11, %cst_12 : f32
      %c0_13 = arith.constant 0 : index
      %c0_14 = arith.constant 0 : index
      %20 = vector.load %arg6[%c0_13, %c0_14] : memref<1x128xf32, #tpu.memory_space<vmem>>, vector<1x128xf32>
      %21 = vector.broadcast %19 : f32 to vector<1x128xf32>
      %22 = arith.mulf %20, %21 : vector<1x128xf32>
      %c0_15 = arith.constant 0 : index
      %c0_16 = arith.constant 0 : index
      %23 = vector.load %arg5[%c0_15, %c0_16] : memref<2048x128xbf16, #tpu.memory_space<vmem>>, vector<2048x128xbf16>
      %24 = arith.extf %23 : vector<2048x128xbf16> to vector<2048x128xf32>
      %25 = tpu.iota {dimensions = array<i32: 0>} : vector<2048x128xi32>
      %c2048_i32 = arith.constant 2048 : i32
      %26 = vector.broadcast %c2048_i32 : i32 to vector<2048x128xi32>
      %27 = arith.cmpi slt, %25, %26 : vector<2048x128xi32>
      %28 = vector.broadcast %22 : vector<1x128xf32> to vector<2048x128xf32>
      %29 = arith.subf %24, %28 : vector<2048x128xf32>
      %cst_17 = arith.constant 0.000000e+00 : f32
      %30 = vector.broadcast %cst_17 : f32 to vector<2048x128xf32>
      %31 = arith.select %27, %29, %30 : vector<2048x128xi1>, vector<2048x128xf32>
      %32 = arith.mulf %31, %31 : vector<2048x128xf32>
      %cst_18 = arith.constant dense<0.000000e+00> : vector<128xf32>
      %33 = vector.multi_reduction <add>, %32, %cst_18 [0] : vector<2048x128xf32> to vector<128xf32>
      %34 = vector.shape_cast %33 : vector<128xf32> to vector<1x128xf32>
      %35 = vector.broadcast %19 : f32 to vector<1x128xf32>
      %36 = arith.mulf %34, %35 : vector<1x128xf32>
      %c0_19 = arith.constant 0 : index
      %c0_20 = arith.constant 0 : index
      %37 = vector.load %arg3[%c0_19, %c0_20] : memref<1x128xf32, #tpu.memory_space<vmem>>, vector<1x128xf32>
      %cst_21 = arith.constant 9.99999974E-6 : f32
      %38 = vector.broadcast %cst_21 : f32 to vector<1x128xf32>
      %39 = arith.addf %36, %38 : vector<1x128xf32>
      %40 = math.rsqrt %39 : vector<1x128xf32>
      %41 = arith.mulf %37, %40 : vector<1x128xf32>
      %c0_22 = arith.constant 0 : index
      %c0_23 = arith.constant 0 : index
      %42 = vector.load %arg4[%c0_22, %c0_23] : memref<1x128xf32, #tpu.memory_space<vmem>>, vector<1x128xf32>
      %43 = arith.mulf %22, %41 : vector<1x128xf32>
      %44 = arith.subf %42, %43 : vector<1x128xf32>
      %45 = vector.broadcast %41 : vector<1x128xf32> to vector<2048x128xf32>
      %46 = arith.mulf %24, %45 : vector<2048x128xf32>
      %47 = vector.broadcast %44 : vector<1x128xf32> to vector<2048x128xf32>
      %48 = arith.addf %46, %47 : vector<2048x128xf32>
      %cst_24 = arith.constant 0.000000e+00 : f32
      %49 = vector.broadcast %cst_24 : f32 to vector<2048x128xf32>
      %50 = arith.cmpf oge, %48, %49 : vector<2048x128xf32>
      %cst_25 = arith.constant 2.000000e-01 : f32
      %51 = vector.broadcast %cst_25 : f32 to vector<2048x128xf32>
      %52 = arith.mulf %51, %48 : vector<2048x128xf32>
      %53 = arith.select %50, %48, %52 : vector<2048x128xi1>, vector<2048x128xf32>
      %54 = arith.truncf %53 : vector<2048x128xf32> to vector<2048x128xbf16>
      %c0_26 = arith.constant 0 : index
      %c0_27 = arith.constant 0 : index
      %55 = vector.load %arg5[%c0_26, %c0_27] : memref<2048x128xbf16, #tpu.memory_space<vmem>>, vector<2048x128xbf16>
      tpu.vector_store %arg5[%c0_26, %c0_27], %54 {strides = array<i32>} : memref<2048x128xbf16, #tpu.memory_space<vmem>>, vector<2048x128xbf16>,
    } else {
    }
    return
  }
  func.func @transform_0(%arg0: i32) -> (i32, i32) {
    %c0_i32 = arith.constant 0 : i32
    %c0_i32_0 = arith.constant 0 : i32
    return %arg0, %c0_i32 : i32, i32
  }
  func.func @transform_1(%arg0: i32) -> (i32, i32) {
    %c0_i32 = arith.constant 0 : i32
    %c0_i32_0 = arith.constant 0 : i32
    %c0_i32_1 = arith.constant 0 : i32
    return %c0_i32, %c0_i32_0 : i32, i32
  }
  func.func @transform_2(%arg0: i32) -> (i32, i32) {
    %c0_i32 = arith.constant 0 : i32
    %c0_i32_0 = arith.constant 0 : i32
    %c0_i32_1 = arith.constant 0 : i32
    return %c0_i32, %c0_i32_0 : i32, i32
  }
  func.func @transform_3(%arg0: i32) -> (i32, i32) {
    %c0_i32 = arith.constant 0 : i32
    %c0_i32_0 = arith.constant 0 : i32
    %c0_i32_1 = arith.constant 0 : i32
    return %c0_i32, %c0_i32_0 : i32, i32
  }
  func.func @transform_4(%arg0: i32) -> (i32, i32) {
    %c0_i32 = arith.constant 0 : i32
    %c0_i32_0 = arith.constant 0 : i32
    %c0_i32_1 = arith.constant 0 : i32
    return %c0_i32, %c0_i32_0 : i32, i32
  }
}

module attributes {stable_mosaic.version = 11 : i64} {
  func.func @_conv_bn_lrelu_kernel(%arg0: i32, %arg1: memref<512x72xbf16, #tpu.memory_space<vmem>>, %arg2: memref<72x128xbf16, #tpu.memory_space<vmem>>, %arg3: memref<1x128xf32, #tpu.memory_space<vmem>>, %arg4: memref<1x128xf32, #tpu.memory_space<vmem>>, %arg5: memref<512x128xbf16, #tpu.memory_space<vmem>>, %arg6: memref<1x128xf32, #tpu.memory_space<vmem>>) attributes {dimension_semantics = [#tpu.dimension_semantics<arbitrary>], iteration_bounds = array<i64: 1>, scalar_prefetch = 0 : i64, scratch_operands = 1 : i64, tpu.core_type = #tpu.core_type<tc>, window_params = [{transform_indices = @transform_0, window_bounds = array<i64: 512, 72>}, {pipeline_mode = #tpu.pipeline_mode<synchronous>, transform_indices = @transform_1, window_bounds = array<i64: 72, 128>}, {pipeline_mode = #tpu.pipeline_mode<synchronous>, transform_indices = @transform_2, window_bounds = array<i64: 1, 128>}, {pipeline_mode = #tpu.pipeline_mode<synchronous>, transform_indices = @transform_3, window_bounds = array<i64: 1, 128>}, {pipeline_mode = #tpu.pipeline_mode<synchronous>, transform_indices = @transform_4, window_bounds = array<i64: 512, 128>}]} {
    %c0_i32 = arith.constant 0 : i32
    %0 = arith.cmpi eq, %arg0, %c0_i32 : i32
    %1 = arith.extui %0 : i1 to i32
    %c0_i32_0 = arith.constant 0 : i32
    %2 = arith.cmpi ne, %1, %c0_i32_0 : i32
    scf.if %2 {
      %cst_12 = arith.constant 0.000000e+00 : f32
      %19 = vector.broadcast %cst_12 : f32 to vector<1x128xf32>
      %c0_13 = arith.constant 0 : index
      %c0_14 = arith.constant 0 : index
      %20 = vector.load %arg6[%c0_13, %c0_14] : memref<1x128xf32, #tpu.memory_space<vmem>>, vector<1x128xf32>
      tpu.vector_store %arg6[%c0_13, %c0_14], %19 {strides = array<i32>} : memref<1x128xf32, #tpu.memory_space<vmem>>, vector<1x128xf32>,
    } else {
    }
    %c0 = arith.constant 0 : index
    %c0_1 = arith.constant 0 : index
    %3 = vector.load %arg1[%c0, %c0_1] : memref<512x72xbf16, #tpu.memory_space<vmem>>, vector<512x72xbf16>
    %c0_2 = arith.constant 0 : index
    %c0_3 = arith.constant 0 : index
    %4 = vector.load %arg2[%c0_2, %c0_3] : memref<72x128xbf16, #tpu.memory_space<vmem>>, vector<72x128xbf16>
    %cst = arith.constant dense<0.000000e+00> : vector<512x128xf32>
    %5 = tpu.matmul %3, %4, %cst {dimension_numbers = #tpu.dot_dimension_numbers<[1], [0], [0], [1], [0, 0, 1, 1], [], []>} : vector<512x72xbf16>, vector<72x128xbf16>, vector<512x128xf32> -> vector<512x128xf32>
    %c0_4 = arith.constant 0 : index
    %c0_5 = arith.constant 0 : index
    %6 = vector.load %arg6[%c0_4, %c0_5] : memref<1x128xf32, #tpu.memory_space<vmem>>, vector<1x128xf32>
    %cst_6 = arith.constant dense<0.000000e+00> : vector<128xf32>
    %7 = vector.multi_reduction <add>, %5, %cst_6 [0] : vector<512x128xf32> to vector<128xf32>
    %8 = vector.shape_cast %7 : vector<128xf32> to vector<1x128xf32>
    %9 = arith.addf %6, %8 : vector<1x128xf32>
    %c0_7 = arith.constant 0 : index
    %c0_8 = arith.constant 0 : index
    %10 = vector.load %arg6[%c0_7, %c0_8] : memref<1x128xf32, #tpu.memory_space<vmem>>, vector<1x128xf32>
    tpu.vector_store %arg6[%c0_7, %c0_8], %9 {strides = array<i32>} : memref<1x128xf32, #tpu.memory_space<vmem>>, vector<1x128xf32>,
    %c512_i32 = arith.constant 512 : i32
    %11 = arith.muli %arg0, %c512_i32 : i32
    %12 = tpu.assume_multiple %11, 8 : i32
    %13 = arith.truncf %5 : vector<512x128xf32> to vector<512x128xbf16>
    %14 = arith.index_cast %12 : i32 to index
    %c0_9 = arith.constant 0 : index
    %15 = vector.load %arg5[%14, %c0_9] : memref<512x128xbf16, #tpu.memory_space<vmem>>, vector<512x128xbf16>
    tpu.vector_store %arg5[%14, %c0_9], %13 {strides = array<i32>} : memref<512x128xbf16, #tpu.memory_space<vmem>>, vector<512x128xbf16>,
    %c0_i32_10 = arith.constant 0 : i32
    %16 = arith.cmpi eq, %arg0, %c0_i32_10 : i32
    %17 = arith.extui %16 : i1 to i32
    %c0_i32_11 = arith.constant 0 : i32
    %18 = arith.cmpi ne, %17, %c0_i32_11 : i32
    scf.if %18 {
      %cst_12 = arith.constant 1.000000e+00 : f32
      %cst_13 = arith.constant 5.120000e+02 : f32
      %19 = arith.divf %cst_12, %cst_13 : f32
      %c0_14 = arith.constant 0 : index
      %c0_15 = arith.constant 0 : index
      %20 = vector.load %arg6[%c0_14, %c0_15] : memref<1x128xf32, #tpu.memory_space<vmem>>, vector<1x128xf32>
      %21 = vector.broadcast %19 : f32 to vector<1x128xf32>
      %22 = arith.mulf %20, %21 : vector<1x128xf32>
      %c0_16 = arith.constant 0 : index
      %c0_17 = arith.constant 0 : index
      %23 = vector.load %arg5[%c0_16, %c0_17] : memref<512x128xbf16, #tpu.memory_space<vmem>>, vector<512x128xbf16>
      %24 = arith.extf %23 : vector<512x128xbf16> to vector<512x128xf32>
      %25 = tpu.iota {dimensions = array<i32: 0>} : vector<512x128xi32>
      %c512_i32_18 = arith.constant 512 : i32
      %26 = vector.broadcast %c512_i32_18 : i32 to vector<512x128xi32>
      %27 = arith.cmpi slt, %25, %26 : vector<512x128xi32>
      %28 = vector.broadcast %22 : vector<1x128xf32> to vector<512x128xf32>
      %29 = arith.subf %24, %28 : vector<512x128xf32>
      %cst_19 = arith.constant 0.000000e+00 : f32
      %30 = vector.broadcast %cst_19 : f32 to vector<512x128xf32>
      %31 = arith.select %27, %29, %30 : vector<512x128xi1>, vector<512x128xf32>
      %32 = arith.mulf %31, %31 : vector<512x128xf32>
      %cst_20 = arith.constant dense<0.000000e+00> : vector<128xf32>
      %33 = vector.multi_reduction <add>, %32, %cst_20 [0] : vector<512x128xf32> to vector<128xf32>
      %34 = vector.shape_cast %33 : vector<128xf32> to vector<1x128xf32>
      %35 = vector.broadcast %19 : f32 to vector<1x128xf32>
      %36 = arith.mulf %34, %35 : vector<1x128xf32>
      %c0_21 = arith.constant 0 : index
      %c0_22 = arith.constant 0 : index
      %37 = vector.load %arg3[%c0_21, %c0_22] : memref<1x128xf32, #tpu.memory_space<vmem>>, vector<1x128xf32>
      %cst_23 = arith.constant 9.99999974E-6 : f32
      %38 = vector.broadcast %cst_23 : f32 to vector<1x128xf32>
      %39 = arith.addf %36, %38 : vector<1x128xf32>
      %40 = math.rsqrt %39 : vector<1x128xf32>
      %41 = arith.mulf %37, %40 : vector<1x128xf32>
      %c0_24 = arith.constant 0 : index
      %c0_25 = arith.constant 0 : index
      %42 = vector.load %arg4[%c0_24, %c0_25] : memref<1x128xf32, #tpu.memory_space<vmem>>, vector<1x128xf32>
      %43 = arith.mulf %22, %41 : vector<1x128xf32>
      %44 = arith.subf %42, %43 : vector<1x128xf32>
      %45 = vector.broadcast %41 : vector<1x128xf32> to vector<512x128xf32>
      %46 = arith.mulf %24, %45 : vector<512x128xf32>
      %47 = vector.broadcast %44 : vector<1x128xf32> to vector<512x128xf32>
      %48 = arith.addf %46, %47 : vector<512x128xf32>
      %cst_26 = arith.constant 0.000000e+00 : f32
      %49 = vector.broadcast %cst_26 : f32 to vector<512x128xf32>
      %50 = arith.cmpf oge, %48, %49 : vector<512x128xf32>
      %cst_27 = arith.constant 2.000000e-01 : f32
      %51 = vector.broadcast %cst_27 : f32 to vector<512x128xf32>
      %52 = arith.mulf %51, %48 : vector<512x128xf32>
      %53 = arith.select %50, %48, %52 : vector<512x128xi1>, vector<512x128xf32>
      %54 = arith.truncf %53 : vector<512x128xf32> to vector<512x128xbf16>
      %c0_28 = arith.constant 0 : index
      %c0_29 = arith.constant 0 : index
      %55 = vector.load %arg5[%c0_28, %c0_29] : memref<512x128xbf16, #tpu.memory_space<vmem>>, vector<512x128xbf16>
      tpu.vector_store %arg5[%c0_28, %c0_29], %54 {strides = array<i32>} : memref<512x128xbf16, #tpu.memory_space<vmem>>, vector<512x128xbf16>,
    } else {
    }
    return
  }
  func.func @transform_0(%arg0: i32) -> (i32, i32) {
    %c0_i32 = arith.constant 0 : i32
    %c0_i32_0 = arith.constant 0 : i32
    return %arg0, %c0_i32 : i32, i32
  }
  func.func @transform_1(%arg0: i32) -> (i32, i32) {
    %c0_i32 = arith.constant 0 : i32
    %c0_i32_0 = arith.constant 0 : i32
    %c0_i32_1 = arith.constant 0 : i32
    return %c0_i32, %c0_i32_0 : i32, i32
  }
  func.func @transform_2(%arg0: i32) -> (i32, i32) {
    %c0_i32 = arith.constant 0 : i32
    %c0_i32_0 = arith.constant 0 : i32
    %c0_i32_1 = arith.constant 0 : i32
    return %c0_i32, %c0_i32_0 : i32, i32
  }
  func.func @transform_3(%arg0: i32) -> (i32, i32) {
    %c0_i32 = arith.constant 0 : i32
    %c0_i32_0 = arith.constant 0 : i32
    %c0_i32_1 = arith.constant 0 : i32
    return %c0_i32, %c0_i32_0 : i32, i32
  }
  func.func @transform_4(%arg0: i32) -> (i32, i32) {
    %c0_i32 = arith.constant 0 : i32
    %c0_i32_0 = arith.constant 0 : i32
    %c0_i32_1 = arith.constant 0 : i32
    return %c0_i32, %c0_i32_0 : i32, i32
  }
}

module attributes {stable_mosaic.version = 11 : i64} {
  func.func @_conv_bn_lrelu_kernel(%arg0: i32, %arg1: memref<128x144xbf16, #tpu.memory_space<vmem>>, %arg2: memref<144x128xbf16, #tpu.memory_space<vmem>>, %arg3: memref<1x128xf32, #tpu.memory_space<vmem>>, %arg4: memref<1x128xf32, #tpu.memory_space<vmem>>, %arg5: memref<128x128xbf16, #tpu.memory_space<vmem>>, %arg6: memref<1x128xf32, #tpu.memory_space<vmem>>) attributes {dimension_semantics = [#tpu.dimension_semantics<arbitrary>], iteration_bounds = array<i64: 1>, scalar_prefetch = 0 : i64, scratch_operands = 1 : i64, tpu.core_type = #tpu.core_type<tc>, window_params = [{transform_indices = @transform_0, window_bounds = array<i64: 128, 144>}, {pipeline_mode = #tpu.pipeline_mode<synchronous>, transform_indices = @transform_1, window_bounds = array<i64: 144, 128>}, {pipeline_mode = #tpu.pipeline_mode<synchronous>, transform_indices = @transform_2, window_bounds = array<i64: 1, 128>}, {pipeline_mode = #tpu.pipeline_mode<synchronous>, transform_indices = @transform_3, window_bounds = array<i64: 1, 128>}, {pipeline_mode = #tpu.pipeline_mode<synchronous>, transform_indices = @transform_4, window_bounds = array<i64: 128, 128>}]} {
    %c0_i32 = arith.constant 0 : i32
    %0 = arith.cmpi eq, %arg0, %c0_i32 : i32
    %1 = arith.extui %0 : i1 to i32
    %c0_i32_0 = arith.constant 0 : i32
    %2 = arith.cmpi ne, %1, %c0_i32_0 : i32
    scf.if %2 {
      %cst_12 = arith.constant 0.000000e+00 : f32
      %19 = vector.broadcast %cst_12 : f32 to vector<1x128xf32>
      %c0_13 = arith.constant 0 : index
      %c0_14 = arith.constant 0 : index
      %20 = vector.load %arg6[%c0_13, %c0_14] : memref<1x128xf32, #tpu.memory_space<vmem>>, vector<1x128xf32>
      tpu.vector_store %arg6[%c0_13, %c0_14], %19 {strides = array<i32>} : memref<1x128xf32, #tpu.memory_space<vmem>>, vector<1x128xf32>,
    } else {
    }
    %c0 = arith.constant 0 : index
    %c0_1 = arith.constant 0 : index
    %3 = vector.load %arg1[%c0, %c0_1] : memref<128x144xbf16, #tpu.memory_space<vmem>>, vector<128x144xbf16>
    %c0_2 = arith.constant 0 : index
    %c0_3 = arith.constant 0 : index
    %4 = vector.load %arg2[%c0_2, %c0_3] : memref<144x128xbf16, #tpu.memory_space<vmem>>, vector<144x128xbf16>
    %cst = arith.constant dense<0.000000e+00> : vector<128x128xf32>
    %5 = tpu.matmul %3, %4, %cst {dimension_numbers = #tpu.dot_dimension_numbers<[1], [0], [0], [1], [0, 0, 1, 1], [], []>} : vector<128x144xbf16>, vector<144x128xbf16>, vector<128x128xf32> -> vector<128x128xf32>
    %c0_4 = arith.constant 0 : index
    %c0_5 = arith.constant 0 : index
    %6 = vector.load %arg6[%c0_4, %c0_5] : memref<1x128xf32, #tpu.memory_space<vmem>>, vector<1x128xf32>
    %cst_6 = arith.constant dense<0.000000e+00> : vector<128xf32>
    %7 = vector.multi_reduction <add>, %5, %cst_6 [0] : vector<128x128xf32> to vector<128xf32>
    %8 = vector.shape_cast %7 : vector<128xf32> to vector<1x128xf32>
    %9 = arith.addf %6, %8 : vector<1x128xf32>
    %c0_7 = arith.constant 0 : index
    %c0_8 = arith.constant 0 : index
    %10 = vector.load %arg6[%c0_7, %c0_8] : memref<1x128xf32, #tpu.memory_space<vmem>>, vector<1x128xf32>
    tpu.vector_store %arg6[%c0_7, %c0_8], %9 {strides = array<i32>} : memref<1x128xf32, #tpu.memory_space<vmem>>, vector<1x128xf32>,
    %c128_i32 = arith.constant 128 : i32
    %11 = arith.muli %arg0, %c128_i32 : i32
    %12 = tpu.assume_multiple %11, 8 : i32
    %13 = arith.truncf %5 : vector<128x128xf32> to vector<128x128xbf16>
    %14 = arith.index_cast %12 : i32 to index
    %c0_9 = arith.constant 0 : index
    %15 = vector.load %arg5[%14, %c0_9] : memref<128x128xbf16, #tpu.memory_space<vmem>>, vector<128x128xbf16>
    tpu.vector_store %arg5[%14, %c0_9], %13 {strides = array<i32>} : memref<128x128xbf16, #tpu.memory_space<vmem>>, vector<128x128xbf16>,
    %c0_i32_10 = arith.constant 0 : i32
    %16 = arith.cmpi eq, %arg0, %c0_i32_10 : i32
    %17 = arith.extui %16 : i1 to i32
    %c0_i32_11 = arith.constant 0 : i32
    %18 = arith.cmpi ne, %17, %c0_i32_11 : i32
    scf.if %18 {
      %cst_12 = arith.constant 1.000000e+00 : f32
      %cst_13 = arith.constant 1.280000e+02 : f32
      %19 = arith.divf %cst_12, %cst_13 : f32
      %c0_14 = arith.constant 0 : index
      %c0_15 = arith.constant 0 : index
      %20 = vector.load %arg6[%c0_14, %c0_15] : memref<1x128xf32, #tpu.memory_space<vmem>>, vector<1x128xf32>
      %21 = vector.broadcast %19 : f32 to vector<1x128xf32>
      %22 = arith.mulf %20, %21 : vector<1x128xf32>
      %c0_16 = arith.constant 0 : index
      %c0_17 = arith.constant 0 : index
      %23 = vector.load %arg5[%c0_16, %c0_17] : memref<128x128xbf16, #tpu.memory_space<vmem>>, vector<128x128xbf16>
      %24 = arith.extf %23 : vector<128x128xbf16> to vector<128x128xf32>
      %25 = tpu.iota {dimensions = array<i32: 0>} : vector<128x128xi32>
      %c128_i32_18 = arith.constant 128 : i32
      %26 = vector.broadcast %c128_i32_18 : i32 to vector<128x128xi32>
      %27 = arith.cmpi slt, %25, %26 : vector<128x128xi32>
      %28 = vector.broadcast %22 : vector<1x128xf32> to vector<128x128xf32>
      %29 = arith.subf %24, %28 : vector<128x128xf32>
      %cst_19 = arith.constant 0.000000e+00 : f32
      %30 = vector.broadcast %cst_19 : f32 to vector<128x128xf32>
      %31 = arith.select %27, %29, %30 : vector<128x128xi1>, vector<128x128xf32>
      %32 = arith.mulf %31, %31 : vector<128x128xf32>
      %cst_20 = arith.constant dense<0.000000e+00> : vector<128xf32>
      %33 = vector.multi_reduction <add>, %32, %cst_20 [0] : vector<128x128xf32> to vector<128xf32>
      %34 = vector.shape_cast %33 : vector<128xf32> to vector<1x128xf32>
      %35 = vector.broadcast %19 : f32 to vector<1x128xf32>
      %36 = arith.mulf %34, %35 : vector<1x128xf32>
      %c0_21 = arith.constant 0 : index
      %c0_22 = arith.constant 0 : index
      %37 = vector.load %arg3[%c0_21, %c0_22] : memref<1x128xf32, #tpu.memory_space<vmem>>, vector<1x128xf32>
      %cst_23 = arith.constant 9.99999974E-6 : f32
      %38 = vector.broadcast %cst_23 : f32 to vector<1x128xf32>
      %39 = arith.addf %36, %38 : vector<1x128xf32>
      %40 = math.rsqrt %39 : vector<1x128xf32>
      %41 = arith.mulf %37, %40 : vector<1x128xf32>
      %c0_24 = arith.constant 0 : index
      %c0_25 = arith.constant 0 : index
      %42 = vector.load %arg4[%c0_24, %c0_25] : memref<1x128xf32, #tpu.memory_space<vmem>>, vector<1x128xf32>
      %43 = arith.mulf %22, %41 : vector<1x128xf32>
      %44 = arith.subf %42, %43 : vector<1x128xf32>
      %45 = vector.broadcast %41 : vector<1x128xf32> to vector<128x128xf32>
      %46 = arith.mulf %24, %45 : vector<128x128xf32>
      %47 = vector.broadcast %44 : vector<1x128xf32> to vector<128x128xf32>
      %48 = arith.addf %46, %47 : vector<128x128xf32>
      %cst_26 = arith.constant 0.000000e+00 : f32
      %49 = vector.broadcast %cst_26 : f32 to vector<128x128xf32>
      %50 = arith.cmpf oge, %48, %49 : vector<128x128xf32>
      %cst_27 = arith.constant 2.000000e-01 : f32
      %51 = vector.broadcast %cst_27 : f32 to vector<128x128xf32>
      %52 = arith.mulf %51, %48 : vector<128x128xf32>
      %53 = arith.select %50, %48, %52 : vector<128x128xi1>, vector<128x128xf32>
      %54 = arith.truncf %53 : vector<128x128xf32> to vector<128x128xbf16>
      %c0_28 = arith.constant 0 : index
      %c0_29 = arith.constant 0 : index
      %55 = vector.load %arg5[%c0_28, %c0_29] : memref<128x128xbf16, #tpu.memory_space<vmem>>, vector<128x128xbf16>
      tpu.vector_store %arg5[%c0_28, %c0_29], %54 {strides = array<i32>} : memref<128x128xbf16, #tpu.memory_space<vmem>>, vector<128x128xbf16>,
    } else {
    }
    return
  }
  func.func @transform_0(%arg0: i32) -> (i32, i32) {
    %c0_i32 = arith.constant 0 : i32
    %c0_i32_0 = arith.constant 0 : i32
    return %arg0, %c0_i32 : i32, i32
  }
  func.func @transform_1(%arg0: i32) -> (i32, i32) {
    %c0_i32 = arith.constant 0 : i32
    %c0_i32_0 = arith.constant 0 : i32
    %c0_i32_1 = arith.constant 0 : i32
    return %c0_i32, %c0_i32_0 : i32, i32
  }
  func.func @transform_2(%arg0: i32) -> (i32, i32) {
    %c0_i32 = arith.constant 0 : i32
    %c0_i32_0 = arith.constant 0 : i32
    %c0_i32_1 = arith.constant 0 : i32
    return %c0_i32, %c0_i32_0 : i32, i32
  }
  func.func @transform_3(%arg0: i32) -> (i32, i32) {
    %c0_i32 = arith.constant 0 : i32
    %c0_i32_0 = arith.constant 0 : i32
    %c0_i32_1 = arith.constant 0 : i32
    return %c0_i32, %c0_i32_0 : i32, i32
  }
  func.func @transform_4(%arg0: i32) -> (i32, i32) {
    %c0_i32 = arith.constant 0 : i32
    %c0_i32_0 = arith.constant 0 : i32
    %c0_i32_1 = arith.constant 0 : i32
    return %c0_i32, %c0_i32_0 : i32, i32
  }
}

module attributes {stable_mosaic.version = 11 : i64} {
  func.func @_conv_bn_lrelu_kernel(%arg0: i32, %arg1: memref<32x288xbf16, #tpu.memory_space<vmem>>, %arg2: memref<288x128xbf16, #tpu.memory_space<vmem>>, %arg3: memref<1x128xf32, #tpu.memory_space<vmem>>, %arg4: memref<1x128xf32, #tpu.memory_space<vmem>>, %arg5: memref<32x128xbf16, #tpu.memory_space<vmem>>, %arg6: memref<1x128xf32, #tpu.memory_space<vmem>>) attributes {dimension_semantics = [#tpu.dimension_semantics<arbitrary>], iteration_bounds = array<i64: 1>, scalar_prefetch = 0 : i64, scratch_operands = 1 : i64, tpu.core_type = #tpu.core_type<tc>, window_params = [{transform_indices = @transform_0, window_bounds = array<i64: 32, 288>}, {pipeline_mode = #tpu.pipeline_mode<synchronous>, transform_indices = @transform_1, window_bounds = array<i64: 288, 128>}, {pipeline_mode = #tpu.pipeline_mode<synchronous>, transform_indices = @transform_2, window_bounds = array<i64: 1, 128>}, {pipeline_mode = #tpu.pipeline_mode<synchronous>, transform_indices = @transform_3, window_bounds = array<i64: 1, 128>}, {pipeline_mode = #tpu.pipeline_mode<synchronous>, transform_indices = @transform_4, window_bounds = array<i64: 32, 128>}]} {
    %c0_i32 = arith.constant 0 : i32
    %0 = arith.cmpi eq, %arg0, %c0_i32 : i32
    %1 = arith.extui %0 : i1 to i32
    %c0_i32_0 = arith.constant 0 : i32
    %2 = arith.cmpi ne, %1, %c0_i32_0 : i32
    scf.if %2 {
      %cst_12 = arith.constant 0.000000e+00 : f32
      %19 = vector.broadcast %cst_12 : f32 to vector<1x128xf32>
      %c0_13 = arith.constant 0 : index
      %c0_14 = arith.constant 0 : index
      %20 = vector.load %arg6[%c0_13, %c0_14] : memref<1x128xf32, #tpu.memory_space<vmem>>, vector<1x128xf32>
      tpu.vector_store %arg6[%c0_13, %c0_14], %19 {strides = array<i32>} : memref<1x128xf32, #tpu.memory_space<vmem>>, vector<1x128xf32>,
    } else {
    }
    %c0 = arith.constant 0 : index
    %c0_1 = arith.constant 0 : index
    %3 = vector.load %arg1[%c0, %c0_1] : memref<32x288xbf16, #tpu.memory_space<vmem>>, vector<32x288xbf16>
    %c0_2 = arith.constant 0 : index
    %c0_3 = arith.constant 0 : index
    %4 = vector.load %arg2[%c0_2, %c0_3] : memref<288x128xbf16, #tpu.memory_space<vmem>>, vector<288x128xbf16>
    %cst = arith.constant dense<0.000000e+00> : vector<32x128xf32>
    %5 = tpu.matmul %3, %4, %cst {dimension_numbers = #tpu.dot_dimension_numbers<[1], [0], [0], [1], [0, 0, 1, 1], [], []>} : vector<32x288xbf16>, vector<288x128xbf16>, vector<32x128xf32> -> vector<32x128xf32>
    %c0_4 = arith.constant 0 : index
    %c0_5 = arith.constant 0 : index
    %6 = vector.load %arg6[%c0_4, %c0_5] : memref<1x128xf32, #tpu.memory_space<vmem>>, vector<1x128xf32>
    %cst_6 = arith.constant dense<0.000000e+00> : vector<128xf32>
    %7 = vector.multi_reduction <add>, %5, %cst_6 [0] : vector<32x128xf32> to vector<128xf32>
    %8 = vector.shape_cast %7 : vector<128xf32> to vector<1x128xf32>
    %9 = arith.addf %6, %8 : vector<1x128xf32>
    %c0_7 = arith.constant 0 : index
    %c0_8 = arith.constant 0 : index
    %10 = vector.load %arg6[%c0_7, %c0_8] : memref<1x128xf32, #tpu.memory_space<vmem>>, vector<1x128xf32>
    tpu.vector_store %arg6[%c0_7, %c0_8], %9 {strides = array<i32>} : memref<1x128xf32, #tpu.memory_space<vmem>>, vector<1x128xf32>,
    %c32_i32 = arith.constant 32 : i32
    %11 = arith.muli %arg0, %c32_i32 : i32
    %12 = tpu.assume_multiple %11, 8 : i32
    %13 = arith.truncf %5 : vector<32x128xf32> to vector<32x128xbf16>
    %14 = arith.index_cast %12 : i32 to index
    %c0_9 = arith.constant 0 : index
    %15 = vector.load %arg5[%14, %c0_9] : memref<32x128xbf16, #tpu.memory_space<vmem>>, vector<32x128xbf16>
    tpu.vector_store %arg5[%14, %c0_9], %13 {strides = array<i32>} : memref<32x128xbf16, #tpu.memory_space<vmem>>, vector<32x128xbf16>,
    %c0_i32_10 = arith.constant 0 : i32
    %16 = arith.cmpi eq, %arg0, %c0_i32_10 : i32
    %17 = arith.extui %16 : i1 to i32
    %c0_i32_11 = arith.constant 0 : i32
    %18 = arith.cmpi ne, %17, %c0_i32_11 : i32
    scf.if %18 {
      %cst_12 = arith.constant 1.000000e+00 : f32
      %cst_13 = arith.constant 3.200000e+01 : f32
      %19 = arith.divf %cst_12, %cst_13 : f32
      %c0_14 = arith.constant 0 : index
      %c0_15 = arith.constant 0 : index
      %20 = vector.load %arg6[%c0_14, %c0_15] : memref<1x128xf32, #tpu.memory_space<vmem>>, vector<1x128xf32>
      %21 = vector.broadcast %19 : f32 to vector<1x128xf32>
      %22 = arith.mulf %20, %21 : vector<1x128xf32>
      %c0_16 = arith.constant 0 : index
      %c0_17 = arith.constant 0 : index
      %23 = vector.load %arg5[%c0_16, %c0_17] : memref<32x128xbf16, #tpu.memory_space<vmem>>, vector<32x128xbf16>
      %24 = arith.extf %23 : vector<32x128xbf16> to vector<32x128xf32>
      %25 = tpu.iota {dimensions = array<i32: 0>} : vector<32x128xi32>
      %c32_i32_18 = arith.constant 32 : i32
      %26 = vector.broadcast %c32_i32_18 : i32 to vector<32x128xi32>
      %27 = arith.cmpi slt, %25, %26 : vector<32x128xi32>
      %28 = vector.broadcast %22 : vector<1x128xf32> to vector<32x128xf32>
      %29 = arith.subf %24, %28 : vector<32x128xf32>
      %cst_19 = arith.constant 0.000000e+00 : f32
      %30 = vector.broadcast %cst_19 : f32 to vector<32x128xf32>
      %31 = arith.select %27, %29, %30 : vector<32x128xi1>, vector<32x128xf32>
      %32 = arith.mulf %31, %31 : vector<32x128xf32>
      %cst_20 = arith.constant dense<0.000000e+00> : vector<128xf32>
      %33 = vector.multi_reduction <add>, %32, %cst_20 [0] : vector<32x128xf32> to vector<128xf32>
      %34 = vector.shape_cast %33 : vector<128xf32> to vector<1x128xf32>
      %35 = vector.broadcast %19 : f32 to vector<1x128xf32>
      %36 = arith.mulf %34, %35 : vector<1x128xf32>
      %c0_21 = arith.constant 0 : index
      %c0_22 = arith.constant 0 : index
      %37 = vector.load %arg3[%c0_21, %c0_22] : memref<1x128xf32, #tpu.memory_space<vmem>>, vector<1x128xf32>
      %cst_23 = arith.constant 9.99999974E-6 : f32
      %38 = vector.broadcast %cst_23 : f32 to vector<1x128xf32>
      %39 = arith.addf %36, %38 : vector<1x128xf32>
      %40 = math.rsqrt %39 : vector<1x128xf32>
      %41 = arith.mulf %37, %40 : vector<1x128xf32>
      %c0_24 = arith.constant 0 : index
      %c0_25 = arith.constant 0 : index
      %42 = vector.load %arg4[%c0_24, %c0_25] : memref<1x128xf32, #tpu.memory_space<vmem>>, vector<1x128xf32>
      %43 = arith.mulf %22, %41 : vector<1x128xf32>
      %44 = arith.subf %42, %43 : vector<1x128xf32>
      %45 = vector.broadcast %41 : vector<1x128xf32> to vector<32x128xf32>
      %46 = arith.mulf %24, %45 : vector<32x128xf32>
      %47 = vector.broadcast %44 : vector<1x128xf32> to vector<32x128xf32>
      %48 = arith.addf %46, %47 : vector<32x128xf32>
      %cst_26 = arith.constant 0.000000e+00 : f32
      %49 = vector.broadcast %cst_26 : f32 to vector<32x128xf32>
      %50 = arith.cmpf oge, %48, %49 : vector<32x128xf32>
      %cst_27 = arith.constant 2.000000e-01 : f32
      %51 = vector.broadcast %cst_27 : f32 to vector<32x128xf32>
      %52 = arith.mulf %51, %48 : vector<32x128xf32>
      %53 = arith.select %50, %48, %52 : vector<32x128xi1>, vector<32x128xf32>
      %54 = arith.truncf %53 : vector<32x128xf32> to vector<32x128xbf16>
      %c0_28 = arith.constant 0 : index
      %c0_29 = arith.constant 0 : index
      %55 = vector.load %arg5[%c0_28, %c0_29] : memref<32x128xbf16, #tpu.memory_space<vmem>>, vector<32x128xbf16>
      tpu.vector_store %arg5[%c0_28, %c0_29], %54 {strides = array<i32>} : memref<32x128xbf16, #tpu.memory_space<vmem>>, vector<32x128xbf16>,
    } else {
    }
    return
  }
  func.func @transform_0(%arg0: i32) -> (i32, i32) {
    %c0_i32 = arith.constant 0 : i32
    %c0_i32_0 = arith.constant 0 : i32
    return %arg0, %c0_i32 : i32, i32
  }
  func.func @transform_1(%arg0: i32) -> (i32, i32) {
    %c0_i32 = arith.constant 0 : i32
    %c0_i32_0 = arith.constant 0 : i32
    %c0_i32_1 = arith.constant 0 : i32
    return %c0_i32, %c0_i32_0 : i32, i32
  }
  func.func @transform_2(%arg0: i32) -> (i32, i32) {
    %c0_i32 = arith.constant 0 : i32
    %c0_i32_0 = arith.constant 0 : i32
    %c0_i32_1 = arith.constant 0 : i32
    return %c0_i32, %c0_i32_0 : i32, i32
  }
  func.func @transform_3(%arg0: i32) -> (i32, i32) {
    %c0_i32 = arith.constant 0 : i32
    %c0_i32_0 = arith.constant 0 : i32
    %c0_i32_1 = arith.constant 0 : i32
    return %c0_i32, %c0_i32_0 : i32, i32
  }
  func.func @transform_4(%arg0: i32) -> (i32, i32) {
    %c0_i32 = arith.constant 0 : i32
    %c0_i32_0 = arith.constant 0 : i32
    %c0_i32_1 = arith.constant 0 : i32
    return %c0_i32, %c0_i32_0 : i32, i32
  }
}

module attributes {stable_mosaic.version = 11 : i64} {
  func.func @_head_kernel(%arg0: memref<8x1024xbf16, #tpu.memory_space<vmem>>, %arg1: memref<1024x128xbf16, #tpu.memory_space<vmem>>, %arg2: memref<1x128xf32, #tpu.memory_space<vmem>>, %arg3: memref<8x128xf32, #tpu.memory_space<vmem>>) attributes {dimension_semantics = [], scalar_prefetch = 0 : i64, scratch_operands = 0 : i64, tpu.core_type = #tpu.core_type<tc>} {
    %c0 = arith.constant 0 : index
    %c0_0 = arith.constant 0 : index
    %0 = vector.load %arg0[%c0, %c0_0] : memref<8x1024xbf16, #tpu.memory_space<vmem>>, vector<8x1024xbf16>
    %c0_1 = arith.constant 0 : index
    %c0_2 = arith.constant 0 : index
    %1 = vector.load %arg1[%c0_1, %c0_2] : memref<1024x128xbf16, #tpu.memory_space<vmem>>, vector<1024x128xbf16>
    %cst = arith.constant dense<0.000000e+00> : vector<8x128xf32>
    %2 = tpu.matmul %0, %1, %cst {dimension_numbers = #tpu.dot_dimension_numbers<[1], [0], [0], [1], [0, 0, 1, 1], [], []>} : vector<8x1024xbf16>, vector<1024x128xbf16>, vector<8x128xf32> -> vector<8x128xf32>
    %c0_3 = arith.constant 0 : index
    %c0_4 = arith.constant 0 : index
    %3 = vector.load %arg2[%c0_3, %c0_4] : memref<1x128xf32, #tpu.memory_space<vmem>>, vector<1x128xf32>
    %4 = vector.broadcast %3 : vector<1x128xf32> to vector<8x128xf32>
    %5 = arith.addf %2, %4 : vector<8x128xf32>
    %6 = tpu.iota {dimensions = array<i32: 1>} : vector<8x128xi32>
    %c4_i32 = arith.constant 4 : i32
    %7 = vector.broadcast %c4_i32 : i32 to vector<8x128xi32>
    %8 = arith.cmpi slt, %6, %7 : vector<8x128xi32>
    %cst_5 = arith.constant 5.000000e-01 : f32
    %9 = vector.broadcast %cst_5 : f32 to vector<8x128xf32>
    %10 = arith.mulf %5, %9 : vector<8x128xf32>
    %11 = math.exp %10 : vector<8x128xf32>
    %12 = arith.select %8, %5, %11 : vector<8x128xi1>, vector<8x128xf32>
    %c0_6 = arith.constant 0 : index
    %c0_7 = arith.constant 0 : index
    %13 = vector.load %arg3[%c0_6, %c0_7] : memref<8x128xf32, #tpu.memory_space<vmem>>, vector<8x128xf32>
    tpu.vector_store %arg3[%c0_6, %c0_7], %12 {strides = array<i32>} : memref<8x128xf32, #tpu.memory_space<vmem>>, vector<8x128xf32>,
    return
  }
}

</mosaic_0001>

<llo_original>
// kernel: _lambda_.6
$region0: #{_lambda_.6}
  #allocation0 [shape = 'u32[]', space=smem, size = 0x4, offset = 0x4, fixed_abs, tag = 'smem constant byte address 0x4 - core index']
  #allocation1 [shape = 'u32[144,128]{1,0:T(1,128)}', space=vmem, size = 0x12000, scoped, tag = 'internal scratch']
  #allocation2 [shape = 'f32[1,128]{1,0:T(1,128)}', space=vmem, size = 0x200, scoped, tag = 'scratch operand']
  %s0 = inlined_call_operand.vmem [shape: bf16[512,72], index: 0, kind: input, shape index: {}]
  %s1 = inlined_call_operand.vmem [shape: bf16[72,128], index: 1, kind: input, shape index: {}]
  %s2 = inlined_call_operand.vmem [shape: f32[1,128], index: 2, kind: input, shape index: {}]
  %s3 = inlined_call_operand.vmem [shape: f32[1,128], index: 3, kind: input, shape index: {}]
  %s4 = inlined_call_operand.vmem [shape: bf16[512,128], index: 4, kind: output, shape index: {}]
  %s5 = sld [smem:[#allocation0]]
  $region34: #{_lambda_.6} parent=0
    _
  %s7 = ssub.s32 1, %s5
  %s8 = scalar_select 0, %s7, %s5
  // Predicated region
  $region2: #{_lambda_.6} parent=0 // pred_check
    _
  $region3: #{_lambda_.6} parent=0 // pred_check_branch
    %10 = sbr.rel (0) target = $region5
  $region4: #{_lambda_.6} parent=0 // pred_region
    _
  $region5: #{_lambda_.6} parent=0 // pred_fallthru
    _
  // Predicated region
  $region6: #{_lambda_.6} parent=0 // pred_check
    _
  $region7: #{_lambda_.6} parent=0 // pred_check_branch
    %12 = sbr.rel (0) target = $region9
  $region8: #{_lambda_.6} parent=0 // pred_region
    _
  $region9: #{_lambda_.6} parent=0 // pred_fallthru
    _
  // Predicated region
  $region10: #{_lambda_.6} parent=0 // pred_check
    _
  $region11: #{_lambda_.6} parent=0 // pred_check_branch
    %14 = sbr.rel (0) target = $region13
  $region12: #{_lambda_.6} parent=0 // pred_region
    _
  $region13: #{_lambda_.6} parent=0 // pred_fallthru
    _
  // Predicated region
  $region14: #{_lambda_.6} parent=0 // pred_check
    _
  $region15: #{_lambda_.6} parent=0 // pred_check_branch
    %16 = sbr.rel (0) target = $region17
  $region16: #{_lambda_.6} parent=0 // pred_region
    _
  $region17: #{_lambda_.6} parent=0 // pred_fallthru
    _
  %p18 = scmp.eq.s32.totalorder 0, 0
  // Predicated region
  $region18: #{_lambda_.6} parent=0 // pred_check
    %p19 = pneg %p18
  $region19: #{_lambda_.6} parent=0 // pred_check_branch
    %21 = sbr.rel (%p19) target = $region21
  $region20: #{_lambda_.6} parent=0 // pred_region
    %22 = vst [vmem:[#allocation2] sm:$0x1] 0.0
  $region21: #{_lambda_.6} parent=0 // pred_fallthru
    _
  %v23 = vld [vmem:[%s0] sm:$0xf]
  %v24 = vld [vmem:[%s0 + $0x4] sm:$0xf]
  %v25 = vld [vmem:[%s0 + $0x8] sm:$0xf]
  %v26 = vld [vmem:[%s0 + $0xc] sm:$0xf]
  %v27 = vld [vmem:[%s0 + $0x10] sm:$0xf]
  %v28 = vld [vmem:[%s0 + $0x14] sm:$0xf]
  %v29 = vld [vmem:[%s0 + $0x18] sm:$0xf]
  %v30 = vld [vmem:[%s0 + $0x1c] sm:$0xf]
  %v31 = vld [vmem:[%s0 + $0x20] sm:$0xf]
  %v32 = vld [vmem:[%s0 + $0x24] sm:$0xf]
  %v33 = vld [vmem:[%s0 + $0x28] sm:$0xf]
  %v34 = vld [vmem:[%s0 + $0x2c] sm:$0xf]
  %v35 = vld [vmem:[%s0 + $0x30] sm:$0xf]
  %v36 = vld [vmem:[%s0 + $0x34] sm:$0xf]
  %v37 = vld [vmem:[%s0 + $0x38] sm:$0xf]
  %v38 = vld [vmem:[%s0 + $0x3c] sm:$0xf]
  %v39 = vld [vmem:[%s0 + $0x40] sm:$0xf]
  %v40 = vld [vmem:[%s0 + $0x44] sm:$0xf]
  %v41 = vld [vmem:[%s0 + $0x48] sm:$0xf]
  %v42 = vld [vmem:[%s0 + $0x4c] sm:$0xf]
  %v43 = vld [vmem:[%s0 + $0x50] sm:$0xf]
  %v44 = vld [vmem:[%s0 + $0x54] sm:$0xf]
  %v45 = vld [vmem:[%s0 + $0x58] sm:$0xf]
  %v46 = vld [vmem:[%s0 + $0x5c] sm:$0xf]
  %v47 = vld [vmem:[%s0 + $0x60] sm:$0xf]
  %v48 = vld [vmem:[%s0 + $0x64] sm:$0xf]
  %v49 = vld [vmem:[%s0 + $0x68] sm:$0xf]
  %v50 = vld [vmem:[%s0 + $0x6c] sm:$0xf]
  %v51 = vld [vmem:[%s0 + $0x70] sm:$0xf]
  %v52 = vld [vmem:[%s0 + $0x74] sm:$0xf]
  %v53 = vld [vmem:[%s0 + $0x78] sm:$0xf]
  %v54 = vld [vmem:[%s0 + $0x7c] sm:$0xf]
  %v55 = vld [vmem:[%s0 + $0x80] sm:$0xf]
  %v56 = vld [vmem:[%s0 + $0x84] sm:$0xf]
  %v57 = vld [vmem:[%s0 + $0x88] sm:$0xf]
  %v58 = vld [vmem:[%s0 + $0x8c] sm:$0xf]
  %v59 = vld [vmem:[%s0 + $0x90] sm:$0xf]
  %v60 = vld [vmem:[%s0 + $0x94] sm:$0xf]
  %v61 = vld [vmem:[%s0 + $0x98] sm:$0xf]
  %v62 = vld [vmem:[%s0 + $0x9c] sm:$0xf]
  %v63 = vld [vmem:[%s0 + $0xa0] sm:$0xf]
  %v64 = vld [vmem:[%s0 + $0xa4] sm:$0xf]
  %v65 = vld [vmem:[%s0 + $0xa8] sm:$0xf]
  %v66 = vld [vmem:[%s0 + $0xac] sm:$0xf]
  %v67 = vld [vmem:[%s0 + $0xb0] sm:$0xf]
  %v68 = vld [vmem:[%s0 + $0xb4] sm:$0xf]
  %v69 = vld [vmem:[%s0 + $0xb8] sm:$0xf]
  %v70 = vld [vmem:[%s0 + $0xbc] sm:$0xf]
  %v71 = vld [vmem:[%s0 + $0xc0] sm:$0xf]
  %v72 = vld [vmem:[%s0 + $0xc4] sm:$0xf]
  %v73 = vld [vmem:[%s0 + $0xc8] sm:$0xf]
  %v74 = vld [vmem:[%s0 + $0xcc] sm:$0xf]
  %v75 = vld [vmem:[%s0 + $0xd0] sm:$0xf]
  %v76 = vld [vmem:[%s0 + $0xd4] sm:$0xf]
  %v77 = vld [vmem:[%s0 + $0xd8] sm:$0xf]
  %v78 = vld [vmem:[%s0 + $0xdc] sm:$0xf]
  %v79 = vld [vmem:[%s0 + $0xe0] sm:$0xf]
  %v80 = vld [vmem:[%s0 + $0xe4] sm:$0xf]
  %v81 = vld [vmem:[%s0 + $0xe8] sm:$0xf]
  %v82 = vld [vmem:[%s0 + $0xec] sm:$0xf]
  %v83 = vld [vmem:[%s0 + $0xf0] sm:$0xf]
  %v84 = vld [vmem:[%s0 + $0xf4] sm:$0xf]
  %v85 = vld [vmem:[%s0 + $0xf8] sm:$0xf]
  %v86 = vld [vmem:[%s0 + $0xfc] sm:$0xf]
  %v87 = vld [vmem:[%s1] sm:$0xf]
  %v88 = vld [vmem:[%s1 + $0x4] sm:$0xf]
  %v89 = vld [vmem:[%s1 + $0x8] sm:$0xf]
  %v90 = vld [vmem:[%s1 + $0xc] sm:$0xf]
  %v91 = vld [vmem:[%s1 + $0x10] sm:$0xf]
  %v92 = vld [vmem:[%s1 + $0x14] sm:$0xf]
  %v93 = vld [vmem:[%s1 + $0x18] sm:$0xf]
  %v94 = vld [vmem:[%s1 + $0x1c] sm:$0xf]
  %v95 = vld [vmem:[%s1 + $0x20] sm:$0xf]
  %v160 = vunpack.c.l.b16 %v23
  %v161 = vunpack.c.l.b16 %v24
  %v162 = vunpack.c.l.b16 %v25
  %v163 = vunpack.c.l.b16 %v26
  %v164 = vunpack.c.l.b16 %v27
  %v165 = vunpack.c.l.b16 %v28
  %v166 = vunpack.c.l.b16 %v29
  %v167 = vunpack.c.l.b16 %v30
  %v168 = vunpack.c.l.b16 %v31
  %v169 = vunpack.c.l.b16 %v32
  %v170 = vunpack.c.l.b16 %v33
  %v171 = vunpack.c.l.b16 %v34
  %v172 = vunpack.c.l.b16 %v35
  %v173 = vunpack.c.l.b16 %v36
  %v174 = vunpack.c.l.b16 %v37
  %v175 = vunpack.c.l.b16 %v38
  %v176 = vunpack.c.l.b16 %v39
  %v177 = vunpack.c.l.b16 %v40
  %v178 = vunpack.c.l.b16 %v41
  %v179 = vunpack.c.l.b16 %v42
  %v180 = vunpack.c.l.b16 %v43
  %v181 = vunpack.c.l.b16 %v44
  %v182 = vunpack.c.l.b16 %v45
  %v183 = vunpack.c.l.b16 %v46
  %v184 = vunpack.c.l.b16 %v47
  %v185 = vunpack.c.l.b16 %v48
  %v186 = vunpack.c.l.b16 %v49
  %v187 = vunpack.c.l.b16 %v50
  %v188 = vunpack.c.l.b16 %v51
  %v189 = vunpack.c.l.b16 %v52
  %v190 = vunpack.c.l.b16 %v53
  %v191 = vunpack.c.l.b16 %v54
  %v192 = vunpack.c.l.b16 %v55
  %v193 = vunpack.c.l.b16 %v56
  %v194 = vunpack.c.l.b16 %v57
  %v195 = vunpack.c.l.b16 %v58
  %v196 = vunpack.c.l.b16 %v59
  %v197 = vunpack.c.l.b16 %v60
  %v198 = vunpack.c.l.b16 %v61
  %v199 = vunpack.c.l.b16 %v62
  %v200 = vunpack.c.l.b16 %v63
  %v201 = vunpack.c.l.b16 %v64
  %v202 = vunpack.c.l.b16 %v65
  %v203 = vunpack.c.l.b16 %v66
  %v204 = vunpack.c.l.b16 %v67
  %v205 = vunpack.c.l.b16 %v68
  %v206 = vunpack.c.l.b16 %v69
  %v207 = vunpack.c.l.b16 %v70
  %v208 = vunpack.c.l.b16 %v71
  %v209 = vunpack.c.l.b16 %v72
  %v210 = vunpack.c.l.b16 %v73
  %v211 = vunpack.c.l.b16 %v74
  %v212 = vunpack.c.l.b16 %v75
  %v213 = vunpack.c.l.b16 %v76
  %v214 = vunpack.c.l.b16 %v77
  %v215 = vunpack.c.l.b16 %v78
  %v216 = vunpack.c.l.b16 %v79
  %v217 = vunpack.c.l.b16 %v80
  %v218 = vunpack.c.l.b16 %v81
  %v219 = vunpack.c.l.b16 %v82
  %v220 = vunpack.c.l.b16 %v83
  %v221 = vunpack.c.l.b16 %v84
  %v222 = vunpack.c.l.b16 %v85
  %v223 = vunpack.c.l.b16 %v86
  %v224 = vpack.c.b16 %v161, %v160
  %v225 = vpack.c.b16 %v163, %v162
  %v226 = vpack.c.b16 %v165, %v164
  %v227 = vpack.c.b16 %v167, %v166
  %v228 = vpack.c.b16 %v169, %v168
  %v229 = vpack.c.b16 %v171, %v170
  %v230 = vpack.c.b16 %v173, %v172
  %v231 = vpack.c.b16 %v175, %v174
  %v232 = vpack.c.b16 %v177, %v176
  %v233 = vpack.c.b16 %v179, %v178
  %v234 = vpack.c.b16 %v181, %v180
  %v235 = vpack.c.b16 %v183, %v182
  %v236 = vpack.c.b16 %v185, %v184
  %v237 = vpack.c.b16 %v187, %v186
  %v238 = vpack.c.b16 %v189, %v188
  %v239 = vpack.c.b16 %v191, %v190
  %v240 = vpack.c.b16 %v193, %v192
  %v241 = vpack.c.b16 %v195, %v194
  %v242 = vpack.c.b16 %v197, %v196
  %v243 = vpack.c.b16 %v199, %v198
  %v244 = vpack.c.b16 %v201, %v200
  %v245 = vpack.c.b16 %v203, %v202
  %v246 = vpack.c.b16 %v205, %v204
  %v247 = vpack.c.b16 %v207, %v206
  %v248 = vpack.c.b16 %v209, %v208
  %v249 = vpack.c.b16 %v211, %v210
  %v250 = vpack.c.b16 %v213, %v212
  %v251 = vpack.c.b16 %v215, %v214
  %v252 = vpack.c.b16 %v217, %v216
  %v253 = vpack.c.b16 %v219, %v218
  %v254 = vpack.c.b16 %v221, %v220
  %v255 = vpack.c.b16 %v223, %v222
  %v265 = vunpack.c.l.b16 %v87
  %v266 = vunpack.c.l.b16 %v88
  %v267 = vunpack.c.l.b16 %v89
  %v268 = vunpack.c.l.b16 %v90
  %v269 = vunpack.c.l.b16 %v91
  %v270 = vunpack.c.l.b16 %v92
  %v271 = vunpack.c.l.b16 %v93
  %v272 = vunpack.c.l.b16 %v94
  %v273 = vunpack.c.l.b16 %v95
  %v274 = vpack.c.b16 %v266, %v265
  %v275 = vpack.c.b16 %v268, %v267
  %v276 = vpack.c.b16 %v270, %v269
  %v277 = vpack.c.b16 %v272, %v271
  %v278 = vpack.c.b16 %v273, %v273
  %vm283 = vcmask 588800
  %v285 = vsel %vm283, %v224, 0
  %v288 = vsel %vm283, %v225, 0
  %v291 = vsel %vm283, %v226, 0
  %v294 = vsel %vm283, %v227, 0
  %v297 = vsel %vm283, %v228, 0
  %v300 = vsel %vm283, %v229, 0
  %v303 = vsel %vm283, %v230, 0
  %v306 = vsel %vm283, %v231, 0
  %v309 = vsel %vm283, %v232, 0
  %v312 = vsel %vm283, %v233, 0
  %v315 = vsel %vm283, %v234, 0
  %v318 = vsel %vm283, %v235, 0
  %v321 = vsel %vm283, %v236, 0
  %v324 = vsel %vm283, %v237, 0
  %v327 = vsel %vm283, %v238, 0
  %v330 = vsel %vm283, %v239, 0
  %v333 = vsel %vm283, %v240, 0
  %v336 = vsel %vm283, %v241, 0
  %v339 = vsel %vm283, %v242, 0
  %v342 = vsel %vm283, %v243, 0
  %v345 = vsel %vm283, %v244, 0
  %v348 = vsel %vm283, %v245, 0
  %v351 = vsel %vm283, %v246, 0
  %v354 = vsel %vm283, %v247, 0
  %v357 = vsel %vm283, %v248, 0
  %v360 = vsel %vm283, %v249, 0
  %v363 = vsel %vm283, %v250, 0
  %v366 = vsel %vm283, %v251, 0
  %v369 = vsel %vm283, %v252, 0
  %v372 = vsel %vm283, %v253, 0
  %v375 = vsel %vm283, %v254, 0
  %v378 = vsel %vm283, %v255, 0
  %vm380 = vcmask 1043456
  %v382 = vsel %vm380, %v278, 0
  %384 = vmatprep.subr.bf16.mxu0 0
  %385 = vmatpush1.bf16.msra.mxu0 %v274
  %386 = vmatprep.subr.bf16.mxu0 0
  %387 = vmatpush1.bf16.msra.mxu0 %v275
  %388 = vmatprep.subr.bf16.mxu0 0
  %389 = vmatpush1.bf16.msra.mxu0 %v276
  %390 = vmatprep.subr.bf16.mxu0 0
  %391 = vmatpush1.bf16.msra.mxu0 %v277
  %392 = vmatprep.subr.bf16.mxu0 0
  %393 = vmatpush1.bf16.msra.mxu0 %v382
  %394 = vmatprep.subr.bf16.mxu0 0
  %395 = vmatpush1.bf16.msra.mxu0 0
  %396 = vmatprep.subr.bf16.mxu0 0
  %397 = vmatpush1.bf16.msra.mxu0 0
  %398 = vmatprep.subr.bf16.mxu0 0
  %399 = vmatpush1.bf16.msra.mxu0 0
  %400 = vmatprep.subr.bf16.mxu0 0
  %401 = vmatpush1.bf16.msra.mxu0 0
  %402 = vmatprep.subr.bf16.mxu0 0
  %403 = vmatpush1.bf16.msra.mxu0 0
  %404 = vmatprep.subr.bf16.mxu0 0
  %405 = vmatpush1.bf16.msra.mxu0 0
  %406 = vmatprep.subr.bf16.mxu0 0
  %407 = vmatpush1.bf16.msra.mxu0 0
  %408 = vmatprep.subr.bf16.mxu0 0
  %409 = vmatpush1.bf16.msra.mxu0 0
  %410 = vmatprep.subr.bf16.mxu0 0
  %411 = vmatpush1.bf16.msra.mxu0 0
  %412 = vmatprep.subr.bf16.mxu0 0
  %413 = vmatpush1.bf16.msra.mxu0 0
  %414 = vmatprep.subr.bf16.mxu0 0
  %415 = vmatpush1.bf16.msra.mxu0 0
  %416 = vmatprep.mubr.bf16.mxu0 0
  %417 = vmatmul.mubr.bf16.gmra.mrb[0].mxu0 %v285
  %v418 = vpop.f32.mrb[0].mxu0
  %v419 = vadd.f32 0.0, %v418
  %v420 = vpop.f32.mrb[0].mxu0
  %v421 = vpop.f32.mrb[0].mxu0
  %v422 = vadd.f32 0.0, %v421
  %v423 = vpop.f32.mrb[0].mxu0
  %424 = vmatprep.mubr.bf16.mxu0 0
  %425 = vmatmul.mubr.bf16.gmra.mrb[0].mxu0 %v288
  %v426 = vpop.f32.mrb[0].mxu0
  %v427 = vadd.f32 0.0, %v426
  %v428 = vpop.f32.mrb[0].mxu0
  %v429 = vpop.f32.mrb[0].mxu0
  %v430 = vadd.f32 0.0, %v429
  %v431 = vpop.f32.mrb[0].mxu0
  %432 = vmatprep.mubr.bf16.mxu0 0
  %433 = vmatmul.mubr.bf16.gmra.mrb[0].mxu0 %v291
  %v434 = vpop.f32.mrb[0].mxu0
  %v435 = vadd.f32 0.0, %v434
  %v436 = vpop.f32.mrb[0].mxu0
  %v437 = vpop.f32.mrb[0].mxu0
  %v438 = vadd.f32 0.0, %v437
  %v439 = vpop.f32.mrb[0].mxu0
  %440 = vmatprep.mubr.bf16.mxu0 0
  %441 = vmatmul.mubr.bf16.gmra.mrb[0].mxu0 %v294
  %v442 = vpop.f32.mrb[0].mxu0
  %v443 = vadd.f32 0.0, %v442
  %v444 = vpop.f32.mrb[0].mxu0
  %v445 = vpop.f32.mrb[0].mxu0
  %v446 = vadd.f32 0.0, %v445
  %v447 = vpop.f32.mrb[0].mxu0
  %448 = vmatprep.mubr.bf16.mxu0 0
  %449 = vmatmul.mubr.bf16.gmra.mrb[0].mxu0 %v297
  %v450 = vpop.f32.mrb[0].mxu0
  %v451 = vadd.f32 0.0, %v450
  %v452 = vpop.f32.mrb[0].mxu0
  %v453 = vpop.f32.mrb[0].mxu0
  %v454 = vadd.f32 0.0, %v453
  %v455 = vpop.f32.mrb[0].mxu0
  %456 = vmatprep.mubr.bf16.mxu0 0
  %457 = vmatmul.mubr.bf16.gmra.mrb[0].mxu0 %v300
  %v458 = vpop.f32.mrb[0].mxu0
  %v459 = vadd.f32 0.0, %v458
  %v460 = vpop.f32.mrb[0].mxu0
  %v461 = vpop.f32.mrb[0].mxu0
  %v462 = vadd.f32 0.0, %v461
  %v463 = vpop.f32.mrb[0].mxu0
  %464 = vmatprep.mubr.bf16.mxu0 0
  %465 = vmatmul.mubr.bf16.gmra.mrb[0].mxu0 %v303
  %v466 = vpop.f32.mrb[0].mxu0
  %v467 = vadd.f32 0.0, %v466
  %v468 = vpop.f32.mrb[0].mxu0
  %v469 = vpop.f32.mrb[0].mxu0
  %v470 = vadd.f32 0.0, %v469
  %v471 = vpop.f32.mrb[0].mxu0
  %472 = vmatprep.mubr.bf16.mxu0 0
  %473 = vmatmul.mubr.bf16.gmra.mrb[0].mxu0 %v306
  %v474 = vpop.f32.mrb[0].mxu0
  %v475 = vadd.f32 0.0, %v474
  %v476 = vpop.f32.mrb[0].mxu0
  %v477 = vpop.f32.mrb[0].mxu0
  %v478 = vadd.f32 0.0, %v477
  %v479 = vpop.f32.mrb[0].mxu0
  %480 = vmatprep.mubr.bf16.mxu0 0
  %481 = vmatmul.mubr.bf16.gmra.mrb[0].mxu0 %v309
  %v482 = vpop.f32.mrb[0].mxu0
  %v483 = vadd.f32 0.0, %v482
  %v484 = vpop.f32.mrb[0].mxu0
  %v485 = vpop.f32.mrb[0].mxu0
  %v486 = vadd.f32 0.0, %v485
  %v487 = vpop.f32.mrb[0].mxu0
  %488 = vmatprep.mubr.bf16.mxu0 0
  %489 = vmatmul.mubr.bf16.gmra.mrb[0].mxu0 %v312
  %v490 = vpop.f32.mrb[0].mxu0
  %v491 = vadd.f32 0.0, %v490
  %v492 = vpop.f32.mrb[0].mxu0
  %v493 = vpop.f32.mrb[0].mxu0
  %v494 = vadd.f32 0.0, %v493
  %v495 = vpop.f32.mrb[0].mxu0
  %496 = vmatprep.mubr.bf16.mxu0 0
  %497 = vmatmul.mubr.bf16.gmra.mrb[0].mxu0 %v315
  %v498 = vpop.f32.mrb[0].mxu0
  %v499 = vadd.f32 0.0, %v498
  %v500 = vpop.f32.mrb[0].mxu0
  %v501 = vpop.f32.mrb[0].mxu0
  %v502 = vadd.f32 0.0, %v501
  %v503 = vpop.f32.mrb[0].mxu0
  %504 = vmatprep.mubr.bf16.mxu0 0
  %505 = vmatmul.mubr.bf16.gmra.mrb[0].mxu0 %v318
  %v506 = vpop.f32.mrb[0].mxu0
  %v507 = vadd.f32 0.0, %v506
  %v508 = vpop.f32.mrb[0].mxu0
  %v509 = vpop.f32.mrb[0].mxu0
  %v510 = vadd.f32 0.0, %v509
  %v511 = vpop.f32.mrb[0].mxu0
  %512 = vmatprep.mubr.bf16.mxu0 0
  %513 = vmatmul.mubr.bf16.gmra.mrb[0].mxu0 %v321
  %v514 = vpop.f32.mrb[0].mxu0
  %v515 = vadd.f32 0.0, %v514
  %v516 = vpop.f32.mrb[0].mxu0
  %v517 = vpop.f32.mrb[0].mxu0
  %v518 = vadd.f32 0.0, %v517
  %v519 = vpop.f32.mrb[0].mxu0
  %520 = vmatprep.mubr.bf16.mxu0 0
  %521 = vmatmul.mubr.bf16.gmra.mrb[0].mxu0 %v324
  %v522 = vpop.f32.mrb[0].mxu0
  %v523 = vadd.f32 0.0, %v522
  %v524 = vpop.f32.mrb[0].mxu0
  %v525 = vpop.f32.mrb[0].mxu0
  %v526 = vadd.f32 0.0, %v525
  %v527 = vpop.f32.mrb[0].mxu0
  %528 = vmatprep.mubr.bf16.mxu0 0
  %529 = vmatmul.mubr.bf16.gmra.mrb[0].mxu0 %v327
  %v530 = vpop.f32.mrb[0].mxu0
  %v531 = vadd.f32 0.0, %v530
  %v532 = vpop.f32.mrb[0].mxu0
  %v533 = vpop.f32.mrb[0].mxu0
  %v534 = vadd.f32 0.0, %v533
  %v535 = vpop.f32.mrb[0].mxu0
  %536 = vmatprep.mubr.bf16.mxu0 0
  %537 = vmatmul.mubr.bf16.gmra.mrb[0].mxu0 %v330
  %v538 = vpop.f32.mrb[0].mxu0
  %v539 = vadd.f32 0.0, %v538
  %v540 = vpop.f32.mrb[0].mxu0
  %v541 = vpop.f32.mrb[0].mxu0
  %v542 = vadd.f32 0.0, %v541
  %v543 = vpop.f32.mrb[0].mxu0
  %544 = vmatprep.mubr.bf16.mxu0 0
  %545 = vmatmul.mubr.bf16.gmra.mrb[0].mxu0 %v333
  %v546 = vpop.f32.mrb[0].mxu0
  %v547 = vadd.f32 0.0, %v546
  %v548 = vpop.f32.mrb[0].mxu0
  %v549 = vpop.f32.mrb[0].mxu0
  %v550 = vadd.f32 0.0, %v549
  %v551 = vpop.f32.mrb[0].mxu0
  %552 = vmatprep.mubr.bf16.mxu0 0
  %553 = vmatmul.mubr.bf16.gmra.mrb[0].mxu0 %v336
  %v554 = vpop.f32.mrb[0].mxu0
  %v555 = vadd.f32 0.0, %v554
  %v556 = vpop.f32.mrb[0].mxu0
  %v557 = vpop.f32.mrb[0].mxu0
  %v558 = vadd.f32 0.0, %v557
  %v559 = vpop.f32.mrb[0].mxu0
  %560 = vmatprep.mubr.bf16.mxu0 0
  %561 = vmatmul.mubr.bf16.gmra.mrb[0].mxu0 %v339
  %v562 = vpop.f32.mrb[0].mxu0
  %v563 = vadd.f32 0.0, %v562
  %v564 = vpop.f32.mrb[0].mxu0
  %v565 = vpop.f32.mrb[0].mxu0
  %v566 = vadd.f32 0.0, %v565
  %v567 = vpop.f32.mrb[0].mxu0
  %568 = vmatprep.mubr.bf16.mxu0 0
  %569 = vmatmul.mubr.bf16.gmra.mrb[0].mxu0 %v342
  %v570 = vpop.f32.mrb[0].mxu0
  %v571 = vadd.f32 0.0, %v570
  %v572 = vpop.f32.mrb[0].mxu0
  %v573 = vpop.f32.mrb[0].mxu0
  %v574 = vadd.f32 0.0, %v573
  %v575 = vpop.f32.mrb[0].mxu0
  %576 = vmatprep.mubr.bf16.mxu0 0
  %577 = vmatmul.mubr.bf16.gmra.mrb[0].mxu0 %v345
  %v578 = vpop.f32.mrb[0].mxu0
  %v579 = vadd.f32 0.0, %v578
  %v580 = vpop.f32.mrb[0].mxu0
  %v581 = vpop.f32.mrb[0].mxu0
  %v582 = vadd.f32 0.0, %v581
  %v583 = vpop.f32.mrb[0].mxu0
  %584 = vmatprep.mubr.bf16.mxu0 0
  %585 = vmatmul.mubr.bf16.gmra.mrb[0].mxu0 %v348
  %v586 = vpop.f32.mrb[0].mxu0
  %v587 = vadd.f32 0.0, %v586
  %v588 = vpop.f32.mrb[0].mxu0
  %v589 = vpop.f32.mrb[0].mxu0
  %v590 = vadd.f32 0.0, %v589
  %v591 = vpop.f32.mrb[0].mxu0
  %592 = vmatprep.mubr.bf16.mxu0 0
  %593 = vmatmul.mubr.bf16.gmra.mrb[0].mxu0 %v351
  %v594 = vpop.f32.mrb[0].mxu0
  %v595 = vadd.f32 0.0, %v594
  %v596 = vpop.f32.mrb[0].mxu0
  %v597 = vpop.f32.mrb[0].mxu0
  %v598 = vadd.f32 0.0, %v597
  %v599 = vpop.f32.mrb[0].mxu0
  %600 = vmatprep.mubr.bf16.mxu0 0
  %601 = vmatmul.mubr.bf16.gmra.mrb[0].mxu0 %v354
  %v602 = vpop.f32.mrb[0].mxu0
  %v603 = vadd.f32 0.0, %v602
  %v604 = vpop.f32.mrb[0].mxu0
  %v605 = vpop.f32.mrb[0].mxu0
  %v606 = vadd.f32 0.0, %v605
  %v607 = vpop.f32.mrb[0].mxu0
  %608 = vmatprep.mubr.bf16.mxu0 0
  %609 = vmatmul.mubr.bf16.gmra.mrb[0].mxu0 %v357
  %v610 = vpop.f32.mrb[0].mxu0
  %v611 = vadd.f32 0.0, %v610
  %v612 = vpop.f32.mrb[0].mxu0
  %v613 = vpop.f32.mrb[0].mxu0
  %v614 = vadd.f32 0.0, %v613
  %v615 = vpop.f32.mrb[0].mxu0
  %616 = vmatprep.mubr.bf16.mxu0 0
  %617 = vmatmul.mubr.bf16.gmra.mrb[0].mxu0 %v360
  %v618 = vpop.f32.mrb[0].mxu0
  %v619 = vadd.f32 0.0, %v618
  %v620 = vpop.f32.mrb[0].mxu0
  %v621 = vpop.f32.mrb[0].mxu0
  %v622 = vadd.f32 0.0, %v621
  %v623 = vpop.f32.mrb[0].mxu0
  %624 = vmatprep.mubr.bf16.mxu0 0
  %625 = vmatmul.mubr.bf16.gmra.mrb[0].mxu0 %v363
  %v626 = vpop.f32.mrb[0].mxu0
  %v627 = vadd.f32 0.0, %v626
  %v628 = vpop.f32.mrb[0].mxu0
  %v629 = vpop.f32.mrb[0].mxu0
  %v630 = vadd.f32 0.0, %v629
  %v631 = vpop.f32.mrb[0].mxu0
  %632 = vmatprep.mubr.bf16.mxu0 0
  %633 = vmatmul.mubr.bf16.gmra.mrb[0].mxu0 %v366
  %v634 = vpop.f32.mrb[0].mxu0
  %v635 = vadd.f32 0.0, %v634
  %v636 = vpop.f32.mrb[0].mxu0
  %v637 = vpop.f32.mrb[0].mxu0
  %v638 = vadd.f32 0.0, %v637
  %v639 = vpop.f32.mrb[0].mxu0
  %640 = vmatprep.mubr.bf16.mxu0 0
  %641 = vmatmul.mubr.bf16.gmra.mrb[0].mxu0 %v369
  %v642 = vpop.f32.mrb[0].mxu0
  %v643 = vadd.f32 0.0, %v642
  %v644 = vpop.f32.mrb[0].mxu0
  %v645 = vpop.f32.mrb[0].mxu0
  %v646 = vadd.f32 0.0, %v645
  %v647 = vpop.f32.mrb[0].mxu0
  %648 = vmatprep.mubr.bf16.mxu0 0
  %649 = vmatmul.mubr.bf16.gmra.mrb[0].mxu0 %v372
  %v650 = vpop.f32.mrb[0].mxu0
  %v651 = vadd.f32 0.0, %v650
  %v652 = vpop.f32.mrb[0].mxu0
  %v653 = vpop.f32.mrb[0].mxu0
  %v654 = vadd.f32 0.0, %v653
  %v655 = vpop.f32.mrb[0].mxu0
  %656 = vmatprep.mubr.bf16.mxu0 0
  %657 = vmatmul.mubr.bf16.gmra.mrb[0].mxu0 %v375
  %v658 = vpop.f32.mrb[0].mxu0
  %v659 = vadd.f32 0.0, %v658
  %v660 = vpop.f32.mrb[0].mxu0
  %v661 = vpop.f32.mrb[0].mxu0
  %v662 = vadd.f32 0.0, %v661
  %v663 = vpop.f32.mrb[0].mxu0
  %664 = vmatprep.mubr.bf16.mxu0 0
  %665 = vmatmul.mubr.bf16.gmra.mrb[0].mxu0 %v378
  %v666 = vpop.f32.mrb[0].mxu0
  %v667 = vadd.f32 0.0, %v666
  %v668 = vpop.f32.mrb[0].mxu0
  %v669 = vpop.f32.mrb[0].mxu0
  %v670 = vadd.f32 0.0, %v669
  %v671 = vpop.f32.mrb[0].mxu0
  %672 = vdwg.mxu0
  %v673 = vld [vmem:[#allocation2] sm:$0x1]
  %v674 = vadd.f32 %v419, %v422
  %v675 = vadd.f32 %v674, %v427
  %v676 = vadd.f32 %v675, %v430
  %v677 = vadd.f32 %v676, %v435
  %v678 = vadd.f32 %v677, %v438
  %v679 = vadd.f32 %v678, %v443
  %v680 = vadd.f32 %v679, %v446
  %v681 = vadd.f32 %v680, %v451
  %v682 = vadd.f32 %v681, %v454
  %v683 = vadd.f32 %v682, %v459
  %v684 = vadd.f32 %v683, %v462
  %v685 = vadd.f32 %v684, %v467
  %v686 = vadd.f32 %v685, %v470
  %v687 = vadd.f32 %v686, %v475
  %v688 = vadd.f32 %v687, %v478
  %v689 = vadd.f32 %v688, %v483
  %v690 = vadd.f32 %v689, %v486
  %v691 = vadd.f32 %v690, %v491
  %v692 = vadd.f32 %v691, %v494
  %v693 = vadd.f32 %v692, %v499
  %v694 = vadd.f32 %v693, %v502
  %v695 = vadd.f32 %v694, %v507
  %v696 = vadd.f32 %v695, %v510
  %v697 = vadd.f32 %v696, %v515
  %v698 = vadd.f32 %v697, %v518
  %v699 = vadd.f32 %v698, %v523
  %v700 = vadd.f32 %v699, %v526
  %v701 = vadd.f32 %v700, %v531
  %v702 = vadd.f32 %v701, %v534
  %v703 = vadd.f32 %v702, %v539
  %v704 = vadd.f32 %v703, %v542
  %v705 = vadd.f32 %v704, %v547
  %v706 = vadd.f32 %v705, %v550
  %v707 = vadd.f32 %v706, %v555
  %v708 = vadd.f32 %v707, %v558
  %v709 = vadd.f32 %v708, %v563
  %v710 = vadd.f32 %v709, %v566
  %v711 = vadd.f32 %v710, %v571
  %v712 = vadd.f32 %v711, %v574
  %v713 = vadd.f32 %v712, %v579
  %v714 = vadd.f32 %v713, %v582
  %v715 = vadd.f32 %v714, %v587
  %v716 = vadd.f32 %v715, %v590
  %v717 = vadd.f32 %v716, %v595
  %v718 = vadd.f32 %v717, %v598
  %v719 = vadd.f32 %v718, %v603
  %v720 = vadd.f32 %v719, %v606
  %v721 = vadd.f32 %v720, %v611
  %v722 = vadd.f32 %v721, %v614
  %v723 = vadd.f32 %v722, %v619
  %v724 = vadd.f32 %v723, %v622
  %v725 = vadd.f32 %v724, %v627
  %v726 = vadd.f32 %v725, %v630
  %v727 = vadd.f32 %v726, %v635
  %v728 = vadd.f32 %v727, %v638
  %v729 = vadd.f32 %v728, %v643
  %v730 = vadd.f32 %v729, %v646
  %v731 = vadd.f32 %v730, %v651
  %v732 = vadd.f32 %v731, %v654
  %v733 = vadd.f32 %v732, %v659
  %v734 = vadd.f32 %v733, %v662
  %v735 = vadd.f32 %v734, %v667
  %v736 = vadd.f32 %v735, %v670
  %v737 = vrot.slane %v736, 4
  %v738 = vadd.f32 %v736, %v737
  %v739 = vrot.slane %v738, 2
  %v740 = vadd.f32 %v738, %v739
  %v741 = vrot.slane %v740, 1
  %v742 = vadd.f32 %v740, %v741
  %v743 = vadd.f32 %v673, %v742
  %744 = vst [vmem:[#allocation2] sm:$0x1] %v743
  %s745 = smul.u32 0, 512
  %v746 = vpack.c.bf16 %v422, %v419
  %v747 = vpack.c.bf16 %v430, %v427
  %v748 = vpack.c.bf16 %v438, %v435
  %v749 = vpack.c.bf16 %v446, %v443
  %v750 = vpack.c.bf16 %v454, %v451
  %v751 = vpack.c.bf16 %v462, %v459
  %v752 = vpack.c.bf16 %v470, %v467
  %v753 = vpack.c.bf16 %v478, %v475
  %v754 = vpack.c.bf16 %v486, %v483
  %v755 = vpack.c.bf16 %v494, %v491
  %v756 = vpack.c.bf16 %v502, %v499
  %v757 = vpack.c.bf16 %v510, %v507
  %v758 = vpack.c.bf16 %v518, %v515
  %v759 = vpack.c.bf16 %v526, %v523
  %v760 = vpack.c.bf16 %v534, %v531
  %v761 = vpack.c.bf16 %v542, %v539
  %v762 = vpack.c.bf16 %v550, %v547
  %v763 = vpack.c.bf16 %v558, %v555
  %v764 = vpack.c.bf16 %v566, %v563
  %v765 = vpack.c.bf16 %v574, %v571
  %v766 = vpack.c.bf16 %v582, %v579
  %v767 = vpack.c.bf16 %v590, %v587
  %v768 = vpack.c.bf16 %v598, %v595
  %v769 = vpack.c.bf16 %v606, %v603
  %v770 = vpack.c.bf16 %v614, %v611
  %v771 = vpack.c.bf16 %v622, %v619
  %v772 = vpack.c.bf16 %v630, %v627
  %v773 = vpack.c.bf16 %v638, %v635
  %v774 = vpack.c.bf16 %v646, %v643
  %v775 = vpack.c.bf16 %v654, %v651
  %v776 = vpack.c.bf16 %v662, %v659
  %v777 = vpack.c.bf16 %v670, %v667
  %v810 = vunpack.c.l.b16 %v746
  %v811 = vunpack.c.h.b16 %v746
  %v812 = vunpack.c.l.b16 %v747
  %v813 = vunpack.c.h.b16 %v747
  %v814 = vunpack.c.l.b16 %v748
  %v815 = vunpack.c.h.b16 %v748
  %v816 = vunpack.c.l.b16 %v749
  %v817 = vunpack.c.h.b16 %v749
  %v818 = vunpack.c.l.b16 %v750
  %v819 = vunpack.c.h.b16 %v750
  %v820 = vunpack.c.l.b16 %v751
  %v821 = vunpack.c.h.b16 %v751
  %v822 = vunpack.c.l.b16 %v752
  %v823 = vunpack.c.h.b16 %v752
  %v824 = vunpack.c.l.b16 %v753
  %v825 = vunpack.c.h.b16 %v753
  %v826 = vunpack.c.l.b16 %v754
  %v827 = vunpack.c.h.b16 %v754
  %v828 = vunpack.c.l.b16 %v755
  %v829 = vunpack.c.h.b16 %v755
  %v830 = vunpack.c.l.b16 %v756
  %v831 = vunpack.c.h.b16 %v756
  %v832 = vunpack.c.l.b16 %v757
  %v833 = vunpack.c.h.b16 %v757
  %v834 = vunpack.c.l.b16 %v758
  %v835 = vunpack.c.h.b16 %v758
  %v836 = vunpack.c.l.b16 %v759
  %v837 = vunpack.c.h.b16 %v759
  %v838 = vunpack.c.l.b16 %v760
  %v839 = vunpack.c.h.b16 %v760
  %v840 = vunpack.c.l.b16 %v761
  %v841 = vunpack.c.h.b16 %v761
  %v842 = vunpack.c.l.b16 %v762
  %v843 = vunpack.c.h.b16 %v762
  %v844 = vunpack.c.l.b16 %v763
  %v845 = vunpack.c.h.b16 %v763
  %v846 = vunpack.c.l.b16 %v764
  %v847 = vunpack.c.h.b16 %v764
  %v848 = vunpack.c.l.b16 %v765
  %v849 = vunpack.c.h.b16 %v765
  %v850 = vunpack.c.l.b16 %v766
  %v851 = vunpack.c.h.b16 %v766
  %v852 = vunpack.c.l.b16 %v767
  %v853 = vunpack.c.h.b16 %v767
  %v854 = vunpack.c.l.b16 %v768
  %v855 = vunpack.c.h.b16 %v768
  %v856 = vunpack.c.l.b16 %v769
  %v857 = vunpack.c.h.b16 %v769
  %v858 = vunpack.c.l.b16 %v770
  %v859 = vunpack.c.h.b16 %v770
  %v860 = vunpack.c.l.b16 %v771
  %v861 = vunpack.c.h.b16 %v771
  %v862 = vunpack.c.l.b16 %v772
  %v863 = vunpack.c.h.b16 %v772
  %v864 = vunpack.c.l.b16 %v773
  %v865 = vunpack.c.h.b16 %v773
  %v866 = vunpack.c.l.b16 %v774
  %v867 = vunpack.c.h.b16 %v774
  %v868 = vunpack.c.l.b16 %v775
  %v869 = vunpack.c.h.b16 %v775
  %v870 = vunpack.c.l.b16 %v776
  %v871 = vunpack.c.h.b16 %v776
  %v872 = vunpack.c.l.b16 %v777
  %v873 = vunpack.c.h.b16 %v777
  %v874 = vpack.c.b16 %v810, %v810
  %v875 = vpack.c.b16 %v811, %v811
  %v876 = vpack.c.b16 %v812, %v812
  %v877 = vpack.c.b16 %v813, %v813
  %v878 = vpack.c.b16 %v814, %v814
  %v879 = vpack.c.b16 %v815, %v815
  %v880 = vpack.c.b16 %v816, %v816
  %v881 = vpack.c.b16 %v817, %v817
  %v882 = vpack.c.b16 %v818, %v818
  %v883 = vpack.c.b16 %v819, %v819
  %v884 = vpack.c.b16 %v820, %v820
  %v885 = vpack.c.b16 %v821, %v821
  %v886 = vpack.c.b16 %v822, %v822
  %v887 = vpack.c.b16 %v823, %v823
  %v888 = vpack.c.b16 %v824, %v824
  %v889 = vpack.c.b16 %v825, %v825
  %v890 = vpack.c.b16 %v826, %v826
  %v891 = vpack.c.b16 %v827, %v827
  %v892 = vpack.c.b16 %v828, %v828
  %v893 = vpack.c.b16 %v829, %v829
  %v894 = vpack.c.b16 %v830, %v830
  %v895 = vpack.c.b16 %v831, %v831
  %v896 = vpack.c.b16 %v832, %v832
  %v897 = vpack.c.b16 %v833, %v833
  %v898 = vpack.c.b16 %v834, %v834
  %v899 = vpack.c.b16 %v835, %v835
  %v900 = vpack.c.b16 %v836, %v836
  %v901 = vpack.c.b16 %v837, %v837
  %v902 = vpack.c.b16 %v838, %v838
  %v903 = vpack.c.b16 %v839, %v839
  %v904 = vpack.c.b16 %v840, %v840
  %v905 = vpack.c.b16 %v841, %v841
  %v906 = vpack.c.b16 %v842, %v842
  %v907 = vpack.c.b16 %v843, %v843
  %v908 = vpack.c.b16 %v844, %v844
  %v909 = vpack.c.b16 %v845, %v845
  %v910 = vpack.c.b16 %v846, %v846
  %v911 = vpack.c.b16 %v847, %v847
  %v912 = vpack.c.b16 %v848, %v848
  %v913 = vpack.c.b16 %v849, %v849
  %v914 = vpack.c.b16 %v850, %v850
  %v915 = vpack.c.b16 %v851, %v851
  %v916 = vpack.c.b16 %v852, %v852
  %v917 = vpack.c.b16 %v853, %v853
  %v918 = vpack.c.b16 %v854, %v854
  %v919 = vpack.c.b16 %v855, %v855
  %v920 = vpack.c.b16 %v856, %v856
  %v921 = vpack.c.b16 %v857, %v857
  %v922 = vpack.c.b16 %v858, %v858
  %v923 = vpack.c.b16 %v859, %v859
  %v924 = vpack.c.b16 %v860, %v860
  %v925 = vpack.c.b16 %v861, %v861
  %v926 = vpack.c.b16 %v862, %v862
  %v927 = vpack.c.b16 %v863, %v863
  %v928 = vpack.c.b16 %v864, %v864
  %v929 = vpack.c.b16 %v865, %v865
  %v930 = vpack.c.b16 %v866, %v866
  %v931 = vpack.c.b16 %v867, %v867
  %v932 = vpack.c.b16 %v868, %v868
  %v933 = vpack.c.b16 %v869, %v869
  %v934 = vpack.c.b16 %v870, %v870
  %v935 = vpack.c.b16 %v871, %v871
  %v936 = vpack.c.b16 %v872, %v872
  %v937 = vpack.c.b16 %v873, %v873
  %s1002 = sshra.s32 %s745, 3
  %s1003 = sand.u32 %s745, 7
  %s1004 = smul.addr %s1002, 4
  %s1005 = scalar_lea.vmem %s4, %s1004
  %1006 = vst [vmem:[%s1005] sm:$0xf] %v874
  %1007 = vst [vmem:[%s1005 + $0x4] sm:$0xf] %v875
  %1008 = vst [vmem:[%s1005 + $0x8] sm:$0xf] %v876
  %1009 = vst [vmem:[%s1005 + $0xc] sm:$0xf] %v877
  %1010 = vst [vmem:[%s1005 + $0x10] sm:$0xf] %v878
  %1011 = vst [vmem:[%s1005 + $0x14] sm:$0xf] %v879
  %1012 = vst [vmem:[%s1005 + $0x18] sm:$0xf] %v880
  %1013 = vst [vmem:[%s1005 + $0x1c] sm:$0xf] %v881
  %1014 = vst [vmem:[%s1005 + $0x20] sm:$0xf] %v882
  %1015 = vst [vmem:[%s1005 + $0x24] sm:$0xf] %v883
  %1016 = vst [vmem:[%s1005 + $0x28] sm:$0xf] %v884
  %1017 = vst [vmem:[%s1005 + $0x2c] sm:$0xf] %v885
  %1018 = vst [vmem:[%s1005 + $0x30] sm:$0xf] %v886
  %1019 = vst [vmem:[%s1005 + $0x34] sm:$0xf] %v887
  %1020 = vst [vmem:[%s1005 + $0x38] sm:$0xf] %v888
  %1021 = vst [vmem:[%s1005 + $0x3c] sm:$0xf] %v889
  %1022 = vst [vmem:[%s1005 + $0x40] sm:$0xf] %v890
  %1023 = vst [vmem:[%s1005 + $0x44] sm:$0xf] %v891
  %1024 = vst [vmem:[%s1005 + $0x48] sm:$0xf] %v892
  %1025 = vst [vmem:[%s1005 + $0x4c] sm:$0xf] %v893
  %1026 = vst [vmem:[%s1005 + $0x50] sm:$0xf] %v894
  %1027 = vst [vmem:[%s1005 + $0x54] sm:$0xf] %v895
  %1028 = vst [vmem:[%s1005 + $0x58] sm:$0xf] %v896
  %1029 = vst [vmem:[%s1005 + $0x5c] sm:$0xf] %v897
  %1030 = vst [vmem:[%s1005 + $0x60] sm:$0xf] %v898
  %1031 = vst [vmem:[%s1005 + $0x64] sm:$0xf] %v899
  %1032 = vst [vmem:[%s1005 + $0x68] sm:$0xf] %v900
  %1033 = vst [vmem:[%s1005 + $0x6c] sm:$0xf] %v901
  %1034 = vst [vmem:[%s1005 + $0x70] sm:$0xf] %v902
  %1035 = vst [vmem:[%s1005 + $0x74] sm:$0xf] %v903
  %1036 = vst [vmem:[%s1005 + $0x78] sm:$0xf] %v904
  %1037 = vst [vmem:[%s1005 + $0x7c] sm:$0xf] %v905
  %1038 = vst [vmem:[%s1005 + $0x80] sm:$0xf] %v906
  %1039 = vst [vmem:[%s1005 + $0x84] sm:$0xf] %v907
  %1040 = vst [vmem:[%s1005 + $0x88] sm:$0xf] %v908
  %1041 = vst [vmem:[%s1005 + $0x8c] sm:$0xf] %v909
  %1042 = vst [vmem:[%s1005 + $0x90] sm:$0xf] %v910
  %1043 = vst [vmem:[%s1005 + $0x94] sm:$0xf] %v911
  %1044 = vst [vmem:[%s1005 + $0x98] sm:$0xf] %v912
  %1045 = vst [vmem:[%s1005 + $0x9c] sm:$0xf] %v913
  %1046 = vst [vmem:[%s1005 + $0xa0] sm:$0xf] %v914
  %1047 = vst [vmem:[%s1005 + $0xa4] sm:$0xf] %v915
  %1048 = vst [vmem:[%s1005 + $0xa8] sm:$0xf] %v916
  %1049 = vst [vmem:[%s1005 + $0xac] sm:$0xf] %v917
  %1050 = vst [vmem:[%s1005 + $0xb0] sm:$0xf] %v918
  %1051 = vst [vmem:[%s1005 + $0xb4] sm:$0xf] %v919
  %1052 = vst [vmem:[%s1005 + $0xb8] sm:$0xf] %v920
  %1053 = vst [vmem:[%s1005 + $0xbc] sm:$0xf] %v921
  %1054 = vst [vmem:[%s1005 + $0xc0] sm:$0xf] %v922
  %1055 = vst [vmem:[%s1005 + $0xc4] sm:$0xf] %v923
  %1056 = vst [vmem:[%s1005 + $0xc8] sm:$0xf] %v924
  %1057 = vst [vmem:[%s1005 + $0xcc] sm:$0xf] %v925
  %1058 = vst [vmem:[%s1005 + $0xd0] sm:$0xf] %v926
  %1059 = vst [vmem:[%s1005 + $0xd4] sm:$0xf] %v927
  %1060 = vst [vmem:[%s1005 + $0xd8] sm:$0xf] %v928
  %1061 = vst [vmem:[%s1005 + $0xdc] sm:$0xf] %v929
  %1062 = vst [vmem:[%s1005 + $0xe0] sm:$0xf] %v930
  %1063 = vst [vmem:[%s1005 + $0xe4] sm:$0xf] %v931
  %1064 = vst [vmem:[%s1005 + $0xe8] sm:$0xf] %v932
  %1065 = vst [vmem:[%s1005 + $0xec] sm:$0xf] %v933
  %1066 = vst [vmem:[%s1005 + $0xf0] sm:$0xf] %v934
  %1067 = vst [vmem:[%s1005 + $0xf4] sm:$0xf] %v935
  %1068 = vst [vmem:[%s1005 + $0xf8] sm:$0xf] %v936
  %1069 = vst [vmem:[%s1005 + $0xfc] sm:$0xf] %v937
  // Predicated region
  $region22: #{_lambda_.6} parent=0 // pred_check
    %p1070 = pneg %p18
  $region23: #{_lambda_.6} parent=0 // pred_check_branch
    %1072 = sbr.rel (%p1070) target = $region25
  $region24: #{_lambda_.6} parent=0 // pred_region
    %v1073 = vld [vmem:[#allocation2] sm:$0x1]
    %v1074 = vmul.f32 %v1073, 0.001953125
    %v1075 = vld [vmem:[%s4] sm:$0xf]
    %v1076 = vld [vmem:[%s4 + $0x4] sm:$0xf]
    %v1077 = vld [vmem:[%s4 + $0x8] sm:$0xf]
    %v1078 = vld [vmem:[%s4 + $0xc] sm:$0xf]
    %v1079 = vld [vmem:[%s4 + $0x10] sm:$0xf]
    %v1080 = vld [vmem:[%s4 + $0x14] sm:$0xf]
    %v1081 = vld [vmem:[%s4 + $0x18] sm:$0xf]
    %v1082 = vld [vmem:[%s4 + $0x1c] sm:$0xf]
    %v1083 = vld [vmem:[%s4 + $0x20] sm:$0xf]
    %v1084 = vld [vmem:[%s4 + $0x24] sm:$0xf]
    %v1085 = vld [vmem:[%s4 + $0x28] sm:$0xf]
    %v1086 = vld [vmem:[%s4 + $0x2c] sm:$0xf]
    %v1087 = vld [vmem:[%s4 + $0x30] sm:$0xf]
    %v1088 = vld [vmem:[%s4 + $0x34] sm:$0xf]
    %v1089 = vld [vmem:[%s4 + $0x38] sm:$0xf]
    %v1090 = vld [vmem:[%s4 + $0x3c] sm:$0xf]
    %v1091 = vld [vmem:[%s4 + $0x40] sm:$0xf]
    %v1092 = vld [vmem:[%s4 + $0x44] sm:$0xf]
    %v1093 = vld [vmem:[%s4 + $0x48] sm:$0xf]
    %v1094 = vld [vmem:[%s4 + $0x4c] sm:$0xf]
    %v1095 = vld [vmem:[%s4 + $0x50] sm:$0xf]
    %v1096 = vld [vmem:[%s4 + $0x54] sm:$0xf]
    %v1097 = vld [vmem:[%s4 + $0x58] sm:$0xf]
    %v1098 = vld [vmem:[%s4 + $0x5c] sm:$0xf]
    %v1099 = vld [vmem:[%s4 + $0x60] sm:$0xf]
    %v1100 = vld [vmem:[%s4 + $0x64] sm:$0xf]
    %v1101 = vld [vmem:[%s4 + $0x68] sm:$0xf]
    %v1102 = vld [vmem:[%s4 + $0x6c] sm:$0xf]
    %v1103 = vld [vmem:[%s4 + $0x70] sm:$0xf]
    %v1104 = vld [vmem:[%s4 + $0x74] sm:$0xf]
    %v1105 = vld [vmem:[%s4 + $0x78] sm:$0xf]
    %v1106 = vld [vmem:[%s4 + $0x7c] sm:$0xf]
    %v1107 = vld [vmem:[%s4 + $0x80] sm:$0xf]
    %v1108 = vld [vmem:[%s4 + $0x84] sm:$0xf]
    %v1109 = vld [vmem:[%s4 + $0x88] sm:$0xf]
    %v1110 = vld [vmem:[%s4 + $0x8c] sm:$0xf]
    %v1111 = vld [vmem:[%s4 + $0x90] sm:$0xf]
    %v1112 = vld [vmem:[%s4 + $0x94] sm:$0xf]
    %v1113 = vld [vmem:[%s4 + $0x98] sm:$0xf]
    %v1114 = vld [vmem:[%s4 + $0x9c] sm:$0xf]
    %v1115 = vld [vmem:[%s4 + $0xa0] sm:$0xf]
    %v1116 = vld [vmem:[%s4 + $0xa4] sm:$0xf]
    %v1117 = vld [vmem:[%s4 + $0xa8] sm:$0xf]
    %v1118 = vld [vmem:[%s4 + $0xac] sm:$0xf]
    %v1119 = vld [vmem:[%s4 + $0xb0] sm:$0xf]
    %v1120 = vld [vmem:[%s4 + $0xb4] sm:$0xf]
    %v1121 = vld [vmem:[%s4 + $0xb8] sm:$0xf]
    %v1122 = vld [vmem:[%s4 + $0xbc] sm:$0xf]
    %v1123 = vld [vmem:[%s4 + $0xc0] sm:$0xf]
    %v1124 = vld [vmem:[%s4 + $0xc4] sm:$0xf]
    %v1125 = vld [vmem:[%s4 + $0xc8] sm:$0xf]
    %v1126 = vld [vmem:[%s4 + $0xcc] sm:$0xf]
    %v1127 = vld [vmem:[%s4 + $0xd0] sm:$0xf]
    %v1128 = vld [vmem:[%s4 + $0xd4] sm:$0xf]
    %v1129 = vld [vmem:[%s4 + $0xd8] sm:$0xf]
    %v1130 = vld [vmem:[%s4 + $0xdc] sm:$0xf]
    %v1131 = vld [vmem:[%s4 + $0xe0] sm:$0xf]
    %v1132 = vld [vmem:[%s4 + $0xe4] sm:$0xf]
    %v1133 = vld [vmem:[%s4 + $0xe8] sm:$0xf]
    %v1134 = vld [vmem:[%s4 + $0xec] sm:$0xf]
    %v1135 = vld [vmem:[%s4 + $0xf0] sm:$0xf]
    %v1136 = vld [vmem:[%s4 + $0xf4] sm:$0xf]
    %v1137 = vld [vmem:[%s4 + $0xf8] sm:$0xf]
    %v1138 = vld [vmem:[%s4 + $0xfc] sm:$0xf]
    %v1139 = vunpack.c.l.bf16 %v1075
    %v1140 = vunpack.c.l.bf16 %v1076
    %v1141 = vunpack.c.l.bf16 %v1077
    %v1142 = vunpack.c.l.bf16 %v1078
    %v1143 = vunpack.c.l.bf16 %v1079
    %v1144 = vunpack.c.l.bf16 %v1080
    %v1145 = vunpack.c.l.bf16 %v1081
    %v1146 = vunpack.c.l.bf16 %v1082
    %v1147 = vunpack.c.l.bf16 %v1083
    %v1148 = vunpack.c.l.bf16 %v1084
    %v1149 = vunpack.c.l.bf16 %v1085
    %v1150 = vunpack.c.l.bf16 %v1086
    %v1151 = vunpack.c.l.bf16 %v1087
    %v1152 = vunpack.c.l.bf16 %v1088
    %v1153 = vunpack.c.l.bf16 %v1089
    %v1154 = vunpack.c.l.bf16 %v1090
    %v1155 = vunpack.c.l.bf16 %v1091
    %v1156 = vunpack.c.l.bf16 %v1092
    %v1157 = vunpack.c.l.bf16 %v1093
    %v1158 = vunpack.c.l.bf16 %v1094
    %v1159 = vunpack.c.l.bf16 %v1095
    %v1160 = vunpack.c.l.bf16 %v1096
    %v1161 = vunpack.c.l.bf16 %v1097
    %v1162 = vunpack.c.l.bf16 %v1098
    %v1163 = vunpack.c.l.bf16 %v1099
    %v1164 = vunpack.c.l.bf16 %v1100
    %v1165 = vunpack.c.l.bf16 %v1101
    %v1166 = vunpack.c.l.bf16 %v1102
    %v1167 = vunpack.c.l.bf16 %v1103
    %v1168 = vunpack.c.l.bf16 %v1104
    %v1169 = vunpack.c.l.bf16 %v1105
    %v1170 = vunpack.c.l.bf16 %v1106
    %v1171 = vunpack.c.l.bf16 %v1107
    %v1172 = vunpack.c.l.bf16 %v1108
    %v1173 = vunpack.c.l.bf16 %v1109
    %v1174 = vunpack.c.l.bf16 %v1110
    %v1175 = vunpack.c.l.bf16 %v1111
    %v1176 = vunpack.c.l.bf16 %v1112
    %v1177 = vunpack.c.l.bf16 %v1113
    %v1178 = vunpack.c.l.bf16 %v1114
    %v1179 = vunpack.c.l.bf16 %v1115
    %v1180 = vunpack.c.l.bf16 %v1116
    %v1181 = vunpack.c.l.bf16 %v1117
    %v1182 = vunpack.c.l.bf16 %v1118
    %v1183 = vunpack.c.l.bf16 %v1119
    %v1184 = vunpack.c.l.bf16 %v1120
    %v1185 = vunpack.c.l.bf16 %v1121
    %v1186 = vunpack.c.l.bf16 %v1122
    %v1187 = vunpack.c.l.bf16 %v1123
    %v1188 = vunpack.c.l.bf16 %v1124
    %v1189 = vunpack.c.l.bf16 %v1125
    %v1190 = vunpack.c.l.bf16 %v1126
    %v1191 = vunpack.c.l.bf16 %v1127
    %v1192 = vunpack.c.l.bf16 %v1128
    %v1193 = vunpack.c.l.bf16 %v1129
    %v1194 = vunpack.c.l.bf16 %v1130
    %v1195 = vunpack.c.l.bf16 %v1131
    %v1196 = vunpack.c.l.bf16 %v1132
    %v1197 = vunpack.c.l.bf16 %v1133
    %v1198 = vunpack.c.l.bf16 %v1134
    %v1199 = vunpack.c.l.bf16 %v1135
    %v1200 = vunpack.c.l.bf16 %v1136
    %v1201 = vunpack.c.l.bf16 %v1137
    %v1202 = vunpack.c.l.bf16 %v1138
    %v1203 = vlaneseq
    %v1204 = vshrl.u32 %v1203, 7
    %v1205 = vadd.s32 %v1204, 8
    %v1206 = vadd.s32 %v1204, 16
    %v1207 = vadd.s32 %v1204, 24
    %v1208 = vadd.s32 %v1204, 32
    %v1209 = vadd.s32 %v1204, 40
    %v1210 = vadd.s32 %v1204, 48
    %v1211 = vadd.s32 %v1204, 56
    %v1212 = vadd.s32 %v1204, 64
    %v1213 = vadd.s32 %v1204, 72
    %v1214 = vadd.s32 %v1204, 80
    %v1215 = vadd.s32 %v1204, 88
    %v1216 = vadd.s32 %v1204, 96
    %v1217 = vadd.s32 %v1204, 104
    %v1218 = vadd.s32 %v1204, 112
    %v1219 = vadd.s32 %v1204, 120
    %v1220 = vadd.s32 %v1204, 128
    %v1221 = vadd.s32 %v1204, 136
    %v1222 = vadd.s32 %v1204, 144
    %v1223 = vadd.s32 %v1204, 152
    %v1224 = vadd.s32 %v1204, 160
    %v1225 = vadd.s32 %v1204, 168
    %v1226 = vadd.s32 %v1204, 176
    %v1227 = vadd.s32 %v1204, 184
    %v1228 = vadd.s32 %v1204, 192
    %v1229 = vadd.s32 %v1204, 200
    %v1230 = vadd.s32 %v1204, 208
    %v1231 = vadd.s32 %v1204, 216
    %v1232 = vadd.s32 %v1204, 224
    %v1233 = vadd.s32 %v1204, 232
    %v1234 = vadd.s32 %v1204, 240
    %v1235 = vadd.s32 %v1204, 248
    %v1236 = vadd.s32 %v1204, 256
    %v1237 = vadd.s32 %v1204, 264
    %v1238 = vadd.s32 %v1204, 272
    %v1239 = vadd.s32 %v1204, 280
    %v1240 = vadd.s32 %v1204, 288
    %v1241 = vadd.s32 %v1204, 296
    %v1242 = vadd.s32 %v1204, 304
    %v1243 = vadd.s32 %v1204, 312
    %v1244 = vadd.s32 %v1204, 320
    %v1245 = vadd.s32 %v1204, 328
    %v1246 = vadd.s32 %v1204, 336
    %v1247 = vadd.s32 %v1204, 344
    %v1248 = vadd.s32 %v1204, 352
    %v1249 = vadd.s32 %v1204, 360
    %v1250 = vadd.s32 %v1204, 368
    %v1251 = vadd.s32 %v1204, 376
    %v1252 = vadd.s32 %v1204, 384
    %v1253 = vadd.s32 %v1204, 392
    %v1254 = vadd.s32 %v1204, 400
    %v1255 = vadd.s32 %v1204, 408
    %v1256 = vadd.s32 %v1204, 416
    %v1257 = vadd.s32 %v1204, 424
    %v1258 = vadd.s32 %v1204, 432
    %v1259 = vadd.s32 %v1204, 440
    %v1260 = vadd.s32 %v1204, 448
    %v1261 = vadd.s32 %v1204, 456
    %v1262 = vadd.s32 %v1204, 464
    %v1263 = vadd.s32 %v1204, 472
    %v1264 = vadd.s32 %v1204, 480
    %v1265 = vadd.s32 %v1204, 488
    %v1266 = vadd.s32 %v1204, 496
    %v1267 = vadd.s32 %v1204, 504
    %vm1268 = vcmp.lt.s32.totalorder %v1204, 512
    %vm1269 = vcmp.lt.s32.totalorder %v1205, 512
    %vm1270 = vcmp.lt.s32.totalorder %v1206, 512
    %vm1271 = vcmp.lt.s32.totalorder %v1207, 512
    %vm1272 = vcmp.lt.s32.totalorder %v1208, 512
    %vm1273 = vcmp.lt.s32.totalorder %v1209, 512
    %vm1274 = vcmp.lt.s32.totalorder %v1210, 512
    %vm1275 = vcmp.lt.s32.totalorder %v1211, 512
    %vm1276 = vcmp.lt.s32.totalorder %v1212, 512
    %vm1277 = vcmp.lt.s32.totalorder %v1213, 512
    %vm1278 = vcmp.lt.s32.totalorder %v1214, 512
    %vm1279 = vcmp.lt.s32.totalorder %v1215, 512
    %vm1280 = vcmp.lt.s32.totalorder %v1216, 512
    %vm1281 = vcmp.lt.s32.totalorder %v1217, 512
    %vm1282 = vcmp.lt.s32.totalorder %v1218, 512
    %vm1283 = vcmp.lt.s32.totalorder %v1219, 512
    %vm1284 = vcmp.lt.s32.totalorder %v1220, 512
    %vm1285 = vcmp.lt.s32.totalorder %v1221, 512
    %vm1286 = vcmp.lt.s32.totalorder %v1222, 512
    %vm1287 = vcmp.lt.s32.totalorder %v1223, 512
    %vm1288 = vcmp.lt.s32.totalorder %v1224, 512
    %vm1289 = vcmp.lt.s32.totalorder %v1225, 512
    %vm1290 = vcmp.lt.s32.totalorder %v1226, 512
    %vm1291 = vcmp.lt.s32.totalorder %v1227, 512
    %vm1292 = vcmp.lt.s32.totalorder %v1228, 512
    %vm1293 = vcmp.lt.s32.totalorder %v1229, 512
    %vm1294 = vcmp.lt.s32.totalorder %v1230, 512
    %vm1295 = vcmp.lt.s32.totalorder %v1231, 512
    %vm1296 = vcmp.lt.s32.totalorder %v1232, 512
    %vm1297 = vcmp.lt.s32.totalorder %v1233, 512
    %vm1298 = vcmp.lt.s32.totalorder %v1234, 512
    %vm1299 = vcmp.lt.s32.totalorder %v1235, 512
    %vm1300 = vcmp.lt.s32.totalorder %v1236, 512
    %vm1301 = vcmp.lt.s32.totalorder %v1237, 512
    %vm1302 = vcmp.lt.s32.totalorder %v1238, 512
    %vm1303 = vcmp.lt.s32.totalorder %v1239, 512
    %vm1304 = vcmp.lt.s32.totalorder %v1240, 512
    %vm1305 = vcmp.lt.s32.totalorder %v1241, 512
    %vm1306 = vcmp.lt.s32.totalorder %v1242, 512
    %vm1307 = vcmp.lt.s32.totalorder %v1243, 512
    %vm1308 = vcmp.lt.s32.totalorder %v1244, 512
    %vm1309 = vcmp.lt.s32.totalorder %v1245, 512
    %vm1310 = vcmp.lt.s32.totalorder %v1246, 512
    %vm1311 = vcmp.lt.s32.totalorder %v1247, 512
    %vm1312 = vcmp.lt.s32.totalorder %v1248, 512
    %vm1313 = vcmp.lt.s32.totalorder %v1249, 512
    %vm1314 = vcmp.lt.s32.totalorder %v1250, 512
    %vm1315 = vcmp.lt.s32.totalorder %v1251, 512
    %vm1316 = vcmp.lt.s32.totalorder %v1252, 512
    %vm1317 = vcmp.lt.s32.totalorder %v1253, 512
    %vm1318 = vcmp.lt.s32.totalorder %v1254, 512
    %vm1319 = vcmp.lt.s32.totalorder %v1255, 512
    %vm1320 = vcmp.lt.s32.totalorder %v1256, 512
    %vm1321 = vcmp.lt.s32.totalorder %v1257, 512
    %vm1322 = vcmp.lt.s32.totalorder %v1258, 512
    %vm1323 = vcmp.lt.s32.totalorder %v1259, 512
    %vm1324 = vcmp.lt.s32.totalorder %v1260, 512
    %vm1325 = vcmp.lt.s32.totalorder %v1261, 512
    %vm1326 = vcmp.lt.s32.totalorder %v1262, 512
    %vm1327 = vcmp.lt.s32.totalorder %v1263, 512
    %vm1328 = vcmp.lt.s32.totalorder %v1264, 512
    %vm1329 = vcmp.lt.s32.totalorder %v1265, 512
    %vm1330 = vcmp.lt.s32.totalorder %v1266, 512
    %vm1331 = vcmp.lt.s32.totalorder %v1267, 512
    %v1333 = vlaneseq
    %v1334 = vshrl.u32 %v1333, 7
    %v1335 = vsub.s32 0, %v1334
    %v1336 = vrot.slane %v1074, %v1335
    %v1338 = vsub.f32 %v1139, %v1336
    %v1339 = vsub.f32 %v1140, %v1336
    %v1340 = vsub.f32 %v1141, %v1336
    %v1341 = vsub.f32 %v1142, %v1336
    %v1342 = vsub.f32 %v1143, %v1336
    %v1343 = vsub.f32 %v1144, %v1336
    %v1344 = vsub.f32 %v1145, %v1336
    %v1345 = vsub.f32 %v1146, %v1336
    %v1346 = vsub.f32 %v1147, %v1336
    %v1347 = vsub.f32 %v1148, %v1336
    %v1348 = vsub.f32 %v1149, %v1336
    %v1349 = vsub.f32 %v1150, %v1336
    %v1350 = vsub.f32 %v1151, %v1336
    %v1351 = vsub.f32 %v1152, %v1336
    %v1352 = vsub.f32 %v1153, %v1336
    %v1353 = vsub.f32 %v1154, %v1336
    %v1354 = vsub.f32 %v1155, %v1336
    %v1355 = vsub.f32 %v1156, %v1336
    %v1356 = vsub.f32 %v1157, %v1336
    %v1357 = vsub.f32 %v1158, %v1336
    %v1358 = vsub.f32 %v1159, %v1336
    %v1359 = vsub.f32 %v1160, %v1336
    %v1360 = vsub.f32 %v1161, %v1336
    %v1361 = vsub.f32 %v1162, %v1336
    %v1362 = vsub.f32 %v1163, %v1336
    %v1363 = vsub.f32 %v1164, %v1336
    %v1364 = vsub.f32 %v1165, %v1336
    %v1365 = vsub.f32 %v1166, %v1336
    %v1366 = vsub.f32 %v1167, %v1336
    %v1367 = vsub.f32 %v1168, %v1336
    %v1368 = vsub.f32 %v1169, %v1336
    %v1369 = vsub.f32 %v1170, %v1336
    %v1370 = vsub.f32 %v1171, %v1336
    %v1371 = vsub.f32 %v1172, %v1336
    %v1372 = vsub.f32 %v1173, %v1336
    %v1373 = vsub.f32 %v1174, %v1336
    %v1374 = vsub.f32 %v1175, %v1336
    %v1375 = vsub.f32 %v1176, %v1336
    %v1376 = vsub.f32 %v1177, %v1336
    %v1377 = vsub.f32 %v1178, %v1336
    %v1378 = vsub.f32 %v1179, %v1336
    %v1379 = vsub.f32 %v1180, %v1336
    %v1380 = vsub.f32 %v1181, %v1336
    %v1381 = vsub.f32 %v1182, %v1336
    %v1382 = vsub.f32 %v1183, %v1336
    %v1383 = vsub.f32 %v1184, %v1336
    %v1384 = vsub.f32 %v1185, %v1336
    %v1385 = vsub.f32 %v1186, %v1336
    %v1386 = vsub.f32 %v1187, %v1336
    %v1387 = vsub.f32 %v1188, %v1336
    %v1388 = vsub.f32 %v1189, %v1336
    %v1389 = vsub.f32 %v1190, %v1336
    %v1390 = vsub.f32 %v1191, %v1336
    %v1391 = vsub.f32 %v1192, %v1336
    %v1392 = vsub.f32 %v1193, %v1336
    %v1393 = vsub.f32 %v1194, %v1336
    %v1394 = vsub.f32 %v1195, %v1336
    %v1395 = vsub.f32 %v1196, %v1336
    %v1396 = vsub.f32 %v1197, %v1336
    %v1397 = vsub.f32 %v1198, %v1336
    %v1398 = vsub.f32 %v1199, %v1336
    %v1399 = vsub.f32 %v1200, %v1336
    %v1400 = vsub.f32 %v1201, %v1336
    %v1401 = vsub.f32 %v1202, %v1336
    %v1402 = vsel %vm1268, %v1338, 0.0
    %v1403 = vsel %vm1269, %v1339, 0.0
    %v1404 = vsel %vm1270, %v1340, 0.0
    %v1405 = vsel %vm1271, %v1341, 0.0
    %v1406 = vsel %vm1272, %v1342, 0.0
    %v1407 = vsel %vm1273, %v1343, 0.0
    %v1408 = vsel %vm1274, %v1344, 0.0
    %v1409 = vsel %vm1275, %v1345, 0.0
    %v1410 = vsel %vm1276, %v1346, 0.0
    %v1411 = vsel %vm1277, %v1347, 0.0
    %v1412 = vsel %vm1278, %v1348, 0.0
    %v1413 = vsel %vm1279, %v1349, 0.0
    %v1414 = vsel %vm1280, %v1350, 0.0
    %v1415 = vsel %vm1281, %v1351, 0.0
    %v1416 = vsel %vm1282, %v1352, 0.0
    %v1417 = vsel %vm1283, %v1353, 0.0
    %v1418 = vsel %vm1284, %v1354, 0.0
    %v1419 = vsel %vm1285, %v1355, 0.0
    %v1420 = vsel %vm1286, %v1356, 0.0
    %v1421 = vsel %vm1287, %v1357, 0.0
    %v1422 = vsel %vm1288, %v1358, 0.0
    %v1423 = vsel %vm1289, %v1359, 0.0
    %v1424 = vsel %vm1290, %v1360, 0.0
    %v1425 = vsel %vm1291, %v1361, 0.0
    %v1426 = vsel %vm1292, %v1362, 0.0
    %v1427 = vsel %vm1293, %v1363, 0.0
    %v1428 = vsel %vm1294, %v1364, 0.0
    %v1429 = vsel %vm1295, %v1365, 0.0
    %v1430 = vsel %vm1296, %v1366, 0.0
    %v1431 = vsel %vm1297, %v1367, 0.0
    %v1432 = vsel %vm1298, %v1368, 0.0
    %v1433 = vsel %vm1299, %v1369, 0.0
    %v1434 = vsel %vm1300, %v1370, 0.0
    %v1435 = vsel %vm1301, %v1371, 0.0
    %v1436 = vsel %vm1302, %v1372, 0.0
    %v1437 = vsel %vm1303, %v1373, 0.0
    %v1438 = vsel %vm1304, %v1374, 0.0
    %v1439 = vsel %vm1305, %v1375, 0.0
    %v1440 = vsel %vm1306, %v1376, 0.0
    %v1441 = vsel %vm1307, %v1377, 0.0
    %v1442 = vsel %vm1308, %v1378, 0.0
    %v1443 = vsel %vm1309, %v1379, 0.0
    %v1444 = vsel %vm1310, %v1380, 0.0
    %v1445 = vsel %vm1311, %v1381, 0.0
    %v1446 = vsel %vm1312, %v1382, 0.0
    %v1447 = vsel %vm1313, %v1383, 0.0
    %v1448 = vsel %vm1314, %v1384, 0.0
    %v1449 = vsel %vm1315, %v1385, 0.0
    %v1450 = vsel %vm1316, %v1386, 0.0
    %v1451 = vsel %vm1317, %v1387, 0.0
    %v1452 = vsel %vm1318, %v1388, 0.0
    %v1453 = vsel %vm1319, %v1389, 0.0
    %v1454 = vsel %vm1320, %v1390, 0.0
    %v1455 = vsel %vm1321, %v1391, 0.0
    %v1456 = vsel %vm1322, %v1392, 0.0
    %v1457 = vsel %vm1323, %v1393, 0.0
    %v1458 = vsel %vm1324, %v1394, 0.0
    %v1459 = vsel %vm1325, %v1395, 0.0
    %v1460 = vsel %vm1326, %v1396, 0.0
    %v1461 = vsel %vm1327, %v1397, 0.0
    %v1462 = vsel %vm1328, %v1398, 0.0
    %v1463 = vsel %vm1329, %v1399, 0.0
    %v1464 = vsel %vm1330, %v1400, 0.0
    %v1465 = vsel %vm1331, %v1401, 0.0
    %v1466 = vmul.f32 %v1402, %v1402
    %v1467 = vmul.f32 %v1403, %v1403
    %v1468 = vmul.f32 %v1404, %v1404
    %v1469 = vmul.f32 %v1405, %v1405
    %v1470 = vmul.f32 %v1406, %v1406
    %v1471 = vmul.f32 %v1407, %v1407
    %v1472 = vmul.f32 %v1408, %v1408
    %v1473 = vmul.f32 %v1409, %v1409
    %v1474 = vmul.f32 %v1410, %v1410
    %v1475 = vmul.f32 %v1411, %v1411
    %v1476 = vmul.f32 %v1412, %v1412
    %v1477 = vmul.f32 %v1413, %v1413
    %v1478 = vmul.f32 %v1414, %v1414
    %v1479 = vmul.f32 %v1415, %v1415
    %v1480 = vmul.f32 %v1416, %v1416
    %v1481 = vmul.f32 %v1417, %v1417
    %v1482 = vmul.f32 %v1418, %v1418
    %v1483 = vmul.f32 %v1419, %v1419
    %v1484 = vmul.f32 %v1420, %v1420
    %v1485 = vmul.f32 %v1421, %v1421
    %v1486 = vmul.f32 %v1422, %v1422
    %v1487 = vmul.f32 %v1423, %v1423
    %v1488 = vmul.f32 %v1424, %v1424
    %v1489 = vmul.f32 %v1425, %v1425
    %v1490 = vmul.f32 %v1426, %v1426
    %v1491 = vmul.f32 %v1427, %v1427
    %v1492 = vmul.f32 %v1428, %v1428
    %v1493 = vmul.f32 %v1429, %v1429
    %v1494 = vmul.f32 %v1430, %v1430
    %v1495 = vmul.f32 %v1431, %v1431
    %v1496 = vmul.f32 %v1432, %v1432
    %v1497 = vmul.f32 %v1433, %v1433
    %v1498 = vmul.f32 %v1434, %v1434
    %v1499 = vmul.f32 %v1435, %v1435
    %v1500 = vmul.f32 %v1436, %v1436
    %v1501 = vmul.f32 %v1437, %v1437
    %v1502 = vmul.f32 %v1438, %v1438
    %v1503 = vmul.f32 %v1439, %v1439
    %v1504 = vmul.f32 %v1440, %v1440
    %v1505 = vmul.f32 %v1441, %v1441
    %v1506 = vmul.f32 %v1442, %v1442
    %v1507 = vmul.f32 %v1443, %v1443
    %v1508 = vmul.f32 %v1444, %v1444
    %v1509 = vmul.f32 %v1445, %v1445
    %v1510 = vmul.f32 %v1446, %v1446
    %v1511 = vmul.f32 %v1447, %v1447
    %v1512 = vmul.f32 %v1448, %v1448
    %v1513 = vmul.f32 %v1449, %v1449
    %v1514 = vmul.f32 %v1450, %v1450
    %v1515 = vmul.f32 %v1451, %v1451
    %v1516 = vmul.f32 %v1452, %v1452
    %v1517 = vmul.f32 %v1453, %v1453
    %v1518 = vmul.f32 %v1454, %v1454
    %v1519 = vmul.f32 %v1455, %v1455
    %v1520 = vmul.f32 %v1456, %v1456
    %v1521 = vmul.f32 %v1457, %v1457
    %v1522 = vmul.f32 %v1458, %v1458
    %v1523 = vmul.f32 %v1459, %v1459
    %v1524 = vmul.f32 %v1460, %v1460
    %v1525 = vmul.f32 %v1461, %v1461
    %v1526 = vmul.f32 %v1462, %v1462
    %v1527 = vmul.f32 %v1463, %v1463
    %v1528 = vmul.f32 %v1464, %v1464
    %v1529 = vmul.f32 %v1465, %v1465
    %v1530 = vadd.f32 %v1466, %v1467
    %v1531 = vadd.f32 %v1530, %v1468
    %v1532 = vadd.f32 %v1531, %v1469
    %v1533 = vadd.f32 %v1532, %v1470
    %v1534 = vadd.f32 %v1533, %v1471
    %v1535 = vadd.f32 %v1534, %v1472
    %v1536 = vadd.f32 %v1535, %v1473
    %v1537 = vadd.f32 %v1536, %v1474
    %v1538 = vadd.f32 %v1537, %v1475
    %v1539 = vadd.f32 %v1538, %v1476
    %v1540 = vadd.f32 %v1539, %v1477
    %v1541 = vadd.f32 %v1540, %v1478
    %v1542 = vadd.f32 %v1541, %v1479
    %v1543 = vadd.f32 %v1542, %v1480
    %v1544 = vadd.f32 %v1543, %v1481
    %v1545 = vadd.f32 %v1544, %v1482
    %v1546 = vadd.f32 %v1545, %v1483
    %v1547 = vadd.f32 %v1546, %v1484
    %v1548 = vadd.f32 %v1547, %v1485
    %v1549 = vadd.f32 %v1548, %v1486
    %v1550 = vadd.f32 %v1549, %v1487
    %v1551 = vadd.f32 %v1550, %v1488
    %v1552 = vadd.f32 %v1551, %v1489
    %v1553 = vadd.f32 %v1552, %v1490
    %v1554 = vadd.f32 %v1553, %v1491
    %v1555 = vadd.f32 %v1554, %v1492
    %v1556 = vadd.f32 %v1555, %v1493
    %v1557 = vadd.f32 %v1556, %v1494
    %v1558 = vadd.f32 %v1557, %v1495
    %v1559 = vadd.f32 %v1558, %v1496
    %v1560 = vadd.f32 %v1559, %v1497
    %v1561 = vadd.f32 %v1560, %v1498
    %v1562 = vadd.f32 %v1561, %v1499
    %v1563 = vadd.f32 %v1562, %v1500
    %v1564 = vadd.f32 %v1563, %v1501
    %v1565 = vadd.f32 %v1564, %v1502
    %v1566 = vadd.f32 %v1565, %v1503
    %v1567 = vadd.f32 %v1566, %v1504
    %v1568 = vadd.f32 %v1567, %v1505
    %v1569 = vadd.f32 %v1568, %v1506
    %v1570 = vadd.f32 %v1569, %v1507
    %v1571 = vadd.f32 %v1570, %v1508
    %v1572 = vadd.f32 %v1571, %v1509
    %v1573 = vadd.f32 %v1572, %v1510
    %v1574 = vadd.f32 %v1573, %v1511
    %v1575 = vadd.f32 %v1574, %v1512
    %v1576 = vadd.f32 %v1575, %v1513
    %v1577 = vadd.f32 %v1576, %v1514
    %v1578 = vadd.f32 %v1577, %v1515
    %v1579 = vadd.f32 %v1578, %v1516
    %v1580 = vadd.f32 %v1579, %v1517
    %v1581 = vadd.f32 %v1580, %v1518
    %v1582 = vadd.f32 %v1581, %v1519
    %v1583 = vadd.f32 %v1582, %v1520
    %v1584 = vadd.f32 %v1583, %v1521
    %v1585 = vadd.f32 %v1584, %v1522
    %v1586 = vadd.f32 %v1585, %v1523
    %v1587 = vadd.f32 %v1586, %v1524
    %v1588 = vadd.f32 %v1587, %v1525
    %v1589 = vadd.f32 %v1588, %v1526
    %v1590 = vadd.f32 %v1589, %v1527
    %v1591 = vadd.f32 %v1590, %v1528
    %v1592 = vadd.f32 %v1591, %v1529
    %v1593 = vrot.slane %v1592, 4
    %v1594 = vadd.f32 %v1592, %v1593
    %v1595 = vrot.slane %v1594, 2
    %v1596 = vadd.f32 %v1594, %v1595
    %v1597 = vrot.slane %v1596, 1
    %v1598 = vadd.f32 %v1596, %v1597
    %v1599 = vmul.f32 %v1598, 0.001953125
    %v1600 = vld [vmem:[%s2] sm:$0x1]
    %v1601 = vadd.f32 %v1599, 1e-05
    %v1602 = vrsqrt.pop %v1601
    %v1603 = vmul.f32 %v1600, %v1602
    %v1604 = vld [vmem:[%s3] sm:$0x1]
    %v1605 = vmul.f32 %v1074, %v1603
    %v1606 = vsub.f32 %v1604, %v1605
    %v1608 = vlaneseq
    %v1609 = vshrl.u32 %v1608, 7
    %v1610 = vsub.s32 0, %v1609
    %v1611 = vrot.slane %v1603, %v1610
    %v1613 = vmul.f32 %v1139, %v1611
    %v1614 = vmul.f32 %v1140, %v1611
    %v1615 = vmul.f32 %v1141, %v1611
    %v1616 = vmul.f32 %v1142, %v1611
    %v1617 = vmul.f32 %v1143, %v1611
    %v1618 = vmul.f32 %v1144, %v1611
    %v1619 = vmul.f32 %v1145, %v1611
    %v1620 = vmul.f32 %v1146, %v1611
    %v1621 = vmul.f32 %v1147, %v1611
    %v1622 = vmul.f32 %v1148, %v1611
    %v1623 = vmul.f32 %v1149, %v1611
    %v1624 = vmul.f32 %v1150, %v1611
    %v1625 = vmul.f32 %v1151, %v1611
    %v1626 = vmul.f32 %v1152, %v1611
    %v1627 = vmul.f32 %v1153, %v1611
    %v1628 = vmul.f32 %v1154, %v1611
    %v1629 = vmul.f32 %v1155, %v1611
    %v1630 = vmul.f32 %v1156, %v1611
    %v1631 = vmul.f32 %v1157, %v1611
    %v1632 = vmul.f32 %v1158, %v1611
    %v1633 = vmul.f32 %v1159, %v1611
    %v1634 = vmul.f32 %v1160, %v1611
    %v1635 = vmul.f32 %v1161, %v1611
    %v1636 = vmul.f32 %v1162, %v1611
    %v1637 = vmul.f32 %v1163, %v1611
    %v1638 = vmul.f32 %v1164, %v1611
    %v1639 = vmul.f32 %v1165, %v1611
    %v1640 = vmul.f32 %v1166, %v1611
    %v1641 = vmul.f32 %v1167, %v1611
    %v1642 = vmul.f32 %v1168, %v1611
    %v1643 = vmul.f32 %v1169, %v1611
    %v1644 = vmul.f32 %v1170, %v1611
    %v1645 = vmul.f32 %v1171, %v1611
    %v1646 = vmul.f32 %v1172, %v1611
    %v1647 = vmul.f32 %v1173, %v1611
    %v1648 = vmul.f32 %v1174, %v1611
    %v1649 = vmul.f32 %v1175, %v1611
    %v1650 = vmul.f32 %v1176, %v1611
    %v1651 = vmul.f32 %v1177, %v1611
    %v1652 = vmul.f32 %v1178, %v1611
    %v1653 = vmul.f32 %v1179, %v1611
    %v1654 = vmul.f32 %v1180, %v1611
    %v1655 = vmul.f32 %v1181, %v1611
    %v1656 = vmul.f32 %v1182, %v1611
    %v1657 = vmul.f32 %v1183, %v1611
    %v1658 = vmul.f32 %v1184, %v1611
    %v1659 = vmul.f32 %v1185, %v1611
    %v1660 = vmul.f32 %v1186, %v1611
    %v1661 = vmul.f32 %v1187, %v1611
    %v1662 = vmul.f32 %v1188, %v1611
    %v1663 = vmul.f32 %v1189, %v1611
    %v1664 = vmul.f32 %v1190, %v1611
    %v1665 = vmul.f32 %v1191, %v1611
    %v1666 = vmul.f32 %v1192, %v1611
    %v1667 = vmul.f32 %v1193, %v1611
    %v1668 = vmul.f32 %v1194, %v1611
    %v1669 = vmul.f32 %v1195, %v1611
    %v1670 = vmul.f32 %v1196, %v1611
    %v1671 = vmul.f32 %v1197, %v1611
    %v1672 = vmul.f32 %v1198, %v1611
    %v1673 = vmul.f32 %v1199, %v1611
    %v1674 = vmul.f32 %v1200, %v1611
    %v1675 = vmul.f32 %v1201, %v1611
    %v1676 = vmul.f32 %v1202, %v1611
    %v1678 = vlaneseq
    %v1679 = vshrl.u32 %v1678, 7
    %v1680 = vsub.s32 0, %v1679
    %v1681 = vrot.slane %v1606, %v1680
    %v1683 = vadd.f32 %v1613, %v1681
    %v1684 = vadd.f32 %v1614, %v1681
    %v1685 = vadd.f32 %v1615, %v1681
    %v1686 = vadd.f32 %v1616, %v1681
    %v1687 = vadd.f32 %v1617, %v1681
    %v1688 = vadd.f32 %v1618, %v1681
    %v1689 = vadd.f32 %v1619, %v1681
    %v1690 = vadd.f32 %v1620, %v1681
    %v1691 = vadd.f32 %v1621, %v1681
    %v1692 = vadd.f32 %v1622, %v1681
    %v1693 = vadd.f32 %v1623, %v1681
    %v1694 = vadd.f32 %v1624, %v1681
    %v1695 = vadd.f32 %v1625, %v1681
    %v1696 = vadd.f32 %v1626, %v1681
    %v1697 = vadd.f32 %v1627, %v1681
    %v1698 = vadd.f32 %v1628, %v1681
    %v1699 = vadd.f32 %v1629, %v1681
    %v1700 = vadd.f32 %v1630, %v1681
    %v1701 = vadd.f32 %v1631, %v1681
    %v1702 = vadd.f32 %v1632, %v1681
    %v1703 = vadd.f32 %v1633, %v1681
    %v1704 = vadd.f32 %v1634, %v1681
    %v1705 = vadd.f32 %v1635, %v1681
    %v1706 = vadd.f32 %v1636, %v1681
    %v1707 = vadd.f32 %v1637, %v1681
    %v1708 = vadd.f32 %v1638, %v1681
    %v1709 = vadd.f32 %v1639, %v1681
    %v1710 = vadd.f32 %v1640, %v1681
    %v1711 = vadd.f32 %v1641, %v1681
    %v1712 = vadd.f32 %v1642, %v1681
    %v1713 = vadd.f32 %v1643, %v1681
    %v1714 = vadd.f32 %v1644, %v1681
    %v1715 = vadd.f32 %v1645, %v1681
    %v1716 = vadd.f32 %v1646, %v1681
    %v1717 = vadd.f32 %v1647, %v1681
    %v1718 = vadd.f32 %v1648, %v1681
    %v1719 = vadd.f32 %v1649, %v1681
    %v1720 = vadd.f32 %v1650, %v1681
    %v1721 = vadd.f32 %v1651, %v1681
    %v1722 = vadd.f32 %v1652, %v1681
    %v1723 = vadd.f32 %v1653, %v1681
    %v1724 = vadd.f32 %v1654, %v1681
    %v1725 = vadd.f32 %v1655, %v1681
    %v1726 = vadd.f32 %v1656, %v1681
    %v1727 = vadd.f32 %v1657, %v1681
    %v1728 = vadd.f32 %v1658, %v1681
    %v1729 = vadd.f32 %v1659, %v1681
    %v1730 = vadd.f32 %v1660, %v1681
    %v1731 = vadd.f32 %v1661, %v1681
    %v1732 = vadd.f32 %v1662, %v1681
    %v1733 = vadd.f32 %v1663, %v1681
    %v1734 = vadd.f32 %v1664, %v1681
    %v1735 = vadd.f32 %v1665, %v1681
    %v1736 = vadd.f32 %v1666, %v1681
    %v1737 = vadd.f32 %v1667, %v1681
    %v1738 = vadd.f32 %v1668, %v1681
    %v1739 = vadd.f32 %v1669, %v1681
    %v1740 = vadd.f32 %v1670, %v1681
    %v1741 = vadd.f32 %v1671, %v1681
    %v1742 = vadd.f32 %v1672, %v1681
    %v1743 = vadd.f32 %v1673, %v1681
    %v1744 = vadd.f32 %v1674, %v1681
    %v1745 = vadd.f32 %v1675, %v1681
    %v1746 = vadd.f32 %v1676, %v1681
    %vm1747 = vcmp.ge.f32.partialorder %v1683, 0.0
    %vm1748 = vcmp.ge.f32.partialorder %v1684, 0.0
    %vm1749 = vcmp.ge.f32.partialorder %v1685, 0.0
    %vm1750 = vcmp.ge.f32.partialorder %v1686, 0.0
    %vm1751 = vcmp.ge.f32.partialorder %v1687, 0.0
    %vm1752 = vcmp.ge.f32.partialorder %v1688, 0.0
    %vm1753 = vcmp.ge.f32.partialorder %v1689, 0.0
    %vm1754 = vcmp.ge.f32.partialorder %v1690, 0.0
    %vm1755 = vcmp.ge.f32.partialorder %v1691, 0.0
    %vm1756 = vcmp.ge.f32.partialorder %v1692, 0.0
    %vm1757 = vcmp.ge.f32.partialorder %v1693, 0.0
    %vm1758 = vcmp.ge.f32.partialorder %v1694, 0.0
    %vm1759 = vcmp.ge.f32.partialorder %v1695, 0.0
    %vm1760 = vcmp.ge.f32.partialorder %v1696, 0.0
    %vm1761 = vcmp.ge.f32.partialorder %v1697, 0.0
    %vm1762 = vcmp.ge.f32.partialorder %v1698, 0.0
    %vm1763 = vcmp.ge.f32.partialorder %v1699, 0.0
    %vm1764 = vcmp.ge.f32.partialorder %v1700, 0.0
    %vm1765 = vcmp.ge.f32.partialorder %v1701, 0.0
    %vm1766 = vcmp.ge.f32.partialorder %v1702, 0.0
    %vm1767 = vcmp.ge.f32.partialorder %v1703, 0.0
    %vm1768 = vcmp.ge.f32.partialorder %v1704, 0.0
    %vm1769 = vcmp.ge.f32.partialorder %v1705, 0.0
    %vm1770 = vcmp.ge.f32.partialorder %v1706, 0.0
    %vm1771 = vcmp.ge.f32.partialorder %v1707, 0.0
    %vm1772 = vcmp.ge.f32.partialorder %v1708, 0.0
    %vm1773 = vcmp.ge.f32.partialorder %v1709, 0.0
    %vm1774 = vcmp.ge.f32.partialorder %v1710, 0.0
    %vm1775 = vcmp.ge.f32.partialorder %v1711, 0.0
    %vm1776 = vcmp.ge.f32.partialorder %v1712, 0.0
    %vm1777 = vcmp.ge.f32.partialorder %v1713, 0.0
    %vm1778 = vcmp.ge.f32.partialorder %v1714, 0.0
    %vm1779 = vcmp.ge.f32.partialorder %v1715, 0.0
    %vm1780 = vcmp.ge.f32.partialorder %v1716, 0.0
    %vm1781 = vcmp.ge.f32.partialorder %v1717, 0.0
    %vm1782 = vcmp.ge.f32.partialorder %v1718, 0.0
    %vm1783 = vcmp.ge.f32.partialorder %v1719, 0.0
    %vm1784 = vcmp.ge.f32.partialorder %v1720, 0.0
    %vm1785 = vcmp.ge.f32.partialorder %v1721, 0.0
    %vm1786 = vcmp.ge.f32.partialorder %v1722, 0.0
    %vm1787 = vcmp.ge.f32.partialorder %v1723, 0.0
    %vm1788 = vcmp.ge.f32.partialorder %v1724, 0.0
    %vm1789 = vcmp.ge.f32.partialorder %v1725, 0.0
    %vm1790 = vcmp.ge.f32.partialorder %v1726, 0.0
    %vm1791 = vcmp.ge.f32.partialorder %v1727, 0.0
    %vm1792 = vcmp.ge.f32.partialorder %v1728, 0.0
    %vm1793 = vcmp.ge.f32.partialorder %v1729, 0.0
    %vm1794 = vcmp.ge.f32.partialorder %v1730, 0.0
    %vm1795 = vcmp.ge.f32.partialorder %v1731, 0.0
    %vm1796 = vcmp.ge.f32.partialorder %v1732, 0.0
    %vm1797 = vcmp.ge.f32.partialorder %v1733, 0.0
    %vm1798 = vcmp.ge.f32.partialorder %v1734, 0.0
    %vm1799 = vcmp.ge.f32.partialorder %v1735, 0.0
    %vm1800 = vcmp.ge.f32.partialorder %v1736, 0.0
    %vm1801 = vcmp.ge.f32.partialorder %v1737, 0.0
    %vm1802 = vcmp.ge.f32.partialorder %v1738, 0.0
    %vm1803 = vcmp.ge.f32.partialorder %v1739, 0.0
    %vm1804 = vcmp.ge.f32.partialorder %v1740, 0.0
    %vm1805 = vcmp.ge.f32.partialorder %v1741, 0.0
    %vm1806 = vcmp.ge.f32.partialorder %v1742, 0.0
    %vm1807 = vcmp.ge.f32.partialorder %v1743, 0.0
    %vm1808 = vcmp.ge.f32.partialorder %v1744, 0.0
    %vm1809 = vcmp.ge.f32.partialorder %v1745, 0.0
    %vm1810 = vcmp.ge.f32.partialorder %v1746, 0.0
    %v1811 = vmul.f32 %v1683, 0.2
    %v1812 = vmul.f32 %v1684, 0.2
    %v1813 = vmul.f32 %v1685, 0.2
    %v1814 = vmul.f32 %v1686, 0.2
    %v1815 = vmul.f32 %v1687, 0.2
    %v1816 = vmul.f32 %v1688, 0.2
    %v1817 = vmul.f32 %v1689, 0.2
    %v1818 = vmul.f32 %v1690, 0.2
    %v1819 = vmul.f32 %v1691, 0.2
    %v1820 = vmul.f32 %v1692, 0.2
    %v1821 = vmul.f32 %v1693, 0.2
    %v1822 = vmul.f32 %v1694, 0.2
    %v1823 = vmul.f32 %v1695, 0.2
    %v1824 = vmul.f32 %v1696, 0.2
    %v1825 = vmul.f32 %v1697, 0.2
    %v1826 = vmul.f32 %v1698, 0.2
    %v1827 = vmul.f32 %v1699, 0.2
    %v1828 = vmul.f32 %v1700, 0.2
    %v1829 = vmul.f32 %v1701, 0.2
    %v1830 = vmul.f32 %v1702, 0.2
    %v1831 = vmul.f32 %v1703, 0.2
    %v1832 = vmul.f32 %v1704, 0.2
    %v1833 = vmul.f32 %v1705, 0.2
    %v1834 = vmul.f32 %v1706, 0.2
    %v1835 = vmul.f32 %v1707, 0.2
    %v1836 = vmul.f32 %v1708, 0.2
    %v1837 = vmul.f32 %v1709, 0.2
    %v1838 = vmul.f32 %v1710, 0.2
    %v1839 = vmul.f32 %v1711, 0.2
    %v1840 = vmul.f32 %v1712, 0.2
    %v1841 = vmul.f32 %v1713, 0.2
    %v1842 = vmul.f32 %v1714, 0.2
    %v1843 = vmul.f32 %v1715, 0.2
    %v1844 = vmul.f32 %v1716, 0.2
    %v1845 = vmul.f32 %v1717, 0.2
    %v1846 = vmul.f32 %v1718, 0.2
    %v1847 = vmul.f32 %v1719, 0.2
    %v1848 = vmul.f32 %v1720, 0.2
    %v1849 = vmul.f32 %v1721, 0.2
    %v1850 = vmul.f32 %v1722, 0.2
    %v1851 = vmul.f32 %v1723, 0.2
    %v1852 = vmul.f32 %v1724, 0.2
    %v1853 = vmul.f32 %v1725, 0.2
    %v1854 = vmul.f32 %v1726, 0.2
    %v1855 = vmul.f32 %v1727, 0.2
    %v1856 = vmul.f32 %v1728, 0.2
    %v1857 = vmul.f32 %v1729, 0.2
    %v1858 = vmul.f32 %v1730, 0.2
    %v1859 = vmul.f32 %v1731, 0.2
    %v1860 = vmul.f32 %v1732, 0.2
    %v1861 = vmul.f32 %v1733, 0.2
    %v1862 = vmul.f32 %v1734, 0.2
    %v1863 = vmul.f32 %v1735, 0.2
    %v1864 = vmul.f32 %v1736, 0.2
    %v1865 = vmul.f32 %v1737, 0.2
    %v1866 = vmul.f32 %v1738, 0.2
    %v1867 = vmul.f32 %v1739, 0.2
    %v1868 = vmul.f32 %v1740, 0.2
    %v1869 = vmul.f32 %v1741, 0.2
    %v1870 = vmul.f32 %v1742, 0.2
    %v1871 = vmul.f32 %v1743, 0.2
    %v1872 = vmul.f32 %v1744, 0.2
    %v1873 = vmul.f32 %v1745, 0.2
    %v1874 = vmul.f32 %v1746, 0.2
    %v1875 = vsel %vm1747, %v1683, %v1811
    %v1876 = vsel %vm1748, %v1684, %v1812
    %v1877 = vsel %vm1749, %v1685, %v1813
    %v1878 = vsel %vm1750, %v1686, %v1814
    %v1879 = vsel %vm1751, %v1687, %v1815
    %v1880 = vsel %vm1752, %v1688, %v1816
    %v1881 = vsel %vm1753, %v1689, %v1817
    %v1882 = vsel %vm1754, %v1690, %v1818
    %v1883 = vsel %vm1755, %v1691, %v1819
    %v1884 = vsel %vm1756, %v1692, %v1820
    %v1885 = vsel %vm1757, %v1693, %v1821
    %v1886 = vsel %vm1758, %v1694, %v1822
    %v1887 = vsel %vm1759, %v1695, %v1823
    %v1888 = vsel %vm1760, %v1696, %v1824
    %v1889 = vsel %vm1761, %v1697, %v1825
    %v1890 = vsel %vm1762, %v1698, %v1826
    %v1891 = vsel %vm1763, %v1699, %v1827
    %v1892 = vsel %vm1764, %v1700, %v1828
    %v1893 = vsel %vm1765, %v1701, %v1829
    %v1894 = vsel %vm1766, %v1702, %v1830
    %v1895 = vsel %vm1767, %v1703, %v1831
    %v1896 = vsel %vm1768, %v1704, %v1832
    %v1897 = vsel %vm1769, %v1705, %v1833
    %v1898 = vsel %vm1770, %v1706, %v1834
    %v1899 = vsel %vm1771, %v1707, %v1835
    %v1900 = vsel %vm1772, %v1708, %v1836
    %v1901 = vsel %vm1773, %v1709, %v1837
    %v1902 = vsel %vm1774, %v1710, %v1838
    %v1903 = vsel %vm1775, %v1711, %v1839
    %v1904 = vsel %vm1776, %v1712, %v1840
    %v1905 = vsel %vm1777, %v1713, %v1841
    %v1906 = vsel %vm1778, %v1714, %v1842
    %v1907 = vsel %vm1779, %v1715, %v1843
    %v1908 = vsel %vm1780, %v1716, %v1844
    %v1909 = vsel %vm1781, %v1717, %v1845
    %v1910 = vsel %vm1782, %v1718, %v1846
    %v1911 = vsel %vm1783, %v1719, %v1847
    %v1912 = vsel %vm1784, %v1720, %v1848
    %v1913 = vsel %vm1785, %v1721, %v1849
    %v1914 = vsel %vm1786, %v1722, %v1850
    %v1915 = vsel %vm1787, %v1723, %v1851
    %v1916 = vsel %vm1788, %v1724, %v1852
    %v1917 = vsel %vm1789, %v1725, %v1853
    %v1918 = vsel %vm1790, %v1726, %v1854
    %v1919 = vsel %vm1791, %v1727, %v1855
    %v1920 = vsel %vm1792, %v1728, %v1856
    %v1921 = vsel %vm1793, %v1729, %v1857
    %v1922 = vsel %vm1794, %v1730, %v1858
    %v1923 = vsel %vm1795, %v1731, %v1859
    %v1924 = vsel %vm1796, %v1732, %v1860
    %v1925 = vsel %vm1797, %v1733, %v1861
    %v1926 = vsel %vm1798, %v1734, %v1862
    %v1927 = vsel %vm1799, %v1735, %v1863
    %v1928 = vsel %vm1800, %v1736, %v1864
    %v1929 = vsel %vm1801, %v1737, %v1865
    %v1930 = vsel %vm1802, %v1738, %v1866
    %v1931 = vsel %vm1803, %v1739, %v1867
    %v1932 = vsel %vm1804, %v1740, %v1868
    %v1933 = vsel %vm1805, %v1741, %v1869
    %v1934 = vsel %vm1806, %v1742, %v1870
    %v1935 = vsel %vm1807, %v1743, %v1871
    %v1936 = vsel %vm1808, %v1744, %v1872
    %v1937 = vsel %vm1809, %v1745, %v1873
    %v1938 = vsel %vm1810, %v1746, %v1874
    %v1939 = vpack.c.bf16 %v1876, %v1875
    %v1940 = vpack.c.bf16 %v1878, %v1877
    %v1941 = vpack.c.bf16 %v1880, %v1879
    %v1942 = vpack.c.bf16 %v1882, %v1881
    %v1943 = vpack.c.bf16 %v1884, %v1883
    %v1944 = vpack.c.bf16 %v1886, %v1885
    %v1945 = vpack.c.bf16 %v1888, %v1887
    %v1946 = vpack.c.bf16 %v1890, %v1889
    %v1947 = vpack.c.bf16 %v1892, %v1891
    %v1948 = vpack.c.bf16 %v1894, %v1893
    %v1949 = vpack.c.bf16 %v1896, %v1895
    %v1950 = vpack.c.bf16 %v1898, %v1897
    %v1951 = vpack.c.bf16 %v1900, %v1899
    %v1952 = vpack.c.bf16 %v1902, %v1901
    %v1953 = vpack.c.bf16 %v1904, %v1903
    %v1954 = vpack.c.bf16 %v1906, %v1905
    %v1955 = vpack.c.bf16 %v1908, %v1907
    %v1956 = vpack.c.bf16 %v1910, %v1909
    %v1957 = vpack.c.bf16 %v1912, %v1911
    %v1958 = vpack.c.bf16 %v1914, %v1913
    %v1959 = vpack.c.bf16 %v1916, %v1915
    %v1960 = vpack.c.bf16 %v1918, %v1917
    %v1961 = vpack.c.bf16 %v1920, %v1919
    %v1962 = vpack.c.bf16 %v1922, %v1921
    %v1963 = vpack.c.bf16 %v1924, %v1923
    %v1964 = vpack.c.bf16 %v1926, %v1925
    %v1965 = vpack.c.bf16 %v1928, %v1927
    %v1966 = vpack.c.bf16 %v1930, %v1929
    %v1967 = vpack.c.bf16 %v1932, %v1931
    %v1968 = vpack.c.bf16 %v1934, %v1933
    %v1969 = vpack.c.bf16 %v1936, %v1935
    %v1970 = vpack.c.bf16 %v1938, %v1937
    %v2003 = vunpack.c.l.b16 %v1939
    %v2004 = vunpack.c.h.b16 %v1939
    %v2005 = vunpack.c.l.b16 %v1940
    %v2006 = vunpack.c.h.b16 %v1940
    %v2007 = vunpack.c.l.b16 %v1941
    %v2008 = vunpack.c.h.b16 %v1941
    %v2009 = vunpack.c.l.b16 %v1942
    %v2010 = vunpack.c.h.b16 %v1942
    %v2011 = vunpack.c.l.b16 %v1943
    %v2012 = vunpack.c.h.b16 %v1943
    %v2013 = vunpack.c.l.b16 %v1944
    %v2014 = vunpack.c.h.b16 %v1944
    %v2015 = vunpack.c.l.b16 %v1945
    %v2016 = vunpack.c.h.b16 %v1945
    %v2017 = vunpack.c.l.b16 %v1946
    %v2018 = vunpack.c.h.b16 %v1946
    %v2019 = vunpack.c.l.b16 %v1947
    %v2020 = vunpack.c.h.b16 %v1947
    %v2021 = vunpack.c.l.b16 %v1948
    %v2022 = vunpack.c.h.b16 %v1948
    %v2023 = vunpack.c.l.b16 %v1949
    %v2024 = vunpack.c.h.b16 %v1949
    %v2025 = vunpack.c.l.b16 %v1950
    %v2026 = vunpack.c.h.b16 %v1950
    %v2027 = vunpack.c.l.b16 %v1951
    %v2028 = vunpack.c.h.b16 %v1951
    %v2029 = vunpack.c.l.b16 %v1952
    %v2030 = vunpack.c.h.b16 %v1952
    %v2031 = vunpack.c.l.b16 %v1953
    %v2032 = vunpack.c.h.b16 %v1953
    %v2033 = vunpack.c.l.b16 %v1954
    %v2034 = vunpack.c.h.b16 %v1954
    %v2035 = vunpack.c.l.b16 %v1955
    %v2036 = vunpack.c.h.b16 %v1955
    %v2037 = vunpack.c.l.b16 %v1956
    %v2038 = vunpack.c.h.b16 %v1956
    %v2039 = vunpack.c.l.b16 %v1957
    %v2040 = vunpack.c.h.b16 %v1957
    %v2041 = vunpack.c.l.b16 %v1958
    %v2042 = vunpack.c.h.b16 %v1958
    %v2043 = vunpack.c.l.b16 %v1959
    %v2044 = vunpack.c.h.b16 %v1959
    %v2045 = vunpack.c.l.b16 %v1960
    %v2046 = vunpack.c.h.b16 %v1960
    %v2047 = vunpack.c.l.b16 %v1961
    %v2048 = vunpack.c.h.b16 %v1961
    %v2049 = vunpack.c.l.b16 %v1962
    %v2050 = vunpack.c.h.b16 %v1962
    %v2051 = vunpack.c.l.b16 %v1963
    %v2052 = vunpack.c.h.b16 %v1963
    %v2053 = vunpack.c.l.b16 %v1964
    %v2054 = vunpack.c.h.b16 %v1964
    %v2055 = vunpack.c.l.b16 %v1965
    %v2056 = vunpack.c.h.b16 %v1965
    %v2057 = vunpack.c.l.b16 %v1966
    %v2058 = vunpack.c.h.b16 %v1966
    %v2059 = vunpack.c.l.b16 %v1967
    %v2060 = vunpack.c.h.b16 %v1967
    %v2061 = vunpack.c.l.b16 %v1968
    %v2062 = vunpack.c.h.b16 %v1968
    %v2063 = vunpack.c.l.b16 %v1969
    %v2064 = vunpack.c.h.b16 %v1969
    %v2065 = vunpack.c.l.b16 %v1970
    %v2066 = vunpack.c.h.b16 %v1970
    %v2067 = vpack.c.b16 %v2003, %v2003
    %v2068 = vpack.c.b16 %v2004, %v2004
    %v2069 = vpack.c.b16 %v2005, %v2005
    %v2070 = vpack.c.b16 %v2006, %v2006
    %v2071 = vpack.c.b16 %v2007, %v2007
    %v2072 = vpack.c.b16 %v2008, %v2008
    %v2073 = vpack.c.b16 %v2009, %v2009
    %v2074 = vpack.c.b16 %v2010, %v2010
    %v2075 = vpack.c.b16 %v2011, %v2011
    %v2076 = vpack.c.b16 %v2012, %v2012
    %v2077 = vpack.c.b16 %v2013, %v2013
    %v2078 = vpack.c.b16 %v2014, %v2014
    %v2079 = vpack.c.b16 %v2015, %v2015
    %v2080 = vpack.c.b16 %v2016, %v2016
    %v2081 = vpack.c.b16 %v2017, %v2017
    %v2082 = vpack.c.b16 %v2018, %v2018
    %v2083 = vpack.c.b16 %v2019, %v2019
    %v2084 = vpack.c.b16 %v2020, %v2020
    %v2085 = vpack.c.b16 %v2021, %v2021
    %v2086 = vpack.c.b16 %v2022, %v2022
    %v2087 = vpack.c.b16 %v2023, %v2023
    %v2088 = vpack.c.b16 %v2024, %v2024
    %v2089 = vpack.c.b16 %v2025, %v2025
    %v2090 = vpack.c.b16 %v2026, %v2026
    %v2091 = vpack.c.b16 %v2027, %v2027
    %v2092 = vpack.c.b16 %v2028, %v2028
    %v2093 = vpack.c.b16 %v2029, %v2029
    %v2094 = vpack.c.b16 %v2030, %v2030
    %v2095 = vpack.c.b16 %v2031, %v2031
    %v2096 = vpack.c.b16 %v2032, %v2032
    %v2097 = vpack.c.b16 %v2033, %v2033
    %v2098 = vpack.c.b16 %v2034, %v2034
    %v2099 = vpack.c.b16 %v2035, %v2035
    %v2100 = vpack.c.b16 %v2036, %v2036
    %v2101 = vpack.c.b16 %v2037, %v2037
    %v2102 = vpack.c.b16 %v2038, %v2038
    %v2103 = vpack.c.b16 %v2039, %v2039
    %v2104 = vpack.c.b16 %v2040, %v2040
    %v2105 = vpack.c.b16 %v2041, %v2041
    %v2106 = vpack.c.b16 %v2042, %v2042
    %v2107 = vpack.c.b16 %v2043, %v2043
    %v2108 = vpack.c.b16 %v2044, %v2044
    %v2109 = vpack.c.b16 %v2045, %v2045
    %v2110 = vpack.c.b16 %v2046, %v2046
    %v2111 = vpack.c.b16 %v2047, %v2047
    %v2112 = vpack.c.b16 %v2048, %v2048
    %v2113 = vpack.c.b16 %v2049, %v2049
    %v2114 = vpack.c.b16 %v2050, %v2050
    %v2115 = vpack.c.b16 %v2051, %v2051
    %v2116 = vpack.c.b16 %v2052, %v2052
    %v2117 = vpack.c.b16 %v2053, %v2053
    %v2118 = vpack.c.b16 %v2054, %v2054
    %v2119 = vpack.c.b16 %v2055, %v2055
    %v2120 = vpack.c.b16 %v2056, %v2056
    %v2121 = vpack.c.b16 %v2057, %v2057
    %v2122 = vpack.c.b16 %v2058, %v2058
    %v2123 = vpack.c.b16 %v2059, %v2059
    %v2124 = vpack.c.b16 %v2060, %v2060
    %v2125 = vpack.c.b16 %v2061, %v2061
    %v2126 = vpack.c.b16 %v2062, %v2062
    %v2127 = vpack.c.b16 %v2063, %v2063
    %v2128 = vpack.c.b16 %v2064, %v2064
    %v2129 = vpack.c.b16 %v2065, %v2065
    %v2130 = vpack.c.b16 %v2066, %v2066
    %2195 = vst [vmem:[%s4] sm:$0xf] %v2067
    %2196 = vst [vmem:[%s4 + $0x4] sm:$0xf] %v2068
    %2197 = vst [vmem:[%s4 + $0x8] sm:$0xf] %v2069
    %2198 = vst [vmem:[%s4 + $0xc] sm:$0xf] %v2070
    %2199 = vst [vmem:[%s4 + $0x10] sm:$0xf] %v2071
    %2200 = vst [vmem:[%s4 + $0x14] sm:$0xf] %v2072
    %2201 = vst [vmem:[%s4 + $0x18] sm:$0xf] %v2073
    %2202 = vst [vmem:[%s4 + $0x1c] sm:$0xf] %v2074
    %2203 = vst [vmem:[%s4 + $0x20] sm:$0xf] %v2075
    %2204 = vst [vmem:[%s4 + $0x24] sm:$0xf] %v2076
    %2205 = vst [vmem:[%s4 + $0x28] sm:$0xf] %v2077
    %2206 = vst [vmem:[%s4 + $0x2c] sm:$0xf] %v2078
    %2207 = vst [vmem:[%s4 + $0x30] sm:$0xf] %v2079
    %2208 = vst [vmem:[%s4 + $0x34] sm:$0xf] %v2080
    %2209 = vst [vmem:[%s4 + $0x38] sm:$0xf] %v2081
    %2210 = vst [vmem:[%s4 + $0x3c] sm:$0xf] %v2082
    %2211 = vst [vmem:[%s4 + $0x40] sm:$0xf] %v2083
    %2212 = vst [vmem:[%s4 + $0x44] sm:$0xf] %v2084
    %2213 = vst [vmem:[%s4 + $0x48] sm:$0xf] %v2085
    %2214 = vst [vmem:[%s4 + $0x4c] sm:$0xf] %v2086
    %2215 = vst [vmem:[%s4 + $0x50] sm:$0xf] %v2087
    %2216 = vst [vmem:[%s4 + $0x54] sm:$0xf] %v2088
    %2217 = vst [vmem:[%s4 + $0x58] sm:$0xf] %v2089
    %2218 = vst [vmem:[%s4 + $0x5c] sm:$0xf] %v2090
    %2219 = vst [vmem:[%s4 + $0x60] sm:$0xf] %v2091
    %2220 = vst [vmem:[%s4 + $0x64] sm:$0xf] %v2092
    %2221 = vst [vmem:[%s4 + $0x68] sm:$0xf] %v2093
    %2222 = vst [vmem:[%s4 + $0x6c] sm:$0xf] %v2094
    %2223 = vst [vmem:[%s4 + $0x70] sm:$0xf] %v2095
    %2224 = vst [vmem:[%s4 + $0x74] sm:$0xf] %v2096
    %2225 = vst [vmem:[%s4 + $0x78] sm:$0xf] %v2097
    %2226 = vst [vmem:[%s4 + $0x7c] sm:$0xf] %v2098
    %2227 = vst [vmem:[%s4 + $0x80] sm:$0xf] %v2099
    %2228 = vst [vmem:[%s4 + $0x84] sm:$0xf] %v2100
    %2229 = vst [vmem:[%s4 + $0x88] sm:$0xf] %v2101
    %2230 = vst [vmem:[%s4 + $0x8c] sm:$0xf] %v2102
    %2231 = vst [vmem:[%s4 + $0x90] sm:$0xf] %v2103
    %2232 = vst [vmem:[%s4 + $0x94] sm:$0xf] %v2104
    %2233 = vst [vmem:[%s4 + $0x98] sm:$0xf] %v2105
    %2234 = vst [vmem:[%s4 + $0x9c] sm:$0xf] %v2106
    %2235 = vst [vmem:[%s4 + $0xa0] sm:$0xf] %v2107
    %2236 = vst [vmem:[%s4 + $0xa4] sm:$0xf] %v2108
    %2237 = vst [vmem:[%s4 + $0xa8] sm:$0xf] %v2109
    %2238 = vst [vmem:[%s4 + $0xac] sm:$0xf] %v2110
    %2239 = vst [vmem:[%s4 + $0xb0] sm:$0xf] %v2111
    %2240 = vst [vmem:[%s4 + $0xb4] sm:$0xf] %v2112
    %2241 = vst [vmem:[%s4 + $0xb8] sm:$0xf] %v2113
    %2242 = vst [vmem:[%s4 + $0xbc] sm:$0xf] %v2114
    %2243 = vst [vmem:[%s4 + $0xc0] sm:$0xf] %v2115
    %2244 = vst [vmem:[%s4 + $0xc4] sm:$0xf] %v2116
    %2245 = vst [vmem:[%s4 + $0xc8] sm:$0xf] %v2117
    %2246 = vst [vmem:[%s4 + $0xcc] sm:$0xf] %v2118
    %2247 = vst [vmem:[%s4 + $0xd0] sm:$0xf] %v2119
    %2248 = vst [vmem:[%s4 + $0xd4] sm:$0xf] %v2120
    %2249 = vst [vmem:[%s4 + $0xd8] sm:$0xf] %v2121
    %2250 = vst [vmem:[%s4 + $0xdc] sm:$0xf] %v2122
    %2251 = vst [vmem:[%s4 + $0xe0] sm:$0xf] %v2123
    %2252 = vst [vmem:[%s4 + $0xe4] sm:$0xf] %v2124
    %2253 = vst [vmem:[%s4 + $0xe8] sm:$0xf] %v2125
    %2254 = vst [vmem:[%s4 + $0xec] sm:$0xf] %v2126
    %2255 = vst [vmem:[%s4 + $0xf0] sm:$0xf] %v2127
    %2256 = vst [vmem:[%s4 + $0xf4] sm:$0xf] %v2128
    %2257 = vst [vmem:[%s4 + $0xf8] sm:$0xf] %v2129
    %2258 = vst [vmem:[%s4 + $0xfc] sm:$0xf] %v2130
  $region25: #{_lambda_.6} parent=0 // pred_fallthru
    _
  // Predicated region
  $region26: #{_lambda_.6} parent=0 // pred_check
    _
  $region27: #{_lambda_.6} parent=0 // pred_check_branch
    %2260 = sbr.rel (0) target = $region29
  $region28: #{_lambda_.6} parent=0 // pred_region
    _
  $region29: #{_lambda_.6} parent=0 // pred_fallthru
    _
  // Predicated region
  $region30: #{_lambda_.6} parent=0 // pred_check
    _
  $region31: #{_lambda_.6} parent=0 // pred_check_branch
    %2262 = sbr.rel (0) target = $region33
  $region32: #{_lambda_.6} parent=0 // pred_region
    _
  $region33: #{_lambda_.6} parent=0 // pred_fallthru
    _

// kernel: _lambda_.5
$region0: #{_lambda_.5}
  #allocation0 [shape = 'u32[]', space=smem, size = 0x4, offset = 0x4, fixed_abs, tag = 'smem constant byte address 0x4 - core index']
  #allocation1 [shape = 'u32[144,128]{1,0:T(1,128)}', space=vmem, size = 0x12000, scoped, tag = 'internal scratch']
  #allocation2 [shape = 'f32[1,128]{1,0:T(1,128)}', space=vmem, size = 0x200, scoped, tag = 'scratch operand']
  %s0 = inlined_call_operand.vmem [shape: bf16[2048,27], index: 0, kind: input, shape index: {}]
  %s1 = inlined_call_operand.vmem [shape: bf16[27,128], index: 1, kind: input, shape index: {}]
  %s2 = inlined_call_operand.vmem [shape: f32[1,128], index: 2, kind: input, shape index: {}]
  %s3 = inlined_call_operand.vmem [shape: f32[1,128], index: 3, kind: input, shape index: {}]
  %s4 = inlined_call_operand.vmem [shape: bf16[2048,128], index: 4, kind: output, shape index: {}]
  %s5 = sld [smem:[#allocation0]]
  $region57: #{_lambda_.5} parent=0
    _
  %s7 = ssub.s32 1, %s5
  %s8 = scalar_select 0, %s7, %s5
  loop: start=0, step=1, limit=4
  $region2: #{_lambda_.5} parent=0 // loop_pre_header
    _
  $region3: #{_lambda_.5} parent=0 // loop_header
    %s10 = sphi 0, %s14
    %p11 = scmp.ge.s32.totalorder %s10, 4
    %s20 = sphi 0, %s22
    %s23 = sphi 0, %s20
    %s24 = sphi 0, %s23
    %s40 = sphi 0, %s24
    %s44 = sphi 0, %s44
    %s46 = sphi 0, %s44
    %s47 = sphi 0, %s46
    %s61 = sphi 0, %s47
    %s65 = sphi 0, %s65
    %s67 = sphi 0, %s65
    %s68 = sphi 0, %s67
    %s82 = sphi 0, %s68
    %s86 = sphi 0, %s86
    %s88 = sphi 0, %s86
    %s89 = sphi 0, %s88
    %s103 = sphi 0, %s89
    %s107 = sphi 0, %s107
    %s109 = sphi 0, %s107
    %s110 = sphi 0, %s109
    %s124 = sphi 0, %s110
  $region4: #{_lambda_.5} parent=0 // loop_header_branch
    %13 = sbr.rel (%p11) target = $region8
  $region5: #{_lambda_.5} parent=0 // loop_body
    %s15 = ssub.s32 %s10, 1
    %s16 = ssub.s32 %s10, 2
    %s17 = sadd.s32 %s10, 1
    %s18 = ssub.s32 %s10, %s17
    %p19 = scmp.eq.s32.totalorder %s18, 0
    %s21 = sadd.s32 %s20, 1
    %s22 = scalar_select %p19, %s20, %s21
    %p25 = pneg %p19
    %p26 = scmp.eq.s32.totalorder %s10, 1
    %p27 = por %p25, %p26
    %p28 = scmp.ne.s32.totalorder %s20, %s23
    %p29 = scmp.eq.s32.totalorder %s10, 0
    %p30 = por %p28, %p29
    %p31 = scmp.ne.s32.totalorder %s20, %s23
    %p32 = scmp.eq.s32.totalorder %s15, 1
    %p33 = por %p31, %p32
    %p34 = scmp.ne.s32.totalorder %s23, %s24
    %p35 = scmp.eq.s32.totalorder %s15, 0
    %p36 = por %p34, %p35
    %p37 = scmp.ne.s32.totalorder %s23, %s24
    %p38 = scmp.eq.s32.totalorder %s16, 1
    %p39 = por %p37, %p38
    %p41 = scmp.ne.s32.totalorder %s24, %s40
    %p42 = scmp.eq.s32.totalorder %s16, 0
    %p43 = por %p41, %p42
    %s45 = sadd.s32 %s44, 1
    %p48 = scmp.eq.s32.totalorder %s10, 1
    %p49 = scmp.ne.s32.totalorder %s44, %s46
    %p50 = scmp.eq.s32.totalorder %s10, 0
    %p51 = por %p49, %p50
    %p52 = scmp.ne.s32.totalorder %s44, %s46
    %p53 = scmp.eq.s32.totalorder %s15, 1
    %p54 = por %p52, %p53
    %p55 = scmp.ne.s32.totalorder %s46, %s47
    %p56 = scmp.eq.s32.totalorder %s15, 0
    %p57 = por %p55, %p56
    %p58 = scmp.ne.s32.totalorder %s46, %s47
    %p59 = scmp.eq.s32.totalorder %s16, 1
    %p60 = por %p58, %p59
    %p62 = scmp.ne.s32.totalorder %s47, %s61
    %p63 = scmp.eq.s32.totalorder %s16, 0
    %p64 = por %p62, %p63
    %s66 = sadd.s32 %s65, 1
    %p69 = scmp.eq.s32.totalorder %s10, 1
    %p70 = scmp.ne.s32.totalorder %s65, %s67
    %p71 = scmp.eq.s32.totalorder %s10, 0
    %p72 = por %p70, %p71
    %p73 = scmp.ne.s32.totalorder %s65, %s67
    %p74 = scmp.eq.s32.totalorder %s15, 1
    %p75 = por %p73, %p74
    %p76 = scmp.ne.s32.totalorder %s67, %s68
    %p77 = scmp.eq.s32.totalorder %s15, 0
    %p78 = por %p76, %p77
    %p79 = scmp.ne.s32.totalorder %s67, %s68
    %p80 = scmp.eq.s32.totalorder %s16, 1
    %p81 = por %p79, %p80
    %p83 = scmp.ne.s32.totalorder %s68, %s82
    %p84 = scmp.eq.s32.totalorder %s16, 0
    %p85 = por %p83, %p84
    %s87 = sadd.s32 %s86, 1
    %p90 = scmp.eq.s32.totalorder %s10, 1
    %p91 = scmp.ne.s32.totalorder %s86, %s88
    %p92 = scmp.eq.s32.totalorder %s10, 0
    %p93 = por %p91, %p92
    %p94 = scmp.ne.s32.totalorder %s86, %s88
    %p95 = scmp.eq.s32.totalorder %s15, 1
    %p96 = por %p94, %p95
    %p97 = scmp.ne.s32.totalorder %s88, %s89
    %p98 = scmp.eq.s32.totalorder %s15, 0
    %p99 = por %p97, %p98
    %p100 = scmp.ne.s32.totalorder %s88, %s89
    %p101 = scmp.eq.s32.totalorder %s16, 1
    %p102 = por %p100, %p101
    %p104 = scmp.ne.s32.totalorder %s89, %s103
    %p105 = scmp.eq.s32.totalorder %s16, 0
    %p106 = por %p104, %p105
    %s108 = sadd.s32 %s107, 1
    %p111 = scmp.eq.s32.totalorder %s10, 1
    %p112 = scmp.ne.s32.totalorder %s107, %s109
    %p113 = scmp.eq.s32.totalorder %s10, 0
    %p114 = por %p112, %p113
    %p115 = scmp.ne.s32.totalorder %s107, %s109
    %p116 = scmp.eq.s32.totalorder %s15, 1
    %p117 = por %p115, %p116
    %p118 = scmp.ne.s32.totalorder %s109, %s110
    %p119 = scmp.eq.s32.totalorder %s15, 0
    %p120 = por %p118, %p119
    %p121 = scmp.ne.s32.totalorder %s109, %s110
    %p122 = scmp.eq.s32.totalorder %s16, 1
    %p123 = por %p121, %p122
    %p125 = scmp.ne.s32.totalorder %s110, %s124
    %p126 = scmp.eq.s32.totalorder %s16, 0
    %p127 = por %p125, %p126
    %p128 = scmp.le.s32.totalorder 1, %s10
    %p129 = scmp.lt.s32.totalorder %s10, 3
    %p130 = pnand %p128, %p129
    %p131 = pneg %p130
    // Predicated region
    $region9: #{_lambda_.5} parent=5 // pred_check
      _
    $region10: #{_lambda_.5} parent=5 // pred_check_branch
      %133 = sbr.rel (%p130) target = $region12
    $region11: #{_lambda_.5} parent=5 // pred_region
      %s134 = ssub.s32 %s10, 1
      // Predicated region
      $region13: #{_lambda_.5} parent=11 // pred_check
        %p135 = pneg %p57
      $region14: #{_lambda_.5} parent=11 // pred_check_branch
        %137 = sbr.rel (%p135) target = $region16
      $region15: #{_lambda_.5} parent=11 // pred_region
        _
      $region16: #{_lambda_.5} parent=11 // pred_fallthru
        _
      // Predicated region
      $region17: #{_lambda_.5} parent=11 // pred_check
        %p138 = pneg %p78
      $region18: #{_lambda_.5} parent=11 // pred_check_branch
        %140 = sbr.rel (%p138) target = $region20
      $region19: #{_lambda_.5} parent=11 // pred_region
        _
      $region20: #{_lambda_.5} parent=11 // pred_fallthru
        _
      // Predicated region
      $region21: #{_lambda_.5} parent=11 // pred_check
        %p141 = pneg %p99
      $region22: #{_lambda_.5} parent=11 // pred_check_branch
        %143 = sbr.rel (%p141) target = $region24
      $region23: #{_lambda_.5} parent=11 // pred_region
        _
      $region24: #{_lambda_.5} parent=11 // pred_fallthru
        _
    $region12: #{_lambda_.5} parent=5 // pred_fallthru
      _
    %p144 = scmp.lt.s32.totalorder %s10, 2
    // Predicated region
    $region25: #{_lambda_.5} parent=5 // pred_check
      %p145 = pneg %p144
    $region26: #{_lambda_.5} parent=5 // pred_check_branch
      %147 = sbr.rel (%p145) target = $region28
    $region27: #{_lambda_.5} parent=5 // pred_region
      // Predicated region
      $region29: #{_lambda_.5} parent=27 // pred_check
        %p148 = pneg %p30
      $region30: #{_lambda_.5} parent=27 // pred_check_branch
        %150 = sbr.rel (%p148) target = $region32
      $region31: #{_lambda_.5} parent=27 // pred_region
        %s151 = smul.u32 128, %s10
        %p152 = scmp.lt.s32.totalorder %s151, 255
        %s153 = scalar_select %p152, %s151, 255
        %s154 = smul.addr %s153, 4
        %s155 = scalar_lea.vmem %s0, %s154
        %s156 = smul.u32 128, %s10
      $region32: #{_lambda_.5} parent=27 // pred_fallthru
        _
    $region28: #{_lambda_.5} parent=5 // pred_fallthru
      _
    %p157 = scmp.le.s32.totalorder 1, %s10
    %p158 = scmp.lt.s32.totalorder %s10, 3
    %p159 = pnand %p157, %p158
    %p160 = pneg %p159
    // Predicated region
    $region33: #{_lambda_.5} parent=5 // pred_check
      _
    $region34: #{_lambda_.5} parent=5 // pred_check_branch
      %162 = sbr.rel (%p159) target = $region36
    $region35: #{_lambda_.5} parent=5 // pred_region
      %s163 = ssub.s32 %s10, 1
      %s164 = smul.u32 128, %s15
      %p165 = scmp.lt.s32.totalorder %s164, 255
      %s166 = scalar_select %p165, %s164, 255
      %s167 = smul.addr %s166, 4
      %s168 = scalar_lea.vmem %s0, %s167
      %p169 = pneg %p36
      %p170 = pneg %p33
      %p171 = pneg %p57
      %p172 = pneg %p54
      %p173 = pneg %p78
      %p174 = pneg %p75
      %p175 = pneg %p99
      %p176 = pneg %p96
      %p177 = pneg %p120
      %p178 = pneg %p117
      %s179 = smul.u32 128, %s15
      %p180 = scmp.lt.s32.totalorder %s179, 255
      %s181 = scalar_select %p180, %s179, 255
      %s182 = smul.addr %s181, 4
      %s183 = scalar_lea.vmem %s0, %s182
      %s184 = smul.u32 128, %s15
      %p186 = scmp.eq.s32.totalorder %s15, 0
      // Predicated region
      $region37: #{_lambda_.5} parent=35 // pred_check
        %p187 = pneg %p186
      $region38: #{_lambda_.5} parent=35 // pred_check_branch
        %189 = sbr.rel (%p187) target = $region40
      $region39: #{_lambda_.5} parent=35 // pred_region
        %190 = vst [vmem:[#allocation2] sm:$0x1] 0.0
      $region40: #{_lambda_.5} parent=35 // pred_fallthru
        _
      %v191 = vld [vmem:[%s183] sm:$0xf]
      %v192 = vld [vmem:[%s183 + $0x4] sm:$0xf]
      %v193 = vld [vmem:[%s183 + $0x8] sm:$0xf]
      %v194 = vld [vmem:[%s183 + $0xc] sm:$0xf]
      %v195 = vld [vmem:[%s183 + $0x10] sm:$0xf]
      %v196 = vld [vmem:[%s183 + $0x14] sm:$0xf]
      %v197 = vld [vmem:[%s183 + $0x18] sm:$0xf]
      %v198 = vld [vmem:[%s183 + $0x1c] sm:$0xf]
      %v199 = vld [vmem:[%s183 + $0x20] sm:$0xf]
      %v200 = vld [vmem:[%s183 + $0x24] sm:$0xf]
      %v201 = vld [vmem:[%s183 + $0x28] sm:$0xf]
      %v202 = vld [vmem:[%s183 + $0x2c] sm:$0xf]
      %v203 = vld [vmem:[%s183 + $0x30] sm:$0xf]
      %v204 = vld [vmem:[%s183 + $0x34] sm:$0xf]
      %v205 = vld [vmem:[%s183 + $0x38] sm:$0xf]
      %v206 = vld [vmem:[%s183 + $0x3c] sm:$0xf]
      %v207 = vld [vmem:[%s183 + $0x40] sm:$0xf]
      %v208 = vld [vmem:[%s183 + $0x44] sm:$0xf]
      %v209 = vld [vmem:[%s183 + $0x48] sm:$0xf]
      %v210 = vld [vmem:[%s183 + $0x4c] sm:$0xf]
      %v211 = vld [vmem:[%s183 + $0x50] sm:$0xf]
      %v212 = vld [vmem:[%s183 + $0x54] sm:$0xf]
      %v213 = vld [vmem:[%s183 + $0x58] sm:$0xf]
      %v214 = vld [vmem:[%s183 + $0x5c] sm:$0xf]
      %v215 = vld [vmem:[%s183 + $0x60] sm:$0xf]
      %v216 = vld [vmem:[%s183 + $0x64] sm:$0xf]
      %v217 = vld [vmem:[%s183 + $0x68] sm:$0xf]
      %v218 = vld [vmem:[%s183 + $0x6c] sm:$0xf]
      %v219 = vld [vmem:[%s183 + $0x70] sm:$0xf]
      %v220 = vld [vmem:[%s183 + $0x74] sm:$0xf]
      %v221 = vld [vmem:[%s183 + $0x78] sm:$0xf]
      %v222 = vld [vmem:[%s183 + $0x7c] sm:$0xf]
      %v223 = vld [vmem:[%s183 + $0x80] sm:$0xf]
      %v224 = vld [vmem:[%s183 + $0x84] sm:$0xf]
      %v225 = vld [vmem:[%s183 + $0x88] sm:$0xf]
      %v226 = vld [vmem:[%s183 + $0x8c] sm:$0xf]
      %v227 = vld [vmem:[%s183 + $0x90] sm:$0xf]
      %v228 = vld [vmem:[%s183 + $0x94] sm:$0xf]
      %v229 = vld [vmem:[%s183 + $0x98] sm:$0xf]
      %v230 = vld [vmem:[%s183 + $0x9c] sm:$0xf]
      %v231 = vld [vmem:[%s183 + $0xa0] sm:$0xf]
      %v232 = vld [vmem:[%s183 + $0xa4] sm:$0xf]
      %v233 = vld [vmem:[%s183 + $0xa8] sm:$0xf]
      %v234 = vld [vmem:[%s183 + $0xac] sm:$0xf]
      %v235 = vld [vmem:[%s183 + $0xb0] sm:$0xf]
      %v236 = vld [vmem:[%s183 + $0xb4] sm:$0xf]
      %v237 = vld [vmem:[%s183 + $0xb8] sm:$0xf]
      %v238 = vld [vmem:[%s183 + $0xbc] sm:$0xf]
      %v239 = vld [vmem:[%s183 + $0xc0] sm:$0xf]
      %v240 = vld [vmem:[%s183 + $0xc4] sm:$0xf]
      %v241 = vld [vmem:[%s183 + $0xc8] sm:$0xf]
      %v242 = vld [vmem:[%s183 + $0xcc] sm:$0xf]
      %v243 = vld [vmem:[%s183 + $0xd0] sm:$0xf]
      %v244 = vld [vmem:[%s183 + $0xd4] sm:$0xf]
      %v245 = vld [vmem:[%s183 + $0xd8] sm:$0xf]
      %v246 = vld [vmem:[%s183 + $0xdc] sm:$0xf]
      %v247 = vld [vmem:[%s183 + $0xe0] sm:$0xf]
      %v248 = vld [vmem:[%s183 + $0xe4] sm:$0xf]
      %v249 = vld [vmem:[%s183 + $0xe8] sm:$0xf]
      %v250 = vld [vmem:[%s183 + $0xec] sm:$0xf]
      %v251 = vld [vmem:[%s183 + $0xf0] sm:$0xf]
      %v252 = vld [vmem:[%s183 + $0xf4] sm:$0xf]
      %v253 = vld [vmem:[%s183 + $0xf8] sm:$0xf]
      %v254 = vld [vmem:[%s183 + $0xfc] sm:$0xf]
      %v255 = vld [vmem:[%s183 + $0x100] sm:$0xf]
      %v256 = vld [vmem:[%s183 + $0x104] sm:$0xf]
      %v257 = vld [vmem:[%s183 + $0x108] sm:$0xf]
      %v258 = vld [vmem:[%s183 + $0x10c] sm:$0xf]
      %v259 = vld [vmem:[%s183 + $0x110] sm:$0xf]
      %v260 = vld [vmem:[%s183 + $0x114] sm:$0xf]
      %v261 = vld [vmem:[%s183 + $0x118] sm:$0xf]
      %v262 = vld [vmem:[%s183 + $0x11c] sm:$0xf]
      %v263 = vld [vmem:[%s183 + $0x120] sm:$0xf]
      %v264 = vld [vmem:[%s183 + $0x124] sm:$0xf]
      %v265 = vld [vmem:[%s183 + $0x128] sm:$0xf]
      %v266 = vld [vmem:[%s183 + $0x12c] sm:$0xf]
      %v267 = vld [vmem:[%s183 + $0x130] sm:$0xf]
      %v268 = vld [vmem:[%s183 + $0x134] sm:$0xf]
      %v269 = vld [vmem:[%s183 + $0x138] sm:$0xf]
      %v270 = vld [vmem:[%s183 + $0x13c] sm:$0xf]
      %v271 = vld [vmem:[%s183 + $0x140] sm:$0xf]
      %v272 = vld [vmem:[%s183 + $0x144] sm:$0xf]
      %v273 = vld [vmem:[%s183 + $0x148] sm:$0xf]
      %v274 = vld [vmem:[%s183 + $0x14c] sm:$0xf]
      %v275 = vld [vmem:[%s183 + $0x150] sm:$0xf]
      %v276 = vld [vmem:[%s183 + $0x154] sm:$0xf]
      %v277 = vld [vmem:[%s183 + $0x158] sm:$0xf]
      %v278 = vld [vmem:[%s183 + $0x15c] sm:$0xf]
      %v279 = vld [vmem:[%s183 + $0x160] sm:$0xf]
      %v280 = vld [vmem:[%s183 + $0x164] sm:$0xf]
      %v281 = vld [vmem:[%s183 + $0x168] sm:$0xf]
      %v282 = vld [vmem:[%s183 + $0x16c] sm:$0xf]
      %v283 = vld [vmem:[%s183 + $0x170] sm:$0xf]
      %v284 = vld [vmem:[%s183 + $0x174] sm:$0xf]
      %v285 = vld [vmem:[%s183 + $0x178] sm:$0xf]
      %v286 = vld [vmem:[%s183 + $0x17c] sm:$0xf]
      %v287 = vld [vmem:[%s183 + $0x180] sm:$0xf]
      %v288 = vld [vmem:[%s183 + $0x184] sm:$0xf]
      %v289 = vld [vmem:[%s183 + $0x188] sm:$0xf]
      %v290 = vld [vmem:[%s183 + $0x18c] sm:$0xf]
      %v291 = vld [vmem:[%s183 + $0x190] sm:$0xf]
      %v292 = vld [vmem:[%s183 + $0x194] sm:$0xf]
      %v293 = vld [vmem:[%s183 + $0x198] sm:$0xf]
      %v294 = vld [vmem:[%s183 + $0x19c] sm:$0xf]
      %v295 = vld [vmem:[%s183 + $0x1a0] sm:$0xf]
      %v296 = vld [vmem:[%s183 + $0x1a4] sm:$0xf]
      %v297 = vld [vmem:[%s183 + $0x1a8] sm:$0xf]
      %v298 = vld [vmem:[%s183 + $0x1ac] sm:$0xf]
      %v299 = vld [vmem:[%s183 + $0x1b0] sm:$0xf]
      %v300 = vld [vmem:[%s183 + $0x1b4] sm:$0xf]
      %v301 = vld [vmem:[%s183 + $0x1b8] sm:$0xf]
      %v302 = vld [vmem:[%s183 + $0x1bc] sm:$0xf]
      %v303 = vld [vmem:[%s183 + $0x1c0] sm:$0xf]
      %v304 = vld [vmem:[%s183 + $0x1c4] sm:$0xf]
      %v305 = vld [vmem:[%s183 + $0x1c8] sm:$0xf]
      %v306 = vld [vmem:[%s183 + $0x1cc] sm:$0xf]
      %v307 = vld [vmem:[%s183 + $0x1d0] sm:$0xf]
      %v308 = vld [vmem:[%s183 + $0x1d4] sm:$0xf]
      %v309 = vld [vmem:[%s183 + $0x1d8] sm:$0xf]
      %v310 = vld [vmem:[%s183 + $0x1dc] sm:$0xf]
      %v311 = vld [vmem:[%s183 + $0x1e0] sm:$0xf]
      %v312 = vld [vmem:[%s183 + $0x1e4] sm:$0xf]
      %v313 = vld [vmem:[%s183 + $0x1e8] sm:$0xf]
      %v314 = vld [vmem:[%s183 + $0x1ec] sm:$0xf]
      %v315 = vld [vmem:[%s183 + $0x1f0] sm:$0xf]
      %v316 = vld [vmem:[%s183 + $0x1f4] sm:$0xf]
      %v317 = vld [vmem:[%s183 + $0x1f8] sm:$0xf]
      %v318 = vld [vmem:[%s183 + $0x1fc] sm:$0xf]
      %v319 = vld [vmem:[%s1] sm:$0xf]
      %v320 = vld [vmem:[%s1 + $0x4] sm:$0xf]
      %v321 = vld [vmem:[%s1 + $0x8] sm:$0xf]
      %v322 = vld [vmem:[%s1 + $0xc] sm:$0x3]
      %v451 = vunpack.c.l.b16 %v191
      %v452 = vunpack.c.l.b16 %v192
      %v453 = vunpack.c.l.b16 %v193
      %v454 = vunpack.c.l.b16 %v194
      %v455 = vunpack.c.l.b16 %v195
      %v456 = vunpack.c.l.b16 %v196
      %v457 = vunpack.c.l.b16 %v197
      %v458 = vunpack.c.l.b16 %v198
      %v459 = vunpack.c.l.b16 %v199
      %v460 = vunpack.c.l.b16 %v200
      %v461 = vunpack.c.l.b16 %v201
      %v462 = vunpack.c.l.b16 %v202
      %v463 = vunpack.c.l.b16 %v203
      %v464 = vunpack.c.l.b16 %v204
      %v465 = vunpack.c.l.b16 %v205
      %v466 = vunpack.c.l.b16 %v206
      %v467 = vunpack.c.l.b16 %v207
      %v468 = vunpack.c.l.b16 %v208
      %v469 = vunpack.c.l.b16 %v209
      %v470 = vunpack.c.l.b16 %v210
      %v471 = vunpack.c.l.b16 %v211
      %v472 = vunpack.c.l.b16 %v212
      %v473 = vunpack.c.l.b16 %v213
      %v474 = vunpack.c.l.b16 %v214
      %v475 = vunpack.c.l.b16 %v215
      %v476 = vunpack.c.l.b16 %v216
      %v477 = vunpack.c.l.b16 %v217
      %v478 = vunpack.c.l.b16 %v218
      %v479 = vunpack.c.l.b16 %v219
      %v480 = vunpack.c.l.b16 %v220
      %v481 = vunpack.c.l.b16 %v221
      %v482 = vunpack.c.l.b16 %v222
      %v483 = vunpack.c.l.b16 %v223
      %v484 = vunpack.c.l.b16 %v224
      %v485 = vunpack.c.l.b16 %v225
      %v486 = vunpack.c.l.b16 %v226
      %v487 = vunpack.c.l.b16 %v227
      %v488 = vunpack.c.l.b16 %v228
      %v489 = vunpack.c.l.b16 %v229
      %v490 = vunpack.c.l.b16 %v230
      %v491 = vunpack.c.l.b16 %v231
      %v492 = vunpack.c.l.b16 %v232
      %v493 = vunpack.c.l.b16 %v233
      %v494 = vunpack.c.l.b16 %v234
      %v495 = vunpack.c.l.b16 %v235
      %v496 = vunpack.c.l.b16 %v236
      %v497 = vunpack.c.l.b16 %v237
      %v498 = vunpack.c.l.b16 %v238
      %v499 = vunpack.c.l.b16 %v239
      %v500 = vunpack.c.l.b16 %v240
      %v501 = vunpack.c.l.b16 %v241
      %v502 = vunpack.c.l.b16 %v242
      %v503 = vunpack.c.l.b16 %v243
      %v504 = vunpack.c.l.b16 %v244
      %v505 = vunpack.c.l.b16 %v245
      %v506 = vunpack.c.l.b16 %v246
      %v507 = vunpack.c.l.b16 %v247
      %v508 = vunpack.c.l.b16 %v248
      %v509 = vunpack.c.l.b16 %v249
      %v510 = vunpack.c.l.b16 %v250
      %v511 = vunpack.c.l.b16 %v251
      %v512 = vunpack.c.l.b16 %v252
      %v513 = vunpack.c.l.b16 %v253
      %v514 = vunpack.c.l.b16 %v254
      %v515 = vunpack.c.l.b16 %v255
      %v516 = vunpack.c.l.b16 %v256
      %v517 = vunpack.c.l.b16 %v257
      %v518 = vunpack.c.l.b16 %v258
      %v519 = vunpack.c.l.b16 %v259
      %v520 = vunpack.c.l.b16 %v260
      %v521 = vunpack.c.l.b16 %v261
      %v522 = vunpack.c.l.b16 %v262
      %v523 = vunpack.c.l.b16 %v263
      %v524 = vunpack.c.l.b16 %v264
      %v525 = vunpack.c.l.b16 %v265
      %v526 = vunpack.c.l.b16 %v266
      %v527 = vunpack.c.l.b16 %v267
      %v528 = vunpack.c.l.b16 %v268
      %v529 = vunpack.c.l.b16 %v269
      %v530 = vunpack.c.l.b16 %v270
      %v531 = vunpack.c.l.b16 %v271
      %v532 = vunpack.c.l.b16 %v272
      %v533 = vunpack.c.l.b16 %v273
      %v534 = vunpack.c.l.b16 %v274
      %v535 = vunpack.c.l.b16 %v275
      %v536 = vunpack.c.l.b16 %v276
      %v537 = vunpack.c.l.b16 %v277
      %v538 = vunpack.c.l.b16 %v278
      %v539 = vunpack.c.l.b16 %v279
      %v540 = vunpack.c.l.b16 %v280
      %v541 = vunpack.c.l.b16 %v281
      %v542 = vunpack.c.l.b16 %v282
      %v543 = vunpack.c.l.b16 %v283
      %v544 = vunpack.c.l.b16 %v284
      %v545 = vunpack.c.l.b16 %v285
      %v546 = vunpack.c.l.b16 %v286
      %v547 = vunpack.c.l.b16 %v287
      %v548 = vunpack.c.l.b16 %v288
      %v549 = vunpack.c.l.b16 %v289
      %v550 = vunpack.c.l.b16 %v290
      %v551 = vunpack.c.l.b16 %v291
      %v552 = vunpack.c.l.b16 %v292
      %v553 = vunpack.c.l.b16 %v293
      %v554 = vunpack.c.l.b16 %v294
      %v555 = vunpack.c.l.b16 %v295
      %v556 = vunpack.c.l.b16 %v296
      %v557 = vunpack.c.l.b16 %v297
      %v558 = vunpack.c.l.b16 %v298
      %v559 = vunpack.c.l.b16 %v299
      %v560 = vunpack.c.l.b16 %v300
      %v561 = vunpack.c.l.b16 %v301
      %v562 = vunpack.c.l.b16 %v302
      %v563 = vunpack.c.l.b16 %v303
      %v564 = vunpack.c.l.b16 %v304
      %v565 = vunpack.c.l.b16 %v305
      %v566 = vunpack.c.l.b16 %v306
      %v567 = vunpack.c.l.b16 %v307
      %v568 = vunpack.c.l.b16 %v308
      %v569 = vunpack.c.l.b16 %v309
      %v570 = vunpack.c.l.b16 %v310
      %v571 = vunpack.c.l.b16 %v311
      %v572 = vunpack.c.l.b16 %v312
      %v573 = vunpack.c.l.b16 %v313
      %v574 = vunpack.c.l.b16 %v314
      %v575 = vunpack.c.l.b16 %v315
      %v576 = vunpack.c.l.b16 %v316
      %v577 = vunpack.c.l.b16 %v317
      %v578 = vunpack.c.l.b16 %v318
      %v579 = vpack.c.b16 %v452, %v451
      %v580 = vpack.c.b16 %v454, %v453
      %v581 = vpack.c.b16 %v456, %v455
      %v582 = vpack.c.b16 %v458, %v457
      %v583 = vpack.c.b16 %v460, %v459
      %v584 = vpack.c.b16 %v462, %v461
      %v585 = vpack.c.b16 %v464, %v463
      %v586 = vpack.c.b16 %v466, %v465
      %v587 = vpack.c.b16 %v468, %v467
      %v588 = vpack.c.b16 %v470, %v469
      %v589 = vpack.c.b16 %v472, %v471
      %v590 = vpack.c.b16 %v474, %v473
      %v591 = vpack.c.b16 %v476, %v475
      %v592 = vpack.c.b16 %v478, %v477
      %v593 = vpack.c.b16 %v480, %v479
      %v594 = vpack.c.b16 %v482, %v481
      %v595 = vpack.c.b16 %v484, %v483
      %v596 = vpack.c.b16 %v486, %v485
      %v597 = vpack.c.b16 %v488, %v487
      %v598 = vpack.c.b16 %v490, %v489
      %v599 = vpack.c.b16 %v492, %v491
      %v600 = vpack.c.b16 %v494, %v493
      %v601 = vpack.c.b16 %v496, %v495
      %v602 = vpack.c.b16 %v498, %v497
      %v603 = vpack.c.b16 %v500, %v499
      %v604 = vpack.c.b16 %v502, %v501
      %v605 = vpack.c.b16 %v504, %v503
      %v606 = vpack.c.b16 %v506, %v505
      %v607 = vpack.c.b16 %v508, %v507
      %v608 = vpack.c.b16 %v510, %v509
      %v609 = vpack.c.b16 %v512, %v511
      %v610 = vpack.c.b16 %v514, %v513
      %v611 = vpack.c.b16 %v516, %v515
      %v612 = vpack.c.b16 %v518, %v517
      %v613 = vpack.c.b16 %v520, %v519
      %v614 = vpack.c.b16 %v522, %v521
      %v615 = vpack.c.b16 %v524, %v523
      %v616 = vpack.c.b16 %v526, %v525
      %v617 = vpack.c.b16 %v528, %v527
      %v618 = vpack.c.b16 %v530, %v529
      %v619 = vpack.c.b16 %v532, %v531
      %v620 = vpack.c.b16 %v534, %v533
      %v621 = vpack.c.b16 %v536, %v535
      %v622 = vpack.c.b16 %v538, %v537
      %v623 = vpack.c.b16 %v540, %v539
      %v624 = vpack.c.b16 %v542, %v541
      %v625 = vpack.c.b16 %v544, %v543
      %v626 = vpack.c.b16 %v546, %v545
      %v627 = vpack.c.b16 %v548, %v547
      %v628 = vpack.c.b16 %v550, %v549
      %v629 = vpack.c.b16 %v552, %v551
      %v630 = vpack.c.b16 %v554, %v553
      %v631 = vpack.c.b16 %v556, %v555
      %v632 = vpack.c.b16 %v558, %v557
      %v633 = vpack.c.b16 %v560, %v559
      %v634 = vpack.c.b16 %v562, %v561
      %v635 = vpack.c.b16 %v564, %v563
      %v636 = vpack.c.b16 %v566, %v565
      %v637 = vpack.c.b16 %v568, %v567
      %v638 = vpack.c.b16 %v570, %v569
      %v639 = vpack.c.b16 %v572, %v571
      %v640 = vpack.c.b16 %v574, %v573
      %v641 = vpack.c.b16 %v576, %v575
      %v642 = vpack.c.b16 %v578, %v577
      %v647 = vunpack.c.l.b16 %v319
      %v648 = vunpack.c.l.b16 %v320
      %v649 = vunpack.c.l.b16 %v321
      %v650 = vunpack.c.l.b16 %v322
      %v651 = vpack.c.b16 %v648, %v647
      %v652 = vpack.c.b16 %v650, %v649
      %vm654 = vcmask 220160
      %v656 = vsel %vm654, %v579, 0
      %v659 = vsel %vm654, %v580, 0
      %v662 = vsel %vm654, %v581, 0
      %v665 = vsel %vm654, %v582, 0
      %v668 = vsel %vm654, %v583, 0
      %v671 = vsel %vm654, %v584, 0
      %v674 = vsel %vm654, %v585, 0
      %v677 = vsel %vm654, %v586, 0
      %v680 = vsel %vm654, %v587, 0
      %v683 = vsel %vm654, %v588, 0
      %v686 = vsel %vm654, %v589, 0
      %v689 = vsel %vm654, %v590, 0
      %v692 = vsel %vm654, %v591, 0
      %v695 = vsel %vm654, %v592, 0
      %v698 = vsel %vm654, %v593, 0
      %v701 = vsel %vm654, %v594, 0
      %v704 = vsel %vm654, %v595, 0
      %v707 = vsel %vm654, %v596, 0
      %v710 = vsel %vm654, %v597, 0
      %v713 = vsel %vm654, %v598, 0
      %v716 = vsel %vm654, %v599, 0
      %v719 = vsel %vm654, %v600, 0
      %v722 = vsel %vm654, %v601, 0
      %v725 = vsel %vm654, %v602, 0
      %v728 = vsel %vm654, %v603, 0
      %v731 = vsel %vm654, %v604, 0
      %v734 = vsel %vm654, %v605, 0
      %v737 = vsel %vm654, %v606, 0
      %v740 = vsel %vm654, %v607, 0
      %v743 = vsel %vm654, %v608, 0
      %v746 = vsel %vm654, %v609, 0
      %v749 = vsel %vm654, %v610, 0
      %v752 = vsel %vm654, %v611, 0
      %v755 = vsel %vm654, %v612, 0
      %v758 = vsel %vm654, %v613, 0
      %v761 = vsel %vm654, %v614, 0
      %v764 = vsel %vm654, %v615, 0
      %v767 = vsel %vm654, %v616, 0
      %v770 = vsel %vm654, %v617, 0
      %v773 = vsel %vm654, %v618, 0
      %v776 = vsel %vm654, %v619, 0
      %v779 = vsel %vm654, %v620, 0
      %v782 = vsel %vm654, %v621, 0
      %v785 = vsel %vm654, %v622, 0
      %v788 = vsel %vm654, %v623, 0
      %v791 = vsel %vm654, %v624, 0
      %v794 = vsel %vm654, %v625, 0
      %v797 = vsel %vm654, %v626, 0
      %v800 = vsel %vm654, %v627, 0
      %v803 = vsel %vm654, %v628, 0
      %v806 = vsel %vm654, %v629, 0
      %v809 = vsel %vm654, %v630, 0
      %v812 = vsel %vm654, %v631, 0
      %v815 = vsel %vm654, %v632, 0
      %v818 = vsel %vm654, %v633, 0
      %v821 = vsel %vm654, %v634, 0
      %v824 = vsel %vm654, %v635, 0
      %v827 = vsel %vm654, %v636, 0
      %v830 = vsel %vm654, %v637, 0
      %v833 = vsel %vm654, %v638, 0
      %v836 = vsel %vm654, %v639, 0
      %v839 = vsel %vm654, %v640, 0
      %v842 = vsel %vm654, %v641, 0
      %v845 = vsel %vm654, %v642, 0
      %vm847 = vcmask 1044480
      %vm848 = vcmask 1045504
      %v849 = vsel %vm847, 4294967295, 65535
      %v850 = vsel %vm848, %v849, 0
      %v852 = vand.u32 %v652, %v850
      %854 = vmatprep.subr.bf16.mxu0 0
      %855 = vmatpush1.bf16.msra.mxu0 %v651
      %856 = vmatprep.subr.bf16.mxu0 0
      %857 = vmatpush1.bf16.msra.mxu0 %v852
      %858 = vmatprep.subr.bf16.mxu0 0
      %859 = vmatpush1.bf16.msra.mxu0 0
      %860 = vmatprep.subr.bf16.mxu0 0
      %861 = vmatpush1.bf16.msra.mxu0 0
      %862 = vmatprep.subr.bf16.mxu0 0
      %863 = vmatpush1.bf16.msra.mxu0 0
      %864 = vmatprep.subr.bf16.mxu0 0
      %865 = vmatpush1.bf16.msra.mxu0 0
      %866 = vmatprep.subr.bf16.mxu0 0
      %867 = vmatpush1.bf16.msra.mxu0 0
      %868 = vmatprep.subr.bf16.mxu0 0
      %869 = vmatpush1.bf16.msra.mxu0 0
      %870 = vmatprep.subr.bf16.mxu0 0
      %871 = vmatpush1.bf16.msra.mxu0 0
      %872 = vmatprep.subr.bf16.mxu0 0
      %873 = vmatpush1.bf16.msra.mxu0 0
      %874 = vmatprep.subr.bf16.mxu0 0
      %875 = vmatpush1.bf16.msra.mxu0 0
      %876 = vmatprep.subr.bf16.mxu0 0
      %877 = vmatpush1.bf16.msra.mxu0 0
      %878 = vmatprep.subr.bf16.mxu0 0
      %879 = vmatpush1.bf16.msra.mxu0 0
      %880 = vmatprep.subr.bf16.mxu0 0
      %881 = vmatpush1.bf16.msra.mxu0 0
      %882 = vmatprep.subr.bf16.mxu0 0
      %883 = vmatpush1.bf16.msra.mxu0 0
      %884 = vmatprep.subr.bf16.mxu0 0
      %885 = vmatpush1.bf16.msra.mxu0 0
      %886 = vmatprep.mubr.bf16.mxu0 0
      %887 = vmatmul.mubr.bf16.gmra.mrb[0].mxu0 %v656
      %v888 = vpop.f32.mrb[0].mxu0
      %v889 = vadd.f32 0.0, %v888
      %v890 = vpop.f32.mrb[0].mxu0
      %v891 = vpop.f32.mrb[0].mxu0
      %v892 = vadd.f32 0.0, %v891
      %v893 = vpop.f32.mrb[0].mxu0
      %894 = vmatprep.mubr.bf16.mxu0 0
      %895 = vmatmul.mubr.bf16.gmra.mrb[0].mxu0 %v659
      %v896 = vpop.f32.mrb[0].mxu0
      %v897 = vadd.f32 0.0, %v896
      %v898 = vpop.f32.mrb[0].mxu0
      %v899 = vpop.f32.mrb[0].mxu0
      %v900 = vadd.f32 0.0, %v899
      %v901 = vpop.f32.mrb[0].mxu0
      %902 = vmatprep.mubr.bf16.mxu0 0
      %903 = vmatmul.mubr.bf16.gmra.mrb[0].mxu0 %v662
      %v904 = vpop.f32.mrb[0].mxu0
      %v905 = vadd.f32 0.0, %v904
      %v906 = vpop.f32.mrb[0].mxu0
      %v907 = vpop.f32.mrb[0].mxu0
      %v908 = vadd.f32 0.0, %v907
      %v909 = vpop.f32.mrb[0].mxu0
      %910 = vmatprep.mubr.bf16.mxu0 0
      %911 = vmatmul.mubr.bf16.gmra.mrb[0].mxu0 %v665
      %v912 = vpop.f32.mrb[0].mxu0
      %v913 = vadd.f32 0.0, %v912
      %v914 = vpop.f32.mrb[0].mxu0
      %v915 = vpop.f32.mrb[0].mxu0
      %v916 = vadd.f32 0.0, %v915
      %v917 = vpop.f32.mrb[0].mxu0
      %918 = vmatprep.mubr.bf16.mxu0 0
      %919 = vmatmul.mubr.bf16.gmra.mrb[0].mxu0 %v668
      %v920 = vpop.f32.mrb[0].mxu0
      %v921 = vadd.f32 0.0, %v920
      %v922 = vpop.f32.mrb[0].mxu0
      %v923 = vpop.f32.mrb[0].mxu0
      %v924 = vadd.f32 0.0, %v923
      %v925 = vpop.f32.mrb[0].mxu0
      %926 = vmatprep.mubr.bf16.mxu0 0
      %927 = vmatmul.mubr.bf16.gmra.mrb[0].mxu0 %v671
      %v928 = vpop.f32.mrb[0].mxu0
      %v929 = vadd.f32 0.0, %v928
      %v930 = vpop.f32.mrb[0].mxu0
      %v931 = vpop.f32.mrb[0].mxu0
      %v932 = vadd.f32 0.0, %v931
      %v933 = vpop.f32.mrb[0].mxu0
      %934 = vmatprep.mubr.bf16.mxu0 0
      %935 = vmatmul.mubr.bf16.gmra.mrb[0].mxu0 %v674
      %v936 = vpop.f32.mrb[0].mxu0
      %v937 = vadd.f32 0.0, %v936
      %v938 = vpop.f32.mrb[0].mxu0
      %v939 = vpop.f32.mrb[0].mxu0
      %v940 = vadd.f32 0.0, %v939
      %v941 = vpop.f32.mrb[0].mxu0
      %942 = vmatprep.mubr.bf16.mxu0 0
      %943 = vmatmul.mubr.bf16.gmra.mrb[0].mxu0 %v677
      %v944 = vpop.f32.mrb[0].mxu0
      %v945 = vadd.f32 0.0, %v944
      %v946 = vpop.f32.mrb[0].mxu0
      %v947 = vpop.f32.mrb[0].mxu0
      %v948 = vadd.f32 0.0, %v947
      %v949 = vpop.f32.mrb[0].mxu0
      %950 = vmatprep.mubr.bf16.mxu0 0
      %951 = vmatmul.mubr.bf16.gmra.mrb[0].mxu0 %v680
      %v952 = vpop.f32.mrb[0].mxu0
      %v953 = vadd.f32 0.0, %v952
      %v954 = vpop.f32.mrb[0].mxu0
      %v955 = vpop.f32.mrb[0].mxu0
      %v956 = vadd.f32 0.0, %v955
      %v957 = vpop.f32.mrb[0].mxu0
      %958 = vmatprep.mubr.bf16.mxu0 0
      %959 = vmatmul.mubr.bf16.gmra.mrb[0].mxu0 %v683
      %v960 = vpop.f32.mrb[0].mxu0
      %v961 = vadd.f32 0.0, %v960
      %v962 = vpop.f32.mrb[0].mxu0
      %v963 = vpop.f32.mrb[0].mxu0
      %v964 = vadd.f32 0.0, %v963
      %v965 = vpop.f32.mrb[0].mxu0
      %966 = vmatprep.mubr.bf16.mxu0 0
      %967 = vmatmul.mubr.bf16.gmra.mrb[0].mxu0 %v686
      %v968 = vpop.f32.mrb[0].mxu0
      %v969 = vadd.f32 0.0, %v968
      %v970 = vpop.f32.mrb[0].mxu0
      %v971 = vpop.f32.mrb[0].mxu0
      %v972 = vadd.f32 0.0, %v971
      %v973 = vpop.f32.mrb[0].mxu0
      %974 = vmatprep.mubr.bf16.mxu0 0
      %975 = vmatmul.mubr.bf16.gmra.mrb[0].mxu0 %v689
      %v976 = vpop.f32.mrb[0].mxu0
      %v977 = vadd.f32 0.0, %v976
      %v978 = vpop.f32.mrb[0].mxu0
      %v979 = vpop.f32.mrb[0].mxu0
      %v980 = vadd.f32 0.0, %v979
      %v981 = vpop.f32.mrb[0].mxu0
      %982 = vmatprep.mubr.bf16.mxu0 0
      %983 = vmatmul.mubr.bf16.gmra.mrb[0].mxu0 %v692
      %v984 = vpop.f32.mrb[0].mxu0
      %v985 = vadd.f32 0.0, %v984
      %v986 = vpop.f32.mrb[0].mxu0
      %v987 = vpop.f32.mrb[0].mxu0
      %v988 = vadd.f32 0.0, %v987
      %v989 = vpop.f32.mrb[0].mxu0
      %990 = vmatprep.mubr.bf16.mxu0 0
      %991 = vmatmul.mubr.bf16.gmra.mrb[0].mxu0 %v695
      %v992 = vpop.f32.mrb[0].mxu0
      %v993 = vadd.f32 0.0, %v992
      %v994 = vpop.f32.mrb[0].mxu0
      %v995 = vpop.f32.mrb[0].mxu0
      %v996 = vadd.f32 0.0, %v995
      %v997 = vpop.f32.mrb[0].mxu0
      %998 = vmatprep.mubr.bf16.mxu0 0
      %999 = vmatmul.mubr.bf16.gmra.mrb[0].mxu0 %v698
      %v1000 = vpop.f32.mrb[0].mxu0
      %v1001 = vadd.f32 0.0, %v1000
      %v1002 = vpop.f32.mrb[0].mxu0
      %v1003 = vpop.f32.mrb[0].mxu0
      %v1004 = vadd.f32 0.0, %v1003
      %v1005 = vpop.f32.mrb[0].mxu0
      %1006 = vmatprep.mubr.bf16.mxu0 0
      %1007 = vmatmul.mubr.bf16.gmra.mrb[0].mxu0 %v701
      %v1008 = vpop.f32.mrb[0].mxu0
      %v1009 = vadd.f32 0.0, %v1008
      %v1010 = vpop.f32.mrb[0].mxu0
      %v1011 = vpop.f32.mrb[0].mxu0
      %v1012 = vadd.f32 0.0, %v1011
      %v1013 = vpop.f32.mrb[0].mxu0
      %1014 = vmatprep.mubr.bf16.mxu0 0
      %1015 = vmatmul.mubr.bf16.gmra.mrb[0].mxu0 %v704
      %v1016 = vpop.f32.mrb[0].mxu0
      %v1017 = vadd.f32 0.0, %v1016
      %v1018 = vpop.f32.mrb[0].mxu0
      %v1019 = vpop.f32.mrb[0].mxu0
      %v1020 = vadd.f32 0.0, %v1019
      %v1021 = vpop.f32.mrb[0].mxu0
      %1022 = vmatprep.mubr.bf16.mxu0 0
      %1023 = vmatmul.mubr.bf16.gmra.mrb[0].mxu0 %v707
      %v1024 = vpop.f32.mrb[0].mxu0
      %v1025 = vadd.f32 0.0, %v1024
      %v1026 = vpop.f32.mrb[0].mxu0
      %v1027 = vpop.f32.mrb[0].mxu0
      %v1028 = vadd.f32 0.0, %v1027
      %v1029 = vpop.f32.mrb[0].mxu0
      %1030 = vmatprep.mubr.bf16.mxu0 0
      %1031 = vmatmul.mubr.bf16.gmra.mrb[0].mxu0 %v710
      %v1032 = vpop.f32.mrb[0].mxu0
      %v1033 = vadd.f32 0.0, %v1032
      %v1034 = vpop.f32.mrb[0].mxu0
      %v1035 = vpop.f32.mrb[0].mxu0
      %v1036 = vadd.f32 0.0, %v1035
      %v1037 = vpop.f32.mrb[0].mxu0
      %1038 = vmatprep.mubr.bf16.mxu0 0
      %1039 = vmatmul.mubr.bf16.gmra.mrb[0].mxu0 %v713
      %v1040 = vpop.f32.mrb[0].mxu0
      %v1041 = vadd.f32 0.0, %v1040
      %v1042 = vpop.f32.mrb[0].mxu0
      %v1043 = vpop.f32.mrb[0].mxu0
      %v1044 = vadd.f32 0.0, %v1043
      %v1045 = vpop.f32.mrb[0].mxu0
      %1046 = vmatprep.mubr.bf16.mxu0 0
      %1047 = vmatmul.mubr.bf16.gmra.mrb[0].mxu0 %v716
      %v1048 = vpop.f32.mrb[0].mxu0
      %v1049 = vadd.f32 0.0, %v1048
      %v1050 = vpop.f32.mrb[0].mxu0
      %v1051 = vpop.f32.mrb[0].mxu0
      %v1052 = vadd.f32 0.0, %v1051
      %v1053 = vpop.f32.mrb[0].mxu0
      %1054 = vmatprep.mubr.bf16.mxu0 0
      %1055 = vmatmul.mubr.bf16.gmra.mrb[0].mxu0 %v719
      %v1056 = vpop.f32.mrb[0].mxu0
      %v1057 = vadd.f32 0.0, %v1056
      %v1058 = vpop.f32.mrb[0].mxu0
      %v1059 = vpop.f32.mrb[0].mxu0
      %v1060 = vadd.f32 0.0, %v1059
      %v1061 = vpop.f32.mrb[0].mxu0
      %1062 = vmatprep.mubr.bf16.mxu0 0
      %1063 = vmatmul.mubr.bf16.gmra.mrb[0].mxu0 %v722
      %v1064 = vpop.f32.mrb[0].mxu0
      %v1065 = vadd.f32 0.0, %v1064
      %v1066 = vpop.f32.mrb[0].mxu0
      %v1067 = vpop.f32.mrb[0].mxu0
      %v1068 = vadd.f32 0.0, %v1067
      %v1069 = vpop.f32.mrb[0].mxu0
      %1070 = vmatprep.mubr.bf16.mxu0 0
      %1071 = vmatmul.mubr.bf16.gmra.mrb[0].mxu0 %v725
      %v1072 = vpop.f32.mrb[0].mxu0
      %v1073 = vadd.f32 0.0, %v1072
      %v1074 = vpop.f32.mrb[0].mxu0
      %v1075 = vpop.f32.mrb[0].mxu0
      %v1076 = vadd.f32 0.0, %v1075
      %v1077 = vpop.f32.mrb[0].mxu0
      %1078 = vmatprep.mubr.bf16.mxu0 0
      %1079 = vmatmul.mubr.bf16.gmra.mrb[0].mxu0 %v728
      %v1080 = vpop.f32.mrb[0].mxu0
      %v1081 = vadd.f32 0.0, %v1080
      %v1082 = vpop.f32.mrb[0].mxu0
      %v1083 = vpop.f32.mrb[0].mxu0
      %v1084 = vadd.f32 0.0, %v1083
      %v1085 = vpop.f32.mrb[0].mxu0
      %1086 = vmatprep.mubr.bf16.mxu0 0
      %1087 = vmatmul.mubr.bf16.gmra.mrb[0].mxu0 %v731
      %v1088 = vpop.f32.mrb[0].mxu0
      %v1089 = vadd.f32 0.0, %v1088
      %v1090 = vpop.f32.mrb[0].mxu0
      %v1091 = vpop.f32.mrb[0].mxu0
      %v1092 = vadd.f32 0.0, %v1091
      %v1093 = vpop.f32.mrb[0].mxu0
      %1094 = vmatprep.mubr.bf16.mxu0 0
      %1095 = vmatmul.mubr.bf16.gmra.mrb[0].mxu0 %v734
      %v1096 = vpop.f32.mrb[0].mxu0
      %v1097 = vadd.f32 0.0, %v1096
      %v1098 = vpop.f32.mrb[0].mxu0
      %v1099 = vpop.f32.mrb[0].mxu0
      %v1100 = vadd.f32 0.0, %v1099
      %v1101 = vpop.f32.mrb[0].mxu0
      %1102 = vmatprep.mubr.bf16.mxu0 0
      %1103 = vmatmul.mubr.bf16.gmra.mrb[0].mxu0 %v737
      %v1104 = vpop.f32.mrb[0].mxu0
      %v1105 = vadd.f32 0.0, %v1104
      %v1106 = vpop.f32.mrb[0].mxu0
      %v1107 = vpop.f32.mrb[0].mxu0
      %v1108 = vadd.f32 0.0, %v1107
      %v1109 = vpop.f32.mrb[0].mxu0
      %1110 = vmatprep.mubr.bf16.mxu0 0
      %1111 = vmatmul.mubr.bf16.gmra.mrb[0].mxu0 %v740
      %v1112 = vpop.f32.mrb[0].mxu0
      %v1113 = vadd.f32 0.0, %v1112
      %v1114 = vpop.f32.mrb[0].mxu0
      %v1115 = vpop.f32.mrb[0].mxu0
      %v1116 = vadd.f32 0.0, %v1115
      %v1117 = vpop.f32.mrb[0].mxu0
      %1118 = vmatprep.mubr.bf16.mxu0 0
      %1119 = vmatmul.mubr.bf16.gmra.mrb[0].mxu0 %v743
      %v1120 = vpop.f32.mrb[0].mxu0
      %v1121 = vadd.f32 0.0, %v1120
      %v1122 = vpop.f32.mrb[0].mxu0
      %v1123 = vpop.f32.mrb[0].mxu0
      %v1124 = vadd.f32 0.0, %v1123
      %v1125 = vpop.f32.mrb[0].mxu0
      %1126 = vmatprep.mubr.bf16.mxu0 0
      %1127 = vmatmul.mubr.bf16.gmra.mrb[0].mxu0 %v746
      %v1128 = vpop.f32.mrb[0].mxu0
      %v1129 = vadd.f32 0.0, %v1128
      %v1130 = vpop.f32.mrb[0].mxu0
      %v1131 = vpop.f32.mrb[0].mxu0
      %v1132 = vadd.f32 0.0, %v1131
      %v1133 = vpop.f32.mrb[0].mxu0
      %1134 = vmatprep.mubr.bf16.mxu0 0
      %1135 = vmatmul.mubr.bf16.gmra.mrb[0].mxu0 %v749
      %v1136 = vpop.f32.mrb[0].mxu0
      %v1137 = vadd.f32 0.0, %v1136
      %v1138 = vpop.f32.mrb[0].mxu0
      %v1139 = vpop.f32.mrb[0].mxu0
      %v1140 = vadd.f32 0.0, %v1139
      %v1141 = vpop.f32.mrb[0].mxu0
      %1142 = vmatprep.mubr.bf16.mxu0 0
      %1143 = vmatmul.mubr.bf16.gmra.mrb[0].mxu0 %v752
      %v1144 = vpop.f32.mrb[0].mxu0
      %v1145 = vadd.f32 0.0, %v1144
      %v1146 = vpop.f32.mrb[0].mxu0
      %v1147 = vpop.f32.mrb[0].mxu0
      %v1148 = vadd.f32 0.0, %v1147
      %v1149 = vpop.f32.mrb[0].mxu0
      %1150 = vmatprep.mubr.bf16.mxu0 0
      %1151 = vmatmul.mubr.bf16.gmra.mrb[0].mxu0 %v755
      %v1152 = vpop.f32.mrb[0].mxu0
      %v1153 = vadd.f32 0.0, %v1152
      %v1154 = vpop.f32.mrb[0].mxu0
      %v1155 = vpop.f32.mrb[0].mxu0
      %v1156 = vadd.f32 0.0, %v1155
      %v1157 = vpop.f32.mrb[0].mxu0
      %1158 = vmatprep.mubr.bf16.mxu0 0
      %1159 = vmatmul.mubr.bf16.gmra.mrb[0].mxu0 %v758
      %v1160 = vpop.f32.mrb[0].mxu0
      %v1161 = vadd.f32 0.0, %v1160
      %v1162 = vpop.f32.mrb[0].mxu0
      %v1163 = vpop.f32.mrb[0].mxu0
      %v1164 = vadd.f32 0.0, %v1163
      %v1165 = vpop.f32.mrb[0].mxu0
      %1166 = vmatprep.mubr.bf16.mxu0 0
      %1167 = vmatmul.mubr.bf16.gmra.mrb[0].mxu0 %v761
      %v1168 = vpop.f32.mrb[0].mxu0
      %v1169 = vadd.f32 0.0, %v1168
      %v1170 = vpop.f32.mrb[0].mxu0
      %v1171 = vpop.f32.mrb[0].mxu0
      %v1172 = vadd.f32 0.0, %v1171
      %v1173 = vpop.f32.mrb[0].mxu0
      %1174 = vmatprep.mubr.bf16.mxu0 0
      %1175 = vmatmul.mubr.bf16.gmra.mrb[0].mxu0 %v764
      %v1176 = vpop.f32.mrb[0].mxu0
      %v1177 = vadd.f32 0.0, %v1176
      %v1178 = vpop.f32.mrb[0].mxu0
      %v1179 = vpop.f32.mrb[0].mxu0
      %v1180 = vadd.f32 0.0, %v1179
      %v1181 = vpop.f32.mrb[0].mxu0
      %1182 = vmatprep.mubr.bf16.mxu0 0
      %1183 = vmatmul.mubr.bf16.gmra.mrb[0].mxu0 %v767
      %v1184 = vpop.f32.mrb[0].mxu0
      %v1185 = vadd.f32 0.0, %v1184
      %v1186 = vpop.f32.mrb[0].mxu0
      %v1187 = vpop.f32.mrb[0].mxu0
      %v1188 = vadd.f32 0.0, %v1187
      %v1189 = vpop.f32.mrb[0].mxu0
      %1190 = vmatprep.mubr.bf16.mxu0 0
      %1191 = vmatmul.mubr.bf16.gmra.mrb[0].mxu0 %v770
      %v1192 = vpop.f32.mrb[0].mxu0
      %v1193 = vadd.f32 0.0, %v1192
      %v1194 = vpop.f32.mrb[0].mxu0
      %v1195 = vpop.f32.mrb[0].mxu0
      %v1196 = vadd.f32 0.0, %v1195
      %v1197 = vpop.f32.mrb[0].mxu0
      %1198 = vmatprep.mubr.bf16.mxu0 0
      %1199 = vmatmul.mubr.bf16.gmra.mrb[0].mxu0 %v773
      %v1200 = vpop.f32.mrb[0].mxu0
      %v1201 = vadd.f32 0.0, %v1200
      %v1202 = vpop.f32.mrb[0].mxu0
      %v1203 = vpop.f32.mrb[0].mxu0
      %v1204 = vadd.f32 0.0, %v1203
      %v1205 = vpop.f32.mrb[0].mxu0
      %1206 = vmatprep.mubr.bf16.mxu0 0
      %1207 = vmatmul.mubr.bf16.gmra.mrb[0].mxu0 %v776
      %v1208 = vpop.f32.mrb[0].mxu0
      %v1209 = vadd.f32 0.0, %v1208
      %v1210 = vpop.f32.mrb[0].mxu0
      %v1211 = vpop.f32.mrb[0].mxu0
      %v1212 = vadd.f32 0.0, %v1211
      %v1213 = vpop.f32.mrb[0].mxu0
      %1214 = vmatprep.mubr.bf16.mxu0 0
      %1215 = vmatmul.mubr.bf16.gmra.mrb[0].mxu0 %v779
      %v1216 = vpop.f32.mrb[0].mxu0
      %v1217 = vadd.f32 0.0, %v1216
      %v1218 = vpop.f32.mrb[0].mxu0
      %v1219 = vpop.f32.mrb[0].mxu0
      %v1220 = vadd.f32 0.0, %v1219
      %v1221 = vpop.f32.mrb[0].mxu0
      %1222 = vmatprep.mubr.bf16.mxu0 0
      %1223 = vmatmul.mubr.bf16.gmra.mrb[0].mxu0 %v782
      %v1224 = vpop.f32.mrb[0].mxu0
      %v1225 = vadd.f32 0.0, %v1224
      %v1226 = vpop.f32.mrb[0].mxu0
      %v1227 = vpop.f32.mrb[0].mxu0
      %v1228 = vadd.f32 0.0, %v1227
      %v1229 = vpop.f32.mrb[0].mxu0
      %1230 = vmatprep.mubr.bf16.mxu0 0
      %1231 = vmatmul.mubr.bf16.gmra.mrb[0].mxu0 %v785
      %v1232 = vpop.f32.mrb[0].mxu0
      %v1233 = vadd.f32 0.0, %v1232
      %v1234 = vpop.f32.mrb[0].mxu0
      %v1235 = vpop.f32.mrb[0].mxu0
      %v1236 = vadd.f32 0.0, %v1235
      %v1237 = vpop.f32.mrb[0].mxu0
      %1238 = vmatprep.mubr.bf16.mxu0 0
      %1239 = vmatmul.mubr.bf16.gmra.mrb[0].mxu0 %v788
      %v1240 = vpop.f32.mrb[0].mxu0
      %v1241 = vadd.f32 0.0, %v1240
      %v1242 = vpop.f32.mrb[0].mxu0
      %v1243 = vpop.f32.mrb[0].mxu0
      %v1244 = vadd.f32 0.0, %v1243
      %v1245 = vpop.f32.mrb[0].mxu0
      %1246 = vmatprep.mubr.bf16.mxu0 0
      %1247 = vmatmul.mubr.bf16.gmra.mrb[0].mxu0 %v791
      %v1248 = vpop.f32.mrb[0].mxu0
      %v1249 = vadd.f32 0.0, %v1248
      %v1250 = vpop.f32.mrb[0].mxu0
      %v1251 = vpop.f32.mrb[0].mxu0
      %v1252 = vadd.f32 0.0, %v1251
      %v1253 = vpop.f32.mrb[0].mxu0
      %1254 = vmatprep.mubr.bf16.mxu0 0
      %1255 = vmatmul.mubr.bf16.gmra.mrb[0].mxu0 %v794
      %v1256 = vpop.f32.mrb[0].mxu0
      %v1257 = vadd.f32 0.0, %v1256
      %v1258 = vpop.f32.mrb[0].mxu0
      %v1259 = vpop.f32.mrb[0].mxu0
      %v1260 = vadd.f32 0.0, %v1259
      %v1261 = vpop.f32.mrb[0].mxu0
      %1262 = vmatprep.mubr.bf16.mxu0 0
      %1263 = vmatmul.mubr.bf16.gmra.mrb[0].mxu0 %v797
      %v1264 = vpop.f32.mrb[0].mxu0
      %v1265 = vadd.f32 0.0, %v1264
      %v1266 = vpop.f32.mrb[0].mxu0
      %v1267 = vpop.f32.mrb[0].mxu0
      %v1268 = vadd.f32 0.0, %v1267
      %v1269 = vpop.f32.mrb[0].mxu0
      %1270 = vmatprep.mubr.bf16.mxu0 0
      %1271 = vmatmul.mubr.bf16.gmra.mrb[0].mxu0 %v800
      %v1272 = vpop.f32.mrb[0].mxu0
      %v1273 = vadd.f32 0.0, %v1272
      %v1274 = vpop.f32.mrb[0].mxu0
      %v1275 = vpop.f32.mrb[0].mxu0
      %v1276 = vadd.f32 0.0, %v1275
      %v1277 = vpop.f32.mrb[0].mxu0
      %1278 = vmatprep.mubr.bf16.mxu0 0
      %1279 = vmatmul.mubr.bf16.gmra.mrb[0].mxu0 %v803
      %v1280 = vpop.f32.mrb[0].mxu0
      %v1281 = vadd.f32 0.0, %v1280
      %v1282 = vpop.f32.mrb[0].mxu0
      %v1283 = vpop.f32.mrb[0].mxu0
      %v1284 = vadd.f32 0.0, %v1283
      %v1285 = vpop.f32.mrb[0].mxu0
      %1286 = vmatprep.mubr.bf16.mxu0 0
      %1287 = vmatmul.mubr.bf16.gmra.mrb[0].mxu0 %v806
      %v1288 = vpop.f32.mrb[0].mxu0
      %v1289 = vadd.f32 0.0, %v1288
      %v1290 = vpop.f32.mrb[0].mxu0
      %v1291 = vpop.f32.mrb[0].mxu0
      %v1292 = vadd.f32 0.0, %v1291
      %v1293 = vpop.f32.mrb[0].mxu0
      %1294 = vmatprep.mubr.bf16.mxu0 0
      %1295 = vmatmul.mubr.bf16.gmra.mrb[0].mxu0 %v809
      %v1296 = vpop.f32.mrb[0].mxu0
      %v1297 = vadd.f32 0.0, %v1296
      %v1298 = vpop.f32.mrb[0].mxu0
      %v1299 = vpop.f32.mrb[0].mxu0
      %v1300 = vadd.f32 0.0, %v1299
      %v1301 = vpop.f32.mrb[0].mxu0
      %1302 = vmatprep.mubr.bf16.mxu0 0
      %1303 = vmatmul.mubr.bf16.gmra.mrb[0].mxu0 %v812
      %v1304 = vpop.f32.mrb[0].mxu0
      %v1305 = vadd.f32 0.0, %v1304
      %v1306 = vpop.f32.mrb[0].mxu0
      %v1307 = vpop.f32.mrb[0].mxu0
      %v1308 = vadd.f32 0.0, %v1307
      %v1309 = vpop.f32.mrb[0].mxu0
      %1310 = vmatprep.mubr.bf16.mxu0 0
      %1311 = vmatmul.mubr.bf16.gmra.mrb[0].mxu0 %v815
      %v1312 = vpop.f32.mrb[0].mxu0
      %v1313 = vadd.f32 0.0, %v1312
      %v1314 = vpop.f32.mrb[0].mxu0
      %v1315 = vpop.f32.mrb[0].mxu0
      %v1316 = vadd.f32 0.0, %v1315
      %v1317 = vpop.f32.mrb[0].mxu0
      %1318 = vmatprep.mubr.bf16.mxu0 0
      %1319 = vmatmul.mubr.bf16.gmra.mrb[0].mxu0 %v818
      %v1320 = vpop.f32.mrb[0].mxu0
      %v1321 = vadd.f32 0.0, %v1320
      %v1322 = vpop.f32.mrb[0].mxu0
      %v1323 = vpop.f32.mrb[0].mxu0
      %v1324 = vadd.f32 0.0, %v1323
      %v1325 = vpop.f32.mrb[0].mxu0
      %1326 = vmatprep.mubr.bf16.mxu0 0
      %1327 = vmatmul.mubr.bf16.gmra.mrb[0].mxu0 %v821
      %v1328 = vpop.f32.mrb[0].mxu0
      %v1329 = vadd.f32 0.0, %v1328
      %v1330 = vpop.f32.mrb[0].mxu0
      %v1331 = vpop.f32.mrb[0].mxu0
      %v1332 = vadd.f32 0.0, %v1331
      %v1333 = vpop.f32.mrb[0].mxu0
      %1334 = vmatprep.mubr.bf16.mxu0 0
      %1335 = vmatmul.mubr.bf16.gmra.mrb[0].mxu0 %v824
      %v1336 = vpop.f32.mrb[0].mxu0
      %v1337 = vadd.f32 0.0, %v1336
      %v1338 = vpop.f32.mrb[0].mxu0
      %v1339 = vpop.f32.mrb[0].mxu0
      %v1340 = vadd.f32 0.0, %v1339
      %v1341 = vpop.f32.mrb[0].mxu0
      %1342 = vmatprep.mubr.bf16.mxu0 0
      %1343 = vmatmul.mubr.bf16.gmra.mrb[0].mxu0 %v827
      %v1344 = vpop.f32.mrb[0].mxu0
      %v1345 = vadd.f32 0.0, %v1344
      %v1346 = vpop.f32.mrb[0].mxu0
      %v1347 = vpop.f32.mrb[0].mxu0
      %v1348 = vadd.f32 0.0, %v1347
      %v1349 = vpop.f32.mrb[0].mxu0
      %1350 = vmatprep.mubr.bf16.mxu0 0
      %1351 = vmatmul.mubr.bf16.gmra.mrb[0].mxu0 %v830
      %v1352 = vpop.f32.mrb[0].mxu0
      %v1353 = vadd.f32 0.0, %v1352
      %v1354 = vpop.f32.mrb[0].mxu0
      %v1355 = vpop.f32.mrb[0].mxu0
      %v1356 = vadd.f32 0.0, %v1355
      %v1357 = vpop.f32.mrb[0].mxu0
      %1358 = vmatprep.mubr.bf16.mxu0 0
      %1359 = vmatmul.mubr.bf16.gmra.mrb[0].mxu0 %v833
      %v1360 = vpop.f32.mrb[0].mxu0
      %v1361 = vadd.f32 0.0, %v1360
      %v1362 = vpop.f32.mrb[0].mxu0
      %v1363 = vpop.f32.mrb[0].mxu0
      %v1364 = vadd.f32 0.0, %v1363
      %v1365 = vpop.f32.mrb[0].mxu0
      %1366 = vmatprep.mubr.bf16.mxu0 0
      %1367 = vmatmul.mubr.bf16.gmra.mrb[0].mxu0 %v836
      %v1368 = vpop.f32.mrb[0].mxu0
      %v1369 = vadd.f32 0.0, %v1368
      %v1370 = vpop.f32.mrb[0].mxu0
      %v1371 = vpop.f32.mrb[0].mxu0
      %v1372 = vadd.f32 0.0, %v1371
      %v1373 = vpop.f32.mrb[0].mxu0
      %1374 = vmatprep.mubr.bf16.mxu0 0
      %1375 = vmatmul.mubr.bf16.gmra.mrb[0].mxu0 %v839
      %v1376 = vpop.f32.mrb[0].mxu0
      %v1377 = vadd.f32 0.0, %v1376
      %v1378 = vpop.f32.mrb[0].mxu0
      %v1379 = vpop.f32.mrb[0].mxu0
      %v1380 = vadd.f32 0.0, %v1379
      %v1381 = vpop.f32.mrb[0].mxu0
      %1382 = vmatprep.mubr.bf16.mxu0 0
      %1383 = vmatmul.mubr.bf16.gmra.mrb[0].mxu0 %v842
      %v1384 = vpop.f32.mrb[0].mxu0
      %v1385 = vadd.f32 0.0, %v1384
      %v1386 = vpop.f32.mrb[0].mxu0
      %v1387 = vpop.f32.mrb[0].mxu0
      %v1388 = vadd.f32 0.0, %v1387
      %v1389 = vpop.f32.mrb[0].mxu0
      %1390 = vmatprep.mubr.bf16.mxu0 0
      %1391 = vmatmul.mubr.bf16.gmra.mrb[0].mxu0 %v845
      %v1392 = vpop.f32.mrb[0].mxu0
      %v1393 = vadd.f32 0.0, %v1392
      %v1394 = vpop.f32.mrb[0].mxu0
      %v1395 = vpop.f32.mrb[0].mxu0
      %v1396 = vadd.f32 0.0, %v1395
      %v1397 = vpop.f32.mrb[0].mxu0
      %1398 = vdwg.mxu0
      %v1399 = vld [vmem:[#allocation2] sm:$0x1]
      %v1400 = vadd.f32 %v889, %v892
      %v1401 = vadd.f32 %v1400, %v897
      %v1402 = vadd.f32 %v1401, %v900
      %v1403 = vadd.f32 %v1402, %v905
      %v1404 = vadd.f32 %v1403, %v908
      %v1405 = vadd.f32 %v1404, %v913
      %v1406 = vadd.f32 %v1405, %v916
      %v1407 = vadd.f32 %v1406, %v921
      %v1408 = vadd.f32 %v1407, %v924
      %v1409 = vadd.f32 %v1408, %v929
      %v1410 = vadd.f32 %v1409, %v932
      %v1411 = vadd.f32 %v1410, %v937
      %v1412 = vadd.f32 %v1411, %v940
      %v1413 = vadd.f32 %v1412, %v945
      %v1414 = vadd.f32 %v1413, %v948
      %v1415 = vadd.f32 %v1414, %v953
      %v1416 = vadd.f32 %v1415, %v956
      %v1417 = vadd.f32 %v1416, %v961
      %v1418 = vadd.f32 %v1417, %v964
      %v1419 = vadd.f32 %v1418, %v969
      %v1420 = vadd.f32 %v1419, %v972
      %v1421 = vadd.f32 %v1420, %v977
      %v1422 = vadd.f32 %v1421, %v980
      %v1423 = vadd.f32 %v1422, %v985
      %v1424 = vadd.f32 %v1423, %v988
      %v1425 = vadd.f32 %v1424, %v993
      %v1426 = vadd.f32 %v1425, %v996
      %v1427 = vadd.f32 %v1426, %v1001
      %v1428 = vadd.f32 %v1427, %v1004
      %v1429 = vadd.f32 %v1428, %v1009
      %v1430 = vadd.f32 %v1429, %v1012
      %v1431 = vadd.f32 %v1430, %v1017
      %v1432 = vadd.f32 %v1431, %v1020
      %v1433 = vadd.f32 %v1432, %v1025
      %v1434 = vadd.f32 %v1433, %v1028
      %v1435 = vadd.f32 %v1434, %v1033
      %v1436 = vadd.f32 %v1435, %v1036
      %v1437 = vadd.f32 %v1436, %v1041
      %v1438 = vadd.f32 %v1437, %v1044
      %v1439 = vadd.f32 %v1438, %v1049
      %v1440 = vadd.f32 %v1439, %v1052
      %v1441 = vadd.f32 %v1440, %v1057
      %v1442 = vadd.f32 %v1441, %v1060
      %v1443 = vadd.f32 %v1442, %v1065
      %v1444 = vadd.f32 %v1443, %v1068
      %v1445 = vadd.f32 %v1444, %v1073
      %v1446 = vadd.f32 %v1445, %v1076
      %v1447 = vadd.f32 %v1446, %v1081
      %v1448 = vadd.f32 %v1447, %v1084
      %v1449 = vadd.f32 %v1448, %v1089
      %v1450 = vadd.f32 %v1449, %v1092
      %v1451 = vadd.f32 %v1450, %v1097
      %v1452 = vadd.f32 %v1451, %v1100
      %v1453 = vadd.f32 %v1452, %v1105
      %v1454 = vadd.f32 %v1453, %v1108
      %v1455 = vadd.f32 %v1454, %v1113
      %v1456 = vadd.f32 %v1455, %v1116
      %v1457 = vadd.f32 %v1456, %v1121
      %v1458 = vadd.f32 %v1457, %v1124
      %v1459 = vadd.f32 %v1458, %v1129
      %v1460 = vadd.f32 %v1459, %v1132
      %v1461 = vadd.f32 %v1460, %v1137
      %v1462 = vadd.f32 %v1461, %v1140
      %v1463 = vadd.f32 %v1462, %v1145
      %v1464 = vadd.f32 %v1463, %v1148
      %v1465 = vadd.f32 %v1464, %v1153
      %v1466 = vadd.f32 %v1465, %v1156
      %v1467 = vadd.f32 %v1466, %v1161
      %v1468 = vadd.f32 %v1467, %v1164
      %v1469 = vadd.f32 %v1468, %v1169
      %v1470 = vadd.f32 %v1469, %v1172
      %v1471 = vadd.f32 %v1470, %v1177
      %v1472 = vadd.f32 %v1471, %v1180
      %v1473 = vadd.f32 %v1472, %v1185
      %v1474 = vadd.f32 %v1473, %v1188
      %v1475 = vadd.f32 %v1474, %v1193
      %v1476 = vadd.f32 %v1475, %v1196
      %v1477 = vadd.f32 %v1476, %v1201
      %v1478 = vadd.f32 %v1477, %v1204
      %v1479 = vadd.f32 %v1478, %v1209
      %v1480 = vadd.f32 %v1479, %v1212
      %v1481 = vadd.f32 %v1480, %v1217
      %v1482 = vadd.f32 %v1481, %v1220
      %v1483 = vadd.f32 %v1482, %v1225
      %v1484 = vadd.f32 %v1483, %v1228
      %v1485 = vadd.f32 %v1484, %v1233
      %v1486 = vadd.f32 %v1485, %v1236
      %v1487 = vadd.f32 %v1486, %v1241
      %v1488 = vadd.f32 %v1487, %v1244
      %v1489 = vadd.f32 %v1488, %v1249
      %v1490 = vadd.f32 %v1489, %v1252
      %v1491 = vadd.f32 %v1490, %v1257
      %v1492 = vadd.f32 %v1491, %v1260
      %v1493 = vadd.f32 %v1492, %v1265
      %v1494 = vadd.f32 %v1493, %v1268
      %v1495 = vadd.f32 %v1494, %v1273
      %v1496 = vadd.f32 %v1495, %v1276
      %v1497 = vadd.f32 %v1496, %v1281
      %v1498 = vadd.f32 %v1497, %v1284
      %v1499 = vadd.f32 %v1498, %v1289
      %v1500 = vadd.f32 %v1499, %v1292
      %v1501 = vadd.f32 %v1500, %v1297
      %v1502 = vadd.f32 %v1501, %v1300
      %v1503 = vadd.f32 %v1502, %v1305
      %v1504 = vadd.f32 %v1503, %v1308
      %v1505 = vadd.f32 %v1504, %v1313
      %v1506 = vadd.f32 %v1505, %v1316
      %v1507 = vadd.f32 %v1506, %v1321
      %v1508 = vadd.f32 %v1507, %v1324
      %v1509 = vadd.f32 %v1508, %v1329
      %v1510 = vadd.f32 %v1509, %v1332
      %v1511 = vadd.f32 %v1510, %v1337
      %v1512 = vadd.f32 %v1511, %v1340
      %v1513 = vadd.f32 %v1512, %v1345
      %v1514 = vadd.f32 %v1513, %v1348
      %v1515 = vadd.f32 %v1514, %v1353
      %v1516 = vadd.f32 %v1515, %v1356
      %v1517 = vadd.f32 %v1516, %v1361
      %v1518 = vadd.f32 %v1517, %v1364
      %v1519 = vadd.f32 %v1518, %v1369
      %v1520 = vadd.f32 %v1519, %v1372
      %v1521 = vadd.f32 %v1520, %v1377
      %v1522 = vadd.f32 %v1521, %v1380
      %v1523 = vadd.f32 %v1522, %v1385
      %v1524 = vadd.f32 %v1523, %v1388
      %v1525 = vadd.f32 %v1524, %v1393
      %v1526 = vadd.f32 %v1525, %v1396
      %v1527 = vrot.slane %v1526, 4
      %v1528 = vadd.f32 %v1526, %v1527
      %v1529 = vrot.slane %v1528, 2
      %v1530 = vadd.f32 %v1528, %v1529
      %v1531 = vrot.slane %v1530, 1
      %v1532 = vadd.f32 %v1530, %v1531
      %v1533 = vadd.f32 %v1399, %v1532
      %1534 = vst [vmem:[#allocation2] sm:$0x1] %v1533
      %s1535 = smul.u32 %s15, 1024
      %v1536 = vpack.c.bf16 %v892, %v889
      %v1537 = vpack.c.bf16 %v900, %v897
      %v1538 = vpack.c.bf16 %v908, %v905
      %v1539 = vpack.c.bf16 %v916, %v913
      %v1540 = vpack.c.bf16 %v924, %v921
      %v1541 = vpack.c.bf16 %v932, %v929
      %v1542 = vpack.c.bf16 %v940, %v937
      %v1543 = vpack.c.bf16 %v948, %v945
      %v1544 = vpack.c.bf16 %v956, %v953
      %v1545 = vpack.c.bf16 %v964, %v961
      %v1546 = vpack.c.bf16 %v972, %v969
      %v1547 = vpack.c.bf16 %v980, %v977
      %v1548 = vpack.c.bf16 %v988, %v985
      %v1549 = vpack.c.bf16 %v996, %v993
      %v1550 = vpack.c.bf16 %v1004, %v1001
      %v1551 = vpack.c.bf16 %v1012, %v1009
      %v1552 = vpack.c.bf16 %v1020, %v1017
      %v1553 = vpack.c.bf16 %v1028, %v1025
      %v1554 = vpack.c.bf16 %v1036, %v1033
      %v1555 = vpack.c.bf16 %v1044, %v1041
      %v1556 = vpack.c.bf16 %v1052, %v1049
      %v1557 = vpack.c.bf16 %v1060, %v1057
      %v1558 = vpack.c.bf16 %v1068, %v1065
      %v1559 = vpack.c.bf16 %v1076, %v1073
      %v1560 = vpack.c.bf16 %v1084, %v1081
      %v1561 = vpack.c.bf16 %v1092, %v1089
      %v1562 = vpack.c.bf16 %v1100, %v1097
      %v1563 = vpack.c.bf16 %v1108, %v1105
      %v1564 = vpack.c.bf16 %v1116, %v1113
      %v1565 = vpack.c.bf16 %v1124, %v1121
      %v1566 = vpack.c.bf16 %v1132, %v1129
      %v1567 = vpack.c.bf16 %v1140, %v1137
      %v1568 = vpack.c.bf16 %v1148, %v1145
      %v1569 = vpack.c.bf16 %v1156, %v1153
      %v1570 = vpack.c.bf16 %v1164, %v1161
      %v1571 = vpack.c.bf16 %v1172, %v1169
      %v1572 = vpack.c.bf16 %v1180, %v1177
      %v1573 = vpack.c.bf16 %v1188, %v1185
      %v1574 = vpack.c.bf16 %v1196, %v1193
      %v1575 = vpack.c.bf16 %v1204, %v1201
      %v1576 = vpack.c.bf16 %v1212, %v1209
      %v1577 = vpack.c.bf16 %v1220, %v1217
      %v1578 = vpack.c.bf16 %v1228, %v1225
      %v1579 = vpack.c.bf16 %v1236, %v1233
      %v1580 = vpack.c.bf16 %v1244, %v1241
      %v1581 = vpack.c.bf16 %v1252, %v1249
      %v1582 = vpack.c.bf16 %v1260, %v1257
      %v1583 = vpack.c.bf16 %v1268, %v1265
      %v1584 = vpack.c.bf16 %v1276, %v1273
      %v1585 = vpack.c.bf16 %v1284, %v1281
      %v1586 = vpack.c.bf16 %v1292, %v1289
      %v1587 = vpack.c.bf16 %v1300, %v1297
      %v1588 = vpack.c.bf16 %v1308, %v1305
      %v1589 = vpack.c.bf16 %v1316, %v1313
      %v1590 = vpack.c.bf16 %v1324, %v1321
      %v1591 = vpack.c.bf16 %v1332, %v1329
      %v1592 = vpack.c.bf16 %v1340, %v1337
      %v1593 = vpack.c.bf16 %v1348, %v1345
      %v1594 = vpack.c.bf16 %v1356, %v1353
      %v1595 = vpack.c.bf16 %v1364, %v1361
      %v1596 = vpack.c.bf16 %v1372, %v1369
      %v1597 = vpack.c.bf16 %v1380, %v1377
      %v1598 = vpack.c.bf16 %v1388, %v1385
      %v1599 = vpack.c.bf16 %v1396, %v1393
      %v1664 = vunpack.c.l.b16 %v1536
      %v1665 = vunpack.c.h.b16 %v1536
      %v1666 = vunpack.c.l.b16 %v1537
      %v1667 = vunpack.c.h.b16 %v1537
      %v1668 = vunpack.c.l.b16 %v1538
      %v1669 = vunpack.c.h.b16 %v1538
      %v1670 = vunpack.c.l.b16 %v1539
      %v1671 = vunpack.c.h.b16 %v1539
      %v1672 = vunpack.c.l.b16 %v1540
      %v1673 = vunpack.c.h.b16 %v1540
      %v1674 = vunpack.c.l.b16 %v1541
      %v1675 = vunpack.c.h.b16 %v1541
      %v1676 = vunpack.c.l.b16 %v1542
      %v1677 = vunpack.c.h.b16 %v1542
      %v1678 = vunpack.c.l.b16 %v1543
      %v1679 = vunpack.c.h.b16 %v1543
      %v1680 = vunpack.c.l.b16 %v1544
      %v1681 = vunpack.c.h.b16 %v1544
      %v1682 = vunpack.c.l.b16 %v1545
      %v1683 = vunpack.c.h.b16 %v1545
      %v1684 = vunpack.c.l.b16 %v1546
      %v1685 = vunpack.c.h.b16 %v1546
      %v1686 = vunpack.c.l.b16 %v1547
      %v1687 = vunpack.c.h.b16 %v1547
      %v1688 = vunpack.c.l.b16 %v1548
      %v1689 = vunpack.c.h.b16 %v1548
      %v1690 = vunpack.c.l.b16 %v1549
      %v1691 = vunpack.c.h.b16 %v1549
      %v1692 = vunpack.c.l.b16 %v1550
      %v1693 = vunpack.c.h.b16 %v1550
      %v1694 = vunpack.c.l.b16 %v1551
      %v1695 = vunpack.c.h.b16 %v1551
      %v1696 = vunpack.c.l.b16 %v1552
      %v1697 = vunpack.c.h.b16 %v1552
      %v1698 = vunpack.c.l.b16 %v1553
      %v1699 = vunpack.c.h.b16 %v1553
      %v1700 = vunpack.c.l.b16 %v1554
      %v1701 = vunpack.c.h.b16 %v1554
      %v1702 = vunpack.c.l.b16 %v1555
      %v1703 = vunpack.c.h.b16 %v1555
      %v1704 = vunpack.c.l.b16 %v1556
      %v1705 = vunpack.c.h.b16 %v1556
      %v1706 = vunpack.c.l.b16 %v1557
      %v1707 = vunpack.c.h.b16 %v1557
      %v1708 = vunpack.c.l.b16 %v1558
      %v1709 = vunpack.c.h.b16 %v1558
      %v1710 = vunpack.c.l.b16 %v1559
      %v1711 = vunpack.c.h.b16 %v1559
      %v1712 = vunpack.c.l.b16 %v1560
      %v1713 = vunpack.c.h.b16 %v1560
      %v1714 = vunpack.c.l.b16 %v1561
      %v1715 = vunpack.c.h.b16 %v1561
      %v1716 = vunpack.c.l.b16 %v1562
      %v1717 = vunpack.c.h.b16 %v1562
      %v1718 = vunpack.c.l.b16 %v1563
      %v1719 = vunpack.c.h.b16 %v1563
      %v1720 = vunpack.c.l.b16 %v1564
      %v1721 = vunpack.c.h.b16 %v1564
      %v1722 = vunpack.c.l.b16 %v1565
      %v1723 = vunpack.c.h.b16 %v1565
      %v1724 = vunpack.c.l.b16 %v1566
      %v1725 = vunpack.c.h.b16 %v1566
      %v1726 = vunpack.c.l.b16 %v1567
      %v1727 = vunpack.c.h.b16 %v1567
      %v1728 = vunpack.c.l.b16 %v1568
      %v1729 = vunpack.c.h.b16 %v1568
      %v1730 = vunpack.c.l.b16 %v1569
      %v1731 = vunpack.c.h.b16 %v1569
      %v1732 = vunpack.c.l.b16 %v1570
      %v1733 = vunpack.c.h.b16 %v1570
      %v1734 = vunpack.c.l.b16 %v1571
      %v1735 = vunpack.c.h.b16 %v1571
      %v1736 = vunpack.c.l.b16 %v1572
      %v1737 = vunpack.c.h.b16 %v1572
      %v1738 = vunpack.c.l.b16 %v1573
      %v1739 = vunpack.c.h.b16 %v1573
      %v1740 = vunpack.c.l.b16 %v1574
      %v1741 = vunpack.c.h.b16 %v1574
      %v1742 = vunpack.c.l.b16 %v1575
      %v1743 = vunpack.c.h.b16 %v1575
      %v1744 = vunpack.c.l.b16 %v1576
      %v1745 = vunpack.c.h.b16 %v1576
      %v1746 = vunpack.c.l.b16 %v1577
      %v1747 = vunpack.c.h.b16 %v1577
      %v1748 = vunpack.c.l.b16 %v1578
      %v1749 = vunpack.c.h.b16 %v1578
      %v1750 = vunpack.c.l.b16 %v1579
      %v1751 = vunpack.c.h.b16 %v1579
      %v1752 = vunpack.c.l.b16 %v1580
      %v1753 = vunpack.c.h.b16 %v1580
      %v1754 = vunpack.c.l.b16 %v1581
      %v1755 = vunpack.c.h.b16 %v1581
      %v1756 = vunpack.c.l.b16 %v1582
      %v1757 = vunpack.c.h.b16 %v1582
      %v1758 = vunpack.c.l.b16 %v1583
      %v1759 = vunpack.c.h.b16 %v1583
      %v1760 = vunpack.c.l.b16 %v1584
      %v1761 = vunpack.c.h.b16 %v1584
      %v1762 = vunpack.c.l.b16 %v1585
      %v1763 = vunpack.c.h.b16 %v1585
      %v1764 = vunpack.c.l.b16 %v1586
      %v1765 = vunpack.c.h.b16 %v1586
      %v1766 = vunpack.c.l.b16 %v1587
      %v1767 = vunpack.c.h.b16 %v1587
      %v1768 = vunpack.c.l.b16 %v1588
      %v1769 = vunpack.c.h.b16 %v1588
      %v1770 = vunpack.c.l.b16 %v1589
      %v1771 = vunpack.c.h.b16 %v1589
      %v1772 = vunpack.c.l.b16 %v1590
      %v1773 = vunpack.c.h.b16 %v1590
      %v1774 = vunpack.c.l.b16 %v1591
      %v1775 = vunpack.c.h.b16 %v1591
      %v1776 = vunpack.c.l.b16 %v1592
      %v1777 = vunpack.c.h.b16 %v1592
      %v1778 = vunpack.c.l.b16 %v1593
      %v1779 = vunpack.c.h.b16 %v1593
      %v1780 = vunpack.c.l.b16 %v1594
      %v1781 = vunpack.c.h.b16 %v1594
      %v1782 = vunpack.c.l.b16 %v1595
      %v1783 = vunpack.c.h.b16 %v1595
      %v1784 = vunpack.c.l.b16 %v1596
      %v1785 = vunpack.c.h.b16 %v1596
      %v1786 = vunpack.c.l.b16 %v1597
      %v1787 = vunpack.c.h.b16 %v1597
      %v1788 = vunpack.c.l.b16 %v1598
      %v1789 = vunpack.c.h.b16 %v1598
      %v1790 = vunpack.c.l.b16 %v1599
      %v1791 = vunpack.c.h.b16 %v1599
      %v1792 = vpack.c.b16 %v1664, %v1664
      %v1793 = vpack.c.b16 %v1665, %v1665
      %v1794 = vpack.c.b16 %v1666, %v1666
      %v1795 = vpack.c.b16 %v1667, %v1667
      %v1796 = vpack.c.b16 %v1668, %v1668
      %v1797 = vpack.c.b16 %v1669, %v1669
      %v1798 = vpack.c.b16 %v1670, %v1670
      %v1799 = vpack.c.b16 %v1671, %v1671
      %v1800 = vpack.c.b16 %v1672, %v1672
      %v1801 = vpack.c.b16 %v1673, %v1673
      %v1802 = vpack.c.b16 %v1674, %v1674
      %v1803 = vpack.c.b16 %v1675, %v1675
      %v1804 = vpack.c.b16 %v1676, %v1676
      %v1805 = vpack.c.b16 %v1677, %v1677
      %v1806 = vpack.c.b16 %v1678, %v1678
      %v1807 = vpack.c.b16 %v1679, %v1679
      %v1808 = vpack.c.b16 %v1680, %v1680
      %v1809 = vpack.c.b16 %v1681, %v1681
      %v1810 = vpack.c.b16 %v1682, %v1682
      %v1811 = vpack.c.b16 %v1683, %v1683
      %v1812 = vpack.c.b16 %v1684, %v1684
      %v1813 = vpack.c.b16 %v1685, %v1685
      %v1814 = vpack.c.b16 %v1686, %v1686
      %v1815 = vpack.c.b16 %v1687, %v1687
      %v1816 = vpack.c.b16 %v1688, %v1688
      %v1817 = vpack.c.b16 %v1689, %v1689
      %v1818 = vpack.c.b16 %v1690, %v1690
      %v1819 = vpack.c.b16 %v1691, %v1691
      %v1820 = vpack.c.b16 %v1692, %v1692
      %v1821 = vpack.c.b16 %v1693, %v1693
      %v1822 = vpack.c.b16 %v1694, %v1694
      %v1823 = vpack.c.b16 %v1695, %v1695
      %v1824 = vpack.c.b16 %v1696, %v1696
      %v1825 = vpack.c.b16 %v1697, %v1697
      %v1826 = vpack.c.b16 %v1698, %v1698
      %v1827 = vpack.c.b16 %v1699, %v1699
      %v1828 = vpack.c.b16 %v1700, %v1700
      %v1829 = vpack.c.b16 %v1701, %v1701
      %v1830 = vpack.c.b16 %v1702, %v1702
      %v1831 = vpack.c.b16 %v1703, %v1703
      %v1832 = vpack.c.b16 %v1704, %v1704
      %v1833 = vpack.c.b16 %v1705, %v1705
      %v1834 = vpack.c.b16 %v1706, %v1706
      %v1835 = vpack.c.b16 %v1707, %v1707
      %v1836 = vpack.c.b16 %v1708, %v1708
      %v1837 = vpack.c.b16 %v1709, %v1709
      %v1838 = vpack.c.b16 %v1710, %v1710
      %v1839 = vpack.c.b16 %v1711, %v1711
      %v1840 = vpack.c.b16 %v1712, %v1712
      %v1841 = vpack.c.b16 %v1713, %v1713
      %v1842 = vpack.c.b16 %v1714, %v1714
      %v1843 = vpack.c.b16 %v1715, %v1715
      %v1844 = vpack.c.b16 %v1716, %v1716
      %v1845 = vpack.c.b16 %v1717, %v1717
      %v1846 = vpack.c.b16 %v1718, %v1718
      %v1847 = vpack.c.b16 %v1719, %v1719
      %v1848 = vpack.c.b16 %v1720, %v1720
      %v1849 = vpack.c.b16 %v1721, %v1721
      %v1850 = vpack.c.b16 %v1722, %v1722
      %v1851 = vpack.c.b16 %v1723, %v1723
      %v1852 = vpack.c.b16 %v1724, %v1724
      %v1853 = vpack.c.b16 %v1725, %v1725
      %v1854 = vpack.c.b16 %v1726, %v1726
      %v1855 = vpack.c.b16 %v1727, %v1727
      %v1856 = vpack.c.b16 %v1728, %v1728
      %v1857 = vpack.c.b16 %v1729, %v1729
      %v1858 = vpack.c.b16 %v1730, %v1730
      %v1859 = vpack.c.b16 %v1731, %v1731
      %v1860 = vpack.c.b16 %v1732, %v1732
      %v1861 = vpack.c.b16 %v1733, %v1733
      %v1862 = vpack.c.b16 %v1734, %v1734
      %v1863 = vpack.c.b16 %v1735, %v1735
      %v1864 = vpack.c.b16 %v1736, %v1736
      %v1865 = vpack.c.b16 %v1737, %v1737
      %v1866 = vpack.c.b16 %v1738, %v1738
      %v1867 = vpack.c.b16 %v1739, %v1739
      %v1868 = vpack.c.b16 %v1740, %v1740
      %v1869 = vpack.c.b16 %v1741, %v1741
      %v1870 = vpack.c.b16 %v1742, %v1742
      %v1871 = vpack.c.b16 %v1743, %v1743
      %v1872 = vpack.c.b16 %v1744, %v1744
      %v1873 = vpack.c.b16 %v1745, %v1745
      %v1874 = vpack.c.b16 %v1746, %v1746
      %v1875 = vpack.c.b16 %v1747, %v1747
      %v1876 = vpack.c.b16 %v1748, %v1748
      %v1877 = vpack.c.b16 %v1749, %v1749
      %v1878 = vpack.c.b16 %v1750, %v1750
      %v1879 = vpack.c.b16 %v1751, %v1751
      %v1880 = vpack.c.b16 %v1752, %v1752
      %v1881 = vpack.c.b16 %v1753, %v1753
      %v1882 = vpack.c.b16 %v1754, %v1754
      %v1883 = vpack.c.b16 %v1755, %v1755
      %v1884 = vpack.c.b16 %v1756, %v1756
      %v1885 = vpack.c.b16 %v1757, %v1757
      %v1886 = vpack.c.b16 %v1758, %v1758
      %v1887 = vpack.c.b16 %v1759, %v1759
      %v1888 = vpack.c.b16 %v1760, %v1760
      %v1889 = vpack.c.b16 %v1761, %v1761
      %v1890 = vpack.c.b16 %v1762, %v1762
      %v1891 = vpack.c.b16 %v1763, %v1763
      %v1892 = vpack.c.b16 %v1764, %v1764
      %v1893 = vpack.c.b16 %v1765, %v1765
      %v1894 = vpack.c.b16 %v1766, %v1766
      %v1895 = vpack.c.b16 %v1767, %v1767
      %v1896 = vpack.c.b16 %v1768, %v1768
      %v1897 = vpack.c.b16 %v1769, %v1769
      %v1898 = vpack.c.b16 %v1770, %v1770
      %v1899 = vpack.c.b16 %v1771, %v1771
      %v1900 = vpack.c.b16 %v1772, %v1772
      %v1901 = vpack.c.b16 %v1773, %v1773
      %v1902 = vpack.c.b16 %v1774, %v1774
      %v1903 = vpack.c.b16 %v1775, %v1775
      %v1904 = vpack.c.b16 %v1776, %v1776
      %v1905 = vpack.c.b16 %v1777, %v1777
      %v1906 = vpack.c.b16 %v1778, %v1778
      %v1907 = vpack.c.b16 %v1779, %v1779
      %v1908 = vpack.c.b16 %v1780, %v1780
      %v1909 = vpack.c.b16 %v1781, %v1781
      %v1910 = vpack.c.b16 %v1782, %v1782
      %v1911 = vpack.c.b16 %v1783, %v1783
      %v1912 = vpack.c.b16 %v1784, %v1784
      %v1913 = vpack.c.b16 %v1785, %v1785
      %v1914 = vpack.c.b16 %v1786, %v1786
      %v1915 = vpack.c.b16 %v1787, %v1787
      %v1916 = vpack.c.b16 %v1788, %v1788
      %v1917 = vpack.c.b16 %v1789, %v1789
      %v1918 = vpack.c.b16 %v1790, %v1790
      %v1919 = vpack.c.b16 %v1791, %v1791
      %s2048 = sshra.s32 %s1535, 3
      %s2049 = sand.u32 %s1535, 7
      %s2050 = smul.addr %s2048, 4
      %s2051 = scalar_lea.vmem %s4, %s2050
      %2052 = vst [vmem:[%s2051] sm:$0xf] %v1792
      %2053 = vst [vmem:[%s2051 + $0x4] sm:$0xf] %v1793
      %2054 = vst [vmem:[%s2051 + $0x8] sm:$0xf] %v1794
      %2055 = vst [vmem:[%s2051 + $0xc] sm:$0xf] %v1795
      %2056 = vst [vmem:[%s2051 + $0x10] sm:$0xf] %v1796
      %2057 = vst [vmem:[%s2051 + $0x14] sm:$0xf] %v1797
      %2058 = vst [vmem:[%s2051 + $0x18] sm:$0xf] %v1798
      %2059 = vst [vmem:[%s2051 + $0x1c] sm:$0xf] %v1799
      %2060 = vst [vmem:[%s2051 + $0x20] sm:$0xf] %v1800
      %2061 = vst [vmem:[%s2051 + $0x24] sm:$0xf] %v1801
      %2062 = vst [vmem:[%s2051 + $0x28] sm:$0xf] %v1802
      %2063 = vst [vmem:[%s2051 + $0x2c] sm:$0xf] %v1803
      %2064 = vst [vmem:[%s2051 + $0x30] sm:$0xf] %v1804
      %2065 = vst [vmem:[%s2051 + $0x34] sm:$0xf] %v1805
      %2066 = vst [vmem:[%s2051 + $0x38] sm:$0xf] %v1806
      %2067 = vst [vmem:[%s2051 + $0x3c] sm:$0xf] %v1807
      %2068 = vst [vmem:[%s2051 + $0x40] sm:$0xf] %v1808
      %2069 = vst [vmem:[%s2051 + $0x44] sm:$0xf] %v1809
      %2070 = vst [vmem:[%s2051 + $0x48] sm:$0xf] %v1810
      %2071 = vst [vmem:[%s2051 + $0x4c] sm:$0xf] %v1811
      %2072 = vst [vmem:[%s2051 + $0x50] sm:$0xf] %v1812
      %2073 = vst [vmem:[%s2051 + $0x54] sm:$0xf] %v1813
      %2074 = vst [vmem:[%s2051 + $0x58] sm:$0xf] %v1814
      %2075 = vst [vmem:[%s2051 + $0x5c] sm:$0xf] %v1815
      %2076 = vst [vmem:[%s2051 + $0x60] sm:$0xf] %v1816
      %2077 = vst [vmem:[%s2051 + $0x64] sm:$0xf] %v1817
      %2078 = vst [vmem:[%s2051 + $0x68] sm:$0xf] %v1818
      %2079 = vst [vmem:[%s2051 + $0x6c] sm:$0xf] %v1819
      %2080 = vst [vmem:[%s2051 + $0x70] sm:$0xf] %v1820
      %2081 = vst [vmem:[%s2051 + $0x74] sm:$0xf] %v1821
      %2082 = vst [vmem:[%s2051 + $0x78] sm:$0xf] %v1822
      %2083 = vst [vmem:[%s2051 + $0x7c] sm:$0xf] %v1823
      %2084 = vst [vmem:[%s2051 + $0x80] sm:$0xf] %v1824
      %2085 = vst [vmem:[%s2051 + $0x84] sm:$0xf] %v1825
      %2086 = vst [vmem:[%s2051 + $0x88] sm:$0xf] %v1826
      %2087 = vst [vmem:[%s2051 + $0x8c] sm:$0xf] %v1827
      %2088 = vst [vmem:[%s2051 + $0x90] sm:$0xf] %v1828
      %2089 = vst [vmem:[%s2051 + $0x94] sm:$0xf] %v1829
      %2090 = vst [vmem:[%s2051 + $0x98] sm:$0xf] %v1830
      %2091 = vst [vmem:[%s2051 + $0x9c] sm:$0xf] %v1831
      %2092 = vst [vmem:[%s2051 + $0xa0] sm:$0xf] %v1832
      %2093 = vst [vmem:[%s2051 + $0xa4] sm:$0xf] %v1833
      %2094 = vst [vmem:[%s2051 + $0xa8] sm:$0xf] %v1834
      %2095 = vst [vmem:[%s2051 + $0xac] sm:$0xf] %v1835
      %2096 = vst [vmem:[%s2051 + $0xb0] sm:$0xf] %v1836
      %2097 = vst [vmem:[%s2051 + $0xb4] sm:$0xf] %v1837
      %2098 = vst [vmem:[%s2051 + $0xb8] sm:$0xf] %v1838
      %2099 = vst [vmem:[%s2051 + $0xbc] sm:$0xf] %v1839
      %2100 = vst [vmem:[%s2051 + $0xc0] sm:$0xf] %v1840
      %2101 = vst [vmem:[%s2051 + $0xc4] sm:$0xf] %v1841
      %2102 = vst [vmem:[%s2051 + $0xc8] sm:$0xf] %v1842
      %2103 = vst [vmem:[%s2051 + $0xcc] sm:$0xf] %v1843
      %2104 = vst [vmem:[%s2051 + $0xd0] sm:$0xf] %v1844
      %2105 = vst [vmem:[%s2051 + $0xd4] sm:$0xf] %v1845
      %2106 = vst [vmem:[%s2051 + $0xd8] sm:$0xf] %v1846
      %2107 = vst [vmem:[%s2051 + $0xdc] sm:$0xf] %v1847
      %2108 = vst [vmem:[%s2051 + $0xe0] sm:$0xf] %v1848
      %2109 = vst [vmem:[%s2051 + $0xe4] sm:$0xf] %v1849
      %2110 = vst [vmem:[%s2051 + $0xe8] sm:$0xf] %v1850
      %2111 = vst [vmem:[%s2051 + $0xec] sm:$0xf] %v1851
      %2112 = vst [vmem:[%s2051 + $0xf0] sm:$0xf] %v1852
      %2113 = vst [vmem:[%s2051 + $0xf4] sm:$0xf] %v1853
      %2114 = vst [vmem:[%s2051 + $0xf8] sm:$0xf] %v1854
      %2115 = vst [vmem:[%s2051 + $0xfc] sm:$0xf] %v1855
      %2116 = vst [vmem:[%s2051 + $0x100] sm:$0xf] %v1856
      %2117 = vst [vmem:[%s2051 + $0x104] sm:$0xf] %v1857
      %2118 = vst [vmem:[%s2051 + $0x108] sm:$0xf] %v1858
      %2119 = vst [vmem:[%s2051 + $0x10c] sm:$0xf] %v1859
      %2120 = vst [vmem:[%s2051 + $0x110] sm:$0xf] %v1860
      %2121 = vst [vmem:[%s2051 + $0x114] sm:$0xf] %v1861
      %2122 = vst [vmem:[%s2051 + $0x118] sm:$0xf] %v1862
      %2123 = vst [vmem:[%s2051 + $0x11c] sm:$0xf] %v1863
      %2124 = vst [vmem:[%s2051 + $0x120] sm:$0xf] %v1864
      %2125 = vst [vmem:[%s2051 + $0x124] sm:$0xf] %v1865
      %2126 = vst [vmem:[%s2051 + $0x128] sm:$0xf] %v1866
      %2127 = vst [vmem:[%s2051 + $0x12c] sm:$0xf] %v1867
      %2128 = vst [vmem:[%s2051 + $0x130] sm:$0xf] %v1868
      %2129 = vst [vmem:[%s2051 + $0x134] sm:$0xf] %v1869
      %2130 = vst [vmem:[%s2051 + $0x138] sm:$0xf] %v1870
      %2131 = vst [vmem:[%s2051 + $0x13c] sm:$0xf] %v1871
      %2132 = vst [vmem:[%s2051 + $0x140] sm:$0xf] %v1872
      %2133 = vst [vmem:[%s2051 + $0x144] sm:$0xf] %v1873
      %2134 = vst [vmem:[%s2051 + $0x148] sm:$0xf] %v1874
      %2135 = vst [vmem:[%s2051 + $0x14c] sm:$0xf] %v1875
      %2136 = vst [vmem:[%s2051 + $0x150] sm:$0xf] %v1876
      %2137 = vst [vmem:[%s2051 + $0x154] sm:$0xf] %v1877
      %2138 = vst [vmem:[%s2051 + $0x158] sm:$0xf] %v1878
      %2139 = vst [vmem:[%s2051 + $0x15c] sm:$0xf] %v1879
      %2140 = vst [vmem:[%s2051 + $0x160] sm:$0xf] %v1880
      %2141 = vst [vmem:[%s2051 + $0x164] sm:$0xf] %v1881
      %2142 = vst [vmem:[%s2051 + $0x168] sm:$0xf] %v1882
      %2143 = vst [vmem:[%s2051 + $0x16c] sm:$0xf] %v1883
      %2144 = vst [vmem:[%s2051 + $0x170] sm:$0xf] %v1884
      %2145 = vst [vmem:[%s2051 + $0x174] sm:$0xf] %v1885
      %2146 = vst [vmem:[%s2051 + $0x178] sm:$0xf] %v1886
      %2147 = vst [vmem:[%s2051 + $0x17c] sm:$0xf] %v1887
      %2148 = vst [vmem:[%s2051 + $0x180] sm:$0xf] %v1888
      %2149 = vst [vmem:[%s2051 + $0x184] sm:$0xf] %v1889
      %2150 = vst [vmem:[%s2051 + $0x188] sm:$0xf] %v1890
      %2151 = vst [vmem:[%s2051 + $0x18c] sm:$0xf] %v1891
      %2152 = vst [vmem:[%s2051 + $0x190] sm:$0xf] %v1892
      %2153 = vst [vmem:[%s2051 + $0x194] sm:$0xf] %v1893
      %2154 = vst [vmem:[%s2051 + $0x198] sm:$0xf] %v1894
      %2155 = vst [vmem:[%s2051 + $0x19c] sm:$0xf] %v1895
      %2156 = vst [vmem:[%s2051 + $0x1a0] sm:$0xf] %v1896
      %2157 = vst [vmem:[%s2051 + $0x1a4] sm:$0xf] %v1897
      %2158 = vst [vmem:[%s2051 + $0x1a8] sm:$0xf] %v1898
      %2159 = vst [vmem:[%s2051 + $0x1ac] sm:$0xf] %v1899
      %2160 = vst [vmem:[%s2051 + $0x1b0] sm:$0xf] %v1900
      %2161 = vst [vmem:[%s2051 + $0x1b4] sm:$0xf] %v1901
      %2162 = vst [vmem:[%s2051 + $0x1b8] sm:$0xf] %v1902
      %2163 = vst [vmem:[%s2051 + $0x1bc] sm:$0xf] %v1903
      %2164 = vst [vmem:[%s2051 + $0x1c0] sm:$0xf] %v1904
      %2165 = vst [vmem:[%s2051 + $0x1c4] sm:$0xf] %v1905
      %2166 = vst [vmem:[%s2051 + $0x1c8] sm:$0xf] %v1906
      %2167 = vst [vmem:[%s2051 + $0x1cc] sm:$0xf] %v1907
      %2168 = vst [vmem:[%s2051 + $0x1d0] sm:$0xf] %v1908
      %2169 = vst [vmem:[%s2051 + $0x1d4] sm:$0xf] %v1909
      %2170 = vst [vmem:[%s2051 + $0x1d8] sm:$0xf] %v1910
      %2171 = vst [vmem:[%s2051 + $0x1dc] sm:$0xf] %v1911
      %2172 = vst [vmem:[%s2051 + $0x1e0] sm:$0xf] %v1912
      %2173 = vst [vmem:[%s2051 + $0x1e4] sm:$0xf] %v1913
      %2174 = vst [vmem:[%s2051 + $0x1e8] sm:$0xf] %v1914
      %2175 = vst [vmem:[%s2051 + $0x1ec] sm:$0xf] %v1915
      %2176 = vst [vmem:[%s2051 + $0x1f0] sm:$0xf] %v1916
      %2177 = vst [vmem:[%s2051 + $0x1f4] sm:$0xf] %v1917
      %2178 = vst [vmem:[%s2051 + $0x1f8] sm:$0xf] %v1918
      %2179 = vst [vmem:[%s2051 + $0x1fc] sm:$0xf] %v1919
      %p2180 = scmp.eq.s32.totalorder %s15, 1
      // Predicated region
      $region41: #{_lambda_.5} parent=35 // pred_check
        %p2181 = pneg %p2180
      $region42: #{_lambda_.5} parent=35 // pred_check_branch
        %2183 = sbr.rel (%p2181) target = $region44
      $region43: #{_lambda_.5} parent=35 // pred_region
        %v2184 = vld [vmem:[#allocation2] sm:$0x1]
        %v2185 = vmul.f32 %v2184, 0.00048828125
        %v2186 = vld [vmem:[%s4] sm:$0xf]
        %v2187 = vld [vmem:[%s4 + $0x4] sm:$0xf]
        %v2188 = vld [vmem:[%s4 + $0x8] sm:$0xf]
        %v2189 = vld [vmem:[%s4 + $0xc] sm:$0xf]
        %v2190 = vld [vmem:[%s4 + $0x10] sm:$0xf]
        %v2191 = vld [vmem:[%s4 + $0x14] sm:$0xf]
        %v2192 = vld [vmem:[%s4 + $0x18] sm:$0xf]
        %v2193 = vld [vmem:[%s4 + $0x1c] sm:$0xf]
        %v2194 = vld [vmem:[%s4 + $0x20] sm:$0xf]
        %v2195 = vld [vmem:[%s4 + $0x24] sm:$0xf]
        %v2196 = vld [vmem:[%s4 + $0x28] sm:$0xf]
        %v2197 = vld [vmem:[%s4 + $0x2c] sm:$0xf]
        %v2198 = vld [vmem:[%s4 + $0x30] sm:$0xf]
        %v2199 = vld [vmem:[%s4 + $0x34] sm:$0xf]
        %v2200 = vld [vmem:[%s4 + $0x38] sm:$0xf]
        %v2201 = vld [vmem:[%s4 + $0x3c] sm:$0xf]
        %v2202 = vld [vmem:[%s4 + $0x40] sm:$0xf]
        %v2203 = vld [vmem:[%s4 + $0x44] sm:$0xf]
        %v2204 = vld [vmem:[%s4 + $0x48] sm:$0xf]
        %v2205 = vld [vmem:[%s4 + $0x4c] sm:$0xf]
        %v2206 = vld [vmem:[%s4 + $0x50] sm:$0xf]
        %v2207 = vld [vmem:[%s4 + $0x54] sm:$0xf]
        %v2208 = vld [vmem:[%s4 + $0x58] sm:$0xf]
        %v2209 = vld [vmem:[%s4 + $0x5c] sm:$0xf]
        %v2210 = vld [vmem:[%s4 + $0x60] sm:$0xf]
        %v2211 = vld [vmem:[%s4 + $0x64] sm:$0xf]
        %v2212 = vld [vmem:[%s4 + $0x68] sm:$0xf]
        %v2213 = vld [vmem:[%s4 + $0x6c] sm:$0xf]
        %v2214 = vld [vmem:[%s4 + $0x70] sm:$0xf]
        %v2215 = vld [vmem:[%s4 + $0x74] sm:$0xf]
        %v2216 = vld [vmem:[%s4 + $0x78] sm:$0xf]
        %v2217 = vld [vmem:[%s4 + $0x7c] sm:$0xf]
        %v2218 = vld [vmem:[%s4 + $0x80] sm:$0xf]
        %v2219 = vld [vmem:[%s4 + $0x84] sm:$0xf]
        %v2220 = vld [vmem:[%s4 + $0x88] sm:$0xf]
        %v2221 = vld [vmem:[%s4 + $0x8c] sm:$0xf]
        %v2222 = vld [vmem:[%s4 + $0x90] sm:$0xf]
        %v2223 = vld [vmem:[%s4 + $0x94] sm:$0xf]
        %v2224 = vld [vmem:[%s4 + $0x98] sm:$0xf]
        %v2225 = vld [vmem:[%s4 + $0x9c] sm:$0xf]
        %v2226 = vld [vmem:[%s4 + $0xa0] sm:$0xf]
        %v2227 = vld [vmem:[%s4 + $0xa4] sm:$0xf]
        %v2228 = vld [vmem:[%s4 + $0xa8] sm:$0xf]
        %v2229 = vld [vmem:[%s4 + $0xac] sm:$0xf]
        %v2230 = vld [vmem:[%s4 + $0xb0] sm:$0xf]
        %v2231 = vld [vmem:[%s4 + $0xb4] sm:$0xf]
        %v2232 = vld [vmem:[%s4 + $0xb8] sm:$0xf]
        %v2233 = vld [vmem:[%s4 + $0xbc] sm:$0xf]
        %v2234 = vld [vmem:[%s4 + $0xc0] sm:$0xf]
        %v2235 = vld [vmem:[%s4 + $0xc4] sm:$0xf]
        %v2236 = vld [vmem:[%s4 + $0xc8] sm:$0xf]
        %v2237 = vld [vmem:[%s4 + $0xcc] sm:$0xf]
        %v2238 = vld [vmem:[%s4 + $0xd0] sm:$0xf]
        %v2239 = vld [vmem:[%s4 + $0xd4] sm:$0xf]
        %v2240 = vld [vmem:[%s4 + $0xd8] sm:$0xf]
        %v2241 = vld [vmem:[%s4 + $0xdc] sm:$0xf]
        %v2242 = vld [vmem:[%s4 + $0xe0] sm:$0xf]
        %v2243 = vld [vmem:[%s4 + $0xe4] sm:$0xf]
        %v2244 = vld [vmem:[%s4 + $0xe8] sm:$0xf]
        %v2245 = vld [vmem:[%s4 + $0xec] sm:$0xf]
        %v2246 = vld [vmem:[%s4 + $0xf0] sm:$0xf]
        %v2247 = vld [vmem:[%s4 + $0xf4] sm:$0xf]
        %v2248 = vld [vmem:[%s4 + $0xf8] sm:$0xf]
        %v2249 = vld [vmem:[%s4 + $0xfc] sm:$0xf]
        %v2250 = vld [vmem:[%s4 + $0x100] sm:$0xf]
        %v2251 = vld [vmem:[%s4 + $0x104] sm:$0xf]
        %v2252 = vld [vmem:[%s4 + $0x108] sm:$0xf]
        %v2253 = vld [vmem:[%s4 + $0x10c] sm:$0xf]
        %v2254 = vld [vmem:[%s4 + $0x110] sm:$0xf]
        %v2255 = vld [vmem:[%s4 + $0x114] sm:$0xf]
        %v2256 = vld [vmem:[%s4 + $0x118] sm:$0xf]
        %v2257 = vld [vmem:[%s4 + $0x11c] sm:$0xf]
        %v2258 = vld [vmem:[%s4 + $0x120] sm:$0xf]
        %v2259 = vld [vmem:[%s4 + $0x124] sm:$0xf]
        %v2260 = vld [vmem:[%s4 + $0x128] sm:$0xf]
        %v2261 = vld [vmem:[%s4 + $0x12c] sm:$0xf]
        %v2262 = vld [vmem:[%s4 + $0x130] sm:$0xf]
        %v2263 = vld [vmem:[%s4 + $0x134] sm:$0xf]
        %v2264 = vld [vmem:[%s4 + $0x138] sm:$0xf]
        %v2265 = vld [vmem:[%s4 + $0x13c] sm:$0xf]
        %v2266 = vld [vmem:[%s4 + $0x140] sm:$0xf]
        %v2267 = vld [vmem:[%s4 + $0x144] sm:$0xf]
        %v2268 = vld [vmem:[%s4 + $0x148] sm:$0xf]
        %v2269 = vld [vmem:[%s4 + $0x14c] sm:$0xf]
        %v2270 = vld [vmem:[%s4 + $0x150] sm:$0xf]
        %v2271 = vld [vmem:[%s4 + $0x154] sm:$0xf]
        %v2272 = vld [vmem:[%s4 + $0x158] sm:$0xf]
        %v2273 = vld [vmem:[%s4 + $0x15c] sm:$0xf]
        %v2274 = vld [vmem:[%s4 + $0x160] sm:$0xf]
        %v2275 = vld [vmem:[%s4 + $0x164] sm:$0xf]
        %v2276 = vld [vmem:[%s4 + $0x168] sm:$0xf]
        %v2277 = vld [vmem:[%s4 + $0x16c] sm:$0xf]
        %v2278 = vld [vmem:[%s4 + $0x170] sm:$0xf]
        %v2279 = vld [vmem:[%s4 + $0x174] sm:$0xf]
        %v2280 = vld [vmem:[%s4 + $0x178] sm:$0xf]
        %v2281 = vld [vmem:[%s4 + $0x17c] sm:$0xf]
        %v2282 = vld [vmem:[%s4 + $0x180] sm:$0xf]
        %v2283 = vld [vmem:[%s4 + $0x184] sm:$0xf]
        %v2284 = vld [vmem:[%s4 + $0x188] sm:$0xf]
        %v2285 = vld [vmem:[%s4 + $0x18c] sm:$0xf]
        %v2286 = vld [vmem:[%s4 + $0x190] sm:$0xf]
        %v2287 = vld [vmem:[%s4 + $0x194] sm:$0xf]
        %v2288 = vld [vmem:[%s4 + $0x198] sm:$0xf]
        %v2289 = vld [vmem:[%s4 + $0x19c] sm:$0xf]
        %v2290 = vld [vmem:[%s4 + $0x1a0] sm:$0xf]
        %v2291 = vld [vmem:[%s4 + $0x1a4] sm:$0xf]
        %v2292 = vld [vmem:[%s4 + $0x1a8] sm:$0xf]
        %v2293 = vld [vmem:[%s4 + $0x1ac] sm:$0xf]
        %v2294 = vld [vmem:[%s4 + $0x1b0] sm:$0xf]
        %v2295 = vld [vmem:[%s4 + $0x1b4] sm:$0xf]
        %v2296 = vld [vmem:[%s4 + $0x1b8] sm:$0xf]
        %v2297 = vld [vmem:[%s4 + $0x1bc] sm:$0xf]
        %v2298 = vld [vmem:[%s4 + $0x1c0] sm:$0xf]
        %v2299 = vld [vmem:[%s4 + $0x1c4] sm:$0xf]
        %v2300 = vld [vmem:[%s4 + $0x1c8] sm:$0xf]
        %v2301 = vld [vmem:[%s4 + $0x1cc] sm:$0xf]
        %v2302 = vld [vmem:[%s4 + $0x1d0] sm:$0xf]
        %v2303 = vld [vmem:[%s4 + $0x1d4] sm:$0xf]
        %v2304 = vld [vmem:[%s4 + $0x1d8] sm:$0xf]
        %v2305 = vld [vmem:[%s4 + $0x1dc] sm:$0xf]
        %v2306 = vld [vmem:[%s4 + $0x1e0] sm:$0xf]
        %v2307 = vld [vmem:[%s4 + $0x1e4] sm:$0xf]
        %v2308 = vld [vmem:[%s4 + $0x1e8] sm:$0xf]
        %v2309 = vld [vmem:[%s4 + $0x1ec] sm:$0xf]
        %v2310 = vld [vmem:[%s4 + $0x1f0] sm:$0xf]
        %v2311 = vld [vmem:[%s4 + $0x1f4] sm:$0xf]
        %v2312 = vld [vmem:[%s4 + $0x1f8] sm:$0xf]
        %v2313 = vld [vmem:[%s4 + $0x1fc] sm:$0xf]
        %v2314 = vld [vmem:[%s4 + $0x200] sm:$0xf]
        %v2315 = vld [vmem:[%s4 + $0x204] sm:$0xf]
        %v2316 = vld [vmem:[%s4 + $0x208] sm:$0xf]
        %v2317 = vld [vmem:[%s4 + $0x20c] sm:$0xf]
        %v2318 = vld [vmem:[%s4 + $0x210] sm:$0xf]
        %v2319 = vld [vmem:[%s4 + $0x214] sm:$0xf]
        %v2320 = vld [vmem:[%s4 + $0x218] sm:$0xf]
        %v2321 = vld [vmem:[%s4 + $0x21c] sm:$0xf]
        %v2322 = vld [vmem:[%s4 + $0x220] sm:$0xf]
        %v2323 = vld [vmem:[%s4 + $0x224] sm:$0xf]
        %v2324 = vld [vmem:[%s4 + $0x228] sm:$0xf]
        %v2325 = vld [vmem:[%s4 + $0x22c] sm:$0xf]
        %v2326 = vld [vmem:[%s4 + $0x230] sm:$0xf]
        %v2327 = vld [vmem:[%s4 + $0x234] sm:$0xf]
        %v2328 = vld [vmem:[%s4 + $0x238] sm:$0xf]
        %v2329 = vld [vmem:[%s4 + $0x23c] sm:$0xf]
        %v2330 = vld [vmem:[%s4 + $0x240] sm:$0xf]
        %v2331 = vld [vmem:[%s4 + $0x244] sm:$0xf]
        %v2332 = vld [vmem:[%s4 + $0x248] sm:$0xf]
        %v2333 = vld [vmem:[%s4 + $0x24c] sm:$0xf]
        %v2334 = vld [vmem:[%s4 + $0x250] sm:$0xf]
        %v2335 = vld [vmem:[%s4 + $0x254] sm:$0xf]
        %v2336 = vld [vmem:[%s4 + $0x258] sm:$0xf]
        %v2337 = vld [vmem:[%s4 + $0x25c] sm:$0xf]
        %v2338 = vld [vmem:[%s4 + $0x260] sm:$0xf]
        %v2339 = vld [vmem:[%s4 + $0x264] sm:$0xf]
        %v2340 = vld [vmem:[%s4 + $0x268] sm:$0xf]
        %v2341 = vld [vmem:[%s4 + $0x26c] sm:$0xf]
        %v2342 = vld [vmem:[%s4 + $0x270] sm:$0xf]
        %v2343 = vld [vmem:[%s4 + $0x274] sm:$0xf]
        %v2344 = vld [vmem:[%s4 + $0x278] sm:$0xf]
        %v2345 = vld [vmem:[%s4 + $0x27c] sm:$0xf]
        %v2346 = vld [vmem:[%s4 + $0x280] sm:$0xf]
        %v2347 = vld [vmem:[%s4 + $0x284] sm:$0xf]
        %v2348 = vld [vmem:[%s4 + $0x288] sm:$0xf]
        %v2349 = vld [vmem:[%s4 + $0x28c] sm:$0xf]
        %v2350 = vld [vmem:[%s4 + $0x290] sm:$0xf]
        %v2351 = vld [vmem:[%s4 + $0x294] sm:$0xf]
        %v2352 = vld [vmem:[%s4 + $0x298] sm:$0xf]
        %v2353 = vld [vmem:[%s4 + $0x29c] sm:$0xf]
        %v2354 = vld [vmem:[%s4 + $0x2a0] sm:$0xf]
        %v2355 = vld [vmem:[%s4 + $0x2a4] sm:$0xf]
        %v2356 = vld [vmem:[%s4 + $0x2a8] sm:$0xf]
        %v2357 = vld [vmem:[%s4 + $0x2ac] sm:$0xf]
        %v2358 = vld [vmem:[%s4 + $0x2b0] sm:$0xf]
        %v2359 = vld [vmem:[%s4 + $0x2b4] sm:$0xf]
        %v2360 = vld [vmem:[%s4 + $0x2b8] sm:$0xf]
        %v2361 = vld [vmem:[%s4 + $0x2bc] sm:$0xf]
        %v2362 = vld [vmem:[%s4 + $0x2c0] sm:$0xf]
        %v2363 = vld [vmem:[%s4 + $0x2c4] sm:$0xf]
        %v2364 = vld [vmem:[%s4 + $0x2c8] sm:$0xf]
        %v2365 = vld [vmem:[%s4 + $0x2cc] sm:$0xf]
        %v2366 = vld [vmem:[%s4 + $0x2d0] sm:$0xf]
        %v2367 = vld [vmem:[%s4 + $0x2d4] sm:$0xf]
        %v2368 = vld [vmem:[%s4 + $0x2d8] sm:$0xf]
        %v2369 = vld [vmem:[%s4 + $0x2dc] sm:$0xf]
        %v2370 = vld [vmem:[%s4 + $0x2e0] sm:$0xf]
        %v2371 = vld [vmem:[%s4 + $0x2e4] sm:$0xf]
        %v2372 = vld [vmem:[%s4 + $0x2e8] sm:$0xf]
        %v2373 = vld [vmem:[%s4 + $0x2ec] sm:$0xf]
        %v2374 = vld [vmem:[%s4 + $0x2f0] sm:$0xf]
        %v2375 = vld [vmem:[%s4 + $0x2f4] sm:$0xf]
        %v2376 = vld [vmem:[%s4 + $0x2f8] sm:$0xf]
        %v2377 = vld [vmem:[%s4 + $0x2fc] sm:$0xf]
        %v2378 = vld [vmem:[%s4 + $0x300] sm:$0xf]
        %v2379 = vld [vmem:[%s4 + $0x304] sm:$0xf]
        %v2380 = vld [vmem:[%s4 + $0x308] sm:$0xf]
        %v2381 = vld [vmem:[%s4 + $0x30c] sm:$0xf]
        %v2382 = vld [vmem:[%s4 + $0x310] sm:$0xf]
        %v2383 = vld [vmem:[%s4 + $0x314] sm:$0xf]
        %v2384 = vld [vmem:[%s4 + $0x318] sm:$0xf]
        %v2385 = vld [vmem:[%s4 + $0x31c] sm:$0xf]
        %v2386 = vld [vmem:[%s4 + $0x320] sm:$0xf]
        %v2387 = vld [vmem:[%s4 + $0x324] sm:$0xf]
        %v2388 = vld [vmem:[%s4 + $0x328] sm:$0xf]
        %v2389 = vld [vmem:[%s4 + $0x32c] sm:$0xf]
        %v2390 = vld [vmem:[%s4 + $0x330] sm:$0xf]
        %v2391 = vld [vmem:[%s4 + $0x334] sm:$0xf]
        %v2392 = vld [vmem:[%s4 + $0x338] sm:$0xf]
        %v2393 = vld [vmem:[%s4 + $0x33c] sm:$0xf]
        %v2394 = vld [vmem:[%s4 + $0x340] sm:$0xf]
        %v2395 = vld [vmem:[%s4 + $0x344] sm:$0xf]
        %v2396 = vld [vmem:[%s4 + $0x348] sm:$0xf]
        %v2397 = vld [vmem:[%s4 + $0x34c] sm:$0xf]
        %v2398 = vld [vmem:[%s4 + $0x350] sm:$0xf]
        %v2399 = vld [vmem:[%s4 + $0x354] sm:$0xf]
        %v2400 = vld [vmem:[%s4 + $0x358] sm:$0xf]
        %v2401 = vld [vmem:[%s4 + $0x35c] sm:$0xf]
        %v2402 = vld [vmem:[%s4 + $0x360] sm:$0xf]
        %v2403 = vld [vmem:[%s4 + $0x364] sm:$0xf]
        %v2404 = vld [vmem:[%s4 + $0x368] sm:$0xf]
        %v2405 = vld [vmem:[%s4 + $0x36c] sm:$0xf]
        %v2406 = vld [vmem:[%s4 + $0x370] sm:$0xf]
        %v2407 = vld [vmem:[%s4 + $0x374] sm:$0xf]
        %v2408 = vld [vmem:[%s4 + $0x378] sm:$0xf]
        %v2409 = vld [vmem:[%s4 + $0x37c] sm:$0xf]
        %v2410 = vld [vmem:[%s4 + $0x380] sm:$0xf]
        %v2411 = vld [vmem:[%s4 + $0x384] sm:$0xf]
        %v2412 = vld [vmem:[%s4 + $0x388] sm:$0xf]
        %v2413 = vld [vmem:[%s4 + $0x38c] sm:$0xf]
        %v2414 = vld [vmem:[%s4 + $0x390] sm:$0xf]
        %v2415 = vld [vmem:[%s4 + $0x394] sm:$0xf]
        %v2416 = vld [vmem:[%s4 + $0x398] sm:$0xf]
        %v2417 = vld [vmem:[%s4 + $0x39c] sm:$0xf]
        %v2418 = vld [vmem:[%s4 + $0x3a0] sm:$0xf]
        %v2419 = vld [vmem:[%s4 + $0x3a4] sm:$0xf]
        %v2420 = vld [vmem:[%s4 + $0x3a8] sm:$0xf]
        %v2421 = vld [vmem:[%s4 + $0x3ac] sm:$0xf]
        %v2422 = vld [vmem:[%s4 + $0x3b0] sm:$0xf]
        %v2423 = vld [vmem:[%s4 + $0x3b4] sm:$0xf]
        %v2424 = vld [vmem:[%s4 + $0x3b8] sm:$0xf]
        %v2425 = vld [vmem:[%s4 + $0x3bc] sm:$0xf]
        %v2426 = vld [vmem:[%s4 + $0x3c0] sm:$0xf]
        %v2427 = vld [vmem:[%s4 + $0x3c4] sm:$0xf]
        %v2428 = vld [vmem:[%s4 + $0x3c8] sm:$0xf]
        %v2429 = vld [vmem:[%s4 + $0x3cc] sm:$0xf]
        %v2430 = vld [vmem:[%s4 + $0x3d0] sm:$0xf]
        %v2431 = vld [vmem:[%s4 + $0x3d4] sm:$0xf]
        %v2432 = vld [vmem:[%s4 + $0x3d8] sm:$0xf]
        %v2433 = vld [vmem:[%s4 + $0x3dc] sm:$0xf]
        %v2434 = vld [vmem:[%s4 + $0x3e0] sm:$0xf]
        %v2435 = vld [vmem:[%s4 + $0x3e4] sm:$0xf]
        %v2436 = vld [vmem:[%s4 + $0x3e8] sm:$0xf]
        %v2437 = vld [vmem:[%s4 + $0x3ec] sm:$0xf]
        %v2438 = vld [vmem:[%s4 + $0x3f0] sm:$0xf]
        %v2439 = vld [vmem:[%s4 + $0x3f4] sm:$0xf]
        %v2440 = vld [vmem:[%s4 + $0x3f8] sm:$0xf]
        %v2441 = vld [vmem:[%s4 + $0x3fc] sm:$0xf]
        %v2442 = vunpack.c.l.bf16 %v2186
        %v2443 = vunpack.c.l.bf16 %v2187
        %v2444 = vunpack.c.l.bf16 %v2188
        %v2445 = vunpack.c.l.bf16 %v2189
        %v2446 = vunpack.c.l.bf16 %v2190
        %v2447 = vunpack.c.l.bf16 %v2191
        %v2448 = vunpack.c.l.bf16 %v2192
        %v2449 = vunpack.c.l.bf16 %v2193
        %v2450 = vunpack.c.l.bf16 %v2194
        %v2451 = vunpack.c.l.bf16 %v2195
        %v2452 = vunpack.c.l.bf16 %v2196
        %v2453 = vunpack.c.l.bf16 %v2197
        %v2454 = vunpack.c.l.bf16 %v2198
        %v2455 = vunpack.c.l.bf16 %v2199
        %v2456 = vunpack.c.l.bf16 %v2200
        %v2457 = vunpack.c.l.bf16 %v2201
        %v2458 = vunpack.c.l.bf16 %v2202
        %v2459 = vunpack.c.l.bf16 %v2203
        %v2460 = vunpack.c.l.bf16 %v2204
        %v2461 = vunpack.c.l.bf16 %v2205
        %v2462 = vunpack.c.l.bf16 %v2206
        %v2463 = vunpack.c.l.bf16 %v2207
        %v2464 = vunpack.c.l.bf16 %v2208
        %v2465 = vunpack.c.l.bf16 %v2209
        %v2466 = vunpack.c.l.bf16 %v2210
        %v2467 = vunpack.c.l.bf16 %v2211
        %v2468 = vunpack.c.l.bf16 %v2212
        %v2469 = vunpack.c.l.bf16 %v2213
        %v2470 = vunpack.c.l.bf16 %v2214
        %v2471 = vunpack.c.l.bf16 %v2215
        %v2472 = vunpack.c.l.bf16 %v2216
        %v2473 = vunpack.c.l.bf16 %v2217
        %v2474 = vunpack.c.l.bf16 %v2218
        %v2475 = vunpack.c.l.bf16 %v2219
        %v2476 = vunpack.c.l.bf16 %v2220
        %v2477 = vunpack.c.l.bf16 %v2221
        %v2478 = vunpack.c.l.bf16 %v2222
        %v2479 = vunpack.c.l.bf16 %v2223
        %v2480 = vunpack.c.l.bf16 %v2224
        %v2481 = vunpack.c.l.bf16 %v2225
        %v2482 = vunpack.c.l.bf16 %v2226
        %v2483 = vunpack.c.l.bf16 %v2227
        %v2484 = vunpack.c.l.bf16 %v2228
        %v2485 = vunpack.c.l.bf16 %v2229
        %v2486 = vunpack.c.l.bf16 %v2230
        %v2487 = vunpack.c.l.bf16 %v2231
        %v2488 = vunpack.c.l.bf16 %v2232
        %v2489 = vunpack.c.l.bf16 %v2233
        %v2490 = vunpack.c.l.bf16 %v2234
        %v2491 = vunpack.c.l.bf16 %v2235
        %v2492 = vunpack.c.l.bf16 %v2236
        %v2493 = vunpack.c.l.bf16 %v2237
        %v2494 = vunpack.c.l.bf16 %v2238
        %v2495 = vunpack.c.l.bf16 %v2239
        %v2496 = vunpack.c.l.bf16 %v2240
        %v2497 = vunpack.c.l.bf16 %v2241
        %v2498 = vunpack.c.l.bf16 %v2242
        %v2499 = vunpack.c.l.bf16 %v2243
        %v2500 = vunpack.c.l.bf16 %v2244
        %v2501 = vunpack.c.l.bf16 %v2245
        %v2502 = vunpack.c.l.bf16 %v2246
        %v2503 = vunpack.c.l.bf16 %v2247
        %v2504 = vunpack.c.l.bf16 %v2248
        %v2505 = vunpack.c.l.bf16 %v2249
        %v2506 = vunpack.c.l.bf16 %v2250
        %v2507 = vunpack.c.l.bf16 %v2251
        %v2508 = vunpack.c.l.bf16 %v2252
        %v2509 = vunpack.c.l.bf16 %v2253
        %v2510 = vunpack.c.l.bf16 %v2254
        %v2511 = vunpack.c.l.bf16 %v2255
        %v2512 = vunpack.c.l.bf16 %v2256
        %v2513 = vunpack.c.l.bf16 %v2257
        %v2514 = vunpack.c.l.bf16 %v2258
        %v2515 = vunpack.c.l.bf16 %v2259
        %v2516 = vunpack.c.l.bf16 %v2260
        %v2517 = vunpack.c.l.bf16 %v2261
        %v2518 = vunpack.c.l.bf16 %v2262
        %v2519 = vunpack.c.l.bf16 %v2263
        %v2520 = vunpack.c.l.bf16 %v2264
        %v2521 = vunpack.c.l.bf16 %v2265
        %v2522 = vunpack.c.l.bf16 %v2266
        %v2523 = vunpack.c.l.bf16 %v2267
        %v2524 = vunpack.c.l.bf16 %v2268
        %v2525 = vunpack.c.l.bf16 %v2269
        %v2526 = vunpack.c.l.bf16 %v2270
        %v2527 = vunpack.c.l.bf16 %v2271
        %v2528 = vunpack.c.l.bf16 %v2272
        %v2529 = vunpack.c.l.bf16 %v2273
        %v2530 = vunpack.c.l.bf16 %v2274
        %v2531 = vunpack.c.l.bf16 %v2275
        %v2532 = vunpack.c.l.bf16 %v2276
        %v2533 = vunpack.c.l.bf16 %v2277
        %v2534 = vunpack.c.l.bf16 %v2278
        %v2535 = vunpack.c.l.bf16 %v2279
        %v2536 = vunpack.c.l.bf16 %v2280
        %v2537 = vunpack.c.l.bf16 %v2281
        %v2538 = vunpack.c.l.bf16 %v2282
        %v2539 = vunpack.c.l.bf16 %v2283
        %v2540 = vunpack.c.l.bf16 %v2284
        %v2541 = vunpack.c.l.bf16 %v2285
        %v2542 = vunpack.c.l.bf16 %v2286
        %v2543 = vunpack.c.l.bf16 %v2287
        %v2544 = vunpack.c.l.bf16 %v2288
        %v2545 = vunpack.c.l.bf16 %v2289
        %v2546 = vunpack.c.l.bf16 %v2290
        %v2547 = vunpack.c.l.bf16 %v2291
        %v2548 = vunpack.c.l.bf16 %v2292
        %v2549 = vunpack.c.l.bf16 %v2293
        %v2550 = vunpack.c.l.bf16 %v2294
        %v2551 = vunpack.c.l.bf16 %v2295
        %v2552 = vunpack.c.l.bf16 %v2296
        %v2553 = vunpack.c.l.bf16 %v2297
        %v2554 = vunpack.c.l.bf16 %v2298
        %v2555 = vunpack.c.l.bf16 %v2299
        %v2556 = vunpack.c.l.bf16 %v2300
        %v2557 = vunpack.c.l.bf16 %v2301
        %v2558 = vunpack.c.l.bf16 %v2302
        %v2559 = vunpack.c.l.bf16 %v2303
        %v2560 = vunpack.c.l.bf16 %v2304
        %v2561 = vunpack.c.l.bf16 %v2305
        %v2562 = vunpack.c.l.bf16 %v2306
        %v2563 = vunpack.c.l.bf16 %v2307
        %v2564 = vunpack.c.l.bf16 %v2308
        %v2565 = vunpack.c.l.bf16 %v2309
        %v2566 = vunpack.c.l.bf16 %v2310
        %v2567 = vunpack.c.l.bf16 %v2311
        %v2568 = vunpack.c.l.bf16 %v2312
        %v2569 = vunpack.c.l.bf16 %v2313
        %v2570 = vunpack.c.l.bf16 %v2314
        %v2571 = vunpack.c.l.bf16 %v2315
        %v2572 = vunpack.c.l.bf16 %v2316
        %v2573 = vunpack.c.l.bf16 %v2317
        %v2574 = vunpack.c.l.bf16 %v2318
        %v2575 = vunpack.c.l.bf16 %v2319
        %v2576 = vunpack.c.l.bf16 %v2320
        %v2577 = vunpack.c.l.bf16 %v2321
        %v2578 = vunpack.c.l.bf16 %v2322
        %v2579 = vunpack.c.l.bf16 %v2323
        %v2580 = vunpack.c.l.bf16 %v2324
        %v2581 = vunpack.c.l.bf16 %v2325
        %v2582 = vunpack.c.l.bf16 %v2326
        %v2583 = vunpack.c.l.bf16 %v2327
        %v2584 = vunpack.c.l.bf16 %v2328
        %v2585 = vunpack.c.l.bf16 %v2329
        %v2586 = vunpack.c.l.bf16 %v2330
        %v2587 = vunpack.c.l.bf16 %v2331
        %v2588 = vunpack.c.l.bf16 %v2332
        %v2589 = vunpack.c.l.bf16 %v2333
        %v2590 = vunpack.c.l.bf16 %v2334
        %v2591 = vunpack.c.l.bf16 %v2335
        %v2592 = vunpack.c.l.bf16 %v2336
        %v2593 = vunpack.c.l.bf16 %v2337
        %v2594 = vunpack.c.l.bf16 %v2338
        %v2595 = vunpack.c.l.bf16 %v2339
        %v2596 = vunpack.c.l.bf16 %v2340
        %v2597 = vunpack.c.l.bf16 %v2341
        %v2598 = vunpack.c.l.bf16 %v2342
        %v2599 = vunpack.c.l.bf16 %v2343
        %v2600 = vunpack.c.l.bf16 %v2344
        %v2601 = vunpack.c.l.bf16 %v2345
        %v2602 = vunpack.c.l.bf16 %v2346
        %v2603 = vunpack.c.l.bf16 %v2347
        %v2604 = vunpack.c.l.bf16 %v2348
        %v2605 = vunpack.c.l.bf16 %v2349
        %v2606 = vunpack.c.l.bf16 %v2350
        %v2607 = vunpack.c.l.bf16 %v2351
        %v2608 = vunpack.c.l.bf16 %v2352
        %v2609 = vunpack.c.l.bf16 %v2353
        %v2610 = vunpack.c.l.bf16 %v2354
        %v2611 = vunpack.c.l.bf16 %v2355
        %v2612 = vunpack.c.l.bf16 %v2356
        %v2613 = vunpack.c.l.bf16 %v2357
        %v2614 = vunpack.c.l.bf16 %v2358
        %v2615 = vunpack.c.l.bf16 %v2359
        %v2616 = vunpack.c.l.bf16 %v2360
        %v2617 = vunpack.c.l.bf16 %v2361
        %v2618 = vunpack.c.l.bf16 %v2362
        %v2619 = vunpack.c.l.bf16 %v2363
        %v2620 = vunpack.c.l.bf16 %v2364
        %v2621 = vunpack.c.l.bf16 %v2365
        %v2622 = vunpack.c.l.bf16 %v2366
        %v2623 = vunpack.c.l.bf16 %v2367
        %v2624 = vunpack.c.l.bf16 %v2368
        %v2625 = vunpack.c.l.bf16 %v2369
        %v2626 = vunpack.c.l.bf16 %v2370
        %v2627 = vunpack.c.l.bf16 %v2371
        %v2628 = vunpack.c.l.bf16 %v2372
        %v2629 = vunpack.c.l.bf16 %v2373
        %v2630 = vunpack.c.l.bf16 %v2374
        %v2631 = vunpack.c.l.bf16 %v2375
        %v2632 = vunpack.c.l.bf16 %v2376
        %v2633 = vunpack.c.l.bf16 %v2377
        %v2634 = vunpack.c.l.bf16 %v2378
        %v2635 = vunpack.c.l.bf16 %v2379
        %v2636 = vunpack.c.l.bf16 %v2380
        %v2637 = vunpack.c.l.bf16 %v2381
        %v2638 = vunpack.c.l.bf16 %v2382
        %v2639 = vunpack.c.l.bf16 %v2383
        %v2640 = vunpack.c.l.bf16 %v2384
        %v2641 = vunpack.c.l.bf16 %v2385
        %v2642 = vunpack.c.l.bf16 %v2386
        %v2643 = vunpack.c.l.bf16 %v2387
        %v2644 = vunpack.c.l.bf16 %v2388
        %v2645 = vunpack.c.l.bf16 %v2389
        %v2646 = vunpack.c.l.bf16 %v2390
        %v2647 = vunpack.c.l.bf16 %v2391
        %v2648 = vunpack.c.l.bf16 %v2392
        %v2649 = vunpack.c.l.bf16 %v2393
        %v2650 = vunpack.c.l.bf16 %v2394
        %v2651 = vunpack.c.l.bf16 %v2395
        %v2652 = vunpack.c.l.bf16 %v2396
        %v2653 = vunpack.c.l.bf16 %v2397
        %v2654 = vunpack.c.l.bf16 %v2398
        %v2655 = vunpack.c.l.bf16 %v2399
        %v2656 = vunpack.c.l.bf16 %v2400
        %v2657 = vunpack.c.l.bf16 %v2401
        %v2658 = vunpack.c.l.bf16 %v2402
        %v2659 = vunpack.c.l.bf16 %v2403
        %v2660 = vunpack.c.l.bf16 %v2404
        %v2661 = vunpack.c.l.bf16 %v2405
        %v2662 = vunpack.c.l.bf16 %v2406
        %v2663 = vunpack.c.l.bf16 %v2407
        %v2664 = vunpack.c.l.bf16 %v2408
        %v2665 = vunpack.c.l.bf16 %v2409
        %v2666 = vunpack.c.l.bf16 %v2410
        %v2667 = vunpack.c.l.bf16 %v2411
        %v2668 = vunpack.c.l.bf16 %v2412
        %v2669 = vunpack.c.l.bf16 %v2413
        %v2670 = vunpack.c.l.bf16 %v2414
        %v2671 = vunpack.c.l.bf16 %v2415
        %v2672 = vunpack.c.l.bf16 %v2416
        %v2673 = vunpack.c.l.bf16 %v2417
        %v2674 = vunpack.c.l.bf16 %v2418
        %v2675 = vunpack.c.l.bf16 %v2419
        %v2676 = vunpack.c.l.bf16 %v2420
        %v2677 = vunpack.c.l.bf16 %v2421
        %v2678 = vunpack.c.l.bf16 %v2422
        %v2679 = vunpack.c.l.bf16 %v2423
        %v2680 = vunpack.c.l.bf16 %v2424
        %v2681 = vunpack.c.l.bf16 %v2425
        %v2682 = vunpack.c.l.bf16 %v2426
        %v2683 = vunpack.c.l.bf16 %v2427
        %v2684 = vunpack.c.l.bf16 %v2428
        %v2685 = vunpack.c.l.bf16 %v2429
        %v2686 = vunpack.c.l.bf16 %v2430
        %v2687 = vunpack.c.l.bf16 %v2431
        %v2688 = vunpack.c.l.bf16 %v2432
        %v2689 = vunpack.c.l.bf16 %v2433
        %v2690 = vunpack.c.l.bf16 %v2434
        %v2691 = vunpack.c.l.bf16 %v2435
        %v2692 = vunpack.c.l.bf16 %v2436
        %v2693 = vunpack.c.l.bf16 %v2437
        %v2694 = vunpack.c.l.bf16 %v2438
        %v2695 = vunpack.c.l.bf16 %v2439
        %v2696 = vunpack.c.l.bf16 %v2440
        %v2697 = vunpack.c.l.bf16 %v2441
        %v2698 = vlaneseq
        %v2699 = vshrl.u32 %v2698, 7
        %v2700 = vadd.s32 %v2699, 8
        %v2701 = vadd.s32 %v2699, 16
        %v2702 = vadd.s32 %v2699, 24
        %v2703 = vadd.s32 %v2699, 32
        %v2704 = vadd.s32 %v2699, 40
        %v2705 = vadd.s32 %v2699, 48
        %v2706 = vadd.s32 %v2699, 56
        %v2707 = vadd.s32 %v2699, 64
        %v2708 = vadd.s32 %v2699, 72
        %v2709 = vadd.s32 %v2699, 80
        %v2710 = vadd.s32 %v2699, 88
        %v2711 = vadd.s32 %v2699, 96
        %v2712 = vadd.s32 %v2699, 104
        %v2713 = vadd.s32 %v2699, 112
        %v2714 = vadd.s32 %v2699, 120
        %v2715 = vadd.s32 %v2699, 128
        %v2716 = vadd.s32 %v2699, 136
        %v2717 = vadd.s32 %v2699, 144
        %v2718 = vadd.s32 %v2699, 152
        %v2719 = vadd.s32 %v2699, 160
        %v2720 = vadd.s32 %v2699, 168
        %v2721 = vadd.s32 %v2699, 176
        %v2722 = vadd.s32 %v2699, 184
        %v2723 = vadd.s32 %v2699, 192
        %v2724 = vadd.s32 %v2699, 200
        %v2725 = vadd.s32 %v2699, 208
        %v2726 = vadd.s32 %v2699, 216
        %v2727 = vadd.s32 %v2699, 224
        %v2728 = vadd.s32 %v2699, 232
        %v2729 = vadd.s32 %v2699, 240
        %v2730 = vadd.s32 %v2699, 248
        %v2731 = vadd.s32 %v2699, 256
        %v2732 = vadd.s32 %v2699, 264
        %v2733 = vadd.s32 %v2699, 272
        %v2734 = vadd.s32 %v2699, 280
        %v2735 = vadd.s32 %v2699, 288
        %v2736 = vadd.s32 %v2699, 296
        %v2737 = vadd.s32 %v2699, 304
        %v2738 = vadd.s32 %v2699, 312
        %v2739 = vadd.s32 %v2699, 320
        %v2740 = vadd.s32 %v2699, 328
        %v2741 = vadd.s32 %v2699, 336
        %v2742 = vadd.s32 %v2699, 344
        %v2743 = vadd.s32 %v2699, 352
        %v2744 = vadd.s32 %v2699, 360
        %v2745 = vadd.s32 %v2699, 368
        %v2746 = vadd.s32 %v2699, 376
        %v2747 = vadd.s32 %v2699, 384
        %v2748 = vadd.s32 %v2699, 392
        %v2749 = vadd.s32 %v2699, 400
        %v2750 = vadd.s32 %v2699, 408
        %v2751 = vadd.s32 %v2699, 416
        %v2752 = vadd.s32 %v2699, 424
        %v2753 = vadd.s32 %v2699, 432
        %v2754 = vadd.s32 %v2699, 440
        %v2755 = vadd.s32 %v2699, 448
        %v2756 = vadd.s32 %v2699, 456
        %v2757 = vadd.s32 %v2699, 464
        %v2758 = vadd.s32 %v2699, 472
        %v2759 = vadd.s32 %v2699, 480
        %v2760 = vadd.s32 %v2699, 488
        %v2761 = vadd.s32 %v2699, 496
        %v2762 = vadd.s32 %v2699, 504
        %v2763 = vadd.s32 %v2699, 512
        %v2764 = vadd.s32 %v2699, 520
        %v2765 = vadd.s32 %v2699, 528
        %v2766 = vadd.s32 %v2699, 536
        %v2767 = vadd.s32 %v2699, 544
        %v2768 = vadd.s32 %v2699, 552
        %v2769 = vadd.s32 %v2699, 560
        %v2770 = vadd.s32 %v2699, 568
        %v2771 = vadd.s32 %v2699, 576
        %v2772 = vadd.s32 %v2699, 584
        %v2773 = vadd.s32 %v2699, 592
        %v2774 = vadd.s32 %v2699, 600
        %v2775 = vadd.s32 %v2699, 608
        %v2776 = vadd.s32 %v2699, 616
        %v2777 = vadd.s32 %v2699, 624
        %v2778 = vadd.s32 %v2699, 632
        %v2779 = vadd.s32 %v2699, 640
        %v2780 = vadd.s32 %v2699, 648
        %v2781 = vadd.s32 %v2699, 656
        %v2782 = vadd.s32 %v2699, 664
        %v2783 = vadd.s32 %v2699, 672
        %v2784 = vadd.s32 %v2699, 680
        %v2785 = vadd.s32 %v2699, 688
        %v2786 = vadd.s32 %v2699, 696
        %v2787 = vadd.s32 %v2699, 704
        %v2788 = vadd.s32 %v2699, 712
        %v2789 = vadd.s32 %v2699, 720
        %v2790 = vadd.s32 %v2699, 728
        %v2791 = vadd.s32 %v2699, 736
        %v2792 = vadd.s32 %v2699, 744
        %v2793 = vadd.s32 %v2699, 752
        %v2794 = vadd.s32 %v2699, 760
        %v2795 = vadd.s32 %v2699, 768
        %v2796 = vadd.s32 %v2699, 776
        %v2797 = vadd.s32 %v2699, 784
        %v2798 = vadd.s32 %v2699, 792
        %v2799 = vadd.s32 %v2699, 800
        %v2800 = vadd.s32 %v2699, 808
        %v2801 = vadd.s32 %v2699, 816
        %v2802 = vadd.s32 %v2699, 824
        %v2803 = vadd.s32 %v2699, 832
        %v2804 = vadd.s32 %v2699, 840
        %v2805 = vadd.s32 %v2699, 848
        %v2806 = vadd.s32 %v2699, 856
        %v2807 = vadd.s32 %v2699, 864
        %v2808 = vadd.s32 %v2699, 872
        %v2809 = vadd.s32 %v2699, 880
        %v2810 = vadd.s32 %v2699, 888
        %v2811 = vadd.s32 %v2699, 896
        %v2812 = vadd.s32 %v2699, 904
        %v2813 = vadd.s32 %v2699, 912
        %v2814 = vadd.s32 %v2699, 920
        %v2815 = vadd.s32 %v2699, 928
        %v2816 = vadd.s32 %v2699, 936
        %v2817 = vadd.s32 %v2699, 944
        %v2818 = vadd.s32 %v2699, 952
        %v2819 = vadd.s32 %v2699, 960
        %v2820 = vadd.s32 %v2699, 968
        %v2821 = vadd.s32 %v2699, 976
        %v2822 = vadd.s32 %v2699, 984
        %v2823 = vadd.s32 %v2699, 992
        %v2824 = vadd.s32 %v2699, 1000
        %v2825 = vadd.s32 %v2699, 1008
        %v2826 = vadd.s32 %v2699, 1016
        %v2827 = vadd.s32 %v2699, 1024
        %v2828 = vadd.s32 %v2699, 1032
        %v2829 = vadd.s32 %v2699, 1040
        %v2830 = vadd.s32 %v2699, 1048
        %v2831 = vadd.s32 %v2699, 1056
        %v2832 = vadd.s32 %v2699, 1064
        %v2833 = vadd.s32 %v2699, 1072
        %v2834 = vadd.s32 %v2699, 1080
        %v2835 = vadd.s32 %v2699, 1088
        %v2836 = vadd.s32 %v2699, 1096
        %v2837 = vadd.s32 %v2699, 1104
        %v2838 = vadd.s32 %v2699, 1112
        %v2839 = vadd.s32 %v2699, 1120
        %v2840 = vadd.s32 %v2699, 1128
        %v2841 = vadd.s32 %v2699, 1136
        %v2842 = vadd.s32 %v2699, 1144
        %v2843 = vadd.s32 %v2699, 1152
        %v2844 = vadd.s32 %v2699, 1160
        %v2845 = vadd.s32 %v2699, 1168
        %v2846 = vadd.s32 %v2699, 1176
        %v2847 = vadd.s32 %v2699, 1184
        %v2848 = vadd.s32 %v2699, 1192
        %v2849 = vadd.s32 %v2699, 1200
        %v2850 = vadd.s32 %v2699, 1208
        %v2851 = vadd.s32 %v2699, 1216
        %v2852 = vadd.s32 %v2699, 1224
        %v2853 = vadd.s32 %v2699, 1232
        %v2854 = vadd.s32 %v2699, 1240
        %v2855 = vadd.s32 %v2699, 1248
        %v2856 = vadd.s32 %v2699, 1256
        %v2857 = vadd.s32 %v2699, 1264
        %v2858 = vadd.s32 %v2699, 1272
        %v2859 = vadd.s32 %v2699, 1280
        %v2860 = vadd.s32 %v2699, 1288
        %v2861 = vadd.s32 %v2699, 1296
        %v2862 = vadd.s32 %v2699, 1304
        %v2863 = vadd.s32 %v2699, 1312
        %v2864 = vadd.s32 %v2699, 1320
        %v2865 = vadd.s32 %v2699, 1328
        %v2866 = vadd.s32 %v2699, 1336
        %v2867 = vadd.s32 %v2699, 1344
        %v2868 = vadd.s32 %v2699, 1352
        %v2869 = vadd.s32 %v2699, 1360
        %v2870 = vadd.s32 %v2699, 1368
        %v2871 = vadd.s32 %v2699, 1376
        %v2872 = vadd.s32 %v2699, 1384
        %v2873 = vadd.s32 %v2699, 1392
        %v2874 = vadd.s32 %v2699, 1400
        %v2875 = vadd.s32 %v2699, 1408
        %v2876 = vadd.s32 %v2699, 1416
        %v2877 = vadd.s32 %v2699, 1424
        %v2878 = vadd.s32 %v2699, 1432
        %v2879 = vadd.s32 %v2699, 1440
        %v2880 = vadd.s32 %v2699, 1448
        %v2881 = vadd.s32 %v2699, 1456
        %v2882 = vadd.s32 %v2699, 1464
        %v2883 = vadd.s32 %v2699, 1472
        %v2884 = vadd.s32 %v2699, 1480
        %v2885 = vadd.s32 %v2699, 1488
        %v2886 = vadd.s32 %v2699, 1496
        %v2887 = vadd.s32 %v2699, 1504
        %v2888 = vadd.s32 %v2699, 1512
        %v2889 = vadd.s32 %v2699, 1520
        %v2890 = vadd.s32 %v2699, 1528
        %v2891 = vadd.s32 %v2699, 1536
        %v2892 = vadd.s32 %v2699, 1544
        %v2893 = vadd.s32 %v2699, 1552
        %v2894 = vadd.s32 %v2699, 1560
        %v2895 = vadd.s32 %v2699, 1568
        %v2896 = vadd.s32 %v2699, 1576
        %v2897 = vadd.s32 %v2699, 1584
        %v2898 = vadd.s32 %v2699, 1592
        %v2899 = vadd.s32 %v2699, 1600
        %v2900 = vadd.s32 %v2699, 1608
        %v2901 = vadd.s32 %v2699, 1616
        %v2902 = vadd.s32 %v2699, 1624
        %v2903 = vadd.s32 %v2699, 1632
        %v2904 = vadd.s32 %v2699, 1640
        %v2905 = vadd.s32 %v2699, 1648
        %v2906 = vadd.s32 %v2699, 1656
        %v2907 = vadd.s32 %v2699, 1664
        %v2908 = vadd.s32 %v2699, 1672
        %v2909 = vadd.s32 %v2699, 1680
        %v2910 = vadd.s32 %v2699, 1688
        %v2911 = vadd.s32 %v2699, 1696
        %v2912 = vadd.s32 %v2699, 1704
        %v2913 = vadd.s32 %v2699, 1712
        %v2914 = vadd.s32 %v2699, 1720
        %v2915 = vadd.s32 %v2699, 1728
        %v2916 = vadd.s32 %v2699, 1736
        %v2917 = vadd.s32 %v2699, 1744
        %v2918 = vadd.s32 %v2699, 1752
        %v2919 = vadd.s32 %v2699, 1760
        %v2920 = vadd.s32 %v2699, 1768
        %v2921 = vadd.s32 %v2699, 1776
        %v2922 = vadd.s32 %v2699, 1784
        %v2923 = vadd.s32 %v2699, 1792
        %v2924 = vadd.s32 %v2699, 1800
        %v2925 = vadd.s32 %v2699, 1808
        %v2926 = vadd.s32 %v2699, 1816
        %v2927 = vadd.s32 %v2699, 1824
        %v2928 = vadd.s32 %v2699, 1832
        %v2929 = vadd.s32 %v2699, 1840
        %v2930 = vadd.s32 %v2699, 1848
        %v2931 = vadd.s32 %v2699, 1856
        %v2932 = vadd.s32 %v2699, 1864
        %v2933 = vadd.s32 %v2699, 1872
        %v2934 = vadd.s32 %v2699, 1880
        %v2935 = vadd.s32 %v2699, 1888
        %v2936 = vadd.s32 %v2699, 1896
        %v2937 = vadd.s32 %v2699, 1904
        %v2938 = vadd.s32 %v2699, 1912
        %v2939 = vadd.s32 %v2699, 1920
        %v2940 = vadd.s32 %v2699, 1928
        %v2941 = vadd.s32 %v2699, 1936
        %v2942 = vadd.s32 %v2699, 1944
        %v2943 = vadd.s32 %v2699, 1952
        %v2944 = vadd.s32 %v2699, 1960
        %v2945 = vadd.s32 %v2699, 1968
        %v2946 = vadd.s32 %v2699, 1976
        %v2947 = vadd.s32 %v2699, 1984
        %v2948 = vadd.s32 %v2699, 1992
        %v2949 = vadd.s32 %v2699, 2000
        %v2950 = vadd.s32 %v2699, 2008
        %v2951 = vadd.s32 %v2699, 2016
        %v2952 = vadd.s32 %v2699, 2024
        %v2953 = vadd.s32 %v2699, 2032
        %v2954 = vadd.s32 %v2699, 2040
        %vm2955 = vcmp.lt.s32.totalorder %v2699, 2048
        %vm2956 = vcmp.lt.s32.totalorder %v2700, 2048
        %vm2957 = vcmp.lt.s32.totalorder %v2701, 2048
        %vm2958 = vcmp.lt.s32.totalorder %v2702, 2048
        %vm2959 = vcmp.lt.s32.totalorder %v2703, 2048
        %vm2960 = vcmp.lt.s32.totalorder %v2704, 2048
        %vm2961 = vcmp.lt.s32.totalorder %v2705, 2048
        %vm2962 = vcmp.lt.s32.totalorder %v2706, 2048
        %vm2963 = vcmp.lt.s32.totalorder %v2707, 2048
        %vm2964 = vcmp.lt.s32.totalorder %v2708, 2048
        %vm2965 = vcmp.lt.s32.totalorder %v2709, 2048
        %vm2966 = vcmp.lt.s32.totalorder %v2710, 2048
        %vm2967 = vcmp.lt.s32.totalorder %v2711, 2048
        %vm2968 = vcmp.lt.s32.totalorder %v2712, 2048
        %vm2969 = vcmp.lt.s32.totalorder %v2713, 2048
        %vm2970 = vcmp.lt.s32.totalorder %v2714, 2048
        %vm2971 = vcmp.lt.s32.totalorder %v2715, 2048
        %vm2972 = vcmp.lt.s32.totalorder %v2716, 2048
        %vm2973 = vcmp.lt.s32.totalorder %v2717, 2048
        %vm2974 = vcmp.lt.s32.totalorder %v2718, 2048
        %vm2975 = vcmp.lt.s32.totalorder %v2719, 2048
        %vm2976 = vcmp.lt.s32.totalorder %v2720, 2048
        %vm2977 = vcmp.lt.s32.totalorder %v2721, 2048
        %vm2978 = vcmp.lt.s32.totalorder %v2722, 2048
        %vm2979 = vcmp.lt.s32.totalorder %v2723, 2048
        %vm2980 = vcmp.lt.s32.totalorder %v2724, 2048
        %vm2981 = vcmp.lt.s32.totalorder %v2725, 2048
        %vm2982 = vcmp.lt.s32.totalorder %v2726, 2048
        %vm2983 = vcmp.lt.s32.totalorder %v2727, 2048
        %vm2984 = vcmp.lt.s32.totalorder %v2728, 2048
        %vm2985 = vcmp.lt.s32.totalorder %v2729, 2048
        %vm2986 = vcmp.lt.s32.totalorder %v2730, 2048
        %vm2987 = vcmp.lt.s32.totalorder %v2731, 2048
        %vm2988 = vcmp.lt.s32.totalorder %v2732, 2048
        %vm2989 = vcmp.lt.s32.totalorder %v2733, 2048
        %vm2990 = vcmp.lt.s32.totalorder %v2734, 2048
        %vm2991 = vcmp.lt.s32.totalorder %v2735, 2048
        %vm2992 = vcmp.lt.s32.totalorder %v2736, 2048
        %vm2993 = vcmp.lt.s32.totalorder %v2737, 2048
        %vm2994 = vcmp.lt.s32.totalorder %v2738, 2048
        %vm2995 = vcmp.lt.s32.totalorder %v2739, 2048
        %vm2996 = vcmp.lt.s32.totalorder %v2740, 2048
        %vm2997 = vcmp.lt.s32.totalorder %v2741, 2048
        %vm2998 = vcmp.lt.s32.totalorder %v2742, 2048
        %vm2999 = vcmp.lt.s32.totalorder %v2743, 2048
        %vm3000 = vcmp.lt.s32.totalorder %v2744, 2048
        %vm3001 = vcmp.lt.s32.totalorder %v2745, 2048
        %vm3002 = vcmp.lt.s32.totalorder %v2746, 2048
        %vm3003 = vcmp.lt.s32.totalorder %v2747, 2048
        %vm3004 = vcmp.lt.s32.totalorder %v2748, 2048
        %vm3005 = vcmp.lt.s32.totalorder %v2749, 2048
        %vm3006 = vcmp.lt.s32.totalorder %v2750, 2048
        %vm3007 = vcmp.lt.s32.totalorder %v2751, 2048
        %vm3008 = vcmp.lt.s32.totalorder %v2752, 2048
        %vm3009 = vcmp.lt.s32.totalorder %v2753, 2048
        %vm3010 = vcmp.lt.s32.totalorder %v2754, 2048
        %vm3011 = vcmp.lt.s32.totalorder %v2755, 2048
        %vm3012 = vcmp.lt.s32.totalorder %v2756, 2048
        %vm3013 = vcmp.lt.s32.totalorder %v2757, 2048
        %vm3014 = vcmp.lt.s32.totalorder %v2758, 2048
        %vm3015 = vcmp.lt.s32.totalorder %v2759, 2048
        %vm3016 = vcmp.lt.s32.totalorder %v2760, 2048
        %vm3017 = vcmp.lt.s32.totalorder %v2761, 2048
        %vm3018 = vcmp.lt.s32.totalorder %v2762, 2048
        %vm3019 = vcmp.lt.s32.totalorder %v2763, 2048
        %vm3020 = vcmp.lt.s32.totalorder %v2764, 2048
        %vm3021 = vcmp.lt.s32.totalorder %v2765, 2048
        %vm3022 = vcmp.lt.s32.totalorder %v2766, 2048
        %vm3023 = vcmp.lt.s32.totalorder %v2767, 2048
        %vm3024 = vcmp.lt.s32.totalorder %v2768, 2048
        %vm3025 = vcmp.lt.s32.totalorder %v2769, 2048
        %vm3026 = vcmp.lt.s32.totalorder %v2770, 2048
        %vm3027 = vcmp.lt.s32.totalorder %v2771, 2048
        %vm3028 = vcmp.lt.s32.totalorder %v2772, 2048
        %vm3029 = vcmp.lt.s32.totalorder %v2773, 2048
        %vm3030 = vcmp.lt.s32.totalorder %v2774, 2048
        %vm3031 = vcmp.lt.s32.totalorder %v2775, 2048
        %vm3032 = vcmp.lt.s32.totalorder %v2776, 2048
        %vm3033 = vcmp.lt.s32.totalorder %v2777, 2048
        %vm3034 = vcmp.lt.s32.totalorder %v2778, 2048
        %vm3035 = vcmp.lt.s32.totalorder %v2779, 2048
        %vm3036 = vcmp.lt.s32.totalorder %v2780, 2048
        %vm3037 = vcmp.lt.s32.totalorder %v2781, 2048
        %vm3038 = vcmp.lt.s32.totalorder %v2782, 2048
        %vm3039 = vcmp.lt.s32.totalorder %v2783, 2048
        %vm3040 = vcmp.lt.s32.totalorder %v2784, 2048
        %vm3041 = vcmp.lt.s32.totalorder %v2785, 2048
        %vm3042 = vcmp.lt.s32.totalorder %v2786, 2048
        %vm3043 = vcmp.lt.s32.totalorder %v2787, 2048
        %vm3044 = vcmp.lt.s32.totalorder %v2788, 2048
        %vm3045 = vcmp.lt.s32.totalorder %v2789, 2048
        %vm3046 = vcmp.lt.s32.totalorder %v2790, 2048
        %vm3047 = vcmp.lt.s32.totalorder %v2791, 2048
        %vm3048 = vcmp.lt.s32.totalorder %v2792, 2048
        %vm3049 = vcmp.lt.s32.totalorder %v2793, 2048
        %vm3050 = vcmp.lt.s32.totalorder %v2794, 2048
        %vm3051 = vcmp.lt.s32.totalorder %v2795, 2048
        %vm3052 = vcmp.lt.s32.totalorder %v2796, 2048
        %vm3053 = vcmp.lt.s32.totalorder %v2797, 2048
        %vm3054 = vcmp.lt.s32.totalorder %v2798, 2048
        %vm3055 = vcmp.lt.s32.totalorder %v2799, 2048
        %vm3056 = vcmp.lt.s32.totalorder %v2800, 2048
        %vm3057 = vcmp.lt.s32.totalorder %v2801, 2048
        %vm3058 = vcmp.lt.s32.totalorder %v2802, 2048
        %vm3059 = vcmp.lt.s32.totalorder %v2803, 2048
        %vm3060 = vcmp.lt.s32.totalorder %v2804, 2048
        %vm3061 = vcmp.lt.s32.totalorder %v2805, 2048
        %vm3062 = vcmp.lt.s32.totalorder %v2806, 2048
        %vm3063 = vcmp.lt.s32.totalorder %v2807, 2048
        %vm3064 = vcmp.lt.s32.totalorder %v2808, 2048
        %vm3065 = vcmp.lt.s32.totalorder %v2809, 2048
        %vm3066 = vcmp.lt.s32.totalorder %v2810, 2048
        %vm3067 = vcmp.lt.s32.totalorder %v2811, 2048
        %vm3068 = vcmp.lt.s32.totalorder %v2812, 2048
        %vm3069 = vcmp.lt.s32.totalorder %v2813, 2048
        %vm3070 = vcmp.lt.s32.totalorder %v2814, 2048
        %vm3071 = vcmp.lt.s32.totalorder %v2815, 2048
        %vm3072 = vcmp.lt.s32.totalorder %v2816, 2048
        %vm3073 = vcmp.lt.s32.totalorder %v2817, 2048
        %vm3074 = vcmp.lt.s32.totalorder %v2818, 2048
        %vm3075 = vcmp.lt.s32.totalorder %v2819, 2048
        %vm3076 = vcmp.lt.s32.totalorder %v2820, 2048
        %vm3077 = vcmp.lt.s32.totalorder %v2821, 2048
        %vm3078 = vcmp.lt.s32.totalorder %v2822, 2048
        %vm3079 = vcmp.lt.s32.totalorder %v2823, 2048
        %vm3080 = vcmp.lt.s32.totalorder %v2824, 2048
        %vm3081 = vcmp.lt.s32.totalorder %v2825, 2048
        %vm3082 = vcmp.lt.s32.totalorder %v2826, 2048
        %vm3083 = vcmp.lt.s32.totalorder %v2827, 2048
        %vm3084 = vcmp.lt.s32.totalorder %v2828, 2048
        %vm3085 = vcmp.lt.s32.totalorder %v2829, 2048
        %vm3086 = vcmp.lt.s32.totalorder %v2830, 2048
        %vm3087 = vcmp.lt.s32.totalorder %v2831, 2048
        %vm3088 = vcmp.lt.s32.totalorder %v2832, 2048
        %vm3089 = vcmp.lt.s32.totalorder %v2833, 2048
        %vm3090 = vcmp.lt.s32.totalorder %v2834, 2048
        %vm3091 = vcmp.lt.s32.totalorder %v2835, 2048
        %vm3092 = vcmp.lt.s32.totalorder %v2836, 2048
        %vm3093 = vcmp.lt.s32.totalorder %v2837, 2048
        %vm3094 = vcmp.lt.s32.totalorder %v2838, 2048
        %vm3095 = vcmp.lt.s32.totalorder %v2839, 2048
        %vm3096 = vcmp.lt.s32.totalorder %v2840, 2048
        %vm3097 = vcmp.lt.s32.totalorder %v2841, 2048
        %vm3098 = vcmp.lt.s32.totalorder %v2842, 2048
        %vm3099 = vcmp.lt.s32.totalorder %v2843, 2048
        %vm3100 = vcmp.lt.s32.totalorder %v2844, 2048
        %vm3101 = vcmp.lt.s32.totalorder %v2845, 2048
        %vm3102 = vcmp.lt.s32.totalorder %v2846, 2048
        %vm3103 = vcmp.lt.s32.totalorder %v2847, 2048
        %vm3104 = vcmp.lt.s32.totalorder %v2848, 2048
        %vm3105 = vcmp.lt.s32.totalorder %v2849, 2048
        %vm3106 = vcmp.lt.s32.totalorder %v2850, 2048
        %vm3107 = vcmp.lt.s32.totalorder %v2851, 2048
        %vm3108 = vcmp.lt.s32.totalorder %v2852, 2048
        %vm3109 = vcmp.lt.s32.totalorder %v2853, 2048
        %vm3110 = vcmp.lt.s32.totalorder %v2854, 2048
        %vm3111 = vcmp.lt.s32.totalorder %v2855, 2048
        %vm3112 = vcmp.lt.s32.totalorder %v2856, 2048
        %vm3113 = vcmp.lt.s32.totalorder %v2857, 2048
        %vm3114 = vcmp.lt.s32.totalorder %v2858, 2048
        %vm3115 = vcmp.lt.s32.totalorder %v2859, 2048
        %vm3116 = vcmp.lt.s32.totalorder %v2860, 2048
        %vm3117 = vcmp.lt.s32.totalorder %v2861, 2048
        %vm3118 = vcmp.lt.s32.totalorder %v2862, 2048
        %vm3119 = vcmp.lt.s32.totalorder %v2863, 2048
        %vm3120 = vcmp.lt.s32.totalorder %v2864, 2048
        %vm3121 = vcmp.lt.s32.totalorder %v2865, 2048
        %vm3122 = vcmp.lt.s32.totalorder %v2866, 2048
        %vm3123 = vcmp.lt.s32.totalorder %v2867, 2048
        %vm3124 = vcmp.lt.s32.totalorder %v2868, 2048
        %vm3125 = vcmp.lt.s32.totalorder %v2869, 2048
        %vm3126 = vcmp.lt.s32.totalorder %v2870, 2048
        %vm3127 = vcmp.lt.s32.totalorder %v2871, 2048
        %vm3128 = vcmp.lt.s32.totalorder %v2872, 2048
        %vm3129 = vcmp.lt.s32.totalorder %v2873, 2048
        %vm3130 = vcmp.lt.s32.totalorder %v2874, 2048
        %vm3131 = vcmp.lt.s32.totalorder %v2875, 2048
        %vm3132 = vcmp.lt.s32.totalorder %v2876, 2048
        %vm3133 = vcmp.lt.s32.totalorder %v2877, 2048
        %vm3134 = vcmp.lt.s32.totalorder %v2878, 2048
        %vm3135 = vcmp.lt.s32.totalorder %v2879, 2048
        %vm3136 = vcmp.lt.s32.totalorder %v2880, 2048
        %vm3137 = vcmp.lt.s32.totalorder %v2881, 2048
        %vm3138 = vcmp.lt.s32.totalorder %v2882, 2048
        %vm3139 = vcmp.lt.s32.totalorder %v2883, 2048
        %vm3140 = vcmp.lt.s32.totalorder %v2884, 2048
        %vm3141 = vcmp.lt.s32.totalorder %v2885, 2048
        %vm3142 = vcmp.lt.s32.totalorder %v2886, 2048
        %vm3143 = vcmp.lt.s32.totalorder %v2887, 2048
        %vm3144 = vcmp.lt.s32.totalorder %v2888, 2048
        %vm3145 = vcmp.lt.s32.totalorder %v2889, 2048
        %vm3146 = vcmp.lt.s32.totalorder %v2890, 2048
        %vm3147 = vcmp.lt.s32.totalorder %v2891, 2048
        %vm3148 = vcmp.lt.s32.totalorder %v2892, 2048
        %vm3149 = vcmp.lt.s32.totalorder %v2893, 2048
        %vm3150 = vcmp.lt.s32.totalorder %v2894, 2048
        %vm3151 = vcmp.lt.s32.totalorder %v2895, 2048
        %vm3152 = vcmp.lt.s32.totalorder %v2896, 2048
        %vm3153 = vcmp.lt.s32.totalorder %v2897, 2048
        %vm3154 = vcmp.lt.s32.totalorder %v2898, 2048
        %vm3155 = vcmp.lt.s32.totalorder %v2899, 2048
        %vm3156 = vcmp.lt.s32.totalorder %v2900, 2048
        %vm3157 = vcmp.lt.s32.totalorder %v2901, 2048
        %vm3158 = vcmp.lt.s32.totalorder %v2902, 2048
        %vm3159 = vcmp.lt.s32.totalorder %v2903, 2048
        %vm3160 = vcmp.lt.s32.totalorder %v2904, 2048
        %vm3161 = vcmp.lt.s32.totalorder %v2905, 2048
        %vm3162 = vcmp.lt.s32.totalorder %v2906, 2048
        %vm3163 = vcmp.lt.s32.totalorder %v2907, 2048
        %vm3164 = vcmp.lt.s32.totalorder %v2908, 2048
        %vm3165 = vcmp.lt.s32.totalorder %v2909, 2048
        %vm3166 = vcmp.lt.s32.totalorder %v2910, 2048
        %vm3167 = vcmp.lt.s32.totalorder %v2911, 2048
        %vm3168 = vcmp.lt.s32.totalorder %v2912, 2048
        %vm3169 = vcmp.lt.s32.totalorder %v2913, 2048
        %vm3170 = vcmp.lt.s32.totalorder %v2914, 2048
        %vm3171 = vcmp.lt.s32.totalorder %v2915, 2048
        %vm3172 = vcmp.lt.s32.totalorder %v2916, 2048
        %vm3173 = vcmp.lt.s32.totalorder %v2917, 2048
        %vm3174 = vcmp.lt.s32.totalorder %v2918, 2048
        %vm3175 = vcmp.lt.s32.totalorder %v2919, 2048
        %vm3176 = vcmp.lt.s32.totalorder %v2920, 2048
        %vm3177 = vcmp.lt.s32.totalorder %v2921, 2048
        %vm3178 = vcmp.lt.s32.totalorder %v2922, 2048
        %vm3179 = vcmp.lt.s32.totalorder %v2923, 2048
        %vm3180 = vcmp.lt.s32.totalorder %v2924, 2048
        %vm3181 = vcmp.lt.s32.totalorder %v2925, 2048
        %vm3182 = vcmp.lt.s32.totalorder %v2926, 2048
        %vm3183 = vcmp.lt.s32.totalorder %v2927, 2048
        %vm3184 = vcmp.lt.s32.totalorder %v2928, 2048
        %vm3185 = vcmp.lt.s32.totalorder %v2929, 2048
        %vm3186 = vcmp.lt.s32.totalorder %v2930, 2048
        %vm3187 = vcmp.lt.s32.totalorder %v2931, 2048
        %vm3188 = vcmp.lt.s32.totalorder %v2932, 2048
        %vm3189 = vcmp.lt.s32.totalorder %v2933, 2048
        %vm3190 = vcmp.lt.s32.totalorder %v2934, 2048
        %vm3191 = vcmp.lt.s32.totalorder %v2935, 2048
        %vm3192 = vcmp.lt.s32.totalorder %v2936, 2048
        %vm3193 = vcmp.lt.s32.totalorder %v2937, 2048
        %vm3194 = vcmp.lt.s32.totalorder %v2938, 2048
        %vm3195 = vcmp.lt.s32.totalorder %v2939, 2048
        %vm3196 = vcmp.lt.s32.totalorder %v2940, 2048
        %vm3197 = vcmp.lt.s32.totalorder %v2941, 2048
        %vm3198 = vcmp.lt.s32.totalorder %v2942, 2048
        %vm3199 = vcmp.lt.s32.totalorder %v2943, 2048
        %vm3200 = vcmp.lt.s32.totalorder %v2944, 2048
        %vm3201 = vcmp.lt.s32.totalorder %v2945, 2048
        %vm3202 = vcmp.lt.s32.totalorder %v2946, 2048
        %vm3203 = vcmp.lt.s32.totalorder %v2947, 2048
        %vm3204 = vcmp.lt.s32.totalorder %v2948, 2048
        %vm3205 = vcmp.lt.s32.totalorder %v2949, 2048
        %vm3206 = vcmp.lt.s32.totalorder %v2950, 2048
        %vm3207 = vcmp.lt.s32.totalorder %v2951, 2048
        %vm3208 = vcmp.lt.s32.totalorder %v2952, 2048
        %vm3209 = vcmp.lt.s32.totalorder %v2953, 2048
        %vm3210 = vcmp.lt.s32.totalorder %v2954, 2048
        %v3212 = vlaneseq
        %v3213 = vshrl.u32 %v3212, 7
        %v3214 = vsub.s32 0, %v3213
        %v3215 = vrot.slane %v2185, %v3214
        %v3217 = vsub.f32 %v2442, %v3215
        %v3218 = vsub.f32 %v2443, %v3215
        %v3219 = vsub.f32 %v2444, %v3215
        %v3220 = vsub.f32 %v2445, %v3215
        %v3221 = vsub.f32 %v2446, %v3215
        %v3222 = vsub.f32 %v2447, %v3215
        %v3223 = vsub.f32 %v2448, %v3215
        %v3224 = vsub.f32 %v2449, %v3215
        %v3225 = vsub.f32 %v2450, %v3215
        %v3226 = vsub.f32 %v2451, %v3215
        %v3227 = vsub.f32 %v2452, %v3215
        %v3228 = vsub.f32 %v2453, %v3215
        %v3229 = vsub.f32 %v2454, %v3215
        %v3230 = vsub.f32 %v2455, %v3215
        %v3231 = vsub.f32 %v2456, %v3215
        %v3232 = vsub.f32 %v2457, %v3215
        %v3233 = vsub.f32 %v2458, %v3215
        %v3234 = vsub.f32 %v2459, %v3215
        %v3235 = vsub.f32 %v2460, %v3215
        %v3236 = vsub.f32 %v2461, %v3215
        %v3237 = vsub.f32 %v2462, %v3215
        %v3238 = vsub.f32 %v2463, %v3215
        %v3239 = vsub.f32 %v2464, %v3215
        %v3240 = vsub.f32 %v2465, %v3215
        %v3241 = vsub.f32 %v2466, %v3215
        %v3242 = vsub.f32 %v2467, %v3215
        %v3243 = vsub.f32 %v2468, %v3215
        %v3244 = vsub.f32 %v2469, %v3215
        %v3245 = vsub.f32 %v2470, %v3215
        %v3246 = vsub.f32 %v2471, %v3215
        %v3247 = vsub.f32 %v2472, %v3215
        %v3248 = vsub.f32 %v2473, %v3215
        %v3249 = vsub.f32 %v2474, %v3215
        %v3250 = vsub.f32 %v2475, %v3215
        %v3251 = vsub.f32 %v2476, %v3215
        %v3252 = vsub.f32 %v2477, %v3215
        %v3253 = vsub.f32 %v2478, %v3215
        %v3254 = vsub.f32 %v2479, %v3215
        %v3255 = vsub.f32 %v2480, %v3215
        %v3256 = vsub.f32 %v2481, %v3215
        %v3257 = vsub.f32 %v2482, %v3215
        %v3258 = vsub.f32 %v2483, %v3215
        %v3259 = vsub.f32 %v2484, %v3215
        %v3260 = vsub.f32 %v2485, %v3215
        %v3261 = vsub.f32 %v2486, %v3215
        %v3262 = vsub.f32 %v2487, %v3215
        %v3263 = vsub.f32 %v2488, %v3215
        %v3264 = vsub.f32 %v2489, %v3215
        %v3265 = vsub.f32 %v2490, %v3215
        %v3266 = vsub.f32 %v2491, %v3215
        %v3267 = vsub.f32 %v2492, %v3215
        %v3268 = vsub.f32 %v2493, %v3215
        %v3269 = vsub.f32 %v2494, %v3215
        %v3270 = vsub.f32 %v2495, %v3215
        %v3271 = vsub.f32 %v2496, %v3215
        %v3272 = vsub.f32 %v2497, %v3215
        %v3273 = vsub.f32 %v2498, %v3215
        %v3274 = vsub.f32 %v2499, %v3215
        %v3275 = vsub.f32 %v2500, %v3215
        %v3276 = vsub.f32 %v2501, %v3215
        %v3277 = vsub.f32 %v2502, %v3215
        %v3278 = vsub.f32 %v2503, %v3215
        %v3279 = vsub.f32 %v2504, %v3215
        %v3280 = vsub.f32 %v2505, %v3215
        %v3281 = vsub.f32 %v2506, %v3215
        %v3282 = vsub.f32 %v2507, %v3215
        %v3283 = vsub.f32 %v2508, %v3215
        %v3284 = vsub.f32 %v2509, %v3215
        %v3285 = vsub.f32 %v2510, %v3215
        %v3286 = vsub.f32 %v2511, %v3215
        %v3287 = vsub.f32 %v2512, %v3215
        %v3288 = vsub.f32 %v2513, %v3215
        %v3289 = vsub.f32 %v2514, %v3215
        %v3290 = vsub.f32 %v2515, %v3215
        %v3291 = vsub.f32 %v2516, %v3215
        %v3292 = vsub.f32 %v2517, %v3215
        %v3293 = vsub.f32 %v2518, %v3215
        %v3294 = vsub.f32 %v2519, %v3215
        %v3295 = vsub.f32 %v2520, %v3215
        %v3296 = vsub.f32 %v2521, %v3215
        %v3297 = vsub.f32 %v2522, %v3215
        %v3298 = vsub.f32 %v2523, %v3215
        %v3299 = vsub.f32 %v2524, %v3215
        %v3300 = vsub.f32 %v2525, %v3215
        %v3301 = vsub.f32 %v2526, %v3215
        %v3302 = vsub.f32 %v2527, %v3215
        %v3303 = vsub.f32 %v2528, %v3215
        %v3304 = vsub.f32 %v2529, %v3215
        %v3305 = vsub.f32 %v2530, %v3215
        %v3306 = vsub.f32 %v2531, %v3215
        %v3307 = vsub.f32 %v2532, %v3215
        %v3308 = vsub.f32 %v2533, %v3215
        %v3309 = vsub.f32 %v2534, %v3215
        %v3310 = vsub.f32 %v2535, %v3215
        %v3311 = vsub.f32 %v2536, %v3215
        %v3312 = vsub.f32 %v2537, %v3215
        %v3313 = vsub.f32 %v2538, %v3215
        %v3314 = vsub.f32 %v2539, %v3215
        %v3315 = vsub.f32 %v2540, %v3215
        %v3316 = vsub.f32 %v2541, %v3215
        %v3317 = vsub.f32 %v2542, %v3215
        %v3318 = vsub.f32 %v2543, %v3215
        %v3319 = vsub.f32 %v2544, %v3215
        %v3320 = vsub.f32 %v2545, %v3215
        %v3321 = vsub.f32 %v2546, %v3215
        %v3322 = vsub.f32 %v2547, %v3215
        %v3323 = vsub.f32 %v2548, %v3215
        %v3324 = vsub.f32 %v2549, %v3215
        %v3325 = vsub.f32 %v2550, %v3215
        %v3326 = vsub.f32 %v2551, %v3215
        %v3327 = vsub.f32 %v2552, %v3215
        %v3328 = vsub.f32 %v2553, %v3215
        %v3329 = vsub.f32 %v2554, %v3215
        %v3330 = vsub.f32 %v2555, %v3215
        %v3331 = vsub.f32 %v2556, %v3215
        %v3332 = vsub.f32 %v2557, %v3215
        %v3333 = vsub.f32 %v2558, %v3215
        %v3334 = vsub.f32 %v2559, %v3215
        %v3335 = vsub.f32 %v2560, %v3215
        %v3336 = vsub.f32 %v2561, %v3215
        %v3337 = vsub.f32 %v2562, %v3215
        %v3338 = vsub.f32 %v2563, %v3215
        %v3339 = vsub.f32 %v2564, %v3215
        %v3340 = vsub.f32 %v2565, %v3215
        %v3341 = vsub.f32 %v2566, %v3215
        %v3342 = vsub.f32 %v2567, %v3215
        %v3343 = vsub.f32 %v2568, %v3215
        %v3344 = vsub.f32 %v2569, %v3215
        %v3345 = vsub.f32 %v2570, %v3215
        %v3346 = vsub.f32 %v2571, %v3215
        %v3347 = vsub.f32 %v2572, %v3215
        %v3348 = vsub.f32 %v2573, %v3215
        %v3349 = vsub.f32 %v2574, %v3215
        %v3350 = vsub.f32 %v2575, %v3215
        %v3351 = vsub.f32 %v2576, %v3215
        %v3352 = vsub.f32 %v2577, %v3215
        %v3353 = vsub.f32 %v2578, %v3215
        %v3354 = vsub.f32 %v2579, %v3215
        %v3355 = vsub.f32 %v2580, %v3215
        %v3356 = vsub.f32 %v2581, %v3215
        %v3357 = vsub.f32 %v2582, %v3215
        %v3358 = vsub.f32 %v2583, %v3215
        %v3359 = vsub.f32 %v2584, %v3215
        %v3360 = vsub.f32 %v2585, %v3215
        %v3361 = vsub.f32 %v2586, %v3215
        %v3362 = vsub.f32 %v2587, %v3215
        %v3363 = vsub.f32 %v2588, %v3215
        %v3364 = vsub.f32 %v2589, %v3215
        %v3365 = vsub.f32 %v2590, %v3215
        %v3366 = vsub.f32 %v2591, %v3215
        %v3367 = vsub.f32 %v2592, %v3215
        %v3368 = vsub.f32 %v2593, %v3215
        %v3369 = vsub.f32 %v2594, %v3215
        %v3370 = vsub.f32 %v2595, %v3215
        %v3371 = vsub.f32 %v2596, %v3215
        %v3372 = vsub.f32 %v2597, %v3215
        %v3373 = vsub.f32 %v2598, %v3215
        %v3374 = vsub.f32 %v2599, %v3215
        %v3375 = vsub.f32 %v2600, %v3215
        %v3376 = vsub.f32 %v2601, %v3215
        %v3377 = vsub.f32 %v2602, %v3215
        %v3378 = vsub.f32 %v2603, %v3215
        %v3379 = vsub.f32 %v2604, %v3215
        %v3380 = vsub.f32 %v2605, %v3215
        %v3381 = vsub.f32 %v2606, %v3215
        %v3382 = vsub.f32 %v2607, %v3215
        %v3383 = vsub.f32 %v2608, %v3215
        %v3384 = vsub.f32 %v2609, %v3215
        %v3385 = vsub.f32 %v2610, %v3215
        %v3386 = vsub.f32 %v2611, %v3215
        %v3387 = vsub.f32 %v2612, %v3215
        %v3388 = vsub.f32 %v2613, %v3215
        %v3389 = vsub.f32 %v2614, %v3215
        %v3390 = vsub.f32 %v2615, %v3215
        %v3391 = vsub.f32 %v2616, %v3215
        %v3392 = vsub.f32 %v2617, %v3215
        %v3393 = vsub.f32 %v2618, %v3215
        %v3394 = vsub.f32 %v2619, %v3215
        %v3395 = vsub.f32 %v2620, %v3215
        %v3396 = vsub.f32 %v2621, %v3215
        %v3397 = vsub.f32 %v2622, %v3215
        %v3398 = vsub.f32 %v2623, %v3215
        %v3399 = vsub.f32 %v2624, %v3215
        %v3400 = vsub.f32 %v2625, %v3215
        %v3401 = vsub.f32 %v2626, %v3215
        %v3402 = vsub.f32 %v2627, %v3215
        %v3403 = vsub.f32 %v2628, %v3215
        %v3404 = vsub.f32 %v2629, %v3215
        %v3405 = vsub.f32 %v2630, %v3215
        %v3406 = vsub.f32 %v2631, %v3215
        %v3407 = vsub.f32 %v2632, %v3215
        %v3408 = vsub.f32 %v2633, %v3215
        %v3409 = vsub.f32 %v2634, %v3215
        %v3410 = vsub.f32 %v2635, %v3215
        %v3411 = vsub.f32 %v2636, %v3215
        %v3412 = vsub.f32 %v2637, %v3215
        %v3413 = vsub.f32 %v2638, %v3215
        %v3414 = vsub.f32 %v2639, %v3215
        %v3415 = vsub.f32 %v2640, %v3215
        %v3416 = vsub.f32 %v2641, %v3215
        %v3417 = vsub.f32 %v2642, %v3215
        %v3418 = vsub.f32 %v2643, %v3215
        %v3419 = vsub.f32 %v2644, %v3215
        %v3420 = vsub.f32 %v2645, %v3215
        %v3421 = vsub.f32 %v2646, %v3215
        %v3422 = vsub.f32 %v2647, %v3215
        %v3423 = vsub.f32 %v2648, %v3215
        %v3424 = vsub.f32 %v2649, %v3215
        %v3425 = vsub.f32 %v2650, %v3215
        %v3426 = vsub.f32 %v2651, %v3215
        %v3427 = vsub.f32 %v2652, %v3215
        %v3428 = vsub.f32 %v2653, %v3215
        %v3429 = vsub.f32 %v2654, %v3215
        %v3430 = vsub.f32 %v2655, %v3215
        %v3431 = vsub.f32 %v2656, %v3215
        %v3432 = vsub.f32 %v2657, %v3215
        %v3433 = vsub.f32 %v2658, %v3215
        %v3434 = vsub.f32 %v2659, %v3215
        %v3435 = vsub.f32 %v2660, %v3215
        %v3436 = vsub.f32 %v2661, %v3215
        %v3437 = vsub.f32 %v2662, %v3215
        %v3438 = vsub.f32 %v2663, %v3215
        %v3439 = vsub.f32 %v2664, %v3215
        %v3440 = vsub.f32 %v2665, %v3215
        %v3441 = vsub.f32 %v2666, %v3215
        %v3442 = vsub.f32 %v2667, %v3215
        %v3443 = vsub.f32 %v2668, %v3215
        %v3444 = vsub.f32 %v2669, %v3215
        %v3445 = vsub.f32 %v2670, %v3215
        %v3446 = vsub.f32 %v2671, %v3215
        %v3447 = vsub.f32 %v2672, %v3215
        %v3448 = vsub.f32 %v2673, %v3215
        %v3449 = vsub.f32 %v2674, %v3215
        %v3450 = vsub.f32 %v2675, %v3215
        %v3451 = vsub.f32 %v2676, %v3215
        %v3452 = vsub.f32 %v2677, %v3215
        %v3453 = vsub.f32 %v2678, %v3215
        %v3454 = vsub.f32 %v2679, %v3215
        %v3455 = vsub.f32 %v2680, %v3215
        %v3456 = vsub.f32 %v2681, %v3215
        %v3457 = vsub.f32 %v2682, %v3215
        %v3458 = vsub.f32 %v2683, %v3215
        %v3459 = vsub.f32 %v2684, %v3215
        %v3460 = vsub.f32 %v2685, %v3215
        %v3461 = vsub.f32 %v2686, %v3215
        %v3462 = vsub.f32 %v2687, %v3215
        %v3463 = vsub.f32 %v2688, %v3215
        %v3464 = vsub.f32 %v2689, %v3215
        %v3465 = vsub.f32 %v2690, %v3215
        %v3466 = vsub.f32 %v2691, %v3215
        %v3467 = vsub.f32 %v2692, %v3215
        %v3468 = vsub.f32 %v2693, %v3215
        %v3469 = vsub.f32 %v2694, %v3215
        %v3470 = vsub.f32 %v2695, %v3215
        %v3471 = vsub.f32 %v2696, %v3215
        %v3472 = vsub.f32 %v2697, %v3215
        %v3473 = vsel %vm2955, %v3217, 0.0
        %v3474 = vsel %vm2956, %v3218, 0.0
        %v3475 = vsel %vm2957, %v3219, 0.0
        %v3476 = vsel %vm2958, %v3220, 0.0
        %v3477 = vsel %vm2959, %v3221, 0.0
        %v3478 = vsel %vm2960, %v3222, 0.0
        %v3479 = vsel %vm2961, %v3223, 0.0
        %v3480 = vsel %vm2962, %v3224, 0.0
        %v3481 = vsel %vm2963, %v3225, 0.0
        %v3482 = vsel %vm2964, %v3226, 0.0
        %v3483 = vsel %vm2965, %v3227, 0.0
        %v3484 = vsel %vm2966, %v3228, 0.0
        %v3485 = vsel %vm2967, %v3229, 0.0
        %v3486 = vsel %vm2968, %v3230, 0.0
        %v3487 = vsel %vm2969, %v3231, 0.0
        %v3488 = vsel %vm2970, %v3232, 0.0
        %v3489 = vsel %vm2971, %v3233, 0.0
        %v3490 = vsel %vm2972, %v3234, 0.0
        %v3491 = vsel %vm2973, %v3235, 0.0
        %v3492 = vsel %vm2974, %v3236, 0.0
        %v3493 = vsel %vm2975, %v3237, 0.0
        %v3494 = vsel %vm2976, %v3238, 0.0
        %v3495 = vsel %vm2977, %v3239, 0.0
        %v3496 = vsel %vm2978, %v3240, 0.0
        %v3497 = vsel %vm2979, %v3241, 0.0
        %v3498 = vsel %vm2980, %v3242, 0.0
        %v3499 = vsel %vm2981, %v3243, 0.0
        %v3500 = vsel %vm2982, %v3244, 0.0
        %v3501 = vsel %vm2983, %v3245, 0.0
        %v3502 = vsel %vm2984, %v3246, 0.0
        %v3503 = vsel %vm2985, %v3247, 0.0
        %v3504 = vsel %vm2986, %v3248, 0.0
        %v3505 = vsel %vm2987, %v3249, 0.0
        %v3506 = vsel %vm2988, %v3250, 0.0
        %v3507 = vsel %vm2989, %v3251, 0.0
        %v3508 = vsel %vm2990, %v3252, 0.0
        %v3509 = vsel %vm2991, %v3253, 0.0
        %v3510 = vsel %vm2992, %v3254, 0.0
        %v3511 = vsel %vm2993, %v3255, 0.0
        %v3512 = vsel %vm2994, %v3256, 0.0
        %v3513 = vsel %vm2995, %v3257, 0.0
        %v3514 = vsel %vm2996, %v3258, 0.0
        %v3515 = vsel %vm2997, %v3259, 0.0
        %v3516 = vsel %vm2998, %v3260, 0.0
        %v3517 = vsel %vm2999, %v3261, 0.0
        %v3518 = vsel %vm3000, %v3262, 0.0
        %v3519 = vsel %vm3001, %v3263, 0.0
        %v3520 = vsel %vm3002, %v3264, 0.0
        %v3521 = vsel %vm3003, %v3265, 0.0
        %v3522 = vsel %vm3004, %v3266, 0.0
        %v3523 = vsel %vm3005, %v3267, 0.0
        %v3524 = vsel %vm3006, %v3268, 0.0
        %v3525 = vsel %vm3007, %v3269, 0.0
        %v3526 = vsel %vm3008, %v3270, 0.0
        %v3527 = vsel %vm3009, %v3271, 0.0
        %v3528 = vsel %vm3010, %v3272, 0.0
        %v3529 = vsel %vm3011, %v3273, 0.0
        %v3530 = vsel %vm3012, %v3274, 0.0
        %v3531 = vsel %vm3013, %v3275, 0.0
        %v3532 = vsel %vm3014, %v3276, 0.0
        %v3533 = vsel %vm3015, %v3277, 0.0
        %v3534 = vsel %vm3016, %v3278, 0.0
        %v3535 = vsel %vm3017, %v3279, 0.0
        %v3536 = vsel %vm3018, %v3280, 0.0
        %v3537 = vsel %vm3019, %v3281, 0.0
        %v3538 = vsel %vm3020, %v3282, 0.0
        %v3539 = vsel %vm3021, %v3283, 0.0
        %v3540 = vsel %vm3022, %v3284, 0.0
        %v3541 = vsel %vm3023, %v3285, 0.0
        %v3542 = vsel %vm3024, %v3286, 0.0
        %v3543 = vsel %vm3025, %v3287, 0.0
        %v3544 = vsel %vm3026, %v3288, 0.0
        %v3545 = vsel %vm3027, %v3289, 0.0
        %v3546 = vsel %vm3028, %v3290, 0.0
        %v3547 = vsel %vm3029, %v3291, 0.0
        %v3548 = vsel %vm3030, %v3292, 0.0
        %v3549 = vsel %vm3031, %v3293, 0.0
        %v3550 = vsel %vm3032, %v3294, 0.0
        %v3551 = vsel %vm3033, %v3295, 0.0
        %v3552 = vsel %vm3034, %v3296, 0.0
        %v3553 = vsel %vm3035, %v3297, 0.0
        %v3554 = vsel %vm3036, %v3298, 0.0
        %v3555 = vsel %vm3037, %v3299, 0.0
        %v3556 = vsel %vm3038, %v3300, 0.0
        %v3557 = vsel %vm3039, %v3301, 0.0
        %v3558 = vsel %vm3040, %v3302, 0.0
        %v3559 = vsel %vm3041, %v3303, 0.0
        %v3560 = vsel %vm3042, %v3304, 0.0
        %v3561 = vsel %vm3043, %v3305, 0.0
        %v3562 = vsel %vm3044, %v3306, 0.0
        %v3563 = vsel %vm3045, %v3307, 0.0
        %v3564 = vsel %vm3046, %v3308, 0.0
        %v3565 = vsel %vm3047, %v3309, 0.0
        %v3566 = vsel %vm3048, %v3310, 0.0
        %v3567 = vsel %vm3049, %v3311, 0.0
        %v3568 = vsel %vm3050, %v3312, 0.0
        %v3569 = vsel %vm3051, %v3313, 0.0
        %v3570 = vsel %vm3052, %v3314, 0.0
        %v3571 = vsel %vm3053, %v3315, 0.0
        %v3572 = vsel %vm3054, %v3316, 0.0
        %v3573 = vsel %vm3055, %v3317, 0.0
        %v3574 = vsel %vm3056, %v3318, 0.0
        %v3575 = vsel %vm3057, %v3319, 0.0
        %v3576 = vsel %vm3058, %v3320, 0.0
        %v3577 = vsel %vm3059, %v3321, 0.0
        %v3578 = vsel %vm3060, %v3322, 0.0
        %v3579 = vsel %vm3061, %v3323, 0.0
        %v3580 = vsel %vm3062, %v3324, 0.0
        %v3581 = vsel %vm3063, %v3325, 0.0
        %v3582 = vsel %vm3064, %v3326, 0.0
        %v3583 = vsel %vm3065, %v3327, 0.0
        %v3584 = vsel %vm3066, %v3328, 0.0
        %v3585 = vsel %vm3067, %v3329, 0.0
        %v3586 = vsel %vm3068, %v3330, 0.0
        %v3587 = vsel %vm3069, %v3331, 0.0
        %v3588 = vsel %vm3070, %v3332, 0.0
        %v3589 = vsel %vm3071, %v3333, 0.0
        %v3590 = vsel %vm3072, %v3334, 0.0
        %v3591 = vsel %vm3073, %v3335, 0.0
        %v3592 = vsel %vm3074, %v3336, 0.0
        %v3593 = vsel %vm3075, %v3337, 0.0
        %v3594 = vsel %vm3076, %v3338, 0.0
        %v3595 = vsel %vm3077, %v3339, 0.0
        %v3596 = vsel %vm3078, %v3340, 0.0
        %v3597 = vsel %vm3079, %v3341, 0.0
        %v3598 = vsel %vm3080, %v3342, 0.0
        %v3599 = vsel %vm3081, %v3343, 0.0
        %v3600 = vsel %vm3082, %v3344, 0.0
        %v3601 = vsel %vm3083, %v3345, 0.0
        %v3602 = vsel %vm3084, %v3346, 0.0
        %v3603 = vsel %vm3085, %v3347, 0.0
        %v3604 = vsel %vm3086, %v3348, 0.0
        %v3605 = vsel %vm3087, %v3349, 0.0
        %v3606 = vsel %vm3088, %v3350, 0.0
        %v3607 = vsel %vm3089, %v3351, 0.0
        %v3608 = vsel %vm3090, %v3352, 0.0
        %v3609 = vsel %vm3091, %v3353, 0.0
        %v3610 = vsel %vm3092, %v3354, 0.0
        %v3611 = vsel %vm3093, %v3355, 0.0
        %v3612 = vsel %vm3094, %v3356, 0.0
        %v3613 = vsel %vm3095, %v3357, 0.0
        %v3614 = vsel %vm3096, %v3358, 0.0
        %v3615 = vsel %vm3097, %v3359, 0.0
        %v3616 = vsel %vm3098, %v3360, 0.0
        %v3617 = vsel %vm3099, %v3361, 0.0
        %v3618 = vsel %vm3100, %v3362, 0.0
        %v3619 = vsel %vm3101, %v3363, 0.0
        %v3620 = vsel %vm3102, %v3364, 0.0
        %v3621 = vsel %vm3103, %v3365, 0.0
        %v3622 = vsel %vm3104, %v3366, 0.0
        %v3623 = vsel %vm3105, %v3367, 0.0
        %v3624 = vsel %vm3106, %v3368, 0.0
        %v3625 = vsel %vm3107, %v3369, 0.0
        %v3626 = vsel %vm3108, %v3370, 0.0
        %v3627 = vsel %vm3109, %v3371, 0.0
        %v3628 = vsel %vm3110, %v3372, 0.0
        %v3629 = vsel %vm3111, %v3373, 0.0
        %v3630 = vsel %vm3112, %v3374, 0.0
        %v3631 = vsel %vm3113, %v3375, 0.0
        %v3632 = vsel %vm3114, %v3376, 0.0
        %v3633 = vsel %vm3115, %v3377, 0.0
        %v3634 = vsel %vm3116, %v3378, 0.0
        %v3635 = vsel %vm3117, %v3379, 0.0
        %v3636 = vsel %vm3118, %v3380, 0.0
        %v3637 = vsel %vm3119, %v3381, 0.0
        %v3638 = vsel %vm3120, %v3382, 0.0
        %v3639 = vsel %vm3121, %v3383, 0.0
        %v3640 = vsel %vm3122, %v3384, 0.0
        %v3641 = vsel %vm3123, %v3385, 0.0
        %v3642 = vsel %vm3124, %v3386, 0.0
        %v3643 = vsel %vm3125, %v3387, 0.0
        %v3644 = vsel %vm3126, %v3388, 0.0
        %v3645 = vsel %vm3127, %v3389, 0.0
        %v3646 = vsel %vm3128, %v3390, 0.0
        %v3647 = vsel %vm3129, %v3391, 0.0
        %v3648 = vsel %vm3130, %v3392, 0.0
        %v3649 = vsel %vm3131, %v3393, 0.0
        %v3650 = vsel %vm3132, %v3394, 0.0
        %v3651 = vsel %vm3133, %v3395, 0.0
        %v3652 = vsel %vm3134, %v3396, 0.0
        %v3653 = vsel %vm3135, %v3397, 0.0
        %v3654 = vsel %vm3136, %v3398, 0.0
        %v3655 = vsel %vm3137, %v3399, 0.0
        %v3656 = vsel %vm3138, %v3400, 0.0
        %v3657 = vsel %vm3139, %v3401, 0.0
        %v3658 = vsel %vm3140, %v3402, 0.0
        %v3659 = vsel %vm3141, %v3403, 0.0
        %v3660 = vsel %vm3142, %v3404, 0.0
        %v3661 = vsel %vm3143, %v3405, 0.0
        %v3662 = vsel %vm3144, %v3406, 0.0
        %v3663 = vsel %vm3145, %v3407, 0.0
        %v3664 = vsel %vm3146, %v3408, 0.0
        %v3665 = vsel %vm3147, %v3409, 0.0
        %v3666 = vsel %vm3148, %v3410, 0.0
        %v3667 = vsel %vm3149, %v3411, 0.0
        %v3668 = vsel %vm3150, %v3412, 0.0
        %v3669 = vsel %vm3151, %v3413, 0.0
        %v3670 = vsel %vm3152, %v3414, 0.0
        %v3671 = vsel %vm3153, %v3415, 0.0
        %v3672 = vsel %vm3154, %v3416, 0.0
        %v3673 = vsel %vm3155, %v3417, 0.0
        %v3674 = vsel %vm3156, %v3418, 0.0
        %v3675 = vsel %vm3157, %v3419, 0.0
        %v3676 = vsel %vm3158, %v3420, 0.0
        %v3677 = vsel %vm3159, %v3421, 0.0
        %v3678 = vsel %vm3160, %v3422, 0.0
        %v3679 = vsel %vm3161, %v3423, 0.0
        %v3680 = vsel %vm3162, %v3424, 0.0
        %v3681 = vsel %vm3163, %v3425, 0.0
        %v3682 = vsel %vm3164, %v3426, 0.0
        %v3683 = vsel %vm3165, %v3427, 0.0
        %v3684 = vsel %vm3166, %v3428, 0.0
        %v3685 = vsel %vm3167, %v3429, 0.0
        %v3686 = vsel %vm3168, %v3430, 0.0
        %v3687 = vsel %vm3169, %v3431, 0.0
        %v3688 = vsel %vm3170, %v3432, 0.0
        %v3689 = vsel %vm3171, %v3433, 0.0
        %v3690 = vsel %vm3172, %v3434, 0.0
        %v3691 = vsel %vm3173, %v3435, 0.0
        %v3692 = vsel %vm3174, %v3436, 0.0
        %v3693 = vsel %vm3175, %v3437, 0.0
        %v3694 = vsel %vm3176, %v3438, 0.0
        %v3695 = vsel %vm3177, %v3439, 0.0
        %v3696 = vsel %vm3178, %v3440, 0.0
        %v3697 = vsel %vm3179, %v3441, 0.0
        %v3698 = vsel %vm3180, %v3442, 0.0
        %v3699 = vsel %vm3181, %v3443, 0.0
        %v3700 = vsel %vm3182, %v3444, 0.0
        %v3701 = vsel %vm3183, %v3445, 0.0
        %v3702 = vsel %vm3184, %v3446, 0.0
        %v3703 = vsel %vm3185, %v3447, 0.0
        %v3704 = vsel %vm3186, %v3448, 0.0
        %v3705 = vsel %vm3187, %v3449, 0.0
        %v3706 = vsel %vm3188, %v3450, 0.0
        %v3707 = vsel %vm3189, %v3451, 0.0
        %v3708 = vsel %vm3190, %v3452, 0.0
        %v3709 = vsel %vm3191, %v3453, 0.0
        %v3710 = vsel %vm3192, %v3454, 0.0
        %v3711 = vsel %vm3193, %v3455, 0.0
        %v3712 = vsel %vm3194, %v3456, 0.0
        %v3713 = vsel %vm3195, %v3457, 0.0
        %v3714 = vsel %vm3196, %v3458, 0.0
        %v3715 = vsel %vm3197, %v3459, 0.0
        %v3716 = vsel %vm3198, %v3460, 0.0
        %v3717 = vsel %vm3199, %v3461, 0.0
        %v3718 = vsel %vm3200, %v3462, 0.0
        %v3719 = vsel %vm3201, %v3463, 0.0
        %v3720 = vsel %vm3202, %v3464, 0.0
        %v3721 = vsel %vm3203, %v3465, 0.0
        %v3722 = vsel %vm3204, %v3466, 0.0
        %v3723 = vsel %vm3205, %v3467, 0.0
        %v3724 = vsel %vm3206, %v3468, 0.0
        %v3725 = vsel %vm3207, %v3469, 0.0
        %v3726 = vsel %vm3208, %v3470, 0.0
        %v3727 = vsel %vm3209, %v3471, 0.0
        %v3728 = vsel %vm3210, %v3472, 0.0
        %v3729 = vmul.f32 %v3473, %v3473
        %v3730 = vmul.f32 %v3474, %v3474
        %v3731 = vmul.f32 %v3475, %v3475
        %v3732 = vmul.f32 %v3476, %v3476
        %v3733 = vmul.f32 %v3477, %v3477
        %v3734 = vmul.f32 %v3478, %v3478
        %v3735 = vmul.f32 %v3479, %v3479
        %v3736 = vmul.f32 %v3480, %v3480
        %v3737 = vmul.f32 %v3481, %v3481
        %v3738 = vmul.f32 %v3482, %v3482
        %v3739 = vmul.f32 %v3483, %v3483
        %v3740 = vmul.f32 %v3484, %v3484
        %v3741 = vmul.f32 %v3485, %v3485
        %v3742 = vmul.f32 %v3486, %v3486
        %v3743 = vmul.f32 %v3487, %v3487
        %v3744 = vmul.f32 %v3488, %v3488
        %v3745 = vmul.f32 %v3489, %v3489
        %v3746 = vmul.f32 %v3490, %v3490
        %v3747 = vmul.f32 %v3491, %v3491
        %v3748 = vmul.f32 %v3492, %v3492
        %v3749 = vmul.f32 %v3493, %v3493
        %v3750 = vmul.f32 %v3494, %v3494
        %v3751 = vmul.f32 %v3495, %v3495
        %v3752 = vmul.f32 %v3496, %v3496
        %v3753 = vmul.f32 %v3497, %v3497
        %v3754 = vmul.f32 %v3498, %v3498
        %v3755 = vmul.f32 %v3499, %v3499
        %v3756 = vmul.f32 %v3500, %v3500
        %v3757 = vmul.f32 %v3501, %v3501
        %v3758 = vmul.f32 %v3502, %v3502
        %v3759 = vmul.f32 %v3503, %v3503
        %v3760 = vmul.f32 %v3504, %v3504
        %v3761 = vmul.f32 %v3505, %v3505
        %v3762 = vmul.f32 %v3506, %v3506
        %v3763 = vmul.f32 %v3507, %v3507
        %v3764 = vmul.f32 %v3508, %v3508
        %v3765 = vmul.f32 %v3509, %v3509
        %v3766 = vmul.f32 %v3510, %v3510
        %v3767 = vmul.f32 %v3511, %v3511
        %v3768 = vmul.f32 %v3512, %v3512
        %v3769 = vmul.f32 %v3513, %v3513
        %v3770 = vmul.f32 %v3514, %v3514
        %v3771 = vmul.f32 %v3515, %v3515
        %v3772 = vmul.f32 %v3516, %v3516
        %v3773 = vmul.f32 %v3517, %v3517
        %v3774 = vmul.f32 %v3518, %v3518
        %v3775 = vmul.f32 %v3519, %v3519
        %v3776 = vmul.f32 %v3520, %v3520
        %v3777 = vmul.f32 %v3521, %v3521
        %v3778 = vmul.f32 %v3522, %v3522
        %v3779 = vmul.f32 %v3523, %v3523
        %v3780 = vmul.f32 %v3524, %v3524
        %v3781 = vmul.f32 %v3525, %v3525
        %v3782 = vmul.f32 %v3526, %v3526
        %v3783 = vmul.f32 %v3527, %v3527
        %v3784 = vmul.f32 %v3528, %v3528
        %v3785 = vmul.f32 %v3529, %v3529
        %v3786 = vmul.f32 %v3530, %v3530
        %v3787 = vmul.f32 %v3531, %v3531
        %v3788 = vmul.f32 %v3532, %v3532
        %v3789 = vmul.f32 %v3533, %v3533
        %v3790 = vmul.f32 %v3534, %v3534
        %v3791 = vmul.f32 %v3535, %v3535
        %v3792 = vmul.f32 %v3536, %v3536
        %v3793 = vmul.f32 %v3537, %v3537
        %v3794 = vmul.f32 %v3538, %v3538
        %v3795 = vmul.f32 %v3539, %v3539
        %v3796 = vmul.f32 %v3540, %v3540
        %v3797 = vmul.f32 %v3541, %v3541
        %v3798 = vmul.f32 %v3542, %v3542
        %v3799 = vmul.f32 %v3543, %v3543
        %v3800 = vmul.f32 %v3544, %v3544
        %v3801 = vmul.f32 %v3545, %v3545
        %v3802 = vmul.f32 %v3546, %v3546
        %v3803 = vmul.f32 %v3547, %v3547
        %v3804 = vmul.f32 %v3548, %v3548
        %v3805 = vmul.f32 %v3549, %v3549
        %v3806 = vmul.f32 %v3550, %v3550
        %v3807 = vmul.f32 %v3551, %v3551
        %v3808 = vmul.f32 %v3552, %v3552
        %v3809 = vmul.f32 %v3553, %v3553
        %v3810 = vmul.f32 %v3554, %v3554
        %v3811 = vmul.f32 %v3555, %v3555
        %v3812 = vmul.f32 %v3556, %v3556
        %v3813 = vmul.f32 %v3557, %v3557
        %v3814 = vmul.f32 %v3558, %v3558
        %v3815 = vmul.f32 %v3559, %v3559
        %v3816 = vmul.f32 %v3560, %v3560
        %v3817 = vmul.f32 %v3561, %v3561
        %v3818 = vmul.f32 %v3562, %v3562
        %v3819 = vmul.f32 %v3563, %v3563
        %v3820 = vmul.f32 %v3564, %v3564
        %v3821 = vmul.f32 %v3565, %v3565
        %v3822 = vmul.f32 %v3566, %v3566
        %v3823 = vmul.f32 %v3567, %v3567
        %v3824 = vmul.f32 %v3568, %v3568
        %v3825 = vmul.f32 %v3569, %v3569
        %v3826 = vmul.f32 %v3570, %v3570
        %v3827 = vmul.f32 %v3571, %v3571
        %v3828 = vmul.f32 %v3572, %v3572
        %v3829 = vmul.f32 %v3573, %v3573
        %v3830 = vmul.f32 %v3574, %v3574
        %v3831 = vmul.f32 %v3575, %v3575
        %v3832 = vmul.f32 %v3576, %v3576
        %v3833 = vmul.f32 %v3577, %v3577
        %v3834 = vmul.f32 %v3578, %v3578
        %v3835 = vmul.f32 %v3579, %v3579
        %v3836 = vmul.f32 %v3580, %v3580
        %v3837 = vmul.f32 %v3581, %v3581
        %v3838 = vmul.f32 %v3582, %v3582
        %v3839 = vmul.f32 %v3583, %v3583
        %v3840 = vmul.f32 %v3584, %v3584
        %v3841 = vmul.f32 %v3585, %v3585
        %v3842 = vmul.f32 %v3586, %v3586
        %v3843 = vmul.f32 %v3587, %v3587
        %v3844 = vmul.f32 %v3588, %v3588
        %v3845 = vmul.f32 %v3589, %v3589
        %v3846 = vmul.f32 %v3590, %v3590
        %v3847 = vmul.f32 %v3591, %v3591
        %v3848 = vmul.f32 %v3592, %v3592
        %v3849 = vmul.f32 %v3593, %v3593
        %v3850 = vmul.f32 %v3594, %v3594
        %v3851 = vmul.f32 %v3595, %v3595
        %v3852 = vmul.f32 %v3596, %v3596
        %v3853 = vmul.f32 %v3597, %v3597
        %v3854 = vmul.f32 %v3598, %v3598
        %v3855 = vmul.f32 %v3599, %v3599
        %v3856 = vmul.f32 %v3600, %v3600
        %v3857 = vmul.f32 %v3601, %v3601
        %v3858 = vmul.f32 %v3602, %v3602
        %v3859 = vmul.f32 %v3603, %v3603
        %v3860 = vmul.f32 %v3604, %v3604
        %v3861 = vmul.f32 %v3605, %v3605
        %v3862 = vmul.f32 %v3606, %v3606
        %v3863 = vmul.f32 %v3607, %v3607
        %v3864 = vmul.f32 %v3608, %v3608
        %v3865 = vmul.f32 %v3609, %v3609
        %v3866 = vmul.f32 %v3610, %v3610
        %v3867 = vmul.f32 %v3611, %v3611
        %v3868 = vmul.f32 %v3612, %v3612
        %v3869 = vmul.f32 %v3613, %v3613
        %v3870 = vmul.f32 %v3614, %v3614
        %v3871 = vmul.f32 %v3615, %v3615
        %v3872 = vmul.f32 %v3616, %v3616
        %v3873 = vmul.f32 %v3617, %v3617
        %v3874 = vmul.f32 %v3618, %v3618
        %v3875 = vmul.f32 %v3619, %v3619
        %v3876 = vmul.f32 %v3620, %v3620
        %v3877 = vmul.f32 %v3621, %v3621
        %v3878 = vmul.f32 %v3622, %v3622
        %v3879 = vmul.f32 %v3623, %v3623
        %v3880 = vmul.f32 %v3624, %v3624
        %v3881 = vmul.f32 %v3625, %v3625
        %v3882 = vmul.f32 %v3626, %v3626
        %v3883 = vmul.f32 %v3627, %v3627
        %v3884 = vmul.f32 %v3628, %v3628
        %v3885 = vmul.f32 %v3629, %v3629
        %v3886 = vmul.f32 %v3630, %v3630
        %v3887 = vmul.f32 %v3631, %v3631
        %v3888 = vmul.f32 %v3632, %v3632
        %v3889 = vmul.f32 %v3633, %v3633
        %v3890 = vmul.f32 %v3634, %v3634
        %v3891 = vmul.f32 %v3635, %v3635
        %v3892 = vmul.f32 %v3636, %v3636
        %v3893 = vmul.f32 %v3637, %v3637
        %v3894 = vmul.f32 %v3638, %v3638
        %v3895 = vmul.f32 %v3639, %v3639
        %v3896 = vmul.f32 %v3640, %v3640
        %v3897 = vmul.f32 %v3641, %v3641
        %v3898 = vmul.f32 %v3642, %v3642
        %v3899 = vmul.f32 %v3643, %v3643
        %v3900 = vmul.f32 %v3644, %v3644
        %v3901 = vmul.f32 %v3645, %v3645
        %v3902 = vmul.f32 %v3646, %v3646
        %v3903 = vmul.f32 %v3647, %v3647
        %v3904 = vmul.f32 %v3648, %v3648
        %v3905 = vmul.f32 %v3649, %v3649
        %v3906 = vmul.f32 %v3650, %v3650
        %v3907 = vmul.f32 %v3651, %v3651
        %v3908 = vmul.f32 %v3652, %v3652
        %v3909 = vmul.f32 %v3653, %v3653
        %v3910 = vmul.f32 %v3654, %v3654
        %v3911 = vmul.f32 %v3655, %v3655
        %v3912 = vmul.f32 %v3656, %v3656
        %v3913 = vmul.f32 %v3657, %v3657
        %v3914 = vmul.f32 %v3658, %v3658
        %v3915 = vmul.f32 %v3659, %v3659
        %v3916 = vmul.f32 %v3660, %v3660
        %v3917 = vmul.f32 %v3661, %v3661
        %v3918 = vmul.f32 %v3662, %v3662
        %v3919 = vmul.f32 %v3663, %v3663
        %v3920 = vmul.f32 %v3664, %v3664
        %v3921 = vmul.f32 %v3665, %v3665
        %v3922 = vmul.f32 %v3666, %v3666
        %v3923 = vmul.f32 %v3667, %v3667
        %v3924 = vmul.f32 %v3668, %v3668
        %v3925 = vmul.f32 %v3669, %v3669
        %v3926 = vmul.f32 %v3670, %v3670
        %v3927 = vmul.f32 %v3671, %v3671
        %v3928 = vmul.f32 %v3672, %v3672
        %v3929 = vmul.f32 %v3673, %v3673
        %v3930 = vmul.f32 %v3674, %v3674
        %v3931 = vmul.f32 %v3675, %v3675
        %v3932 = vmul.f32 %v3676, %v3676
        %v3933 = vmul.f32 %v3677, %v3677
        %v3934 = vmul.f32 %v3678, %v3678
        %v3935 = vmul.f32 %v3679, %v3679
        %v3936 = vmul.f32 %v3680, %v3680
        %v3937 = vmul.f32 %v3681, %v3681
        %v3938 = vmul.f32 %v3682, %v3682
        %v3939 = vmul.f32 %v3683, %v3683
        %v3940 = vmul.f32 %v3684, %v3684
        %v3941 = vmul.f32 %v3685, %v3685
        %v3942 = vmul.f32 %v3686, %v3686
        %v3943 = vmul.f32 %v3687, %v3687
        %v3944 = vmul.f32 %v3688, %v3688
        %v3945 = vmul.f32 %v3689, %v3689
        %v3946 = vmul.f32 %v3690, %v3690
        %v3947 = vmul.f32 %v3691, %v3691
        %v3948 = vmul.f32 %v3692, %v3692
        %v3949 = vmul.f32 %v3693, %v3693
        %v3950 = vmul.f32 %v3694, %v3694
        %v3951 = vmul.f32 %v3695, %v3695
        %v3952 = vmul.f32 %v3696, %v3696
        %v3953 = vmul.f32 %v3697, %v3697
        %v3954 = vmul.f32 %v3698, %v3698
        %v3955 = vmul.f32 %v3699, %v3699
        %v3956 = vmul.f32 %v3700, %v3700
        %v3957 = vmul.f32 %v3701, %v3701
        %v3958 = vmul.f32 %v3702, %v3702
        %v3959 = vmul.f32 %v3703, %v3703
        %v3960 = vmul.f32 %v3704, %v3704
        %v3961 = vmul.f32 %v3705, %v3705
        %v3962 = vmul.f32 %v3706, %v3706
        %v3963 = vmul.f32 %v3707, %v3707
        %v3964 = vmul.f32 %v3708, %v3708
        %v3965 = vmul.f32 %v3709, %v3709
        %v3966 = vmul.f32 %v3710, %v3710
        %v3967 = vmul.f32 %v3711, %v3711
        %v3968 = vmul.f32 %v3712, %v3712
        %v3969 = vmul.f32 %v3713, %v3713
        %v3970 = vmul.f32 %v3714, %v3714
        %v3971 = vmul.f32 %v3715, %v3715
        %v3972 = vmul.f32 %v3716, %v3716
        %v3973 = vmul.f32 %v3717, %v3717
        %v3974 = vmul.f32 %v3718, %v3718
        %v3975 = vmul.f32 %v3719, %v3719
        %v3976 = vmul.f32 %v3720, %v3720
        %v3977 = vmul.f32 %v3721, %v3721
        %v3978 = vmul.f32 %v3722, %v3722
        %v3979 = vmul.f32 %v3723, %v3723
        %v3980 = vmul.f32 %v3724, %v3724
        %v3981 = vmul.f32 %v3725, %v3725
        %v3982 = vmul.f32 %v3726, %v3726
        %v3983 = vmul.f32 %v3727, %v3727
        %v3984 = vmul.f32 %v3728, %v3728
        %v3985 = vadd.f32 %v3729, %v3730
        %v3986 = vadd.f32 %v3985, %v3731
        %v3987 = vadd.f32 %v3986, %v3732
        %v3988 = vadd.f32 %v3987, %v3733
        %v3989 = vadd.f32 %v3988, %v3734
        %v3990 = vadd.f32 %v3989, %v3735
        %v3991 = vadd.f32 %v3990, %v3736
        %v3992 = vadd.f32 %v3991, %v3737
        %v3993 = vadd.f32 %v3992, %v3738
        %v3994 = vadd.f32 %v3993, %v3739
        %v3995 = vadd.f32 %v3994, %v3740
        %v3996 = vadd.f32 %v3995, %v3741
        %v3997 = vadd.f32 %v3996, %v3742
        %v3998 = vadd.f32 %v3997, %v3743
        %v3999 = vadd.f32 %v3998, %v3744
        %v4000 = vadd.f32 %v3999, %v3745
        %v4001 = vadd.f32 %v4000, %v3746
        %v4002 = vadd.f32 %v4001, %v3747
        %v4003 = vadd.f32 %v4002, %v3748
        %v4004 = vadd.f32 %v4003, %v3749
        %v4005 = vadd.f32 %v4004, %v3750
        %v4006 = vadd.f32 %v4005, %v3751
        %v4007 = vadd.f32 %v4006, %v3752
        %v4008 = vadd.f32 %v4007, %v3753
        %v4009 = vadd.f32 %v4008, %v3754
        %v4010 = vadd.f32 %v4009, %v3755
        %v4011 = vadd.f32 %v4010, %v3756
        %v4012 = vadd.f32 %v4011, %v3757
        %v4013 = vadd.f32 %v4012, %v3758
        %v4014 = vadd.f32 %v4013, %v3759
        %v4015 = vadd.f32 %v4014, %v3760
        %v4016 = vadd.f32 %v4015, %v3761
        %v4017 = vadd.f32 %v4016, %v3762
        %v4018 = vadd.f32 %v4017, %v3763
        %v4019 = vadd.f32 %v4018, %v3764
        %v4020 = vadd.f32 %v4019, %v3765
        %v4021 = vadd.f32 %v4020, %v3766
        %v4022 = vadd.f32 %v4021, %v3767
        %v4023 = vadd.f32 %v4022, %v3768
        %v4024 = vadd.f32 %v4023, %v3769
        %v4025 = vadd.f32 %v4024, %v3770
        %v4026 = vadd.f32 %v4025, %v3771
        %v4027 = vadd.f32 %v4026, %v3772
        %v4028 = vadd.f32 %v4027, %v3773
        %v4029 = vadd.f32 %v4028, %v3774
        %v4030 = vadd.f32 %v4029, %v3775
        %v4031 = vadd.f32 %v4030, %v3776
        %v4032 = vadd.f32 %v4031, %v3777
        %v4033 = vadd.f32 %v4032, %v3778
        %v4034 = vadd.f32 %v4033, %v3779
        %v4035 = vadd.f32 %v4034, %v3780
        %v4036 = vadd.f32 %v4035, %v3781
        %v4037 = vadd.f32 %v4036, %v3782
        %v4038 = vadd.f32 %v4037, %v3783
        %v4039 = vadd.f32 %v4038, %v3784
        %v4040 = vadd.f32 %v4039, %v3785
        %v4041 = vadd.f32 %v4040, %v3786
        %v4042 = vadd.f32 %v4041, %v3787
        %v4043 = vadd.f32 %v4042, %v3788
        %v4044 = vadd.f32 %v4043, %v3789
        %v4045 = vadd.f32 %v4044, %v3790
        %v4046 = vadd.f32 %v4045, %v3791
        %v4047 = vadd.f32 %v4046, %v3792
        %v4048 = vadd.f32 %v4047, %v3793
        %v4049 = vadd.f32 %v4048, %v3794
        %v4050 = vadd.f32 %v4049, %v3795
        %v4051 = vadd.f32 %v4050, %v3796
        %v4052 = vadd.f32 %v4051, %v3797
        %v4053 = vadd.f32 %v4052, %v3798
        %v4054 = vadd.f32 %v4053, %v3799
        %v4055 = vadd.f32 %v4054, %v3800
        %v4056 = vadd.f32 %v4055, %v3801
        %v4057 = vadd.f32 %v4056, %v3802
        %v4058 = vadd.f32 %v4057, %v3803
        %v4059 = vadd.f32 %v4058, %v3804
        %v4060 = vadd.f32 %v4059, %v3805
        %v4061 = vadd.f32 %v4060, %v3806
        %v4062 = vadd.f32 %v4061, %v3807
        %v4063 = vadd.f32 %v4062, %v3808
        %v4064 = vadd.f32 %v4063, %v3809
        %v4065 = vadd.f32 %v4064, %v3810
        %v4066 = vadd.f32 %v4065, %v3811
        %v4067 = vadd.f32 %v4066, %v3812
        %v4068 = vadd.f32 %v4067, %v3813
        %v4069 = vadd.f32 %v4068, %v3814
        %v4070 = vadd.f32 %v4069, %v3815
        %v4071 = vadd.f32 %v4070, %v3816
        %v4072 = vadd.f32 %v4071, %v3817
        %v4073 = vadd.f32 %v4072, %v3818
        %v4074 = vadd.f32 %v4073, %v3819
        %v4075 = vadd.f32 %v4074, %v3820
        %v4076 = vadd.f32 %v4075, %v3821
        %v4077 = vadd.f32 %v4076, %v3822
        %v4078 = vadd.f32 %v4077, %v3823
        %v4079 = vadd.f32 %v4078, %v3824
        %v4080 = vadd.f32 %v4079, %v3825
        %v4081 = vadd.f32 %v4080, %v3826
        %v4082 = vadd.f32 %v4081, %v3827
        %v4083 = vadd.f32 %v4082, %v3828
        %v4084 = vadd.f32 %v4083, %v3829
        %v4085 = vadd.f32 %v4084, %v3830
        %v4086 = vadd.f32 %v4085, %v3831
        %v4087 = vadd.f32 %v4086, %v3832
        %v4088 = vadd.f32 %v4087, %v3833
        %v4089 = vadd.f32 %v4088, %v3834
        %v4090 = vadd.f32 %v4089, %v3835
        %v4091 = vadd.f32 %v4090, %v3836
        %v4092 = vadd.f32 %v4091, %v3837
        %v4093 = vadd.f32 %v4092, %v3838
        %v4094 = vadd.f32 %v4093, %v3839
        %v4095 = vadd.f32 %v4094, %v3840
        %v4096 = vadd.f32 %v4095, %v3841
        %v4097 = vadd.f32 %v4096, %v3842
        %v4098 = vadd.f32 %v4097, %v3843
        %v4099 = vadd.f32 %v4098, %v3844
        %v4100 = vadd.f32 %v4099, %v3845
        %v4101 = vadd.f32 %v4100, %v3846
        %v4102 = vadd.f32 %v4101, %v3847
        %v4103 = vadd.f32 %v4102, %v3848
        %v4104 = vadd.f32 %v4103, %v3849
        %v4105 = vadd.f32 %v4104, %v3850
        %v4106 = vadd.f32 %v4105, %v3851
        %v4107 = vadd.f32 %v4106, %v3852
        %v4108 = vadd.f32 %v4107, %v3853
        %v4109 = vadd.f32 %v4108, %v3854
        %v4110 = vadd.f32 %v4109, %v3855
        %v4111 = vadd.f32 %v4110, %v3856
        %v4112 = vadd.f32 %v4111, %v3857
        %v4113 = vadd.f32 %v4112, %v3858
        %v4114 = vadd.f32 %v4113, %v3859
        %v4115 = vadd.f32 %v4114, %v3860
        %v4116 = vadd.f32 %v4115, %v3861
        %v4117 = vadd.f32 %v4116, %v3862
        %v4118 = vadd.f32 %v4117, %v3863
        %v4119 = vadd.f32 %v4118, %v3864
        %v4120 = vadd.f32 %v4119, %v3865
        %v4121 = vadd.f32 %v4120, %v3866
        %v4122 = vadd.f32 %v4121, %v3867
        %v4123 = vadd.f32 %v4122, %v3868
        %v4124 = vadd.f32 %v4123, %v3869
        %v4125 = vadd.f32 %v4124, %v3870
        %v4126 = vadd.f32 %v4125, %v3871
        %v4127 = vadd.f32 %v4126, %v3872
        %v4128 = vadd.f32 %v4127, %v3873
        %v4129 = vadd.f32 %v4128, %v3874
        %v4130 = vadd.f32 %v4129, %v3875
        %v4131 = vadd.f32 %v4130, %v3876
        %v4132 = vadd.f32 %v4131, %v3877
        %v4133 = vadd.f32 %v4132, %v3878
        %v4134 = vadd.f32 %v4133, %v3879
        %v4135 = vadd.f32 %v4134, %v3880
        %v4136 = vadd.f32 %v4135, %v3881
        %v4137 = vadd.f32 %v4136, %v3882
        %v4138 = vadd.f32 %v4137, %v3883
        %v4139 = vadd.f32 %v4138, %v3884
        %v4140 = vadd.f32 %v4139, %v3885
        %v4141 = vadd.f32 %v4140, %v3886
        %v4142 = vadd.f32 %v4141, %v3887
        %v4143 = vadd.f32 %v4142, %v3888
        %v4144 = vadd.f32 %v4143, %v3889
        %v4145 = vadd.f32 %v4144, %v3890
        %v4146 = vadd.f32 %v4145, %v3891
        %v4147 = vadd.f32 %v4146, %v3892
        %v4148 = vadd.f32 %v4147, %v3893
        %v4149 = vadd.f32 %v4148, %v3894
        %v4150 = vadd.f32 %v4149, %v3895
        %v4151 = vadd.f32 %v4150, %v3896
        %v4152 = vadd.f32 %v4151, %v3897
        %v4153 = vadd.f32 %v4152, %v3898
        %v4154 = vadd.f32 %v4153, %v3899
        %v4155 = vadd.f32 %v4154, %v3900
        %v4156 = vadd.f32 %v4155, %v3901
        %v4157 = vadd.f32 %v4156, %v3902
        %v4158 = vadd.f32 %v4157, %v3903
        %v4159 = vadd.f32 %v4158, %v3904
        %v4160 = vadd.f32 %v4159, %v3905
        %v4161 = vadd.f32 %v4160, %v3906
        %v4162 = vadd.f32 %v4161, %v3907
        %v4163 = vadd.f32 %v4162, %v3908
        %v4164 = vadd.f32 %v4163, %v3909
        %v4165 = vadd.f32 %v4164, %v3910
        %v4166 = vadd.f32 %v4165, %v3911
        %v4167 = vadd.f32 %v4166, %v3912
        %v4168 = vadd.f32 %v4167, %v3913
        %v4169 = vadd.f32 %v4168, %v3914
        %v4170 = vadd.f32 %v4169, %v3915
        %v4171 = vadd.f32 %v4170, %v3916
        %v4172 = vadd.f32 %v4171, %v3917
        %v4173 = vadd.f32 %v4172, %v3918
        %v4174 = vadd.f32 %v4173, %v3919
        %v4175 = vadd.f32 %v4174, %v3920
        %v4176 = vadd.f32 %v4175, %v3921
        %v4177 = vadd.f32 %v4176, %v3922
        %v4178 = vadd.f32 %v4177, %v3923
        %v4179 = vadd.f32 %v4178, %v3924
        %v4180 = vadd.f32 %v4179, %v3925
        %v4181 = vadd.f32 %v4180, %v3926
        %v4182 = vadd.f32 %v4181, %v3927
        %v4183 = vadd.f32 %v4182, %v3928
        %v4184 = vadd.f32 %v4183, %v3929
        %v4185 = vadd.f32 %v4184, %v3930
        %v4186 = vadd.f32 %v4185, %v3931
        %v4187 = vadd.f32 %v4186, %v3932
        %v4188 = vadd.f32 %v4187, %v3933
        %v4189 = vadd.f32 %v4188, %v3934
        %v4190 = vadd.f32 %v4189, %v3935
        %v4191 = vadd.f32 %v4190, %v3936
        %v4192 = vadd.f32 %v4191, %v3937
        %v4193 = vadd.f32 %v4192, %v3938
        %v4194 = vadd.f32 %v4193, %v3939
        %v4195 = vadd.f32 %v4194, %v3940
        %v4196 = vadd.f32 %v4195, %v3941
        %v4197 = vadd.f32 %v4196, %v3942
        %v4198 = vadd.f32 %v4197, %v3943
        %v4199 = vadd.f32 %v4198, %v3944
        %v4200 = vadd.f32 %v4199, %v3945
        %v4201 = vadd.f32 %v4200, %v3946
        %v4202 = vadd.f32 %v4201, %v3947
        %v4203 = vadd.f32 %v4202, %v3948
        %v4204 = vadd.f32 %v4203, %v3949
        %v4205 = vadd.f32 %v4204, %v3950
        %v4206 = vadd.f32 %v4205, %v3951
        %v4207 = vadd.f32 %v4206, %v3952
        %v4208 = vadd.f32 %v4207, %v3953
        %v4209 = vadd.f32 %v4208, %v3954
        %v4210 = vadd.f32 %v4209, %v3955
        %v4211 = vadd.f32 %v4210, %v3956
        %v4212 = vadd.f32 %v4211, %v3957
        %v4213 = vadd.f32 %v4212, %v3958
        %v4214 = vadd.f32 %v4213, %v3959
        %v4215 = vadd.f32 %v4214, %v3960
        %v4216 = vadd.f32 %v4215, %v3961
        %v4217 = vadd.f32 %v4216, %v3962
        %v4218 = vadd.f32 %v4217, %v3963
        %v4219 = vadd.f32 %v4218, %v3964
        %v4220 = vadd.f32 %v4219, %v3965
        %v4221 = vadd.f32 %v4220, %v3966
        %v4222 = vadd.f32 %v4221, %v3967
        %v4223 = vadd.f32 %v4222, %v3968
        %v4224 = vadd.f32 %v4223, %v3969
        %v4225 = vadd.f32 %v4224, %v3970
        %v4226 = vadd.f32 %v4225, %v3971
        %v4227 = vadd.f32 %v4226, %v3972
        %v4228 = vadd.f32 %v4227, %v3973
        %v4229 = vadd.f32 %v4228, %v3974
        %v4230 = vadd.f32 %v4229, %v3975
        %v4231 = vadd.f32 %v4230, %v3976
        %v4232 = vadd.f32 %v4231, %v3977
        %v4233 = vadd.f32 %v4232, %v3978
        %v4234 = vadd.f32 %v4233, %v3979
        %v4235 = vadd.f32 %v4234, %v3980
        %v4236 = vadd.f32 %v4235, %v3981
        %v4237 = vadd.f32 %v4236, %v3982
        %v4238 = vadd.f32 %v4237, %v3983
        %v4239 = vadd.f32 %v4238, %v3984
        %v4240 = vrot.slane %v4239, 4
        %v4241 = vadd.f32 %v4239, %v4240
        %v4242 = vrot.slane %v4241, 2
        %v4243 = vadd.f32 %v4241, %v4242
        %v4244 = vrot.slane %v4243, 1
        %v4245 = vadd.f32 %v4243, %v4244
        %v4246 = vmul.f32 %v4245, 0.00048828125
        %v4247 = vld [vmem:[%s2] sm:$0x1]
        %v4248 = vadd.f32 %v4246, 1e-05
        %v4249 = vrsqrt.pop %v4248
        %v4250 = vmul.f32 %v4247, %v4249
        %v4251 = vld [vmem:[%s3] sm:$0x1]
        %v4252 = vmul.f32 %v2185, %v4250
        %v4253 = vsub.f32 %v4251, %v4252
        %v4255 = vlaneseq
        %v4256 = vshrl.u32 %v4255, 7
        %v4257 = vsub.s32 0, %v4256
        %v4258 = vrot.slane %v4250, %v4257
        %v4260 = vmul.f32 %v2442, %v4258
        %v4261 = vmul.f32 %v2443, %v4258
        %v4262 = vmul.f32 %v2444, %v4258
        %v4263 = vmul.f32 %v2445, %v4258
        %v4264 = vmul.f32 %v2446, %v4258
        %v4265 = vmul.f32 %v2447, %v4258
        %v4266 = vmul.f32 %v2448, %v4258
        %v4267 = vmul.f32 %v2449, %v4258
        %v4268 = vmul.f32 %v2450, %v4258
        %v4269 = vmul.f32 %v2451, %v4258
        %v4270 = vmul.f32 %v2452, %v4258
        %v4271 = vmul.f32 %v2453, %v4258
        %v4272 = vmul.f32 %v2454, %v4258
        %v4273 = vmul.f32 %v2455, %v4258
        %v4274 = vmul.f32 %v2456, %v4258
        %v4275 = vmul.f32 %v2457, %v4258
        %v4276 = vmul.f32 %v2458, %v4258
        %v4277 = vmul.f32 %v2459, %v4258
        %v4278 = vmul.f32 %v2460, %v4258
        %v4279 = vmul.f32 %v2461, %v4258
        %v4280 = vmul.f32 %v2462, %v4258
        %v4281 = vmul.f32 %v2463, %v4258
        %v4282 = vmul.f32 %v2464, %v4258
        %v4283 = vmul.f32 %v2465, %v4258
        %v4284 = vmul.f32 %v2466, %v4258
        %v4285 = vmul.f32 %v2467, %v4258
        %v4286 = vmul.f32 %v2468, %v4258
        %v4287 = vmul.f32 %v2469, %v4258
        %v4288 = vmul.f32 %v2470, %v4258
        %v4289 = vmul.f32 %v2471, %v4258
        %v4290 = vmul.f32 %v2472, %v4258
        %v4291 = vmul.f32 %v2473, %v4258
        %v4292 = vmul.f32 %v2474, %v4258
        %v4293 = vmul.f32 %v2475, %v4258
        %v4294 = vmul.f32 %v2476, %v4258
        %v4295 = vmul.f32 %v2477, %v4258
        %v4296 = vmul.f32 %v2478, %v4258
        %v4297 = vmul.f32 %v2479, %v4258
        %v4298 = vmul.f32 %v2480, %v4258
        %v4299 = vmul.f32 %v2481, %v4258
        %v4300 = vmul.f32 %v2482, %v4258
        %v4301 = vmul.f32 %v2483, %v4258
        %v4302 = vmul.f32 %v2484, %v4258
        %v4303 = vmul.f32 %v2485, %v4258
        %v4304 = vmul.f32 %v2486, %v4258
        %v4305 = vmul.f32 %v2487, %v4258
        %v4306 = vmul.f32 %v2488, %v4258
        %v4307 = vmul.f32 %v2489, %v4258
        %v4308 = vmul.f32 %v2490, %v4258
        %v4309 = vmul.f32 %v2491, %v4258
        %v4310 = vmul.f32 %v2492, %v4258
        %v4311 = vmul.f32 %v2493, %v4258
        %v4312 = vmul.f32 %v2494, %v4258
        %v4313 = vmul.f32 %v2495, %v4258
        %v4314 = vmul.f32 %v2496, %v4258
        %v4315 = vmul.f32 %v2497, %v4258
        %v4316 = vmul.f32 %v2498, %v4258
        %v4317 = vmul.f32 %v2499, %v4258
        %v4318 = vmul.f32 %v2500, %v4258
        %v4319 = vmul.f32 %v2501, %v4258
        %v4320 = vmul.f32 %v2502, %v4258
        %v4321 = vmul.f32 %v2503, %v4258
        %v4322 = vmul.f32 %v2504, %v4258
        %v4323 = vmul.f32 %v2505, %v4258
        %v4324 = vmul.f32 %v2506, %v4258
        %v4325 = vmul.f32 %v2507, %v4258
        %v4326 = vmul.f32 %v2508, %v4258
        %v4327 = vmul.f32 %v2509, %v4258
        %v4328 = vmul.f32 %v2510, %v4258
        %v4329 = vmul.f32 %v2511, %v4258
        %v4330 = vmul.f32 %v2512, %v4258
        %v4331 = vmul.f32 %v2513, %v4258
        %v4332 = vmul.f32 %v2514, %v4258
        %v4333 = vmul.f32 %v2515, %v4258
        %v4334 = vmul.f32 %v2516, %v4258
        %v4335 = vmul.f32 %v2517, %v4258
        %v4336 = vmul.f32 %v2518, %v4258
        %v4337 = vmul.f32 %v2519, %v4258
        %v4338 = vmul.f32 %v2520, %v4258
        %v4339 = vmul.f32 %v2521, %v4258
        %v4340 = vmul.f32 %v2522, %v4258
        %v4341 = vmul.f32 %v2523, %v4258
        %v4342 = vmul.f32 %v2524, %v4258
        %v4343 = vmul.f32 %v2525, %v4258
        %v4344 = vmul.f32 %v2526, %v4258
        %v4345 = vmul.f32 %v2527, %v4258
        %v4346 = vmul.f32 %v2528, %v4258
        %v4347 = vmul.f32 %v2529, %v4258
        %v4348 = vmul.f32 %v2530, %v4258
        %v4349 = vmul.f32 %v2531, %v4258
        %v4350 = vmul.f32 %v2532, %v4258
        %v4351 = vmul.f32 %v2533, %v4258
        %v4352 = vmul.f32 %v2534, %v4258
        %v4353 = vmul.f32 %v2535, %v4258
        %v4354 = vmul.f32 %v2536, %v4258
        %v4355 = vmul.f32 %v2537, %v4258
        %v4356 = vmul.f32 %v2538, %v4258
        %v4357 = vmul.f32 %v2539, %v4258
        %v4358 = vmul.f32 %v2540, %v4258
        %v4359 = vmul.f32 %v2541, %v4258
        %v4360 = vmul.f32 %v2542, %v4258
        %v4361 = vmul.f32 %v2543, %v4258
        %v4362 = vmul.f32 %v2544, %v4258
        %v4363 = vmul.f32 %v2545, %v4258
        %v4364 = vmul.f32 %v2546, %v4258
        %v4365 = vmul.f32 %v2547, %v4258
        %v4366 = vmul.f32 %v2548, %v4258
        %v4367 = vmul.f32 %v2549, %v4258
        %v4368 = vmul.f32 %v2550, %v4258
        %v4369 = vmul.f32 %v2551, %v4258
        %v4370 = vmul.f32 %v2552, %v4258
        %v4371 = vmul.f32 %v2553, %v4258
        %v4372 = vmul.f32 %v2554, %v4258
        %v4373 = vmul.f32 %v2555, %v4258
        %v4374 = vmul.f32 %v2556, %v4258
        %v4375 = vmul.f32 %v2557, %v4258
        %v4376 = vmul.f32 %v2558, %v4258
        %v4377 = vmul.f32 %v2559, %v4258
        %v4378 = vmul.f32 %v2560, %v4258
        %v4379 = vmul.f32 %v2561, %v4258
        %v4380 = vmul.f32 %v2562, %v4258
        %v4381 = vmul.f32 %v2563, %v4258
        %v4382 = vmul.f32 %v2564, %v4258
        %v4383 = vmul.f32 %v2565, %v4258
        %v4384 = vmul.f32 %v2566, %v4258
        %v4385 = vmul.f32 %v2567, %v4258
        %v4386 = vmul.f32 %v2568, %v4258
        %v4387 = vmul.f32 %v2569, %v4258
        %v4388 = vmul.f32 %v2570, %v4258
        %v4389 = vmul.f32 %v2571, %v4258
        %v4390 = vmul.f32 %v2572, %v4258
        %v4391 = vmul.f32 %v2573, %v4258
        %v4392 = vmul.f32 %v2574, %v4258
        %v4393 = vmul.f32 %v2575, %v4258
        %v4394 = vmul.f32 %v2576, %v4258
        %v4395 = vmul.f32 %v2577, %v4258
        %v4396 = vmul.f32 %v2578, %v4258
        %v4397 = vmul.f32 %v2579, %v4258
        %v4398 = vmul.f32 %v2580, %v4258
        %v4399 = vmul.f32 %v2581, %v4258
        %v4400 = vmul.f32 %v2582, %v4258
        %v4401 = vmul.f32 %v2583, %v4258
        %v4402 = vmul.f32 %v2584, %v4258
        %v4403 = vmul.f32 %v2585, %v4258
        %v4404 = vmul.f32 %v2586, %v4258
        %v4405 = vmul.f32 %v2587, %v4258
        %v4406 = vmul.f32 %v2588, %v4258
        %v4407 = vmul.f32 %v2589, %v4258
        %v4408 = vmul.f32 %v2590, %v4258
        %v4409 = vmul.f32 %v2591, %v4258
        %v4410 = vmul.f32 %v2592, %v4258
        %v4411 = vmul.f32 %v2593, %v4258
        %v4412 = vmul.f32 %v2594, %v4258
        %v4413 = vmul.f32 %v2595, %v4258
        %v4414 = vmul.f32 %v2596, %v4258
        %v4415 = vmul.f32 %v2597, %v4258
        %v4416 = vmul.f32 %v2598, %v4258
        %v4417 = vmul.f32 %v2599, %v4258
        %v4418 = vmul.f32 %v2600, %v4258
        %v4419 = vmul.f32 %v2601, %v4258
        %v4420 = vmul.f32 %v2602, %v4258
        %v4421 = vmul.f32 %v2603, %v4258
        %v4422 = vmul.f32 %v2604, %v4258
        %v4423 = vmul.f32 %v2605, %v4258
        %v4424 = vmul.f32 %v2606, %v4258
        %v4425 = vmul.f32 %v2607, %v4258
        %v4426 = vmul.f32 %v2608, %v4258
        %v4427 = vmul.f32 %v2609, %v4258
        %v4428 = vmul.f32 %v2610, %v4258
        %v4429 = vmul.f32 %v2611, %v4258
        %v4430 = vmul.f32 %v2612, %v4258
        %v4431 = vmul.f32 %v2613, %v4258
        %v4432 = vmul.f32 %v2614, %v4258
        %v4433 = vmul.f32 %v2615, %v4258
        %v4434 = vmul.f32 %v2616, %v4258
        %v4435 = vmul.f32 %v2617, %v4258
        %v4436 = vmul.f32 %v2618, %v4258
        %v4437 = vmul.f32 %v2619, %v4258
        %v4438 = vmul.f32 %v2620, %v4258
        %v4439 = vmul.f32 %v2621, %v4258
        %v4440 = vmul.f32 %v2622, %v4258
        %v4441 = vmul.f32 %v2623, %v4258
        %v4442 = vmul.f32 %v2624, %v4258
        %v4443 = vmul.f32 %v2625, %v4258
        %v4444 = vmul.f32 %v2626, %v4258
        %v4445 = vmul.f32 %v2627, %v4258
        %v4446 = vmul.f32 %v2628, %v4258
        %v4447 = vmul.f32 %v2629, %v4258
        %v4448 = vmul.f32 %v2630, %v4258
        %v4449 = vmul.f32 %v2631, %v4258
        %v4450 = vmul.f32 %v2632, %v4258
        %v4451 = vmul.f32 %v2633, %v4258
        %v4452 = vmul.f32 %v2634, %v4258
        %v4453 = vmul.f32 %v2635, %v4258
        %v4454 = vmul.f32 %v2636, %v4258
        %v4455 = vmul.f32 %v2637, %v4258
        %v4456 = vmul.f32 %v2638, %v4258
        %v4457 = vmul.f32 %v2639, %v4258
        %v4458 = vmul.f32 %v2640, %v4258
        %v4459 = vmul.f32 %v2641, %v4258
        %v4460 = vmul.f32 %v2642, %v4258
        %v4461 = vmul.f32 %v2643, %v4258
        %v4462 = vmul.f32 %v2644, %v4258
        %v4463 = vmul.f32 %v2645, %v4258
        %v4464 = vmul.f32 %v2646, %v4258
        %v4465 = vmul.f32 %v2647, %v4258
        %v4466 = vmul.f32 %v2648, %v4258
        %v4467 = vmul.f32 %v2649, %v4258
        %v4468 = vmul.f32 %v2650, %v4258
        %v4469 = vmul.f32 %v2651, %v4258
        %v4470 = vmul.f32 %v2652, %v4258
        %v4471 = vmul.f32 %v2653, %v4258
        %v4472 = vmul.f32 %v2654, %v4258
        %v4473 = vmul.f32 %v2655, %v4258
        %v4474 = vmul.f32 %v2656, %v4258
        %v4475 = vmul.f32 %v2657, %v4258
        %v4476 = vmul.f32 %v2658, %v4258
        %v4477 = vmul.f32 %v2659, %v4258
        %v4478 = vmul.f32 %v2660, %v4258
        %v4479 = vmul.f32 %v2661, %v4258
        %v4480 = vmul.f32 %v2662, %v4258
        %v4481 = vmul.f32 %v2663, %v4258
        %v4482 = vmul.f32 %v2664, %v4258
        %v4483 = vmul.f32 %v2665, %v4258
        %v4484 = vmul.f32 %v2666, %v4258
        %v4485 = vmul.f32 %v2667, %v4258
        %v4486 = vmul.f32 %v2668, %v4258
        %v4487 = vmul.f32 %v2669, %v4258
        %v4488 = vmul.f32 %v2670, %v4258
        %v4489 = vmul.f32 %v2671, %v4258
        %v4490 = vmul.f32 %v2672, %v4258
        %v4491 = vmul.f32 %v2673, %v4258
        %v4492 = vmul.f32 %v2674, %v4258
        %v4493 = vmul.f32 %v2675, %v4258
        %v4494 = vmul.f32 %v2676, %v4258
        %v4495 = vmul.f32 %v2677, %v4258
        %v4496 = vmul.f32 %v2678, %v4258
        %v4497 = vmul.f32 %v2679, %v4258
        %v4498 = vmul.f32 %v2680, %v4258
        %v4499 = vmul.f32 %v2681, %v4258
        %v4500 = vmul.f32 %v2682, %v4258
        %v4501 = vmul.f32 %v2683, %v4258
        %v4502 = vmul.f32 %v2684, %v4258
        %v4503 = vmul.f32 %v2685, %v4258
        %v4504 = vmul.f32 %v2686, %v4258
        %v4505 = vmul.f32 %v2687, %v4258
        %v4506 = vmul.f32 %v2688, %v4258
        %v4507 = vmul.f32 %v2689, %v4258
        %v4508 = vmul.f32 %v2690, %v4258
        %v4509 = vmul.f32 %v2691, %v4258
        %v4510 = vmul.f32 %v2692, %v4258
        %v4511 = vmul.f32 %v2693, %v4258
        %v4512 = vmul.f32 %v2694, %v4258
        %v4513 = vmul.f32 %v2695, %v4258
        %v4514 = vmul.f32 %v2696, %v4258
        %v4515 = vmul.f32 %v2697, %v4258
        %v4517 = vlaneseq
        %v4518 = vshrl.u32 %v4517, 7
        %v4519 = vsub.s32 0, %v4518
        %v4520 = vrot.slane %v4253, %v4519
        %v4522 = vadd.f32 %v4260, %v4520
        %v4523 = vadd.f32 %v4261, %v4520
        %v4524 = vadd.f32 %v4262, %v4520
        %v4525 = vadd.f32 %v4263, %v4520
        %v4526 = vadd.f32 %v4264, %v4520
        %v4527 = vadd.f32 %v4265, %v4520
        %v4528 = vadd.f32 %v4266, %v4520
        %v4529 = vadd.f32 %v4267, %v4520
        %v4530 = vadd.f32 %v4268, %v4520
        %v4531 = vadd.f32 %v4269, %v4520
        %v4532 = vadd.f32 %v4270, %v4520
        %v4533 = vadd.f32 %v4271, %v4520
        %v4534 = vadd.f32 %v4272, %v4520
        %v4535 = vadd.f32 %v4273, %v4520
        %v4536 = vadd.f32 %v4274, %v4520
        %v4537 = vadd.f32 %v4275, %v4520
        %v4538 = vadd.f32 %v4276, %v4520
        %v4539 = vadd.f32 %v4277, %v4520
        %v4540 = vadd.f32 %v4278, %v4520
        %v4541 = vadd.f32 %v4279, %v4520
        %v4542 = vadd.f32 %v4280, %v4520
        %v4543 = vadd.f32 %v4281, %v4520
        %v4544 = vadd.f32 %v4282, %v4520
        %v4545 = vadd.f32 %v4283, %v4520
        %v4546 = vadd.f32 %v4284, %v4520
        %v4547 = vadd.f32 %v4285, %v4520
        %v4548 = vadd.f32 %v4286, %v4520
        %v4549 = vadd.f32 %v4287, %v4520
        %v4550 = vadd.f32 %v4288, %v4520
        %v4551 = vadd.f32 %v4289, %v4520
        %v4552 = vadd.f32 %v4290, %v4520
        %v4553 = vadd.f32 %v4291, %v4520
        %v4554 = vadd.f32 %v4292, %v4520
        %v4555 = vadd.f32 %v4293, %v4520
        %v4556 = vadd.f32 %v4294, %v4520
        %v4557 = vadd.f32 %v4295, %v4520
        %v4558 = vadd.f32 %v4296, %v4520
        %v4559 = vadd.f32 %v4297, %v4520
        %v4560 = vadd.f32 %v4298, %v4520
        %v4561 = vadd.f32 %v4299, %v4520
        %v4562 = vadd.f32 %v4300, %v4520
        %v4563 = vadd.f32 %v4301, %v4520
        %v4564 = vadd.f32 %v4302, %v4520
        %v4565 = vadd.f32 %v4303, %v4520
        %v4566 = vadd.f32 %v4304, %v4520
        %v4567 = vadd.f32 %v4305, %v4520
        %v4568 = vadd.f32 %v4306, %v4520
        %v4569 = vadd.f32 %v4307, %v4520
        %v4570 = vadd.f32 %v4308, %v4520
        %v4571 = vadd.f32 %v4309, %v4520
        %v4572 = vadd.f32 %v4310, %v4520
        %v4573 = vadd.f32 %v4311, %v4520
        %v4574 = vadd.f32 %v4312, %v4520
        %v4575 = vadd.f32 %v4313, %v4520
        %v4576 = vadd.f32 %v4314, %v4520
        %v4577 = vadd.f32 %v4315, %v4520
        %v4578 = vadd.f32 %v4316, %v4520
        %v4579 = vadd.f32 %v4317, %v4520
        %v4580 = vadd.f32 %v4318, %v4520
        %v4581 = vadd.f32 %v4319, %v4520
        %v4582 = vadd.f32 %v4320, %v4520
        %v4583 = vadd.f32 %v4321, %v4520
        %v4584 = vadd.f32 %v4322, %v4520
        %v4585 = vadd.f32 %v4323, %v4520
        %v4586 = vadd.f32 %v4324, %v4520
        %v4587 = vadd.f32 %v4325, %v4520
        %v4588 = vadd.f32 %v4326, %v4520
        %v4589 = vadd.f32 %v4327, %v4520
        %v4590 = vadd.f32 %v4328, %v4520
        %v4591 = vadd.f32 %v4329, %v4520
        %v4592 = vadd.f32 %v4330, %v4520
        %v4593 = vadd.f32 %v4331, %v4520
        %v4594 = vadd.f32 %v4332, %v4520
        %v4595 = vadd.f32 %v4333, %v4520
        %v4596 = vadd.f32 %v4334, %v4520
        %v4597 = vadd.f32 %v4335, %v4520
        %v4598 = vadd.f32 %v4336, %v4520
        %v4599 = vadd.f32 %v4337, %v4520
        %v4600 = vadd.f32 %v4338, %v4520
        %v4601 = vadd.f32 %v4339, %v4520
        %v4602 = vadd.f32 %v4340, %v4520
        %v4603 = vadd.f32 %v4341, %v4520
        %v4604 = vadd.f32 %v4342, %v4520
        %v4605 = vadd.f32 %v4343, %v4520
        %v4606 = vadd.f32 %v4344, %v4520
        %v4607 = vadd.f32 %v4345, %v4520
        %v4608 = vadd.f32 %v4346, %v4520
        %v4609 = vadd.f32 %v4347, %v4520
        %v4610 = vadd.f32 %v4348, %v4520
        %v4611 = vadd.f32 %v4349, %v4520
        %v4612 = vadd.f32 %v4350, %v4520
        %v4613 = vadd.f32 %v4351, %v4520
        %v4614 = vadd.f32 %v4352, %v4520
        %v4615 = vadd.f32 %v4353, %v4520
        %v4616 = vadd.f32 %v4354, %v4520
        %v4617 = vadd.f32 %v4355, %v4520
        %v4618 = vadd.f32 %v4356, %v4520
        %v4619 = vadd.f32 %v4357, %v4520
        %v4620 = vadd.f32 %v4358, %v4520
        %v4621 = vadd.f32 %v4359, %v4520
        %v4622 = vadd.f32 %v4360, %v4520
        %v4623 = vadd.f32 %v4361, %v4520
        %v4624 = vadd.f32 %v4362, %v4520
        %v4625 = vadd.f32 %v4363, %v4520
        %v4626 = vadd.f32 %v4364, %v4520
        %v4627 = vadd.f32 %v4365, %v4520
        %v4628 = vadd.f32 %v4366, %v4520
        %v4629 = vadd.f32 %v4367, %v4520
        %v4630 = vadd.f32 %v4368, %v4520
        %v4631 = vadd.f32 %v4369, %v4520
        %v4632 = vadd.f32 %v4370, %v4520
        %v4633 = vadd.f32 %v4371, %v4520
        %v4634 = vadd.f32 %v4372, %v4520
        %v4635 = vadd.f32 %v4373, %v4520
        %v4636 = vadd.f32 %v4374, %v4520
        %v4637 = vadd.f32 %v4375, %v4520
        %v4638 = vadd.f32 %v4376, %v4520
        %v4639 = vadd.f32 %v4377, %v4520
        %v4640 = vadd.f32 %v4378, %v4520
        %v4641 = vadd.f32 %v4379, %v4520
        %v4642 = vadd.f32 %v4380, %v4520
        %v4643 = vadd.f32 %v4381, %v4520
        %v4644 = vadd.f32 %v4382, %v4520
        %v4645 = vadd.f32 %v4383, %v4520
        %v4646 = vadd.f32 %v4384, %v4520
        %v4647 = vadd.f32 %v4385, %v4520
        %v4648 = vadd.f32 %v4386, %v4520
        %v4649 = vadd.f32 %v4387, %v4520
        %v4650 = vadd.f32 %v4388, %v4520
        %v4651 = vadd.f32 %v4389, %v4520
        %v4652 = vadd.f32 %v4390, %v4520
        %v4653 = vadd.f32 %v4391, %v4520
        %v4654 = vadd.f32 %v4392, %v4520
        %v4655 = vadd.f32 %v4393, %v4520
        %v4656 = vadd.f32 %v4394, %v4520
        %v4657 = vadd.f32 %v4395, %v4520
        %v4658 = vadd.f32 %v4396, %v4520
        %v4659 = vadd.f32 %v4397, %v4520
        %v4660 = vadd.f32 %v4398, %v4520
        %v4661 = vadd.f32 %v4399, %v4520
        %v4662 = vadd.f32 %v4400, %v4520
        %v4663 = vadd.f32 %v4401, %v4520
        %v4664 = vadd.f32 %v4402, %v4520
        %v4665 = vadd.f32 %v4403, %v4520
        %v4666 = vadd.f32 %v4404, %v4520
        %v4667 = vadd.f32 %v4405, %v4520
        %v4668 = vadd.f32 %v4406, %v4520
        %v4669 = vadd.f32 %v4407, %v4520
        %v4670 = vadd.f32 %v4408, %v4520
        %v4671 = vadd.f32 %v4409, %v4520
        %v4672 = vadd.f32 %v4410, %v4520
        %v4673 = vadd.f32 %v4411, %v4520
        %v4674 = vadd.f32 %v4412, %v4520
        %v4675 = vadd.f32 %v4413, %v4520
        %v4676 = vadd.f32 %v4414, %v4520
        %v4677 = vadd.f32 %v4415, %v4520
        %v4678 = vadd.f32 %v4416, %v4520
        %v4679 = vadd.f32 %v4417, %v4520
        %v4680 = vadd.f32 %v4418, %v4520
        %v4681 = vadd.f32 %v4419, %v4520
        %v4682 = vadd.f32 %v4420, %v4520
        %v4683 = vadd.f32 %v4421, %v4520
        %v4684 = vadd.f32 %v4422, %v4520
        %v4685 = vadd.f32 %v4423, %v4520
        %v4686 = vadd.f32 %v4424, %v4520
        %v4687 = vadd.f32 %v4425, %v4520
        %v4688 = vadd.f32 %v4426, %v4520
        %v4689 = vadd.f32 %v4427, %v4520
        %v4690 = vadd.f32 %v4428, %v4520
        %v4691 = vadd.f32 %v4429, %v4520
        %v4692 = vadd.f32 %v4430, %v4520
        %v4693 = vadd.f32 %v4431, %v4520
        %v4694 = vadd.f32 %v4432, %v4520
        %v4695 = vadd.f32 %v4433, %v4520
        %v4696 = vadd.f32 %v4434, %v4520
        %v4697 = vadd.f32 %v4435, %v4520
        %v4698 = vadd.f32 %v4436, %v4520
        %v4699 = vadd.f32 %v4437, %v4520
        %v4700 = vadd.f32 %v4438, %v4520
        %v4701 = vadd.f32 %v4439, %v4520
        %v4702 = vadd.f32 %v4440, %v4520
        %v4703 = vadd.f32 %v4441, %v4520
        %v4704 = vadd.f32 %v4442, %v4520
        %v4705 = vadd.f32 %v4443, %v4520
        %v4706 = vadd.f32 %v4444, %v4520
        %v4707 = vadd.f32 %v4445, %v4520
        %v4708 = vadd.f32 %v4446, %v4520
        %v4709 = vadd.f32 %v4447, %v4520
        %v4710 = vadd.f32 %v4448, %v4520
        %v4711 = vadd.f32 %v4449, %v4520
        %v4712 = vadd.f32 %v4450, %v4520
        %v4713 = vadd.f32 %v4451, %v4520
        %v4714 = vadd.f32 %v4452, %v4520
        %v4715 = vadd.f32 %v4453, %v4520
        %v4716 = vadd.f32 %v4454, %v4520
        %v4717 = vadd.f32 %v4455, %v4520
        %v4718 = vadd.f32 %v4456, %v4520
        %v4719 = vadd.f32 %v4457, %v4520
        %v4720 = vadd.f32 %v4458, %v4520
        %v4721 = vadd.f32 %v4459, %v4520
        %v4722 = vadd.f32 %v4460, %v4520
        %v4723 = vadd.f32 %v4461, %v4520
        %v4724 = vadd.f32 %v4462, %v4520
        %v4725 = vadd.f32 %v4463, %v4520
        %v4726 = vadd.f32 %v4464, %v4520
        %v4727 = vadd.f32 %v4465, %v4520
        %v4728 = vadd.f32 %v4466, %v4520
        %v4729 = vadd.f32 %v4467, %v4520
        %v4730 = vadd.f32 %v4468, %v4520
        %v4731 = vadd.f32 %v4469, %v4520
        %v4732 = vadd.f32 %v4470, %v4520
        %v4733 = vadd.f32 %v4471, %v4520
        %v4734 = vadd.f32 %v4472, %v4520
        %v4735 = vadd.f32 %v4473, %v4520
        %v4736 = vadd.f32 %v4474, %v4520
        %v4737 = vadd.f32 %v4475, %v4520
        %v4738 = vadd.f32 %v4476, %v4520
        %v4739 = vadd.f32 %v4477, %v4520
        %v4740 = vadd.f32 %v4478, %v4520
        %v4741 = vadd.f32 %v4479, %v4520
        %v4742 = vadd.f32 %v4480, %v4520
        %v4743 = vadd.f32 %v4481, %v4520
        %v4744 = vadd.f32 %v4482, %v4520
        %v4745 = vadd.f32 %v4483, %v4520
        %v4746 = vadd.f32 %v4484, %v4520
        %v4747 = vadd.f32 %v4485, %v4520
        %v4748 = vadd.f32 %v4486, %v4520
        %v4749 = vadd.f32 %v4487, %v4520
        %v4750 = vadd.f32 %v4488, %v4520
        %v4751 = vadd.f32 %v4489, %v4520
        %v4752 = vadd.f32 %v4490, %v4520
        %v4753 = vadd.f32 %v4491, %v4520
        %v4754 = vadd.f32 %v4492, %v4520
        %v4755 = vadd.f32 %v4493, %v4520
        %v4756 = vadd.f32 %v4494, %v4520
        %v4757 = vadd.f32 %v4495, %v4520
        %v4758 = vadd.f32 %v4496, %v4520
        %v4759 = vadd.f32 %v4497, %v4520
        %v4760 = vadd.f32 %v4498, %v4520
        %v4761 = vadd.f32 %v4499, %v4520
        %v4762 = vadd.f32 %v4500, %v4520
        %v4763 = vadd.f32 %v4501, %v4520
        %v4764 = vadd.f32 %v4502, %v4520
        %v4765 = vadd.f32 %v4503, %v4520
        %v4766 = vadd.f32 %v4504, %v4520
        %v4767 = vadd.f32 %v4505, %v4520
        %v4768 = vadd.f32 %v4506, %v4520
        %v4769 = vadd.f32 %v4507, %v4520
        %v4770 = vadd.f32 %v4508, %v4520
        %v4771 = vadd.f32 %v4509, %v4520
        %v4772 = vadd.f32 %v4510, %v4520
        %v4773 = vadd.f32 %v4511, %v4520
        %v4774 = vadd.f32 %v4512, %v4520
        %v4775 = vadd.f32 %v4513, %v4520
        %v4776 = vadd.f32 %v4514, %v4520
        %v4777 = vadd.f32 %v4515, %v4520
        %vm4778 = vcmp.ge.f32.partialorder %v4522, 0.0
        %vm4779 = vcmp.ge.f32.partialorder %v4523, 0.0
        %vm4780 = vcmp.ge.f32.partialorder %v4524, 0.0
        %vm4781 = vcmp.ge.f32.partialorder %v4525, 0.0
        %vm4782 = vcmp.ge.f32.partialorder %v4526, 0.0
        %vm4783 = vcmp.ge.f32.partialorder %v4527, 0.0
        %vm4784 = vcmp.ge.f32.partialorder %v4528, 0.0
        %vm4785 = vcmp.ge.f32.partialorder %v4529, 0.0
        %vm4786 = vcmp.ge.f32.partialorder %v4530, 0.0
        %vm4787 = vcmp.ge.f32.partialorder %v4531, 0.0
        %vm4788 = vcmp.ge.f32.partialorder %v4532, 0.0
        %vm4789 = vcmp.ge.f32.partialorder %v4533, 0.0
        %vm4790 = vcmp.ge.f32.partialorder %v4534, 0.0
        %vm4791 = vcmp.ge.f32.partialorder %v4535, 0.0
        %vm4792 = vcmp.ge.f32.partialorder %v4536, 0.0
        %vm4793 = vcmp.ge.f32.partialorder %v4537, 0.0
        %vm4794 = vcmp.ge.f32.partialorder %v4538, 0.0
        %vm4795 = vcmp.ge.f32.partialorder %v4539, 0.0
        %vm4796 = vcmp.ge.f32.partialorder %v4540, 0.0
        %vm4797 = vcmp.ge.f32.partialorder %v4541, 0.0
        %vm4798 = vcmp.ge.f32.partialorder %v4542, 0.0
        %vm4799 = vcmp.ge.f32.partialorder %v4543, 0.0
        %vm4800 = vcmp.ge.f32.partialorder %v4544, 0.0
        %vm4801 = vcmp.ge.f32.partialorder %v4545, 0.0
        %vm4802 = vcmp.ge.f32.partialorder %v4546, 0.0
        %vm4803 = vcmp.ge.f32.partialorder %v4547, 0.0
        %vm4804 = vcmp.ge.f32.partialorder %v4548, 0.0
        %vm4805 = vcmp.ge.f32.partialorder %v4549, 0.0
        %vm4806 = vcmp.ge.f32.partialorder %v4550, 0.0
        %vm4807 = vcmp.ge.f32.partialorder %v4551, 0.0
        %vm4808 = vcmp.ge.f32.partialorder %v4552, 0.0
        %vm4809 = vcmp.ge.f32.partialorder %v4553, 0.0
        %vm4810 = vcmp.ge.f32.partialorder %v4554, 0.0
        %vm4811 = vcmp.ge.f32.partialorder %v4555, 0.0
        %vm4812 = vcmp.ge.f32.partialorder %v4556, 0.0
        %vm4813 = vcmp.ge.f32.partialorder %v4557, 0.0
        %vm4814 = vcmp.ge.f32.partialorder %v4558, 0.0
        %vm4815 = vcmp.ge.f32.partialorder %v4559, 0.0
        %vm4816 = vcmp.ge.f32.partialorder %v4560, 0.0
        %vm4817 = vcmp.ge.f32.partialorder %v4561, 0.0
        %vm4818 = vcmp.ge.f32.partialorder %v4562, 0.0
        %vm4819 = vcmp.ge.f32.partialorder %v4563, 0.0
        %vm4820 = vcmp.ge.f32.partialorder %v4564, 0.0
        %vm4821 = vcmp.ge.f32.partialorder %v4565, 0.0
        %vm4822 = vcmp.ge.f32.partialorder %v4566, 0.0
        %vm4823 = vcmp.ge.f32.partialorder %v4567, 0.0
        %vm4824 = vcmp.ge.f32.partialorder %v4568, 0.0
        %vm4825 = vcmp.ge.f32.partialorder %v4569, 0.0
        %vm4826 = vcmp.ge.f32.partialorder %v4570, 0.0
        %vm4827 = vcmp.ge.f32.partialorder %v4571, 0.0
        %vm4828 = vcmp.ge.f32.partialorder %v4572, 0.0
        %vm4829 = vcmp.ge.f32.partialorder %v4573, 0.0
        %vm4830 = vcmp.ge.f32.partialorder %v4574, 0.0
        %vm4831 = vcmp.ge.f32.partialorder %v4575, 0.0
        %vm4832 = vcmp.ge.f32.partialorder %v4576, 0.0
        %vm4833 = vcmp.ge.f32.partialorder %v4577, 0.0
        %vm4834 = vcmp.ge.f32.partialorder %v4578, 0.0
        %vm4835 = vcmp.ge.f32.partialorder %v4579, 0.0
        %vm4836 = vcmp.ge.f32.partialorder %v4580, 0.0
        %vm4837 = vcmp.ge.f32.partialorder %v4581, 0.0
        %vm4838 = vcmp.ge.f32.partialorder %v4582, 0.0
        %vm4839 = vcmp.ge.f32.partialorder %v4583, 0.0
        %vm4840 = vcmp.ge.f32.partialorder %v4584, 0.0
        %vm4841 = vcmp.ge.f32.partialorder %v4585, 0.0
        %vm4842 = vcmp.ge.f32.partialorder %v4586, 0.0
        %vm4843 = vcmp.ge.f32.partialorder %v4587, 0.0
        %vm4844 = vcmp.ge.f32.partialorder %v4588, 0.0
        %vm4845 = vcmp.ge.f32.partialorder %v4589, 0.0
        %vm4846 = vcmp.ge.f32.partialorder %v4590, 0.0
        %vm4847 = vcmp.ge.f32.partialorder %v4591, 0.0
        %vm4848 = vcmp.ge.f32.partialorder %v4592, 0.0
        %vm4849 = vcmp.ge.f32.partialorder %v4593, 0.0
        %vm4850 = vcmp.ge.f32.partialorder %v4594, 0.0
        %vm4851 = vcmp.ge.f32.partialorder %v4595, 0.0
        %vm4852 = vcmp.ge.f32.partialorder %v4596, 0.0
        %vm4853 = vcmp.ge.f32.partialorder %v4597, 0.0
        %vm4854 = vcmp.ge.f32.partialorder %v4598, 0.0
        %vm4855 = vcmp.ge.f32.partialorder %v4599, 0.0
        %vm4856 = vcmp.ge.f32.partialorder %v4600, 0.0
        %vm4857 = vcmp.ge.f32.partialorder %v4601, 0.0
        %vm4858 = vcmp.ge.f32.partialorder %v4602, 0.0
        %vm4859 = vcmp.ge.f32.partialorder %v4603, 0.0
        %vm4860 = vcmp.ge.f32.partialorder %v4604, 0.0
        %vm4861 = vcmp.ge.f32.partialorder %v4605, 0.0
        %vm4862 = vcmp.ge.f32.partialorder %v4606, 0.0
        %vm4863 = vcmp.ge.f32.partialorder %v4607, 0.0
        %vm4864 = vcmp.ge.f32.partialorder %v4608, 0.0
        %vm4865 = vcmp.ge.f32.partialorder %v4609, 0.0
        %vm4866 = vcmp.ge.f32.partialorder %v4610, 0.0
        %vm4867 = vcmp.ge.f32.partialorder %v4611, 0.0
        %vm4868 = vcmp.ge.f32.partialorder %v4612, 0.0
        %vm4869 = vcmp.ge.f32.partialorder %v4613, 0.0
        %vm4870 = vcmp.ge.f32.partialorder %v4614, 0.0
        %vm4871 = vcmp.ge.f32.partialorder %v4615, 0.0
        %vm4872 = vcmp.ge.f32.partialorder %v4616, 0.0
        %vm4873 = vcmp.ge.f32.partialorder %v4617, 0.0
        %vm4874 = vcmp.ge.f32.partialorder %v4618, 0.0
        %vm4875 = vcmp.ge.f32.partialorder %v4619, 0.0
        %vm4876 = vcmp.ge.f32.partialorder %v4620, 0.0
        %vm4877 = vcmp.ge.f32.partialorder %v4621, 0.0
        %vm4878 = vcmp.ge.f32.partialorder %v4622, 0.0
        %vm4879 = vcmp.ge.f32.partialorder %v4623, 0.0
        %vm4880 = vcmp.ge.f32.partialorder %v4624, 0.0
        %vm4881 = vcmp.ge.f32.partialorder %v4625, 0.0
        %vm4882 = vcmp.ge.f32.partialorder %v4626, 0.0
        %vm4883 = vcmp.ge.f32.partialorder %v4627, 0.0
        %vm4884 = vcmp.ge.f32.partialorder %v4628, 0.0
        %vm4885 = vcmp.ge.f32.partialorder %v4629, 0.0
        %vm4886 = vcmp.ge.f32.partialorder %v4630, 0.0
        %vm4887 = vcmp.ge.f32.partialorder %v4631, 0.0
        %vm4888 = vcmp.ge.f32.partialorder %v4632, 0.0
        %vm4889 = vcmp.ge.f32.partialorder %v4633, 0.0
        %vm4890 = vcmp.ge.f32.partialorder %v4634, 0.0
        %vm4891 = vcmp.ge.f32.partialorder %v4635, 0.0
        %vm4892 = vcmp.ge.f32.partialorder %v4636, 0.0
        %vm4893 = vcmp.ge.f32.partialorder %v4637, 0.0
        %vm4894 = vcmp.ge.f32.partialorder %v4638, 0.0
        %vm4895 = vcmp.ge.f32.partialorder %v4639, 0.0
        %vm4896 = vcmp.ge.f32.partialorder %v4640, 0.0
        %vm4897 = vcmp.ge.f32.partialorder %v4641, 0.0
        %vm4898 = vcmp.ge.f32.partialorder %v4642, 0.0
        %vm4899 = vcmp.ge.f32.partialorder %v4643, 0.0
        %vm4900 = vcmp.ge.f32.partialorder %v4644, 0.0
        %vm4901 = vcmp.ge.f32.partialorder %v4645, 0.0
        %vm4902 = vcmp.ge.f32.partialorder %v4646, 0.0
        %vm4903 = vcmp.ge.f32.partialorder %v4647, 0.0
        %vm4904 = vcmp.ge.f32.partialorder %v4648, 0.0
        %vm4905 = vcmp.ge.f32.partialorder %v4649, 0.0
        %vm4906 = vcmp.ge.f32.partialorder %v4650, 0.0
        %vm4907 = vcmp.ge.f32.partialorder %v4651, 0.0
        %vm4908 = vcmp.ge.f32.partialorder %v4652, 0.0
        %vm4909 = vcmp.ge.f32.partialorder %v4653, 0.0
        %vm4910 = vcmp.ge.f32.partialorder %v4654, 0.0
        %vm4911 = vcmp.ge.f32.partialorder %v4655, 0.0
        %vm4912 = vcmp.ge.f32.partialorder %v4656, 0.0
        %vm4913 = vcmp.ge.f32.partialorder %v4657, 0.0
        %vm4914 = vcmp.ge.f32.partialorder %v4658, 0.0
        %vm4915 = vcmp.ge.f32.partialorder %v4659, 0.0
        %vm4916 = vcmp.ge.f32.partialorder %v4660, 0.0
        %vm4917 = vcmp.ge.f32.partialorder %v4661, 0.0
        %vm4918 = vcmp.ge.f32.partialorder %v4662, 0.0
        %vm4919 = vcmp.ge.f32.partialorder %v4663, 0.0
        %vm4920 = vcmp.ge.f32.partialorder %v4664, 0.0
        %vm4921 = vcmp.ge.f32.partialorder %v4665, 0.0
        %vm4922 = vcmp.ge.f32.partialorder %v4666, 0.0
        %vm4923 = vcmp.ge.f32.partialorder %v4667, 0.0
        %vm4924 = vcmp.ge.f32.partialorder %v4668, 0.0
        %vm4925 = vcmp.ge.f32.partialorder %v4669, 0.0
        %vm4926 = vcmp.ge.f32.partialorder %v4670, 0.0
        %vm4927 = vcmp.ge.f32.partialorder %v4671, 0.0
        %vm4928 = vcmp.ge.f32.partialorder %v4672, 0.0
        %vm4929 = vcmp.ge.f32.partialorder %v4673, 0.0
        %vm4930 = vcmp.ge.f32.partialorder %v4674, 0.0
        %vm4931 = vcmp.ge.f32.partialorder %v4675, 0.0
        %vm4932 = vcmp.ge.f32.partialorder %v4676, 0.0
        %vm4933 = vcmp.ge.f32.partialorder %v4677, 0.0
        %vm4934 = vcmp.ge.f32.partialorder %v4678, 0.0
        %vm4935 = vcmp.ge.f32.partialorder %v4679, 0.0
        %vm4936 = vcmp.ge.f32.partialorder %v4680, 0.0
        %vm4937 = vcmp.ge.f32.partialorder %v4681, 0.0
        %vm4938 = vcmp.ge.f32.partialorder %v4682, 0.0
        %vm4939 = vcmp.ge.f32.partialorder %v4683, 0.0
        %vm4940 = vcmp.ge.f32.partialorder %v4684, 0.0
        %vm4941 = vcmp.ge.f32.partialorder %v4685, 0.0
        %vm4942 = vcmp.ge.f32.partialorder %v4686, 0.0
        %vm4943 = vcmp.ge.f32.partialorder %v4687, 0.0
        %vm4944 = vcmp.ge.f32.partialorder %v4688, 0.0
        %vm4945 = vcmp.ge.f32.partialorder %v4689, 0.0
        %vm4946 = vcmp.ge.f32.partialorder %v4690, 0.0
        %vm4947 = vcmp.ge.f32.partialorder %v4691, 0.0
        %vm4948 = vcmp.ge.f32.partialorder %v4692, 0.0
        %vm4949 = vcmp.ge.f32.partialorder %v4693, 0.0
        %vm4950 = vcmp.ge.f32.partialorder %v4694, 0.0
        %vm4951 = vcmp.ge.f32.partialorder %v4695, 0.0
        %vm4952 = vcmp.ge.f32.partialorder %v4696, 0.0
        %vm4953 = vcmp.ge.f32.partialorder %v4697, 0.0
        %vm4954 = vcmp.ge.f32.partialorder %v4698, 0.0
        %vm4955 = vcmp.ge.f32.partialorder %v4699, 0.0
        %vm4956 = vcmp.ge.f32.partialorder %v4700, 0.0
        %vm4957 = vcmp.ge.f32.partialorder %v4701, 0.0
        %vm4958 = vcmp.ge.f32.partialorder %v4702, 0.0
        %vm4959 = vcmp.ge.f32.partialorder %v4703, 0.0
        %vm4960 = vcmp.ge.f32.partialorder %v4704, 0.0
        %vm4961 = vcmp.ge.f32.partialorder %v4705, 0.0
        %vm4962 = vcmp.ge.f32.partialorder %v4706, 0.0
        %vm4963 = vcmp.ge.f32.partialorder %v4707, 0.0
        %vm4964 = vcmp.ge.f32.partialorder %v4708, 0.0
        %vm4965 = vcmp.ge.f32.partialorder %v4709, 0.0
        %vm4966 = vcmp.ge.f32.partialorder %v4710, 0.0
        %vm4967 = vcmp.ge.f32.partialorder %v4711, 0.0
        %vm4968 = vcmp.ge.f32.partialorder %v4712, 0.0
        %vm4969 = vcmp.ge.f32.partialorder %v4713, 0.0
        %vm4970 = vcmp.ge.f32.partialorder %v4714, 0.0
        %vm4971 = vcmp.ge.f32.partialorder %v4715, 0.0
        %vm4972 = vcmp.ge.f32.partialorder %v4716, 0.0
        %vm4973 = vcmp.ge.f32.partialorder %v4717, 0.0
        %vm4974 = vcmp.ge.f32.partialorder %v4718, 0.0
        %vm4975 = vcmp.ge.f32.partialorder %v4719, 0.0
        %vm4976 = vcmp.ge.f32.partialorder %v4720, 0.0
        %vm4977 = vcmp.ge.f32.partialorder %v4721, 0.0
        %vm4978 = vcmp.ge.f32.partialorder %v4722, 0.0
        %vm4979 = vcmp.ge.f32.partialorder %v4723, 0.0
        %vm4980 = vcmp.ge.f32.partialorder %v4724, 0.0
        %vm4981 = vcmp.ge.f32.partialorder %v4725, 0.0
        %vm4982 = vcmp.ge.f32.partialorder %v4726, 0.0
        %vm4983 = vcmp.ge.f32.partialorder %v4727, 0.0
        %vm4984 = vcmp.ge.f32.partialorder %v4728, 0.0
        %vm4985 = vcmp.ge.f32.partialorder %v4729, 0.0
        %vm4986 = vcmp.ge.f32.partialorder %v4730, 0.0
        %vm4987 = vcmp.ge.f32.partialorder %v4731, 0.0
        %vm4988 = vcmp.ge.f32.partialorder %v4732, 0.0
        %vm4989 = vcmp.ge.f32.partialorder %v4733, 0.0
        %vm4990 = vcmp.ge.f32.partialorder %v4734, 0.0
        %vm4991 = vcmp.ge.f32.partialorder %v4735, 0.0
        %vm4992 = vcmp.ge.f32.partialorder %v4736, 0.0
        %vm4993 = vcmp.ge.f32.partialorder %v4737, 0.0
        %vm4994 = vcmp.ge.f32.partialorder %v4738, 0.0
        %vm4995 = vcmp.ge.f32.partialorder %v4739, 0.0
        %vm4996 = vcmp.ge.f32.partialorder %v4740, 0.0
        %vm4997 = vcmp.ge.f32.partialorder %v4741, 0.0
        %vm4998 = vcmp.ge.f32.partialorder %v4742, 0.0
        %vm4999 = vcmp.ge.f32.partialorder %v4743, 0.0
        %vm5000 = vcmp.ge.f32.partialorder %v4744, 0.0
        %vm5001 = vcmp.ge.f32.partialorder %v4745, 0.0
        %vm5002 = vcmp.ge.f32.partialorder %v4746, 0.0
        %vm5003 = vcmp.ge.f32.partialorder %v4747, 0.0
        %vm5004 = vcmp.ge.f32.partialorder %v4748, 0.0
        %vm5005 = vcmp.ge.f32.partialorder %v4749, 0.0
        %vm5006 = vcmp.ge.f32.partialorder %v4750, 0.0
        %vm5007 = vcmp.ge.f32.partialorder %v4751, 0.0
        %vm5008 = vcmp.ge.f32.partialorder %v4752, 0.0
        %vm5009 = vcmp.ge.f32.partialorder %v4753, 0.0
        %vm5010 = vcmp.ge.f32.partialorder %v4754, 0.0
        %vm5011 = vcmp.ge.f32.partialorder %v4755, 0.0
        %vm5012 = vcmp.ge.f32.partialorder %v4756, 0.0
        %vm5013 = vcmp.ge.f32.partialorder %v4757, 0.0
        %vm5014 = vcmp.ge.f32.partialorder %v4758, 0.0
        %vm5015 = vcmp.ge.f32.partialorder %v4759, 0.0
        %vm5016 = vcmp.ge.f32.partialorder %v4760, 0.0
        %vm5017 = vcmp.ge.f32.partialorder %v4761, 0.0
        %vm5018 = vcmp.ge.f32.partialorder %v4762, 0.0
        %vm5019 = vcmp.ge.f32.partialorder %v4763, 0.0
        %vm5020 = vcmp.ge.f32.partialorder %v4764, 0.0
        %vm5021 = vcmp.ge.f32.partialorder %v4765, 0.0
        %vm5022 = vcmp.ge.f32.partialorder %v4766, 0.0
        %vm5023 = vcmp.ge.f32.partialorder %v4767, 0.0
        %vm5024 = vcmp.ge.f32.partialorder %v4768, 0.0
        %vm5025 = vcmp.ge.f32.partialorder %v4769, 0.0
        %vm5026 = vcmp.ge.f32.partialorder %v4770, 0.0
        %vm5027 = vcmp.ge.f32.partialorder %v4771, 0.0
        %vm5028 = vcmp.ge.f32.partialorder %v4772, 0.0
        %vm5029 = vcmp.ge.f32.partialorder %v4773, 0.0
        %vm5030 = vcmp.ge.f32.partialorder %v4774, 0.0
        %vm5031 = vcmp.ge.f32.partialorder %v4775, 0.0
        %vm5032 = vcmp.ge.f32.partialorder %v4776, 0.0
        %vm5033 = vcmp.ge.f32.partialorder %v4777, 0.0
        %v5034 = vmul.f32 %v4522, 0.2
        %v5035 = vmul.f32 %v4523, 0.2
        %v5036 = vmul.f32 %v4524, 0.2
        %v5037 = vmul.f32 %v4525, 0.2
        %v5038 = vmul.f32 %v4526, 0.2
        %v5039 = vmul.f32 %v4527, 0.2
        %v5040 = vmul.f32 %v4528, 0.2
        %v5041 = vmul.f32 %v4529, 0.2
        %v5042 = vmul.f32 %v4530, 0.2
        %v5043 = vmul.f32 %v4531, 0.2
        %v5044 = vmul.f32 %v4532, 0.2
        %v5045 = vmul.f32 %v4533, 0.2
        %v5046 = vmul.f32 %v4534, 0.2
        %v5047 = vmul.f32 %v4535, 0.2
        %v5048 = vmul.f32 %v4536, 0.2
        %v5049 = vmul.f32 %v4537, 0.2
        %v5050 = vmul.f32 %v4538, 0.2
        %v5051 = vmul.f32 %v4539, 0.2
        %v5052 = vmul.f32 %v4540, 0.2
        %v5053 = vmul.f32 %v4541, 0.2
        %v5054 = vmul.f32 %v4542, 0.2
        %v5055 = vmul.f32 %v4543, 0.2
        %v5056 = vmul.f32 %v4544, 0.2
        %v5057 = vmul.f32 %v4545, 0.2
        %v5058 = vmul.f32 %v4546, 0.2
        %v5059 = vmul.f32 %v4547, 0.2
        %v5060 = vmul.f32 %v4548, 0.2
        %v5061 = vmul.f32 %v4549, 0.2
        %v5062 = vmul.f32 %v4550, 0.2
        %v5063 = vmul.f32 %v4551, 0.2
        %v5064 = vmul.f32 %v4552, 0.2
        %v5065 = vmul.f32 %v4553, 0.2
        %v5066 = vmul.f32 %v4554, 0.2
        %v5067 = vmul.f32 %v4555, 0.2
        %v5068 = vmul.f32 %v4556, 0.2
        %v5069 = vmul.f32 %v4557, 0.2
        %v5070 = vmul.f32 %v4558, 0.2
        %v5071 = vmul.f32 %v4559, 0.2
        %v5072 = vmul.f32 %v4560, 0.2
        %v5073 = vmul.f32 %v4561, 0.2
        %v5074 = vmul.f32 %v4562, 0.2
        %v5075 = vmul.f32 %v4563, 0.2
        %v5076 = vmul.f32 %v4564, 0.2
        %v5077 = vmul.f32 %v4565, 0.2
        %v5078 = vmul.f32 %v4566, 0.2
        %v5079 = vmul.f32 %v4567, 0.2
        %v5080 = vmul.f32 %v4568, 0.2
        %v5081 = vmul.f32 %v4569, 0.2
        %v5082 = vmul.f32 %v4570, 0.2
        %v5083 = vmul.f32 %v4571, 0.2
        %v5084 = vmul.f32 %v4572, 0.2
        %v5085 = vmul.f32 %v4573, 0.2
        %v5086 = vmul.f32 %v4574, 0.2
        %v5087 = vmul.f32 %v4575, 0.2
        %v5088 = vmul.f32 %v4576, 0.2
        %v5089 = vmul.f32 %v4577, 0.2
        %v5090 = vmul.f32 %v4578, 0.2
        %v5091 = vmul.f32 %v4579, 0.2
        %v5092 = vmul.f32 %v4580, 0.2
        %v5093 = vmul.f32 %v4581, 0.2
        %v5094 = vmul.f32 %v4582, 0.2
        %v5095 = vmul.f32 %v4583, 0.2
        %v5096 = vmul.f32 %v4584, 0.2
        %v5097 = vmul.f32 %v4585, 0.2
        %v5098 = vmul.f32 %v4586, 0.2
        %v5099 = vmul.f32 %v4587, 0.2
        %v5100 = vmul.f32 %v4588, 0.2
        %v5101 = vmul.f32 %v4589, 0.2
        %v5102 = vmul.f32 %v4590, 0.2
        %v5103 = vmul.f32 %v4591, 0.2
        %v5104 = vmul.f32 %v4592, 0.2
        %v5105 = vmul.f32 %v4593, 0.2
        %v5106 = vmul.f32 %v4594, 0.2
        %v5107 = vmul.f32 %v4595, 0.2
        %v5108 = vmul.f32 %v4596, 0.2
        %v5109 = vmul.f32 %v4597, 0.2
        %v5110 = vmul.f32 %v4598, 0.2
        %v5111 = vmul.f32 %v4599, 0.2
        %v5112 = vmul.f32 %v4600, 0.2
        %v5113 = vmul.f32 %v4601, 0.2
        %v5114 = vmul.f32 %v4602, 0.2
        %v5115 = vmul.f32 %v4603, 0.2
        %v5116 = vmul.f32 %v4604, 0.2
        %v5117 = vmul.f32 %v4605, 0.2
        %v5118 = vmul.f32 %v4606, 0.2
        %v5119 = vmul.f32 %v4607, 0.2
        %v5120 = vmul.f32 %v4608, 0.2
        %v5121 = vmul.f32 %v4609, 0.2
        %v5122 = vmul.f32 %v4610, 0.2
        %v5123 = vmul.f32 %v4611, 0.2
        %v5124 = vmul.f32 %v4612, 0.2
        %v5125 = vmul.f32 %v4613, 0.2
        %v5126 = vmul.f32 %v4614, 0.2
        %v5127 = vmul.f32 %v4615, 0.2
        %v5128 = vmul.f32 %v4616, 0.2
        %v5129 = vmul.f32 %v4617, 0.2
        %v5130 = vmul.f32 %v4618, 0.2
        %v5131 = vmul.f32 %v4619, 0.2
        %v5132 = vmul.f32 %v4620, 0.2
        %v5133 = vmul.f32 %v4621, 0.2
        %v5134 = vmul.f32 %v4622, 0.2
        %v5135 = vmul.f32 %v4623, 0.2
        %v5136 = vmul.f32 %v4624, 0.2
        %v5137 = vmul.f32 %v4625, 0.2
        %v5138 = vmul.f32 %v4626, 0.2
        %v5139 = vmul.f32 %v4627, 0.2
        %v5140 = vmul.f32 %v4628, 0.2
        %v5141 = vmul.f32 %v4629, 0.2
        %v5142 = vmul.f32 %v4630, 0.2
        %v5143 = vmul.f32 %v4631, 0.2
        %v5144 = vmul.f32 %v4632, 0.2
        %v5145 = vmul.f32 %v4633, 0.2
        %v5146 = vmul.f32 %v4634, 0.2
        %v5147 = vmul.f32 %v4635, 0.2
        %v5148 = vmul.f32 %v4636, 0.2
        %v5149 = vmul.f32 %v4637, 0.2
        %v5150 = vmul.f32 %v4638, 0.2
        %v5151 = vmul.f32 %v4639, 0.2
        %v5152 = vmul.f32 %v4640, 0.2
        %v5153 = vmul.f32 %v4641, 0.2
        %v5154 = vmul.f32 %v4642, 0.2
        %v5155 = vmul.f32 %v4643, 0.2
        %v5156 = vmul.f32 %v4644, 0.2
        %v5157 = vmul.f32 %v4645, 0.2
        %v5158 = vmul.f32 %v4646, 0.2
        %v5159 = vmul.f32 %v4647, 0.2
        %v5160 = vmul.f32 %v4648, 0.2
        %v5161 = vmul.f32 %v4649, 0.2
        %v5162 = vmul.f32 %v4650, 0.2
        %v5163 = vmul.f32 %v4651, 0.2
        %v5164 = vmul.f32 %v4652, 0.2
        %v5165 = vmul.f32 %v4653, 0.2
        %v5166 = vmul.f32 %v4654, 0.2
        %v5167 = vmul.f32 %v4655, 0.2
        %v5168 = vmul.f32 %v4656, 0.2
        %v5169 = vmul.f32 %v4657, 0.2
        %v5170 = vmul.f32 %v4658, 0.2
        %v5171 = vmul.f32 %v4659, 0.2
        %v5172 = vmul.f32 %v4660, 0.2
        %v5173 = vmul.f32 %v4661, 0.2
        %v5174 = vmul.f32 %v4662, 0.2
        %v5175 = vmul.f32 %v4663, 0.2
        %v5176 = vmul.f32 %v4664, 0.2
        %v5177 = vmul.f32 %v4665, 0.2
        %v5178 = vmul.f32 %v4666, 0.2
        %v5179 = vmul.f32 %v4667, 0.2
        %v5180 = vmul.f32 %v4668, 0.2
        %v5181 = vmul.f32 %v4669, 0.2
        %v5182 = vmul.f32 %v4670, 0.2
        %v5183 = vmul.f32 %v4671, 0.2
        %v5184 = vmul.f32 %v4672, 0.2
        %v5185 = vmul.f32 %v4673, 0.2
        %v5186 = vmul.f32 %v4674, 0.2
        %v5187 = vmul.f32 %v4675, 0.2
        %v5188 = vmul.f32 %v4676, 0.2
        %v5189 = vmul.f32 %v4677, 0.2
        %v5190 = vmul.f32 %v4678, 0.2
        %v5191 = vmul.f32 %v4679, 0.2
        %v5192 = vmul.f32 %v4680, 0.2
        %v5193 = vmul.f32 %v4681, 0.2
        %v5194 = vmul.f32 %v4682, 0.2
        %v5195 = vmul.f32 %v4683, 0.2
        %v5196 = vmul.f32 %v4684, 0.2
        %v5197 = vmul.f32 %v4685, 0.2
        %v5198 = vmul.f32 %v4686, 0.2
        %v5199 = vmul.f32 %v4687, 0.2
        %v5200 = vmul.f32 %v4688, 0.2
        %v5201 = vmul.f32 %v4689, 0.2
        %v5202 = vmul.f32 %v4690, 0.2
        %v5203 = vmul.f32 %v4691, 0.2
        %v5204 = vmul.f32 %v4692, 0.2
        %v5205 = vmul.f32 %v4693, 0.2
        %v5206 = vmul.f32 %v4694, 0.2
        %v5207 = vmul.f32 %v4695, 0.2
        %v5208 = vmul.f32 %v4696, 0.2
        %v5209 = vmul.f32 %v4697, 0.2
        %v5210 = vmul.f32 %v4698, 0.2
        %v5211 = vmul.f32 %v4699, 0.2
        %v5212 = vmul.f32 %v4700, 0.2
        %v5213 = vmul.f32 %v4701, 0.2
        %v5214 = vmul.f32 %v4702, 0.2
        %v5215 = vmul.f32 %v4703, 0.2
        %v5216 = vmul.f32 %v4704, 0.2
        %v5217 = vmul.f32 %v4705, 0.2
        %v5218 = vmul.f32 %v4706, 0.2
        %v5219 = vmul.f32 %v4707, 0.2
        %v5220 = vmul.f32 %v4708, 0.2
        %v5221 = vmul.f32 %v4709, 0.2
        %v5222 = vmul.f32 %v4710, 0.2
        %v5223 = vmul.f32 %v4711, 0.2
        %v5224 = vmul.f32 %v4712, 0.2
        %v5225 = vmul.f32 %v4713, 0.2
        %v5226 = vmul.f32 %v4714, 0.2
        %v5227 = vmul.f32 %v4715, 0.2
        %v5228 = vmul.f32 %v4716, 0.2
        %v5229 = vmul.f32 %v4717, 0.2
        %v5230 = vmul.f32 %v4718, 0.2
        %v5231 = vmul.f32 %v4719, 0.2
        %v5232 = vmul.f32 %v4720, 0.2
        %v5233 = vmul.f32 %v4721, 0.2
        %v5234 = vmul.f32 %v4722, 0.2
        %v5235 = vmul.f32 %v4723, 0.2
        %v5236 = vmul.f32 %v4724, 0.2
        %v5237 = vmul.f32 %v4725, 0.2
        %v5238 = vmul.f32 %v4726, 0.2
        %v5239 = vmul.f32 %v4727, 0.2
        %v5240 = vmul.f32 %v4728, 0.2
        %v5241 = vmul.f32 %v4729, 0.2
        %v5242 = vmul.f32 %v4730, 0.2
        %v5243 = vmul.f32 %v4731, 0.2
        %v5244 = vmul.f32 %v4732, 0.2
        %v5245 = vmul.f32 %v4733, 0.2
        %v5246 = vmul.f32 %v4734, 0.2
        %v5247 = vmul.f32 %v4735, 0.2
        %v5248 = vmul.f32 %v4736, 0.2
        %v5249 = vmul.f32 %v4737, 0.2
        %v5250 = vmul.f32 %v4738, 0.2
        %v5251 = vmul.f32 %v4739, 0.2
        %v5252 = vmul.f32 %v4740, 0.2
        %v5253 = vmul.f32 %v4741, 0.2
        %v5254 = vmul.f32 %v4742, 0.2
        %v5255 = vmul.f32 %v4743, 0.2
        %v5256 = vmul.f32 %v4744, 0.2
        %v5257 = vmul.f32 %v4745, 0.2
        %v5258 = vmul.f32 %v4746, 0.2
        %v5259 = vmul.f32 %v4747, 0.2
        %v5260 = vmul.f32 %v4748, 0.2
        %v5261 = vmul.f32 %v4749, 0.2
        %v5262 = vmul.f32 %v4750, 0.2
        %v5263 = vmul.f32 %v4751, 0.2
        %v5264 = vmul.f32 %v4752, 0.2
        %v5265 = vmul.f32 %v4753, 0.2
        %v5266 = vmul.f32 %v4754, 0.2
        %v5267 = vmul.f32 %v4755, 0.2
        %v5268 = vmul.f32 %v4756, 0.2
        %v5269 = vmul.f32 %v4757, 0.2
        %v5270 = vmul.f32 %v4758, 0.2
        %v5271 = vmul.f32 %v4759, 0.2
        %v5272 = vmul.f32 %v4760, 0.2
        %v5273 = vmul.f32 %v4761, 0.2
        %v5274 = vmul.f32 %v4762, 0.2
        %v5275 = vmul.f32 %v4763, 0.2
        %v5276 = vmul.f32 %v4764, 0.2
        %v5277 = vmul.f32 %v4765, 0.2
        %v5278 = vmul.f32 %v4766, 0.2
        %v5279 = vmul.f32 %v4767, 0.2
        %v5280 = vmul.f32 %v4768, 0.2
        %v5281 = vmul.f32 %v4769, 0.2
        %v5282 = vmul.f32 %v4770, 0.2
        %v5283 = vmul.f32 %v4771, 0.2
        %v5284 = vmul.f32 %v4772, 0.2
        %v5285 = vmul.f32 %v4773, 0.2
        %v5286 = vmul.f32 %v4774, 0.2
        %v5287 = vmul.f32 %v4775, 0.2
        %v5288 = vmul.f32 %v4776, 0.2
        %v5289 = vmul.f32 %v4777, 0.2
        %v5290 = vsel %vm4778, %v4522, %v5034
        %v5291 = vsel %vm4779, %v4523, %v5035
        %v5292 = vsel %vm4780, %v4524, %v5036
        %v5293 = vsel %vm4781, %v4525, %v5037
        %v5294 = vsel %vm4782, %v4526, %v5038
        %v5295 = vsel %vm4783, %v4527, %v5039
        %v5296 = vsel %vm4784, %v4528, %v5040
        %v5297 = vsel %vm4785, %v4529, %v5041
        %v5298 = vsel %vm4786, %v4530, %v5042
        %v5299 = vsel %vm4787, %v4531, %v5043
        %v5300 = vsel %vm4788, %v4532, %v5044
        %v5301 = vsel %vm4789, %v4533, %v5045
        %v5302 = vsel %vm4790, %v4534, %v5046
        %v5303 = vsel %vm4791, %v4535, %v5047
        %v5304 = vsel %vm4792, %v4536, %v5048
        %v5305 = vsel %vm4793, %v4537, %v5049
        %v5306 = vsel %vm4794, %v4538, %v5050
        %v5307 = vsel %vm4795, %v4539, %v5051
        %v5308 = vsel %vm4796, %v4540, %v5052
        %v5309 = vsel %vm4797, %v4541, %v5053
        %v5310 = vsel %vm4798, %v4542, %v5054
        %v5311 = vsel %vm4799, %v4543, %v5055
        %v5312 = vsel %vm4800, %v4544, %v5056
        %v5313 = vsel %vm4801, %v4545, %v5057
        %v5314 = vsel %vm4802, %v4546, %v5058
        %v5315 = vsel %vm4803, %v4547, %v5059
        %v5316 = vsel %vm4804, %v4548, %v5060
        %v5317 = vsel %vm4805, %v4549, %v5061
        %v5318 = vsel %vm4806, %v4550, %v5062
        %v5319 = vsel %vm4807, %v4551, %v5063
        %v5320 = vsel %vm4808, %v4552, %v5064
        %v5321 = vsel %vm4809, %v4553, %v5065
        %v5322 = vsel %vm4810, %v4554, %v5066
        %v5323 = vsel %vm4811, %v4555, %v5067
        %v5324 = vsel %vm4812, %v4556, %v5068
        %v5325 = vsel %vm4813, %v4557, %v5069
        %v5326 = vsel %vm4814, %v4558, %v5070
        %v5327 = vsel %vm4815, %v4559, %v5071
        %v5328 = vsel %vm4816, %v4560, %v5072
        %v5329 = vsel %vm4817, %v4561, %v5073
        %v5330 = vsel %vm4818, %v4562, %v5074
        %v5331 = vsel %vm4819, %v4563, %v5075
        %v5332 = vsel %vm4820, %v4564, %v5076
        %v5333 = vsel %vm4821, %v4565, %v5077
        %v5334 = vsel %vm4822, %v4566, %v5078
        %v5335 = vsel %vm4823, %v4567, %v5079
        %v5336 = vsel %vm4824, %v4568, %v5080
        %v5337 = vsel %vm4825, %v4569, %v5081
        %v5338 = vsel %vm4826, %v4570, %v5082
        %v5339 = vsel %vm4827, %v4571, %v5083
        %v5340 = vsel %vm4828, %v4572, %v5084
        %v5341 = vsel %vm4829, %v4573, %v5085
        %v5342 = vsel %vm4830, %v4574, %v5086
        %v5343 = vsel %vm4831, %v4575, %v5087
        %v5344 = vsel %vm4832, %v4576, %v5088
        %v5345 = vsel %vm4833, %v4577, %v5089
        %v5346 = vsel %vm4834, %v4578, %v5090
        %v5347 = vsel %vm4835, %v4579, %v5091
        %v5348 = vsel %vm4836, %v4580, %v5092
        %v5349 = vsel %vm4837, %v4581, %v5093
        %v5350 = vsel %vm4838, %v4582, %v5094
        %v5351 = vsel %vm4839, %v4583, %v5095
        %v5352 = vsel %vm4840, %v4584, %v5096
        %v5353 = vsel %vm4841, %v4585, %v5097
        %v5354 = vsel %vm4842, %v4586, %v5098
        %v5355 = vsel %vm4843, %v4587, %v5099
        %v5356 = vsel %vm4844, %v4588, %v5100
        %v5357 = vsel %vm4845, %v4589, %v5101
        %v5358 = vsel %vm4846, %v4590, %v5102
        %v5359 = vsel %vm4847, %v4591, %v5103
        %v5360 = vsel %vm4848, %v4592, %v5104
        %v5361 = vsel %vm4849, %v4593, %v5105
        %v5362 = vsel %vm4850, %v4594, %v5106
        %v5363 = vsel %vm4851, %v4595, %v5107
        %v5364 = vsel %vm4852, %v4596, %v5108
        %v5365 = vsel %vm4853, %v4597, %v5109
        %v5366 = vsel %vm4854, %v4598, %v5110
        %v5367 = vsel %vm4855, %v4599, %v5111
        %v5368 = vsel %vm4856, %v4600, %v5112
        %v5369 = vsel %vm4857, %v4601, %v5113
        %v5370 = vsel %vm4858, %v4602, %v5114
        %v5371 = vsel %vm4859, %v4603, %v5115
        %v5372 = vsel %vm4860, %v4604, %v5116
        %v5373 = vsel %vm4861, %v4605, %v5117
        %v5374 = vsel %vm4862, %v4606, %v5118
        %v5375 = vsel %vm4863, %v4607, %v5119
        %v5376 = vsel %vm4864, %v4608, %v5120
        %v5377 = vsel %vm4865, %v4609, %v5121
        %v5378 = vsel %vm4866, %v4610, %v5122
        %v5379 = vsel %vm4867, %v4611, %v5123
        %v5380 = vsel %vm4868, %v4612, %v5124
        %v5381 = vsel %vm4869, %v4613, %v5125
        %v5382 = vsel %vm4870, %v4614, %v5126
        %v5383 = vsel %vm4871, %v4615, %v5127
        %v5384 = vsel %vm4872, %v4616, %v5128
        %v5385 = vsel %vm4873, %v4617, %v5129
        %v5386 = vsel %vm4874, %v4618, %v5130
        %v5387 = vsel %vm4875, %v4619, %v5131
        %v5388 = vsel %vm4876, %v4620, %v5132
        %v5389 = vsel %vm4877, %v4621, %v5133
        %v5390 = vsel %vm4878, %v4622, %v5134
        %v5391 = vsel %vm4879, %v4623, %v5135
        %v5392 = vsel %vm4880, %v4624, %v5136
        %v5393 = vsel %vm4881, %v4625, %v5137
        %v5394 = vsel %vm4882, %v4626, %v5138
        %v5395 = vsel %vm4883, %v4627, %v5139
        %v5396 = vsel %vm4884, %v4628, %v5140
        %v5397 = vsel %vm4885, %v4629, %v5141
        %v5398 = vsel %vm4886, %v4630, %v5142
        %v5399 = vsel %vm4887, %v4631, %v5143
        %v5400 = vsel %vm4888, %v4632, %v5144
        %v5401 = vsel %vm4889, %v4633, %v5145
        %v5402 = vsel %vm4890, %v4634, %v5146
        %v5403 = vsel %vm4891, %v4635, %v5147
        %v5404 = vsel %vm4892, %v4636, %v5148
        %v5405 = vsel %vm4893, %v4637, %v5149
        %v5406 = vsel %vm4894, %v4638, %v5150
        %v5407 = vsel %vm4895, %v4639, %v5151
        %v5408 = vsel %vm4896, %v4640, %v5152
        %v5409 = vsel %vm4897, %v4641, %v5153
        %v5410 = vsel %vm4898, %v4642, %v5154
        %v5411 = vsel %vm4899, %v4643, %v5155
        %v5412 = vsel %vm4900, %v4644, %v5156
        %v5413 = vsel %vm4901, %v4645, %v5157
        %v5414 = vsel %vm4902, %v4646, %v5158
        %v5415 = vsel %vm4903, %v4647, %v5159
        %v5416 = vsel %vm4904, %v4648, %v5160
        %v5417 = vsel %vm4905, %v4649, %v5161
        %v5418 = vsel %vm4906, %v4650, %v5162
        %v5419 = vsel %vm4907, %v4651, %v5163
        %v5420 = vsel %vm4908, %v4652, %v5164
        %v5421 = vsel %vm4909, %v4653, %v5165
        %v5422 = vsel %vm4910, %v4654, %v5166
        %v5423 = vsel %vm4911, %v4655, %v5167
        %v5424 = vsel %vm4912, %v4656, %v5168
        %v5425 = vsel %vm4913, %v4657, %v5169
        %v5426 = vsel %vm4914, %v4658, %v5170
        %v5427 = vsel %vm4915, %v4659, %v5171
        %v5428 = vsel %vm4916, %v4660, %v5172
        %v5429 = vsel %vm4917, %v4661, %v5173
        %v5430 = vsel %vm4918, %v4662, %v5174
        %v5431 = vsel %vm4919, %v4663, %v5175
        %v5432 = vsel %vm4920, %v4664, %v5176
        %v5433 = vsel %vm4921, %v4665, %v5177
        %v5434 = vsel %vm4922, %v4666, %v5178
        %v5435 = vsel %vm4923, %v4667, %v5179
        %v5436 = vsel %vm4924, %v4668, %v5180
        %v5437 = vsel %vm4925, %v4669, %v5181
        %v5438 = vsel %vm4926, %v4670, %v5182
        %v5439 = vsel %vm4927, %v4671, %v5183
        %v5440 = vsel %vm4928, %v4672, %v5184
        %v5441 = vsel %vm4929, %v4673, %v5185
        %v5442 = vsel %vm4930, %v4674, %v5186
        %v5443 = vsel %vm4931, %v4675, %v5187
        %v5444 = vsel %vm4932, %v4676, %v5188
        %v5445 = vsel %vm4933, %v4677, %v5189
        %v5446 = vsel %vm4934, %v4678, %v5190
        %v5447 = vsel %vm4935, %v4679, %v5191
        %v5448 = vsel %vm4936, %v4680, %v5192
        %v5449 = vsel %vm4937, %v4681, %v5193
        %v5450 = vsel %vm4938, %v4682, %v5194
        %v5451 = vsel %vm4939, %v4683, %v5195
        %v5452 = vsel %vm4940, %v4684, %v5196
        %v5453 = vsel %vm4941, %v4685, %v5197
        %v5454 = vsel %vm4942, %v4686, %v5198
        %v5455 = vsel %vm4943, %v4687, %v5199
        %v5456 = vsel %vm4944, %v4688, %v5200
        %v5457 = vsel %vm4945, %v4689, %v5201
        %v5458 = vsel %vm4946, %v4690, %v5202
        %v5459 = vsel %vm4947, %v4691, %v5203
        %v5460 = vsel %vm4948, %v4692, %v5204
        %v5461 = vsel %vm4949, %v4693, %v5205
        %v5462 = vsel %vm4950, %v4694, %v5206
        %v5463 = vsel %vm4951, %v4695, %v5207
        %v5464 = vsel %vm4952, %v4696, %v5208
        %v5465 = vsel %vm4953, %v4697, %v5209
        %v5466 = vsel %vm4954, %v4698, %v5210
        %v5467 = vsel %vm4955, %v4699, %v5211
        %v5468 = vsel %vm4956, %v4700, %v5212
        %v5469 = vsel %vm4957, %v4701, %v5213
        %v5470 = vsel %vm4958, %v4702, %v5214
        %v5471 = vsel %vm4959, %v4703, %v5215
        %v5472 = vsel %vm4960, %v4704, %v5216
        %v5473 = vsel %vm4961, %v4705, %v5217
        %v5474 = vsel %vm4962, %v4706, %v5218
        %v5475 = vsel %vm4963, %v4707, %v5219
        %v5476 = vsel %vm4964, %v4708, %v5220
        %v5477 = vsel %vm4965, %v4709, %v5221
        %v5478 = vsel %vm4966, %v4710, %v5222
        %v5479 = vsel %vm4967, %v4711, %v5223
        %v5480 = vsel %vm4968, %v4712, %v5224
        %v5481 = vsel %vm4969, %v4713, %v5225
        %v5482 = vsel %vm4970, %v4714, %v5226
        %v5483 = vsel %vm4971, %v4715, %v5227
        %v5484 = vsel %vm4972, %v4716, %v5228
        %v5485 = vsel %vm4973, %v4717, %v5229
        %v5486 = vsel %vm4974, %v4718, %v5230
        %v5487 = vsel %vm4975, %v4719, %v5231
        %v5488 = vsel %vm4976, %v4720, %v5232
        %v5489 = vsel %vm4977, %v4721, %v5233
        %v5490 = vsel %vm4978, %v4722, %v5234
        %v5491 = vsel %vm4979, %v4723, %v5235
        %v5492 = vsel %vm4980, %v4724, %v5236
        %v5493 = vsel %vm4981, %v4725, %v5237
        %v5494 = vsel %vm4982, %v4726, %v5238
        %v5495 = vsel %vm4983, %v4727, %v5239
        %v5496 = vsel %vm4984, %v4728, %v5240
        %v5497 = vsel %vm4985, %v4729, %v5241
        %v5498 = vsel %vm4986, %v4730, %v5242
        %v5499 = vsel %vm4987, %v4731, %v5243
        %v5500 = vsel %vm4988, %v4732, %v5244
        %v5501 = vsel %vm4989, %v4733, %v5245
        %v5502 = vsel %vm4990, %v4734, %v5246
        %v5503 = vsel %vm4991, %v4735, %v5247
        %v5504 = vsel %vm4992, %v4736, %v5248
        %v5505 = vsel %vm4993, %v4737, %v5249
        %v5506 = vsel %vm4994, %v4738, %v5250
        %v5507 = vsel %vm4995, %v4739, %v5251
        %v5508 = vsel %vm4996, %v4740, %v5252
        %v5509 = vsel %vm4997, %v4741, %v5253
        %v5510 = vsel %vm4998, %v4742, %v5254
        %v5511 = vsel %vm4999, %v4743, %v5255
        %v5512 = vsel %vm5000, %v4744, %v5256
        %v5513 = vsel %vm5001, %v4745, %v5257
        %v5514 = vsel %vm5002, %v4746, %v5258
        %v5515 = vsel %vm5003, %v4747, %v5259
        %v5516 = vsel %vm5004, %v4748, %v5260
        %v5517 = vsel %vm5005, %v4749, %v5261
        %v5518 = vsel %vm5006, %v4750, %v5262
        %v5519 = vsel %vm5007, %v4751, %v5263
        %v5520 = vsel %vm5008, %v4752, %v5264
        %v5521 = vsel %vm5009, %v4753, %v5265
        %v5522 = vsel %vm5010, %v4754, %v5266
        %v5523 = vsel %vm5011, %v4755, %v5267
        %v5524 = vsel %vm5012, %v4756, %v5268
        %v5525 = vsel %vm5013, %v4757, %v5269
        %v5526 = vsel %vm5014, %v4758, %v5270
        %v5527 = vsel %vm5015, %v4759, %v5271
        %v5528 = vsel %vm5016, %v4760, %v5272
        %v5529 = vsel %vm5017, %v4761, %v5273
        %v5530 = vsel %vm5018, %v4762, %v5274
        %v5531 = vsel %vm5019, %v4763, %v5275
        %v5532 = vsel %vm5020, %v4764, %v5276
        %v5533 = vsel %vm5021, %v4765, %v5277
        %v5534 = vsel %vm5022, %v4766, %v5278
        %v5535 = vsel %vm5023, %v4767, %v5279
        %v5536 = vsel %vm5024, %v4768, %v5280
        %v5537 = vsel %vm5025, %v4769, %v5281
        %v5538 = vsel %vm5026, %v4770, %v5282
        %v5539 = vsel %vm5027, %v4771, %v5283
        %v5540 = vsel %vm5028, %v4772, %v5284
        %v5541 = vsel %vm5029, %v4773, %v5285
        %v5542 = vsel %vm5030, %v4774, %v5286
        %v5543 = vsel %vm5031, %v4775, %v5287
        %v5544 = vsel %vm5032, %v4776, %v5288
        %v5545 = vsel %vm5033, %v4777, %v5289
        %v5546 = vpack.c.bf16 %v5291, %v5290
        %v5547 = vpack.c.bf16 %v5293, %v5292
        %v5548 = vpack.c.bf16 %v5295, %v5294
        %v5549 = vpack.c.bf16 %v5297, %v5296
        %v5550 = vpack.c.bf16 %v5299, %v5298
        %v5551 = vpack.c.bf16 %v5301, %v5300
        %v5552 = vpack.c.bf16 %v5303, %v5302
        %v5553 = vpack.c.bf16 %v5305, %v5304
        %v5554 = vpack.c.bf16 %v5307, %v5306
        %v5555 = vpack.c.bf16 %v5309, %v5308
        %v5556 = vpack.c.bf16 %v5311, %v5310
        %v5557 = vpack.c.bf16 %v5313, %v5312
        %v5558 = vpack.c.bf16 %v5315, %v5314
        %v5559 = vpack.c.bf16 %v5317, %v5316
        %v5560 = vpack.c.bf16 %v5319, %v5318
        %v5561 = vpack.c.bf16 %v5321, %v5320
        %v5562 = vpack.c.bf16 %v5323, %v5322
        %v5563 = vpack.c.bf16 %v5325, %v5324
        %v5564 = vpack.c.bf16 %v5327, %v5326
        %v5565 = vpack.c.bf16 %v5329, %v5328
        %v5566 = vpack.c.bf16 %v5331, %v5330
        %v5567 = vpack.c.bf16 %v5333, %v5332
        %v5568 = vpack.c.bf16 %v5335, %v5334
        %v5569 = vpack.c.bf16 %v5337, %v5336
        %v5570 = vpack.c.bf16 %v5339, %v5338
        %v5571 = vpack.c.bf16 %v5341, %v5340
        %v5572 = vpack.c.bf16 %v5343, %v5342
        %v5573 = vpack.c.bf16 %v5345, %v5344
        %v5574 = vpack.c.bf16 %v5347, %v5346
        %v5575 = vpack.c.bf16 %v5349, %v5348
        %v5576 = vpack.c.bf16 %v5351, %v5350
        %v5577 = vpack.c.bf16 %v5353, %v5352
        %v5578 = vpack.c.bf16 %v5355, %v5354
        %v5579 = vpack.c.bf16 %v5357, %v5356
        %v5580 = vpack.c.bf16 %v5359, %v5358
        %v5581 = vpack.c.bf16 %v5361, %v5360
        %v5582 = vpack.c.bf16 %v5363, %v5362
        %v5583 = vpack.c.bf16 %v5365, %v5364
        %v5584 = vpack.c.bf16 %v5367, %v5366
        %v5585 = vpack.c.bf16 %v5369, %v5368
        %v5586 = vpack.c.bf16 %v5371, %v5370
        %v5587 = vpack.c.bf16 %v5373, %v5372
        %v5588 = vpack.c.bf16 %v5375, %v5374
        %v5589 = vpack.c.bf16 %v5377, %v5376
        %v5590 = vpack.c.bf16 %v5379, %v5378
        %v5591 = vpack.c.bf16 %v5381, %v5380
        %v5592 = vpack.c.bf16 %v5383, %v5382
        %v5593 = vpack.c.bf16 %v5385, %v5384
        %v5594 = vpack.c.bf16 %v5387, %v5386
        %v5595 = vpack.c.bf16 %v5389, %v5388
        %v5596 = vpack.c.bf16 %v5391, %v5390
        %v5597 = vpack.c.bf16 %v5393, %v5392
        %v5598 = vpack.c.bf16 %v5395, %v5394
        %v5599 = vpack.c.bf16 %v5397, %v5396
        %v5600 = vpack.c.bf16 %v5399, %v5398
        %v5601 = vpack.c.bf16 %v5401, %v5400
        %v5602 = vpack.c.bf16 %v5403, %v5402
        %v5603 = vpack.c.bf16 %v5405, %v5404
        %v5604 = vpack.c.bf16 %v5407, %v5406
        %v5605 = vpack.c.bf16 %v5409, %v5408
        %v5606 = vpack.c.bf16 %v5411, %v5410
        %v5607 = vpack.c.bf16 %v5413, %v5412
        %v5608 = vpack.c.bf16 %v5415, %v5414
        %v5609 = vpack.c.bf16 %v5417, %v5416
        %v5610 = vpack.c.bf16 %v5419, %v5418
        %v5611 = vpack.c.bf16 %v5421, %v5420
        %v5612 = vpack.c.bf16 %v5423, %v5422
        %v5613 = vpack.c.bf16 %v5425, %v5424
        %v5614 = vpack.c.bf16 %v5427, %v5426
        %v5615 = vpack.c.bf16 %v5429, %v5428
        %v5616 = vpack.c.bf16 %v5431, %v5430
        %v5617 = vpack.c.bf16 %v5433, %v5432
        %v5618 = vpack.c.bf16 %v5435, %v5434
        %v5619 = vpack.c.bf16 %v5437, %v5436
        %v5620 = vpack.c.bf16 %v5439, %v5438
        %v5621 = vpack.c.bf16 %v5441, %v5440
        %v5622 = vpack.c.bf16 %v5443, %v5442
        %v5623 = vpack.c.bf16 %v5445, %v5444
        %v5624 = vpack.c.bf16 %v5447, %v5446
        %v5625 = vpack.c.bf16 %v5449, %v5448
        %v5626 = vpack.c.bf16 %v5451, %v5450
        %v5627 = vpack.c.bf16 %v5453, %v5452
        %v5628 = vpack.c.bf16 %v5455, %v5454
        %v5629 = vpack.c.bf16 %v5457, %v5456
        %v5630 = vpack.c.bf16 %v5459, %v5458
        %v5631 = vpack.c.bf16 %v5461, %v5460
        %v5632 = vpack.c.bf16 %v5463, %v5462
        %v5633 = vpack.c.bf16 %v5465, %v5464
        %v5634 = vpack.c.bf16 %v5467, %v5466
        %v5635 = vpack.c.bf16 %v5469, %v5468
        %v5636 = vpack.c.bf16 %v5471, %v5470
        %v5637 = vpack.c.bf16 %v5473, %v5472
        %v5638 = vpack.c.bf16 %v5475, %v5474
        %v5639 = vpack.c.bf16 %v5477, %v5476
        %v5640 = vpack.c.bf16 %v5479, %v5478
        %v5641 = vpack.c.bf16 %v5481, %v5480
        %v5642 = vpack.c.bf16 %v5483, %v5482
        %v5643 = vpack.c.bf16 %v5485, %v5484
        %v5644 = vpack.c.bf16 %v5487, %v5486
        %v5645 = vpack.c.bf16 %v5489, %v5488
        %v5646 = vpack.c.bf16 %v5491, %v5490
        %v5647 = vpack.c.bf16 %v5493, %v5492
        %v5648 = vpack.c.bf16 %v5495, %v5494
        %v5649 = vpack.c.bf16 %v5497, %v5496
        %v5650 = vpack.c.bf16 %v5499, %v5498
        %v5651 = vpack.c.bf16 %v5501, %v5500
        %v5652 = vpack.c.bf16 %v5503, %v5502
        %v5653 = vpack.c.bf16 %v5505, %v5504
        %v5654 = vpack.c.bf16 %v5507, %v5506
        %v5655 = vpack.c.bf16 %v5509, %v5508
        %v5656 = vpack.c.bf16 %v5511, %v5510
        %v5657 = vpack.c.bf16 %v5513, %v5512
        %v5658 = vpack.c.bf16 %v5515, %v5514
        %v5659 = vpack.c.bf16 %v5517, %v5516
        %v5660 = vpack.c.bf16 %v5519, %v5518
        %v5661 = vpack.c.bf16 %v5521, %v5520
        %v5662 = vpack.c.bf16 %v5523, %v5522
        %v5663 = vpack.c.bf16 %v5525, %v5524
        %v5664 = vpack.c.bf16 %v5527, %v5526
        %v5665 = vpack.c.bf16 %v5529, %v5528
        %v5666 = vpack.c.bf16 %v5531, %v5530
        %v5667 = vpack.c.bf16 %v5533, %v5532
        %v5668 = vpack.c.bf16 %v5535, %v5534
        %v5669 = vpack.c.bf16 %v5537, %v5536
        %v5670 = vpack.c.bf16 %v5539, %v5538
        %v5671 = vpack.c.bf16 %v5541, %v5540
        %v5672 = vpack.c.bf16 %v5543, %v5542
        %v5673 = vpack.c.bf16 %v5545, %v5544
        %v5802 = vunpack.c.l.b16 %v5546
        %v5803 = vunpack.c.h.b16 %v5546
        %v5804 = vunpack.c.l.b16 %v5547
        %v5805 = vunpack.c.h.b16 %v5547
        %v5806 = vunpack.c.l.b16 %v5548
        %v5807 = vunpack.c.h.b16 %v5548
        %v5808 = vunpack.c.l.b16 %v5549
        %v5809 = vunpack.c.h.b16 %v5549
        %v5810 = vunpack.c.l.b16 %v5550
        %v5811 = vunpack.c.h.b16 %v5550
        %v5812 = vunpack.c.l.b16 %v5551
        %v5813 = vunpack.c.h.b16 %v5551
        %v5814 = vunpack.c.l.b16 %v5552
        %v5815 = vunpack.c.h.b16 %v5552
        %v5816 = vunpack.c.l.b16 %v5553
        %v5817 = vunpack.c.h.b16 %v5553
        %v5818 = vunpack.c.l.b16 %v5554
        %v5819 = vunpack.c.h.b16 %v5554
        %v5820 = vunpack.c.l.b16 %v5555
        %v5821 = vunpack.c.h.b16 %v5555
        %v5822 = vunpack.c.l.b16 %v5556
        %v5823 = vunpack.c.h.b16 %v5556
        %v5824 = vunpack.c.l.b16 %v5557
        %v5825 = vunpack.c.h.b16 %v5557
        %v5826 = vunpack.c.l.b16 %v5558
        %v5827 = vunpack.c.h.b16 %v5558
        %v5828 = vunpack.c.l.b16 %v5559
        %v5829 = vunpack.c.h.b16 %v5559
        %v5830 = vunpack.c.l.b16 %v5560
        %v5831 = vunpack.c.h.b16 %v5560
        %v5832 = vunpack.c.l.b16 %v5561
        %v5833 = vunpack.c.h.b16 %v5561
        %v5834 = vunpack.c.l.b16 %v5562
        %v5835 = vunpack.c.h.b16 %v5562
        %v5836 = vunpack.c.l.b16 %v5563
        %v5837 = vunpack.c.h.b16 %v5563
        %v5838 = vunpack.c.l.b16 %v5564
        %v5839 = vunpack.c.h.b16 %v5564
        %v5840 = vunpack.c.l.b16 %v5565
        %v5841 = vunpack.c.h.b16 %v5565
        %v5842 = vunpack.c.l.b16 %v5566
        %v5843 = vunpack.c.h.b16 %v5566
        %v5844 = vunpack.c.l.b16 %v5567
        %v5845 = vunpack.c.h.b16 %v5567
        %v5846 = vunpack.c.l.b16 %v5568
        %v5847 = vunpack.c.h.b16 %v5568
        %v5848 = vunpack.c.l.b16 %v5569
        %v5849 = vunpack.c.h.b16 %v5569
        %v5850 = vunpack.c.l.b16 %v5570
        %v5851 = vunpack.c.h.b16 %v5570
        %v5852 = vunpack.c.l.b16 %v5571
        %v5853 = vunpack.c.h.b16 %v5571
        %v5854 = vunpack.c.l.b16 %v5572
        %v5855 = vunpack.c.h.b16 %v5572
        %v5856 = vunpack.c.l.b16 %v5573
        %v5857 = vunpack.c.h.b16 %v5573
        %v5858 = vunpack.c.l.b16 %v5574
        %v5859 = vunpack.c.h.b16 %v5574
        %v5860 = vunpack.c.l.b16 %v5575
        %v5861 = vunpack.c.h.b16 %v5575
        %v5862 = vunpack.c.l.b16 %v5576
        %v5863 = vunpack.c.h.b16 %v5576
        %v5864 = vunpack.c.l.b16 %v5577
        %v5865 = vunpack.c.h.b16 %v5577
        %v5866 = vunpack.c.l.b16 %v5578
        %v5867 = vunpack.c.h.b16 %v5578
        %v5868 = vunpack.c.l.b16 %v5579
        %v5869 = vunpack.c.h.b16 %v5579
        %v5870 = vunpack.c.l.b16 %v5580
        %v5871 = vunpack.c.h.b16 %v5580
        %v5872 = vunpack.c.l.b16 %v5581
        %v5873 = vunpack.c.h.b16 %v5581
        %v5874 = vunpack.c.l.b16 %v5582
        %v5875 = vunpack.c.h.b16 %v5582
        %v5876 = vunpack.c.l.b16 %v5583
        %v5877 = vunpack.c.h.b16 %v5583
        %v5878 = vunpack.c.l.b16 %v5584
        %v5879 = vunpack.c.h.b16 %v5584
        %v5880 = vunpack.c.l.b16 %v5585
        %v5881 = vunpack.c.h.b16 %v5585
        %v5882 = vunpack.c.l.b16 %v5586
        %v5883 = vunpack.c.h.b16 %v5586
        %v5884 = vunpack.c.l.b16 %v5587
        %v5885 = vunpack.c.h.b16 %v5587
        %v5886 = vunpack.c.l.b16 %v5588
        %v5887 = vunpack.c.h.b16 %v5588
        %v5888 = vunpack.c.l.b16 %v5589
        %v5889 = vunpack.c.h.b16 %v5589
        %v5890 = vunpack.c.l.b16 %v5590
        %v5891 = vunpack.c.h.b16 %v5590
        %v5892 = vunpack.c.l.b16 %v5591
        %v5893 = vunpack.c.h.b16 %v5591
        %v5894 = vunpack.c.l.b16 %v5592
        %v5895 = vunpack.c.h.b16 %v5592
        %v5896 = vunpack.c.l.b16 %v5593
        %v5897 = vunpack.c.h.b16 %v5593
        %v5898 = vunpack.c.l.b16 %v5594
        %v5899 = vunpack.c.h.b16 %v5594
        %v5900 = vunpack.c.l.b16 %v5595
        %v5901 = vunpack.c.h.b16 %v5595
        %v5902 = vunpack.c.l.b16 %v5596
        %v5903 = vunpack.c.h.b16 %v5596
        %v5904 = vunpack.c.l.b16 %v5597
        %v5905 = vunpack.c.h.b16 %v5597
        %v5906 = vunpack.c.l.b16 %v5598
        %v5907 = vunpack.c.h.b16 %v5598
        %v5908 = vunpack.c.l.b16 %v5599
        %v5909 = vunpack.c.h.b16 %v5599
        %v5910 = vunpack.c.l.b16 %v5600
        %v5911 = vunpack.c.h.b16 %v5600
        %v5912 = vunpack.c.l.b16 %v5601
        %v5913 = vunpack.c.h.b16 %v5601
        %v5914 = vunpack.c.l.b16 %v5602
        %v5915 = vunpack.c.h.b16 %v5602
        %v5916 = vunpack.c.l.b16 %v5603
        %v5917 = vunpack.c.h.b16 %v5603
        %v5918 = vunpack.c.l.b16 %v5604
        %v5919 = vunpack.c.h.b16 %v5604
        %v5920 = vunpack.c.l.b16 %v5605
        %v5921 = vunpack.c.h.b16 %v5605
        %v5922 = vunpack.c.l.b16 %v5606
        %v5923 = vunpack.c.h.b16 %v5606
        %v5924 = vunpack.c.l.b16 %v5607
        %v5925 = vunpack.c.h.b16 %v5607
        %v5926 = vunpack.c.l.b16 %v5608
        %v5927 = vunpack.c.h.b16 %v5608
        %v5928 = vunpack.c.l.b16 %v5609
        %v5929 = vunpack.c.h.b16 %v5609
        %v5930 = vunpack.c.l.b16 %v5610
        %v5931 = vunpack.c.h.b16 %v5610
        %v5932 = vunpack.c.l.b16 %v5611
        %v5933 = vunpack.c.h.b16 %v5611
        %v5934 = vunpack.c.l.b16 %v5612
        %v5935 = vunpack.c.h.b16 %v5612
        %v5936 = vunpack.c.l.b16 %v5613
        %v5937 = vunpack.c.h.b16 %v5613
        %v5938 = vunpack.c.l.b16 %v5614
        %v5939 = vunpack.c.h.b16 %v5614
        %v5940 = vunpack.c.l.b16 %v5615
        %v5941 = vunpack.c.h.b16 %v5615
        %v5942 = vunpack.c.l.b16 %v5616
        %v5943 = vunpack.c.h.b16 %v5616
        %v5944 = vunpack.c.l.b16 %v5617
        %v5945 = vunpack.c.h.b16 %v5617
        %v5946 = vunpack.c.l.b16 %v5618
        %v5947 = vunpack.c.h.b16 %v5618
        %v5948 = vunpack.c.l.b16 %v5619
        %v5949 = vunpack.c.h.b16 %v5619
        %v5950 = vunpack.c.l.b16 %v5620
        %v5951 = vunpack.c.h.b16 %v5620
        %v5952 = vunpack.c.l.b16 %v5621
        %v5953 = vunpack.c.h.b16 %v5621
        %v5954 = vunpack.c.l.b16 %v5622
        %v5955 = vunpack.c.h.b16 %v5622
        %v5956 = vunpack.c.l.b16 %v5623
        %v5957 = vunpack.c.h.b16 %v5623
        %v5958 = vunpack.c.l.b16 %v5624
        %v5959 = vunpack.c.h.b16 %v5624
        %v5960 = vunpack.c.l.b16 %v5625
        %v5961 = vunpack.c.h.b16 %v5625
        %v5962 = vunpack.c.l.b16 %v5626
        %v5963 = vunpack.c.h.b16 %v5626
        %v5964 = vunpack.c.l.b16 %v5627
        %v5965 = vunpack.c.h.b16 %v5627
        %v5966 = vunpack.c.l.b16 %v5628
        %v5967 = vunpack.c.h.b16 %v5628
        %v5968 = vunpack.c.l.b16 %v5629
        %v5969 = vunpack.c.h.b16 %v5629
        %v5970 = vunpack.c.l.b16 %v5630
        %v5971 = vunpack.c.h.b16 %v5630
        %v5972 = vunpack.c.l.b16 %v5631
        %v5973 = vunpack.c.h.b16 %v5631
        %v5974 = vunpack.c.l.b16 %v5632
        %v5975 = vunpack.c.h.b16 %v5632
        %v5976 = vunpack.c.l.b16 %v5633
        %v5977 = vunpack.c.h.b16 %v5633
        %v5978 = vunpack.c.l.b16 %v5634
        %v5979 = vunpack.c.h.b16 %v5634
        %v5980 = vunpack.c.l.b16 %v5635
        %v5981 = vunpack.c.h.b16 %v5635
        %v5982 = vunpack.c.l.b16 %v5636
        %v5983 = vunpack.c.h.b16 %v5636
        %v5984 = vunpack.c.l.b16 %v5637
        %v5985 = vunpack.c.h.b16 %v5637
        %v5986 = vunpack.c.l.b16 %v5638
        %v5987 = vunpack.c.h.b16 %v5638
        %v5988 = vunpack.c.l.b16 %v5639
        %v5989 = vunpack.c.h.b16 %v5639
        %v5990 = vunpack.c.l.b16 %v5640
        %v5991 = vunpack.c.h.b16 %v5640
        %v5992 = vunpack.c.l.b16 %v5641
        %v5993 = vunpack.c.h.b16 %v5641
        %v5994 = vunpack.c.l.b16 %v5642
        %v5995 = vunpack.c.h.b16 %v5642
        %v5996 = vunpack.c.l.b16 %v5643
        %v5997 = vunpack.c.h.b16 %v5643
        %v5998 = vunpack.c.l.b16 %v5644
        %v5999 = vunpack.c.h.b16 %v5644
        %v6000 = vunpack.c.l.b16 %v5645
        %v6001 = vunpack.c.h.b16 %v5645
        %v6002 = vunpack.c.l.b16 %v5646
        %v6003 = vunpack.c.h.b16 %v5646
        %v6004 = vunpack.c.l.b16 %v5647
        %v6005 = vunpack.c.h.b16 %v5647
        %v6006 = vunpack.c.l.b16 %v5648
        %v6007 = vunpack.c.h.b16 %v5648
        %v6008 = vunpack.c.l.b16 %v5649
        %v6009 = vunpack.c.h.b16 %v5649
        %v6010 = vunpack.c.l.b16 %v5650
        %v6011 = vunpack.c.h.b16 %v5650
        %v6012 = vunpack.c.l.b16 %v5651
        %v6013 = vunpack.c.h.b16 %v5651
        %v6014 = vunpack.c.l.b16 %v5652
        %v6015 = vunpack.c.h.b16 %v5652
        %v6016 = vunpack.c.l.b16 %v5653
        %v6017 = vunpack.c.h.b16 %v5653
        %v6018 = vunpack.c.l.b16 %v5654
        %v6019 = vunpack.c.h.b16 %v5654
        %v6020 = vunpack.c.l.b16 %v5655
        %v6021 = vunpack.c.h.b16 %v5655
        %v6022 = vunpack.c.l.b16 %v5656
        %v6023 = vunpack.c.h.b16 %v5656
        %v6024 = vunpack.c.l.b16 %v5657
        %v6025 = vunpack.c.h.b16 %v5657
        %v6026 = vunpack.c.l.b16 %v5658
        %v6027 = vunpack.c.h.b16 %v5658
        %v6028 = vunpack.c.l.b16 %v5659
        %v6029 = vunpack.c.h.b16 %v5659
        %v6030 = vunpack.c.l.b16 %v5660
        %v6031 = vunpack.c.h.b16 %v5660
        %v6032 = vunpack.c.l.b16 %v5661
        %v6033 = vunpack.c.h.b16 %v5661
        %v6034 = vunpack.c.l.b16 %v5662
        %v6035 = vunpack.c.h.b16 %v5662
        %v6036 = vunpack.c.l.b16 %v5663
        %v6037 = vunpack.c.h.b16 %v5663
        %v6038 = vunpack.c.l.b16 %v5664
        %v6039 = vunpack.c.h.b16 %v5664
        %v6040 = vunpack.c.l.b16 %v5665
        %v6041 = vunpack.c.h.b16 %v5665
        %v6042 = vunpack.c.l.b16 %v5666
        %v6043 = vunpack.c.h.b16 %v5666
        %v6044 = vunpack.c.l.b16 %v5667
        %v6045 = vunpack.c.h.b16 %v5667
        %v6046 = vunpack.c.l.b16 %v5668
        %v6047 = vunpack.c.h.b16 %v5668
        %v6048 = vunpack.c.l.b16 %v5669
        %v6049 = vunpack.c.h.b16 %v5669
        %v6050 = vunpack.c.l.b16 %v5670
        %v6051 = vunpack.c.h.b16 %v5670
        %v6052 = vunpack.c.l.b16 %v5671
        %v6053 = vunpack.c.h.b16 %v5671
        %v6054 = vunpack.c.l.b16 %v5672
        %v6055 = vunpack.c.h.b16 %v5672
        %v6056 = vunpack.c.l.b16 %v5673
        %v6057 = vunpack.c.h.b16 %v5673
        %v6058 = vpack.c.b16 %v5802, %v5802
        %v6059 = vpack.c.b16 %v5803, %v5803
        %v6060 = vpack.c.b16 %v5804, %v5804
        %v6061 = vpack.c.b16 %v5805, %v5805
        %v6062 = vpack.c.b16 %v5806, %v5806
        %v6063 = vpack.c.b16 %v5807, %v5807
        %v6064 = vpack.c.b16 %v5808, %v5808
        %v6065 = vpack.c.b16 %v5809, %v5809
        %v6066 = vpack.c.b16 %v5810, %v5810
        %v6067 = vpack.c.b16 %v5811, %v5811
        %v6068 = vpack.c.b16 %v5812, %v5812
        %v6069 = vpack.c.b16 %v5813, %v5813
        %v6070 = vpack.c.b16 %v5814, %v5814
        %v6071 = vpack.c.b16 %v5815, %v5815
        %v6072 = vpack.c.b16 %v5816, %v5816
        %v6073 = vpack.c.b16 %v5817, %v5817
        %v6074 = vpack.c.b16 %v5818, %v5818
        %v6075 = vpack.c.b16 %v5819, %v5819
        %v6076 = vpack.c.b16 %v5820, %v5820
        %v6077 = vpack.c.b16 %v5821, %v5821
        %v6078 = vpack.c.b16 %v5822, %v5822
        %v6079 = vpack.c.b16 %v5823, %v5823
        %v6080 = vpack.c.b16 %v5824, %v5824
        %v6081 = vpack.c.b16 %v5825, %v5825
        %v6082 = vpack.c.b16 %v5826, %v5826
        %v6083 = vpack.c.b16 %v5827, %v5827
        %v6084 = vpack.c.b16 %v5828, %v5828
        %v6085 = vpack.c.b16 %v5829, %v5829
        %v6086 = vpack.c.b16 %v5830, %v5830
        %v6087 = vpack.c.b16 %v5831, %v5831
        %v6088 = vpack.c.b16 %v5832, %v5832
        %v6089 = vpack.c.b16 %v5833, %v5833
        %v6090 = vpack.c.b16 %v5834, %v5834
        %v6091 = vpack.c.b16 %v5835, %v5835
        %v6092 = vpack.c.b16 %v5836, %v5836
        %v6093 = vpack.c.b16 %v5837, %v5837
        %v6094 = vpack.c.b16 %v5838, %v5838
        %v6095 = vpack.c.b16 %v5839, %v5839
        %v6096 = vpack.c.b16 %v5840, %v5840
        %v6097 = vpack.c.b16 %v5841, %v5841
        %v6098 = vpack.c.b16 %v5842, %v5842
        %v6099 = vpack.c.b16 %v5843, %v5843
        %v6100 = vpack.c.b16 %v5844, %v5844
        %v6101 = vpack.c.b16 %v5845, %v5845
        %v6102 = vpack.c.b16 %v5846, %v5846
        %v6103 = vpack.c.b16 %v5847, %v5847
        %v6104 = vpack.c.b16 %v5848, %v5848
        %v6105 = vpack.c.b16 %v5849, %v5849
        %v6106 = vpack.c.b16 %v5850, %v5850
        %v6107 = vpack.c.b16 %v5851, %v5851
        %v6108 = vpack.c.b16 %v5852, %v5852
        %v6109 = vpack.c.b16 %v5853, %v5853
        %v6110 = vpack.c.b16 %v5854, %v5854
        %v6111 = vpack.c.b16 %v5855, %v5855
        %v6112 = vpack.c.b16 %v5856, %v5856
        %v6113 = vpack.c.b16 %v5857, %v5857
        %v6114 = vpack.c.b16 %v5858, %v5858
        %v6115 = vpack.c.b16 %v5859, %v5859
        %v6116 = vpack.c.b16 %v5860, %v5860
        %v6117 = vpack.c.b16 %v5861, %v5861
        %v6118 = vpack.c.b16 %v5862, %v5862
        %v6119 = vpack.c.b16 %v5863, %v5863
        %v6120 = vpack.c.b16 %v5864, %v5864
        %v6121 = vpack.c.b16 %v5865, %v5865
        %v6122 = vpack.c.b16 %v5866, %v5866
        %v6123 = vpack.c.b16 %v5867, %v5867
        %v6124 = vpack.c.b16 %v5868, %v5868
        %v6125 = vpack.c.b16 %v5869, %v5869
        %v6126 = vpack.c.b16 %v5870, %v5870
        %v6127 = vpack.c.b16 %v5871, %v5871
        %v6128 = vpack.c.b16 %v5872, %v5872
        %v6129 = vpack.c.b16 %v5873, %v5873
        %v6130 = vpack.c.b16 %v5874, %v5874
        %v6131 = vpack.c.b16 %v5875, %v5875
        %v6132 = vpack.c.b16 %v5876, %v5876
        %v6133 = vpack.c.b16 %v5877, %v5877
        %v6134 = vpack.c.b16 %v5878, %v5878
        %v6135 = vpack.c.b16 %v5879, %v5879
        %v6136 = vpack.c.b16 %v5880, %v5880
        %v6137 = vpack.c.b16 %v5881, %v5881
        %v6138 = vpack.c.b16 %v5882, %v5882
        %v6139 = vpack.c.b16 %v5883, %v5883
        %v6140 = vpack.c.b16 %v5884, %v5884
        %v6141 = vpack.c.b16 %v5885, %v5885
        %v6142 = vpack.c.b16 %v5886, %v5886
        %v6143 = vpack.c.b16 %v5887, %v5887
        %v6144 = vpack.c.b16 %v5888, %v5888
        %v6145 = vpack.c.b16 %v5889, %v5889
        %v6146 = vpack.c.b16 %v5890, %v5890
        %v6147 = vpack.c.b16 %v5891, %v5891
        %v6148 = vpack.c.b16 %v5892, %v5892
        %v6149 = vpack.c.b16 %v5893, %v5893
        %v6150 = vpack.c.b16 %v5894, %v5894
        %v6151 = vpack.c.b16 %v5895, %v5895
        %v6152 = vpack.c.b16 %v5896, %v5896
        %v6153 = vpack.c.b16 %v5897, %v5897
        %v6154 = vpack.c.b16 %v5898, %v5898
        %v6155 = vpack.c.b16 %v5899, %v5899
        %v6156 = vpack.c.b16 %v5900, %v5900
        %v6157 = vpack.c.b16 %v5901, %v5901
        %v6158 = vpack.c.b16 %v5902, %v5902
        %v6159 = vpack.c.b16 %v5903, %v5903
        %v6160 = vpack.c.b16 %v5904, %v5904
        %v6161 = vpack.c.b16 %v5905, %v5905
        %v6162 = vpack.c.b16 %v5906, %v5906
        %v6163 = vpack.c.b16 %v5907, %v5907
        %v6164 = vpack.c.b16 %v5908, %v5908
        %v6165 = vpack.c.b16 %v5909, %v5909
        %v6166 = vpack.c.b16 %v5910, %v5910
        %v6167 = vpack.c.b16 %v5911, %v5911
        %v6168 = vpack.c.b16 %v5912, %v5912
        %v6169 = vpack.c.b16 %v5913, %v5913
        %v6170 = vpack.c.b16 %v5914, %v5914
        %v6171 = vpack.c.b16 %v5915, %v5915
        %v6172 = vpack.c.b16 %v5916, %v5916
        %v6173 = vpack.c.b16 %v5917, %v5917
        %v6174 = vpack.c.b16 %v5918, %v5918
        %v6175 = vpack.c.b16 %v5919, %v5919
        %v6176 = vpack.c.b16 %v5920, %v5920
        %v6177 = vpack.c.b16 %v5921, %v5921
        %v6178 = vpack.c.b16 %v5922, %v5922
        %v6179 = vpack.c.b16 %v5923, %v5923
        %v6180 = vpack.c.b16 %v5924, %v5924
        %v6181 = vpack.c.b16 %v5925, %v5925
        %v6182 = vpack.c.b16 %v5926, %v5926
        %v6183 = vpack.c.b16 %v5927, %v5927
        %v6184 = vpack.c.b16 %v5928, %v5928
        %v6185 = vpack.c.b16 %v5929, %v5929
        %v6186 = vpack.c.b16 %v5930, %v5930
        %v6187 = vpack.c.b16 %v5931, %v5931
        %v6188 = vpack.c.b16 %v5932, %v5932
        %v6189 = vpack.c.b16 %v5933, %v5933
        %v6190 = vpack.c.b16 %v5934, %v5934
        %v6191 = vpack.c.b16 %v5935, %v5935
        %v6192 = vpack.c.b16 %v5936, %v5936
        %v6193 = vpack.c.b16 %v5937, %v5937
        %v6194 = vpack.c.b16 %v5938, %v5938
        %v6195 = vpack.c.b16 %v5939, %v5939
        %v6196 = vpack.c.b16 %v5940, %v5940
        %v6197 = vpack.c.b16 %v5941, %v5941
        %v6198 = vpack.c.b16 %v5942, %v5942
        %v6199 = vpack.c.b16 %v5943, %v5943
        %v6200 = vpack.c.b16 %v5944, %v5944
        %v6201 = vpack.c.b16 %v5945, %v5945
        %v6202 = vpack.c.b16 %v5946, %v5946
        %v6203 = vpack.c.b16 %v5947, %v5947
        %v6204 = vpack.c.b16 %v5948, %v5948
        %v6205 = vpack.c.b16 %v5949, %v5949
        %v6206 = vpack.c.b16 %v5950, %v5950
        %v6207 = vpack.c.b16 %v5951, %v5951
        %v6208 = vpack.c.b16 %v5952, %v5952
        %v6209 = vpack.c.b16 %v5953, %v5953
        %v6210 = vpack.c.b16 %v5954, %v5954
        %v6211 = vpack.c.b16 %v5955, %v5955
        %v6212 = vpack.c.b16 %v5956, %v5956
        %v6213 = vpack.c.b16 %v5957, %v5957
        %v6214 = vpack.c.b16 %v5958, %v5958
        %v6215 = vpack.c.b16 %v5959, %v5959
        %v6216 = vpack.c.b16 %v5960, %v5960
        %v6217 = vpack.c.b16 %v5961, %v5961
        %v6218 = vpack.c.b16 %v5962, %v5962
        %v6219 = vpack.c.b16 %v5963, %v5963
        %v6220 = vpack.c.b16 %v5964, %v5964
        %v6221 = vpack.c.b16 %v5965, %v5965
        %v6222 = vpack.c.b16 %v5966, %v5966
        %v6223 = vpack.c.b16 %v5967, %v5967
        %v6224 = vpack.c.b16 %v5968, %v5968
        %v6225 = vpack.c.b16 %v5969, %v5969
        %v6226 = vpack.c.b16 %v5970, %v5970
        %v6227 = vpack.c.b16 %v5971, %v5971
        %v6228 = vpack.c.b16 %v5972, %v5972
        %v6229 = vpack.c.b16 %v5973, %v5973
        %v6230 = vpack.c.b16 %v5974, %v5974
        %v6231 = vpack.c.b16 %v5975, %v5975
        %v6232 = vpack.c.b16 %v5976, %v5976
        %v6233 = vpack.c.b16 %v5977, %v5977
        %v6234 = vpack.c.b16 %v5978, %v5978
        %v6235 = vpack.c.b16 %v5979, %v5979
        %v6236 = vpack.c.b16 %v5980, %v5980
        %v6237 = vpack.c.b16 %v5981, %v5981
        %v6238 = vpack.c.b16 %v5982, %v5982
        %v6239 = vpack.c.b16 %v5983, %v5983
        %v6240 = vpack.c.b16 %v5984, %v5984
        %v6241 = vpack.c.b16 %v5985, %v5985
        %v6242 = vpack.c.b16 %v5986, %v5986
        %v6243 = vpack.c.b16 %v5987, %v5987
        %v6244 = vpack.c.b16 %v5988, %v5988
        %v6245 = vpack.c.b16 %v5989, %v5989
        %v6246 = vpack.c.b16 %v5990, %v5990
        %v6247 = vpack.c.b16 %v5991, %v5991
        %v6248 = vpack.c.b16 %v5992, %v5992
        %v6249 = vpack.c.b16 %v5993, %v5993
        %v6250 = vpack.c.b16 %v5994, %v5994
        %v6251 = vpack.c.b16 %v5995, %v5995
        %v6252 = vpack.c.b16 %v5996, %v5996
        %v6253 = vpack.c.b16 %v5997, %v5997
        %v6254 = vpack.c.b16 %v5998, %v5998
        %v6255 = vpack.c.b16 %v5999, %v5999
        %v6256 = vpack.c.b16 %v6000, %v6000
        %v6257 = vpack.c.b16 %v6001, %v6001
        %v6258 = vpack.c.b16 %v6002, %v6002
        %v6259 = vpack.c.b16 %v6003, %v6003
        %v6260 = vpack.c.b16 %v6004, %v6004
        %v6261 = vpack.c.b16 %v6005, %v6005
        %v6262 = vpack.c.b16 %v6006, %v6006
        %v6263 = vpack.c.b16 %v6007, %v6007
        %v6264 = vpack.c.b16 %v6008, %v6008
        %v6265 = vpack.c.b16 %v6009, %v6009
        %v6266 = vpack.c.b16 %v6010, %v6010
        %v6267 = vpack.c.b16 %v6011, %v6011
        %v6268 = vpack.c.b16 %v6012, %v6012
        %v6269 = vpack.c.b16 %v6013, %v6013
        %v6270 = vpack.c.b16 %v6014, %v6014
        %v6271 = vpack.c.b16 %v6015, %v6015
        %v6272 = vpack.c.b16 %v6016, %v6016
        %v6273 = vpack.c.b16 %v6017, %v6017
        %v6274 = vpack.c.b16 %v6018, %v6018
        %v6275 = vpack.c.b16 %v6019, %v6019
        %v6276 = vpack.c.b16 %v6020, %v6020
        %v6277 = vpack.c.b16 %v6021, %v6021
        %v6278 = vpack.c.b16 %v6022, %v6022
        %v6279 = vpack.c.b16 %v6023, %v6023
        %v6280 = vpack.c.b16 %v6024, %v6024
        %v6281 = vpack.c.b16 %v6025, %v6025
        %v6282 = vpack.c.b16 %v6026, %v6026
        %v6283 = vpack.c.b16 %v6027, %v6027
        %v6284 = vpack.c.b16 %v6028, %v6028
        %v6285 = vpack.c.b16 %v6029, %v6029
        %v6286 = vpack.c.b16 %v6030, %v6030
        %v6287 = vpack.c.b16 %v6031, %v6031
        %v6288 = vpack.c.b16 %v6032, %v6032
        %v6289 = vpack.c.b16 %v6033, %v6033
        %v6290 = vpack.c.b16 %v6034, %v6034
        %v6291 = vpack.c.b16 %v6035, %v6035
        %v6292 = vpack.c.b16 %v6036, %v6036
        %v6293 = vpack.c.b16 %v6037, %v6037
        %v6294 = vpack.c.b16 %v6038, %v6038
        %v6295 = vpack.c.b16 %v6039, %v6039
        %v6296 = vpack.c.b16 %v6040, %v6040
        %v6297 = vpack.c.b16 %v6041, %v6041
        %v6298 = vpack.c.b16 %v6042, %v6042
        %v6299 = vpack.c.b16 %v6043, %v6043
        %v6300 = vpack.c.b16 %v6044, %v6044
        %v6301 = vpack.c.b16 %v6045, %v6045
        %v6302 = vpack.c.b16 %v6046, %v6046
        %v6303 = vpack.c.b16 %v6047, %v6047
        %v6304 = vpack.c.b16 %v6048, %v6048
        %v6305 = vpack.c.b16 %v6049, %v6049
        %v6306 = vpack.c.b16 %v6050, %v6050
        %v6307 = vpack.c.b16 %v6051, %v6051
        %v6308 = vpack.c.b16 %v6052, %v6052
        %v6309 = vpack.c.b16 %v6053, %v6053
        %v6310 = vpack.c.b16 %v6054, %v6054
        %v6311 = vpack.c.b16 %v6055, %v6055
        %v6312 = vpack.c.b16 %v6056, %v6056
        %v6313 = vpack.c.b16 %v6057, %v6057
        %6570 = vst [vmem:[%s4] sm:$0xf] %v6058
        %6571 = vst [vmem:[%s4 + $0x4] sm:$0xf] %v6059
        %6572 = vst [vmem:[%s4 + $0x8] sm:$0xf] %v6060
        %6573 = vst [vmem:[%s4 + $0xc] sm:$0xf] %v6061
        %6574 = vst [vmem:[%s4 + $0x10] sm:$0xf] %v6062
        %6575 = vst [vmem:[%s4 + $0x14] sm:$0xf] %v6063
        %6576 = vst [vmem:[%s4 + $0x18] sm:$0xf] %v6064
        %6577 = vst [vmem:[%s4 + $0x1c] sm:$0xf] %v6065
        %6578 = vst [vmem:[%s4 + $0x20] sm:$0xf] %v6066
        %6579 = vst [vmem:[%s4 + $0x24] sm:$0xf] %v6067
        %6580 = vst [vmem:[%s4 + $0x28] sm:$0xf] %v6068
        %6581 = vst [vmem:[%s4 + $0x2c] sm:$0xf] %v6069
        %6582 = vst [vmem:[%s4 + $0x30] sm:$0xf] %v6070
        %6583 = vst [vmem:[%s4 + $0x34] sm:$0xf] %v6071
        %6584 = vst [vmem:[%s4 + $0x38] sm:$0xf] %v6072
        %6585 = vst [vmem:[%s4 + $0x3c] sm:$0xf] %v6073
        %6586 = vst [vmem:[%s4 + $0x40] sm:$0xf] %v6074
        %6587 = vst [vmem:[%s4 + $0x44] sm:$0xf] %v6075
        %6588 = vst [vmem:[%s4 + $0x48] sm:$0xf] %v6076
        %6589 = vst [vmem:[%s4 + $0x4c] sm:$0xf] %v6077
        %6590 = vst [vmem:[%s4 + $0x50] sm:$0xf] %v6078
        %6591 = vst [vmem:[%s4 + $0x54] sm:$0xf] %v6079
        %6592 = vst [vmem:[%s4 + $0x58] sm:$0xf] %v6080
        %6593 = vst [vmem:[%s4 + $0x5c] sm:$0xf] %v6081
        %6594 = vst [vmem:[%s4 + $0x60] sm:$0xf] %v6082
        %6595 = vst [vmem:[%s4 + $0x64] sm:$0xf] %v6083
        %6596 = vst [vmem:[%s4 + $0x68] sm:$0xf] %v6084
        %6597 = vst [vmem:[%s4 + $0x6c] sm:$0xf] %v6085
        %6598 = vst [vmem:[%s4 + $0x70] sm:$0xf] %v6086
        %6599 = vst [vmem:[%s4 + $0x74] sm:$0xf] %v6087
        %6600 = vst [vmem:[%s4 + $0x78] sm:$0xf] %v6088
        %6601 = vst [vmem:[%s4 + $0x7c] sm:$0xf] %v6089
        %6602 = vst [vmem:[%s4 + $0x80] sm:$0xf] %v6090
        %6603 = vst [vmem:[%s4 + $0x84] sm:$0xf] %v6091
        %6604 = vst [vmem:[%s4 + $0x88] sm:$0xf] %v6092
        %6605 = vst [vmem:[%s4 + $0x8c] sm:$0xf] %v6093
        %6606 = vst [vmem:[%s4 + $0x90] sm:$0xf] %v6094
        %6607 = vst [vmem:[%s4 + $0x94] sm:$0xf] %v6095
        %6608 = vst [vmem:[%s4 + $0x98] sm:$0xf] %v6096
        %6609 = vst [vmem:[%s4 + $0x9c] sm:$0xf] %v6097
        %6610 = vst [vmem:[%s4 + $0xa0] sm:$0xf] %v6098
        %6611 = vst [vmem:[%s4 + $0xa4] sm:$0xf] %v6099
        %6612 = vst [vmem:[%s4 + $0xa8] sm:$0xf] %v6100
        %6613 = vst [vmem:[%s4 + $0xac] sm:$0xf] %v6101
        %6614 = vst [vmem:[%s4 + $0xb0] sm:$0xf] %v6102
        %6615 = vst [vmem:[%s4 + $0xb4] sm:$0xf] %v6103
        %6616 = vst [vmem:[%s4 + $0xb8] sm:$0xf] %v6104
        %6617 = vst [vmem:[%s4 + $0xbc] sm:$0xf] %v6105
        %6618 = vst [vmem:[%s4 + $0xc0] sm:$0xf] %v6106
        %6619 = vst [vmem:[%s4 + $0xc4] sm:$0xf] %v6107
        %6620 = vst [vmem:[%s4 + $0xc8] sm:$0xf] %v6108
        %6621 = vst [vmem:[%s4 + $0xcc] sm:$0xf] %v6109
        %6622 = vst [vmem:[%s4 + $0xd0] sm:$0xf] %v6110
        %6623 = vst [vmem:[%s4 + $0xd4] sm:$0xf] %v6111
        %6624 = vst [vmem:[%s4 + $0xd8] sm:$0xf] %v6112
        %6625 = vst [vmem:[%s4 + $0xdc] sm:$0xf] %v6113
        %6626 = vst [vmem:[%s4 + $0xe0] sm:$0xf] %v6114
        %6627 = vst [vmem:[%s4 + $0xe4] sm:$0xf] %v6115
        %6628 = vst [vmem:[%s4 + $0xe8] sm:$0xf] %v6116
        %6629 = vst [vmem:[%s4 + $0xec] sm:$0xf] %v6117
        %6630 = vst [vmem:[%s4 + $0xf0] sm:$0xf] %v6118
        %6631 = vst [vmem:[%s4 + $0xf4] sm:$0xf] %v6119
        %6632 = vst [vmem:[%s4 + $0xf8] sm:$0xf] %v6120
        %6633 = vst [vmem:[%s4 + $0xfc] sm:$0xf] %v6121
        %6634 = vst [vmem:[%s4 + $0x100] sm:$0xf] %v6122
        %6635 = vst [vmem:[%s4 + $0x104] sm:$0xf] %v6123
        %6636 = vst [vmem:[%s4 + $0x108] sm:$0xf] %v6124
        %6637 = vst [vmem:[%s4 + $0x10c] sm:$0xf] %v6125
        %6638 = vst [vmem:[%s4 + $0x110] sm:$0xf] %v6126
        %6639 = vst [vmem:[%s4 + $0x114] sm:$0xf] %v6127
        %6640 = vst [vmem:[%s4 + $0x118] sm:$0xf] %v6128
        %6641 = vst [vmem:[%s4 + $0x11c] sm:$0xf] %v6129
        %6642 = vst [vmem:[%s4 + $0x120] sm:$0xf] %v6130
        %6643 = vst [vmem:[%s4 + $0x124] sm:$0xf] %v6131
        %6644 = vst [vmem:[%s4 + $0x128] sm:$0xf] %v6132
        %6645 = vst [vmem:[%s4 + $0x12c] sm:$0xf] %v6133
        %6646 = vst [vmem:[%s4 + $0x130] sm:$0xf] %v6134
        %6647 = vst [vmem:[%s4 + $0x134] sm:$0xf] %v6135
        %6648 = vst [vmem:[%s4 + $0x138] sm:$0xf] %v6136
        %6649 = vst [vmem:[%s4 + $0x13c] sm:$0xf] %v6137
        %6650 = vst [vmem:[%s4 + $0x140] sm:$0xf] %v6138
        %6651 = vst [vmem:[%s4 + $0x144] sm:$0xf] %v6139
        %6652 = vst [vmem:[%s4 + $0x148] sm:$0xf] %v6140
        %6653 = vst [vmem:[%s4 + $0x14c] sm:$0xf] %v6141
        %6654 = vst [vmem:[%s4 + $0x150] sm:$0xf] %v6142
        %6655 = vst [vmem:[%s4 + $0x154] sm:$0xf] %v6143
        %6656 = vst [vmem:[%s4 + $0x158] sm:$0xf] %v6144
        %6657 = vst [vmem:[%s4 + $0x15c] sm:$0xf] %v6145
        %6658 = vst [vmem:[%s4 + $0x160] sm:$0xf] %v6146
        %6659 = vst [vmem:[%s4 + $0x164] sm:$0xf] %v6147
        %6660 = vst [vmem:[%s4 + $0x168] sm:$0xf] %v6148
        %6661 = vst [vmem:[%s4 + $0x16c] sm:$0xf] %v6149
        %6662 = vst [vmem:[%s4 + $0x170] sm:$0xf] %v6150
        %6663 = vst [vmem:[%s4 + $0x174] sm:$0xf] %v6151
        %6664 = vst [vmem:[%s4 + $0x178] sm:$0xf] %v6152
        %6665 = vst [vmem:[%s4 + $0x17c] sm:$0xf] %v6153
        %6666 = vst [vmem:[%s4 + $0x180] sm:$0xf] %v6154
        %6667 = vst [vmem:[%s4 + $0x184] sm:$0xf] %v6155
        %6668 = vst [vmem:[%s4 + $0x188] sm:$0xf] %v6156
        %6669 = vst [vmem:[%s4 + $0x18c] sm:$0xf] %v6157
        %6670 = vst [vmem:[%s4 + $0x190] sm:$0xf] %v6158
        %6671 = vst [vmem:[%s4 + $0x194] sm:$0xf] %v6159
        %6672 = vst [vmem:[%s4 + $0x198] sm:$0xf] %v6160
        %6673 = vst [vmem:[%s4 + $0x19c] sm:$0xf] %v6161
        %6674 = vst [vmem:[%s4 + $0x1a0] sm:$0xf] %v6162
        %6675 = vst [vmem:[%s4 + $0x1a4] sm:$0xf] %v6163
        %6676 = vst [vmem:[%s4 + $0x1a8] sm:$0xf] %v6164
        %6677 = vst [vmem:[%s4 + $0x1ac] sm:$0xf] %v6165
        %6678 = vst [vmem:[%s4 + $0x1b0] sm:$0xf] %v6166
        %6679 = vst [vmem:[%s4 + $0x1b4] sm:$0xf] %v6167
        %6680 = vst [vmem:[%s4 + $0x1b8] sm:$0xf] %v6168
        %6681 = vst [vmem:[%s4 + $0x1bc] sm:$0xf] %v6169
        %6682 = vst [vmem:[%s4 + $0x1c0] sm:$0xf] %v6170
        %6683 = vst [vmem:[%s4 + $0x1c4] sm:$0xf] %v6171
        %6684 = vst [vmem:[%s4 + $0x1c8] sm:$0xf] %v6172
        %6685 = vst [vmem:[%s4 + $0x1cc] sm:$0xf] %v6173
        %6686 = vst [vmem:[%s4 + $0x1d0] sm:$0xf] %v6174
        %6687 = vst [vmem:[%s4 + $0x1d4] sm:$0xf] %v6175
        %6688 = vst [vmem:[%s4 + $0x1d8] sm:$0xf] %v6176
        %6689 = vst [vmem:[%s4 + $0x1dc] sm:$0xf] %v6177
        %6690 = vst [vmem:[%s4 + $0x1e0] sm:$0xf] %v6178
        %6691 = vst [vmem:[%s4 + $0x1e4] sm:$0xf] %v6179
        %6692 = vst [vmem:[%s4 + $0x1e8] sm:$0xf] %v6180
        %6693 = vst [vmem:[%s4 + $0x1ec] sm:$0xf] %v6181
        %6694 = vst [vmem:[%s4 + $0x1f0] sm:$0xf] %v6182
        %6695 = vst [vmem:[%s4 + $0x1f4] sm:$0xf] %v6183
        %6696 = vst [vmem:[%s4 + $0x1f8] sm:$0xf] %v6184
        %6697 = vst [vmem:[%s4 + $0x1fc] sm:$0xf] %v6185
        %6698 = vst [vmem:[%s4 + $0x200] sm:$0xf] %v6186
        %6699 = vst [vmem:[%s4 + $0x204] sm:$0xf] %v6187
        %6700 = vst [vmem:[%s4 + $0x208] sm:$0xf] %v6188
        %6701 = vst [vmem:[%s4 + $0x20c] sm:$0xf] %v6189
        %6702 = vst [vmem:[%s4 + $0x210] sm:$0xf] %v6190
        %6703 = vst [vmem:[%s4 + $0x214] sm:$0xf] %v6191
        %6704 = vst [vmem:[%s4 + $0x218] sm:$0xf] %v6192
        %6705 = vst [vmem:[%s4 + $0x21c] sm:$0xf] %v6193
        %6706 = vst [vmem:[%s4 + $0x220] sm:$0xf] %v6194
        %6707 = vst [vmem:[%s4 + $0x224] sm:$0xf] %v6195
        %6708 = vst [vmem:[%s4 + $0x228] sm:$0xf] %v6196
        %6709 = vst [vmem:[%s4 + $0x22c] sm:$0xf] %v6197
        %6710 = vst [vmem:[%s4 + $0x230] sm:$0xf] %v6198
        %6711 = vst [vmem:[%s4 + $0x234] sm:$0xf] %v6199
        %6712 = vst [vmem:[%s4 + $0x238] sm:$0xf] %v6200
        %6713 = vst [vmem:[%s4 + $0x23c] sm:$0xf] %v6201
        %6714 = vst [vmem:[%s4 + $0x240] sm:$0xf] %v6202
        %6715 = vst [vmem:[%s4 + $0x244] sm:$0xf] %v6203
        %6716 = vst [vmem:[%s4 + $0x248] sm:$0xf] %v6204
        %6717 = vst [vmem:[%s4 + $0x24c] sm:$0xf] %v6205
        %6718 = vst [vmem:[%s4 + $0x250] sm:$0xf] %v6206
        %6719 = vst [vmem:[%s4 + $0x254] sm:$0xf] %v6207
        %6720 = vst [vmem:[%s4 + $0x258] sm:$0xf] %v6208
        %6721 = vst [vmem:[%s4 + $0x25c] sm:$0xf] %v6209
        %6722 = vst [vmem:[%s4 + $0x260] sm:$0xf] %v6210
        %6723 = vst [vmem:[%s4 + $0x264] sm:$0xf] %v6211
        %6724 = vst [vmem:[%s4 + $0x268] sm:$0xf] %v6212
        %6725 = vst [vmem:[%s4 + $0x26c] sm:$0xf] %v6213
        %6726 = vst [vmem:[%s4 + $0x270] sm:$0xf] %v6214
        %6727 = vst [vmem:[%s4 + $0x274] sm:$0xf] %v6215
        %6728 = vst [vmem:[%s4 + $0x278] sm:$0xf] %v6216
        %6729 = vst [vmem:[%s4 + $0x27c] sm:$0xf] %v6217
        %6730 = vst [vmem:[%s4 + $0x280] sm:$0xf] %v6218
        %6731 = vst [vmem:[%s4 + $0x284] sm:$0xf] %v6219
        %6732 = vst [vmem:[%s4 + $0x288] sm:$0xf] %v6220
        %6733 = vst [vmem:[%s4 + $0x28c] sm:$0xf] %v6221
        %6734 = vst [vmem:[%s4 + $0x290] sm:$0xf] %v6222
        %6735 = vst [vmem:[%s4 + $0x294] sm:$0xf] %v6223
        %6736 = vst [vmem:[%s4 + $0x298] sm:$0xf] %v6224
        %6737 = vst [vmem:[%s4 + $0x29c] sm:$0xf] %v6225
        %6738 = vst [vmem:[%s4 + $0x2a0] sm:$0xf] %v6226
        %6739 = vst [vmem:[%s4 + $0x2a4] sm:$0xf] %v6227
        %6740 = vst [vmem:[%s4 + $0x2a8] sm:$0xf] %v6228
        %6741 = vst [vmem:[%s4 + $0x2ac] sm:$0xf] %v6229
        %6742 = vst [vmem:[%s4 + $0x2b0] sm:$0xf] %v6230
        %6743 = vst [vmem:[%s4 + $0x2b4] sm:$0xf] %v6231
        %6744 = vst [vmem:[%s4 + $0x2b8] sm:$0xf] %v6232
        %6745 = vst [vmem:[%s4 + $0x2bc] sm:$0xf] %v6233
        %6746 = vst [vmem:[%s4 + $0x2c0] sm:$0xf] %v6234
        %6747 = vst [vmem:[%s4 + $0x2c4] sm:$0xf] %v6235
        %6748 = vst [vmem:[%s4 + $0x2c8] sm:$0xf] %v6236
        %6749 = vst [vmem:[%s4 + $0x2cc] sm:$0xf] %v6237
        %6750 = vst [vmem:[%s4 + $0x2d0] sm:$0xf] %v6238
        %6751 = vst [vmem:[%s4 + $0x2d4] sm:$0xf] %v6239
        %6752 = vst [vmem:[%s4 + $0x2d8] sm:$0xf] %v6240
        %6753 = vst [vmem:[%s4 + $0x2dc] sm:$0xf] %v6241
        %6754 = vst [vmem:[%s4 + $0x2e0] sm:$0xf] %v6242
        %6755 = vst [vmem:[%s4 + $0x2e4] sm:$0xf] %v6243
        %6756 = vst [vmem:[%s4 + $0x2e8] sm:$0xf] %v6244
        %6757 = vst [vmem:[%s4 + $0x2ec] sm:$0xf] %v6245
        %6758 = vst [vmem:[%s4 + $0x2f0] sm:$0xf] %v6246
        %6759 = vst [vmem:[%s4 + $0x2f4] sm:$0xf] %v6247
        %6760 = vst [vmem:[%s4 + $0x2f8] sm:$0xf] %v6248
        %6761 = vst [vmem:[%s4 + $0x2fc] sm:$0xf] %v6249
        %6762 = vst [vmem:[%s4 + $0x300] sm:$0xf] %v6250
        %6763 = vst [vmem:[%s4 + $0x304] sm:$0xf] %v6251
        %6764 = vst [vmem:[%s4 + $0x308] sm:$0xf] %v6252
        %6765 = vst [vmem:[%s4 + $0x30c] sm:$0xf] %v6253
        %6766 = vst [vmem:[%s4 + $0x310] sm:$0xf] %v6254
        %6767 = vst [vmem:[%s4 + $0x314] sm:$0xf] %v6255
        %6768 = vst [vmem:[%s4 + $0x318] sm:$0xf] %v6256
        %6769 = vst [vmem:[%s4 + $0x31c] sm:$0xf] %v6257
        %6770 = vst [vmem:[%s4 + $0x320] sm:$0xf] %v6258
        %6771 = vst [vmem:[%s4 + $0x324] sm:$0xf] %v6259
        %6772 = vst [vmem:[%s4 + $0x328] sm:$0xf] %v6260
        %6773 = vst [vmem:[%s4 + $0x32c] sm:$0xf] %v6261
        %6774 = vst [vmem:[%s4 + $0x330] sm:$0xf] %v6262
        %6775 = vst [vmem:[%s4 + $0x334] sm:$0xf] %v6263
        %6776 = vst [vmem:[%s4 + $0x338] sm:$0xf] %v6264
        %6777 = vst [vmem:[%s4 + $0x33c] sm:$0xf] %v6265
        %6778 = vst [vmem:[%s4 + $0x340] sm:$0xf] %v6266
        %6779 = vst [vmem:[%s4 + $0x344] sm:$0xf] %v6267
        %6780 = vst [vmem:[%s4 + $0x348] sm:$0xf] %v6268
        %6781 = vst [vmem:[%s4 + $0x34c] sm:$0xf] %v6269
        %6782 = vst [vmem:[%s4 + $0x350] sm:$0xf] %v6270
        %6783 = vst [vmem:[%s4 + $0x354] sm:$0xf] %v6271
        %6784 = vst [vmem:[%s4 + $0x358] sm:$0xf] %v6272
        %6785 = vst [vmem:[%s4 + $0x35c] sm:$0xf] %v6273
        %6786 = vst [vmem:[%s4 + $0x360] sm:$0xf] %v6274
        %6787 = vst [vmem:[%s4 + $0x364] sm:$0xf] %v6275
        %6788 = vst [vmem:[%s4 + $0x368] sm:$0xf] %v6276
        %6789 = vst [vmem:[%s4 + $0x36c] sm:$0xf] %v6277
        %6790 = vst [vmem:[%s4 + $0x370] sm:$0xf] %v6278
        %6791 = vst [vmem:[%s4 + $0x374] sm:$0xf] %v6279
        %6792 = vst [vmem:[%s4 + $0x378] sm:$0xf] %v6280
        %6793 = vst [vmem:[%s4 + $0x37c] sm:$0xf] %v6281
        %6794 = vst [vmem:[%s4 + $0x380] sm:$0xf] %v6282
        %6795 = vst [vmem:[%s4 + $0x384] sm:$0xf] %v6283
        %6796 = vst [vmem:[%s4 + $0x388] sm:$0xf] %v6284
        %6797 = vst [vmem:[%s4 + $0x38c] sm:$0xf] %v6285
        %6798 = vst [vmem:[%s4 + $0x390] sm:$0xf] %v6286
        %6799 = vst [vmem:[%s4 + $0x394] sm:$0xf] %v6287
        %6800 = vst [vmem:[%s4 + $0x398] sm:$0xf] %v6288
        %6801 = vst [vmem:[%s4 + $0x39c] sm:$0xf] %v6289
        %6802 = vst [vmem:[%s4 + $0x3a0] sm:$0xf] %v6290
        %6803 = vst [vmem:[%s4 + $0x3a4] sm:$0xf] %v6291
        %6804 = vst [vmem:[%s4 + $0x3a8] sm:$0xf] %v6292
        %6805 = vst [vmem:[%s4 + $0x3ac] sm:$0xf] %v6293
        %6806 = vst [vmem:[%s4 + $0x3b0] sm:$0xf] %v6294
        %6807 = vst [vmem:[%s4 + $0x3b4] sm:$0xf] %v6295
        %6808 = vst [vmem:[%s4 + $0x3b8] sm:$0xf] %v6296
        %6809 = vst [vmem:[%s4 + $0x3bc] sm:$0xf] %v6297
        %6810 = vst [vmem:[%s4 + $0x3c0] sm:$0xf] %v6298
        %6811 = vst [vmem:[%s4 + $0x3c4] sm:$0xf] %v6299
        %6812 = vst [vmem:[%s4 + $0x3c8] sm:$0xf] %v6300
        %6813 = vst [vmem:[%s4 + $0x3cc] sm:$0xf] %v6301
        %6814 = vst [vmem:[%s4 + $0x3d0] sm:$0xf] %v6302
        %6815 = vst [vmem:[%s4 + $0x3d4] sm:$0xf] %v6303
        %6816 = vst [vmem:[%s4 + $0x3d8] sm:$0xf] %v6304
        %6817 = vst [vmem:[%s4 + $0x3dc] sm:$0xf] %v6305
        %6818 = vst [vmem:[%s4 + $0x3e0] sm:$0xf] %v6306
        %6819 = vst [vmem:[%s4 + $0x3e4] sm:$0xf] %v6307
        %6820 = vst [vmem:[%s4 + $0x3e8] sm:$0xf] %v6308
        %6821 = vst [vmem:[%s4 + $0x3ec] sm:$0xf] %v6309
        %6822 = vst [vmem:[%s4 + $0x3f0] sm:$0xf] %v6310
        %6823 = vst [vmem:[%s4 + $0x3f4] sm:$0xf] %v6311
        %6824 = vst [vmem:[%s4 + $0x3f8] sm:$0xf] %v6312
        %6825 = vst [vmem:[%s4 + $0x3fc] sm:$0xf] %v6313
      $region44: #{_lambda_.5} parent=35 // pred_fallthru
        _
      // Predicated region
      $region45: #{_lambda_.5} parent=35 // pred_check
        %p6826 = pneg %p117
      $region46: #{_lambda_.5} parent=35 // pred_check_branch
        %6828 = sbr.rel (%p6826) target = $region48
      $region47: #{_lambda_.5} parent=35 // pred_region
        _
      $region48: #{_lambda_.5} parent=35 // pred_fallthru
        _
      // Predicated region
      $region49: #{_lambda_.5} parent=35 // pred_check
        %p6829 = pneg %p117
      $region50: #{_lambda_.5} parent=35 // pred_check_branch
        %6831 = sbr.rel (%p6829) target = $region52
      $region51: #{_lambda_.5} parent=35 // pred_region
        _
      $region52: #{_lambda_.5} parent=35 // pred_fallthru
        _
    $region36: #{_lambda_.5} parent=5 // pred_fallthru
      _
    %p6832 = scmp.le.s32.totalorder 2, %s10
    // Predicated region
    $region53: #{_lambda_.5} parent=5 // pred_check
      %p6833 = pneg %p6832
    $region54: #{_lambda_.5} parent=5 // pred_check_branch
      %6835 = sbr.rel (%p6833) target = $region56
    $region55: #{_lambda_.5} parent=5 // pred_region
      %s6836 = ssub.s32 %s10, 2
    $region56: #{_lambda_.5} parent=5 // pred_fallthru
      _
  $region6: #{_lambda_.5} parent=0 // loop_footer
    %s14 = sadd.s32 1, %s10
  $region7: #{_lambda_.5} parent=0 // loop_footer_branch
    %9 = sbr.rel target = $region3
  $region8: #{_lambda_.5} parent=0 // loop_exit
    _

// kernel: _lambda_.7
$region0: #{_lambda_.7}
  #allocation0 [shape = 'u32[]', space=smem, size = 0x4, offset = 0x4, fixed_abs, tag = 'smem constant byte address 0x4 - core index']
  #allocation1 [shape = 'u32[144,128]{1,0:T(1,128)}', space=vmem, size = 0x12000, scoped, tag = 'internal scratch']
  #allocation2 [shape = 'f32[1,128]{1,0:T(1,128)}', space=vmem, size = 0x200, scoped, tag = 'scratch operand']
  %s0 = inlined_call_operand.vmem [shape: bf16[128,144], index: 0, kind: input, shape index: {}]
  %s1 = inlined_call_operand.vmem [shape: bf16[144,128], index: 1, kind: input, shape index: {}]
  %s2 = inlined_call_operand.vmem [shape: f32[1,128], index: 2, kind: input, shape index: {}]
  %s3 = inlined_call_operand.vmem [shape: f32[1,128], index: 3, kind: input, shape index: {}]
  %s4 = inlined_call_operand.vmem [shape: bf16[128,128], index: 4, kind: output, shape index: {}]
  %s5 = sld [smem:[#allocation0]]
  $region34: #{_lambda_.7} parent=0
    _
  %s7 = ssub.s32 1, %s5
  %s8 = scalar_select 0, %s7, %s5
  // Predicated region
  $region2: #{_lambda_.7} parent=0 // pred_check
    _
  $region3: #{_lambda_.7} parent=0 // pred_check_branch
    %10 = sbr.rel (0) target = $region5
  $region4: #{_lambda_.7} parent=0 // pred_region
    _
  $region5: #{_lambda_.7} parent=0 // pred_fallthru
    _
  // Predicated region
  $region6: #{_lambda_.7} parent=0 // pred_check
    _
  $region7: #{_lambda_.7} parent=0 // pred_check_branch
    %12 = sbr.rel (0) target = $region9
  $region8: #{_lambda_.7} parent=0 // pred_region
    _
  $region9: #{_lambda_.7} parent=0 // pred_fallthru
    _
  // Predicated region
  $region10: #{_lambda_.7} parent=0 // pred_check
    _
  $region11: #{_lambda_.7} parent=0 // pred_check_branch
    %14 = sbr.rel (0) target = $region13
  $region12: #{_lambda_.7} parent=0 // pred_region
    _
  $region13: #{_lambda_.7} parent=0 // pred_fallthru
    _
  // Predicated region
  $region14: #{_lambda_.7} parent=0 // pred_check
    _
  $region15: #{_lambda_.7} parent=0 // pred_check_branch
    %16 = sbr.rel (0) target = $region17
  $region16: #{_lambda_.7} parent=0 // pred_region
    _
  $region17: #{_lambda_.7} parent=0 // pred_fallthru
    _
  %p18 = scmp.eq.s32.totalorder 0, 0
  // Predicated region
  $region18: #{_lambda_.7} parent=0 // pred_check
    %p19 = pneg %p18
  $region19: #{_lambda_.7} parent=0 // pred_check_branch
    %21 = sbr.rel (%p19) target = $region21
  $region20: #{_lambda_.7} parent=0 // pred_region
    %22 = vst [vmem:[#allocation2] sm:$0x1] 0.0
  $region21: #{_lambda_.7} parent=0 // pred_fallthru
    _
  %v23 = vld [vmem:[%s0] sm:$0xff]
  %v24 = vld [vmem:[%s0 + $0x8] sm:$0xff]
  %v25 = vld [vmem:[%s0 + $0x10] sm:$0xff]
  %v26 = vld [vmem:[%s0 + $0x18] sm:$0xff]
  %v27 = vld [vmem:[%s0 + $0x20] sm:$0xff]
  %v28 = vld [vmem:[%s0 + $0x28] sm:$0xff]
  %v29 = vld [vmem:[%s0 + $0x30] sm:$0xff]
  %v30 = vld [vmem:[%s0 + $0x38] sm:$0xff]
  %v31 = vld [vmem:[%s0 + $0x40] sm:$0xff]
  %v32 = vld [vmem:[%s0 + $0x48] sm:$0xff]
  %v33 = vld [vmem:[%s0 + $0x50] sm:$0xff]
  %v34 = vld [vmem:[%s0 + $0x58] sm:$0xff]
  %v35 = vld [vmem:[%s0 + $0x60] sm:$0xff]
  %v36 = vld [vmem:[%s0 + $0x68] sm:$0xff]
  %v37 = vld [vmem:[%s0 + $0x70] sm:$0xff]
  %v38 = vld [vmem:[%s0 + $0x78] sm:$0xff]
  %v39 = vld [vmem:[%s1] sm:$0xf]
  %v40 = vld [vmem:[%s1 + $0x4] sm:$0xf]
  %v41 = vld [vmem:[%s1 + $0x8] sm:$0xf]
  %v42 = vld [vmem:[%s1 + $0xc] sm:$0xf]
  %v43 = vld [vmem:[%s1 + $0x10] sm:$0xf]
  %v44 = vld [vmem:[%s1 + $0x14] sm:$0xf]
  %v45 = vld [vmem:[%s1 + $0x18] sm:$0xf]
  %v46 = vld [vmem:[%s1 + $0x1c] sm:$0xf]
  %v47 = vld [vmem:[%s1 + $0x20] sm:$0xf]
  %v48 = vld [vmem:[%s1 + $0x24] sm:$0xf]
  %v49 = vld [vmem:[%s1 + $0x28] sm:$0xf]
  %v50 = vld [vmem:[%s1 + $0x2c] sm:$0xf]
  %v51 = vld [vmem:[%s1 + $0x30] sm:$0xf]
  %v52 = vld [vmem:[%s1 + $0x34] sm:$0xf]
  %v53 = vld [vmem:[%s1 + $0x38] sm:$0xf]
  %v54 = vld [vmem:[%s1 + $0x3c] sm:$0xf]
  %v55 = vld [vmem:[%s1 + $0x40] sm:$0xf]
  %v56 = vld [vmem:[%s1 + $0x44] sm:$0xf]
  %v73 = vunpack.c.l.b16 %v23
  %v74 = vunpack.c.h.b16 %v23
  %v75 = vunpack.c.l.b16 %v24
  %v76 = vunpack.c.h.b16 %v24
  %v77 = vunpack.c.l.b16 %v25
  %v78 = vunpack.c.h.b16 %v25
  %v79 = vunpack.c.l.b16 %v26
  %v80 = vunpack.c.h.b16 %v26
  %v81 = vunpack.c.l.b16 %v27
  %v82 = vunpack.c.h.b16 %v27
  %v83 = vunpack.c.l.b16 %v28
  %v84 = vunpack.c.h.b16 %v28
  %v85 = vunpack.c.l.b16 %v29
  %v86 = vunpack.c.h.b16 %v29
  %v87 = vunpack.c.l.b16 %v30
  %v88 = vunpack.c.h.b16 %v30
  %v89 = vunpack.c.l.b16 %v31
  %v90 = vunpack.c.h.b16 %v31
  %v91 = vunpack.c.l.b16 %v32
  %v92 = vunpack.c.h.b16 %v32
  %v93 = vunpack.c.l.b16 %v33
  %v94 = vunpack.c.h.b16 %v33
  %v95 = vunpack.c.l.b16 %v34
  %v96 = vunpack.c.h.b16 %v34
  %v97 = vunpack.c.l.b16 %v35
  %v98 = vunpack.c.h.b16 %v35
  %v99 = vunpack.c.l.b16 %v36
  %v100 = vunpack.c.h.b16 %v36
  %v101 = vunpack.c.l.b16 %v37
  %v102 = vunpack.c.h.b16 %v37
  %v103 = vunpack.c.l.b16 %v38
  %v104 = vunpack.c.h.b16 %v38
  %v105 = vpack.c.b16 %v75, %v73
  %v106 = vpack.c.b16 %v76, %v74
  %v107 = vpack.c.b16 %v79, %v77
  %v108 = vpack.c.b16 %v80, %v78
  %v109 = vpack.c.b16 %v83, %v81
  %v110 = vpack.c.b16 %v84, %v82
  %v111 = vpack.c.b16 %v87, %v85
  %v112 = vpack.c.b16 %v88, %v86
  %v113 = vpack.c.b16 %v91, %v89
  %v114 = vpack.c.b16 %v92, %v90
  %v115 = vpack.c.b16 %v95, %v93
  %v116 = vpack.c.b16 %v96, %v94
  %v117 = vpack.c.b16 %v99, %v97
  %v118 = vpack.c.b16 %v100, %v98
  %v119 = vpack.c.b16 %v103, %v101
  %v120 = vpack.c.b16 %v104, %v102
  %v147 = vunpack.c.l.b16 %v39
  %v148 = vunpack.c.l.b16 %v40
  %v149 = vunpack.c.l.b16 %v41
  %v150 = vunpack.c.l.b16 %v42
  %v151 = vunpack.c.l.b16 %v43
  %v152 = vunpack.c.l.b16 %v44
  %v153 = vunpack.c.l.b16 %v45
  %v154 = vunpack.c.l.b16 %v46
  %v155 = vunpack.c.l.b16 %v47
  %v156 = vunpack.c.l.b16 %v48
  %v157 = vunpack.c.l.b16 %v49
  %v158 = vunpack.c.l.b16 %v50
  %v159 = vunpack.c.l.b16 %v51
  %v160 = vunpack.c.l.b16 %v52
  %v161 = vunpack.c.l.b16 %v53
  %v162 = vunpack.c.l.b16 %v54
  %v163 = vunpack.c.l.b16 %v55
  %v164 = vunpack.c.l.b16 %v56
  %v165 = vpack.c.b16 %v148, %v147
  %v166 = vpack.c.b16 %v150, %v149
  %v167 = vpack.c.b16 %v152, %v151
  %v168 = vpack.c.b16 %v154, %v153
  %v169 = vpack.c.b16 %v156, %v155
  %v170 = vpack.c.b16 %v158, %v157
  %v171 = vpack.c.b16 %v160, %v159
  %v172 = vpack.c.b16 %v162, %v161
  %v173 = vpack.c.b16 %v164, %v163
  %vm183 = vcmask 130048
  %v185 = vsel %vm183, %v106, 0
  %v188 = vsel %vm183, %v108, 0
  %v191 = vsel %vm183, %v110, 0
  %v194 = vsel %vm183, %v112, 0
  %v197 = vsel %vm183, %v114, 0
  %v200 = vsel %vm183, %v116, 0
  %v203 = vsel %vm183, %v118, 0
  %v206 = vsel %vm183, %v120, 0
  %208 = vmatprep.subr.bf16.mxu0 0
  %209 = vmatpush1.bf16.msra.mxu0 %v165
  %210 = vmatprep.subr.bf16.mxu0 0
  %211 = vmatpush1.bf16.msra.mxu0 %v166
  %212 = vmatprep.subr.bf16.mxu0 0
  %213 = vmatpush1.bf16.msra.mxu0 %v167
  %214 = vmatprep.subr.bf16.mxu0 0
  %215 = vmatpush1.bf16.msra.mxu0 %v168
  %216 = vmatprep.subr.bf16.mxu0 0
  %217 = vmatpush1.bf16.msra.mxu0 %v169
  %218 = vmatprep.subr.bf16.mxu0 0
  %219 = vmatpush1.bf16.msra.mxu0 %v170
  %220 = vmatprep.subr.bf16.mxu0 0
  %221 = vmatpush1.bf16.msra.mxu0 %v171
  %222 = vmatprep.subr.bf16.mxu0 0
  %223 = vmatpush1.bf16.msra.mxu0 %v172
  %224 = vmatprep.subr.bf16.mxu0 0
  %225 = vmatpush1.bf16.msra.mxu0 %v173
  %226 = vmatprep.subr.bf16.mxu0 0
  %227 = vmatpush1.bf16.msra.mxu0 0
  %228 = vmatprep.subr.bf16.mxu0 0
  %229 = vmatpush1.bf16.msra.mxu0 0
  %230 = vmatprep.subr.bf16.mxu0 0
  %231 = vmatpush1.bf16.msra.mxu0 0
  %232 = vmatprep.subr.bf16.mxu0 0
  %233 = vmatpush1.bf16.msra.mxu0 0
  %234 = vmatprep.subr.bf16.mxu0 0
  %235 = vmatpush1.bf16.msra.mxu0 0
  %236 = vmatprep.subr.bf16.mxu0 0
  %237 = vmatpush1.bf16.msra.mxu0 0
  %238 = vmatprep.subr.bf16.mxu0 0
  %239 = vmatpush1.bf16.msra.mxu0 0
  %240 = vmatprep.mubr.bf16.mxu0 %v185
  %241 = vmatmul.mubr.bf16.gmra.mrb[0].mxu0 %v105
  %v242 = vpop.f32.mrb[0].mxu0
  %v243 = vadd.f32 0.0, %v242
  %v244 = vpop.f32.mrb[0].mxu0
  %v245 = vpop.f32.mrb[0].mxu0
  %v246 = vadd.f32 0.0, %v245
  %v247 = vpop.f32.mrb[0].mxu0
  %248 = vmatprep.mubr.bf16.mxu0 %v188
  %249 = vmatmul.mubr.bf16.gmra.mrb[0].mxu0 %v107
  %v250 = vpop.f32.mrb[0].mxu0
  %v251 = vadd.f32 0.0, %v250
  %v252 = vpop.f32.mrb[0].mxu0
  %v253 = vpop.f32.mrb[0].mxu0
  %v254 = vadd.f32 0.0, %v253
  %v255 = vpop.f32.mrb[0].mxu0
  %256 = vmatprep.mubr.bf16.mxu0 %v191
  %257 = vmatmul.mubr.bf16.gmra.mrb[0].mxu0 %v109
  %v258 = vpop.f32.mrb[0].mxu0
  %v259 = vadd.f32 0.0, %v258
  %v260 = vpop.f32.mrb[0].mxu0
  %v261 = vpop.f32.mrb[0].mxu0
  %v262 = vadd.f32 0.0, %v261
  %v263 = vpop.f32.mrb[0].mxu0
  %264 = vmatprep.mubr.bf16.mxu0 %v194
  %265 = vmatmul.mubr.bf16.gmra.mrb[0].mxu0 %v111
  %v266 = vpop.f32.mrb[0].mxu0
  %v267 = vadd.f32 0.0, %v266
  %v268 = vpop.f32.mrb[0].mxu0
  %v269 = vpop.f32.mrb[0].mxu0
  %v270 = vadd.f32 0.0, %v269
  %v271 = vpop.f32.mrb[0].mxu0
  %272 = vmatprep.mubr.bf16.mxu0 %v197
  %273 = vmatmul.mubr.bf16.gmra.mrb[0].mxu0 %v113
  %v274 = vpop.f32.mrb[0].mxu0
  %v275 = vadd.f32 0.0, %v274
  %v276 = vpop.f32.mrb[0].mxu0
  %v277 = vpop.f32.mrb[0].mxu0
  %v278 = vadd.f32 0.0, %v277
  %v279 = vpop.f32.mrb[0].mxu0
  %280 = vmatprep.mubr.bf16.mxu0 %v200
  %281 = vmatmul.mubr.bf16.gmra.mrb[0].mxu0 %v115
  %v282 = vpop.f32.mrb[0].mxu0
  %v283 = vadd.f32 0.0, %v282
  %v284 = vpop.f32.mrb[0].mxu0
  %v285 = vpop.f32.mrb[0].mxu0
  %v286 = vadd.f32 0.0, %v285
  %v287 = vpop.f32.mrb[0].mxu0
  %288 = vmatprep.mubr.bf16.mxu0 %v203
  %289 = vmatmul.mubr.bf16.gmra.mrb[0].mxu0 %v117
  %v290 = vpop.f32.mrb[0].mxu0
  %v291 = vadd.f32 0.0, %v290
  %v292 = vpop.f32.mrb[0].mxu0
  %v293 = vpop.f32.mrb[0].mxu0
  %v294 = vadd.f32 0.0, %v293
  %v295 = vpop.f32.mrb[0].mxu0
  %296 = vmatprep.mubr.bf16.mxu0 %v206
  %297 = vmatmul.mubr.bf16.gmra.mrb[0].mxu0 %v119
  %v298 = vpop.f32.mrb[0].mxu0
  %v299 = vadd.f32 0.0, %v298
  %v300 = vpop.f32.mrb[0].mxu0
  %v301 = vpop.f32.mrb[0].mxu0
  %v302 = vadd.f32 0.0, %v301
  %v303 = vpop.f32.mrb[0].mxu0
  %304 = vdwg.mxu0
  %v305 = vld [vmem:[#allocation2] sm:$0x1]
  %v306 = vadd.f32 %v243, %v246
  %v307 = vadd.f32 %v306, %v251
  %v308 = vadd.f32 %v307, %v254
  %v309 = vadd.f32 %v308, %v259
  %v310 = vadd.f32 %v309, %v262
  %v311 = vadd.f32 %v310, %v267
  %v312 = vadd.f32 %v311, %v270
  %v313 = vadd.f32 %v312, %v275
  %v314 = vadd.f32 %v313, %v278
  %v315 = vadd.f32 %v314, %v283
  %v316 = vadd.f32 %v315, %v286
  %v317 = vadd.f32 %v316, %v291
  %v318 = vadd.f32 %v317, %v294
  %v319 = vadd.f32 %v318, %v299
  %v320 = vadd.f32 %v319, %v302
  %v321 = vrot.slane %v320, 4
  %v322 = vadd.f32 %v320, %v321
  %v323 = vrot.slane %v322, 2
  %v324 = vadd.f32 %v322, %v323
  %v325 = vrot.slane %v324, 1
  %v326 = vadd.f32 %v324, %v325
  %v327 = vadd.f32 %v305, %v326
  %328 = vst [vmem:[#allocation2] sm:$0x1] %v327
  %s329 = smul.u32 0, 128
  %v330 = vpack.c.bf16 %v246, %v243
  %v331 = vpack.c.bf16 %v254, %v251
  %v332 = vpack.c.bf16 %v262, %v259
  %v333 = vpack.c.bf16 %v270, %v267
  %v334 = vpack.c.bf16 %v278, %v275
  %v335 = vpack.c.bf16 %v286, %v283
  %v336 = vpack.c.bf16 %v294, %v291
  %v337 = vpack.c.bf16 %v302, %v299
  %v346 = vunpack.c.l.b16 %v330
  %v347 = vunpack.c.h.b16 %v330
  %v348 = vunpack.c.l.b16 %v331
  %v349 = vunpack.c.h.b16 %v331
  %v350 = vunpack.c.l.b16 %v332
  %v351 = vunpack.c.h.b16 %v332
  %v352 = vunpack.c.l.b16 %v333
  %v353 = vunpack.c.h.b16 %v333
  %v354 = vunpack.c.l.b16 %v334
  %v355 = vunpack.c.h.b16 %v334
  %v356 = vunpack.c.l.b16 %v335
  %v357 = vunpack.c.h.b16 %v335
  %v358 = vunpack.c.l.b16 %v336
  %v359 = vunpack.c.h.b16 %v336
  %v360 = vunpack.c.l.b16 %v337
  %v361 = vunpack.c.h.b16 %v337
  %v362 = vpack.c.b16 %v346, %v346
  %v363 = vpack.c.b16 %v347, %v347
  %v364 = vpack.c.b16 %v348, %v348
  %v365 = vpack.c.b16 %v349, %v349
  %v366 = vpack.c.b16 %v350, %v350
  %v367 = vpack.c.b16 %v351, %v351
  %v368 = vpack.c.b16 %v352, %v352
  %v369 = vpack.c.b16 %v353, %v353
  %v370 = vpack.c.b16 %v354, %v354
  %v371 = vpack.c.b16 %v355, %v355
  %v372 = vpack.c.b16 %v356, %v356
  %v373 = vpack.c.b16 %v357, %v357
  %v374 = vpack.c.b16 %v358, %v358
  %v375 = vpack.c.b16 %v359, %v359
  %v376 = vpack.c.b16 %v360, %v360
  %v377 = vpack.c.b16 %v361, %v361
  %s394 = sshra.s32 %s329, 3
  %s395 = sand.u32 %s329, 7
  %s396 = smul.addr %s394, 4
  %s397 = scalar_lea.vmem %s4, %s396
  %398 = vst [vmem:[%s397] sm:$0xf] %v362
  %399 = vst [vmem:[%s397 + $0x4] sm:$0xf] %v363
  %400 = vst [vmem:[%s397 + $0x8] sm:$0xf] %v364
  %401 = vst [vmem:[%s397 + $0xc] sm:$0xf] %v365
  %402 = vst [vmem:[%s397 + $0x10] sm:$0xf] %v366
  %403 = vst [vmem:[%s397 + $0x14] sm:$0xf] %v367
  %404 = vst [vmem:[%s397 + $0x18] sm:$0xf] %v368
  %405 = vst [vmem:[%s397 + $0x1c] sm:$0xf] %v369
  %406 = vst [vmem:[%s397 + $0x20] sm:$0xf] %v370
  %407 = vst [vmem:[%s397 + $0x24] sm:$0xf] %v371
  %408 = vst [vmem:[%s397 + $0x28] sm:$0xf] %v372
  %409 = vst [vmem:[%s397 + $0x2c] sm:$0xf] %v373
  %410 = vst [vmem:[%s397 + $0x30] sm:$0xf] %v374
  %411 = vst [vmem:[%s397 + $0x34] sm:$0xf] %v375
  %412 = vst [vmem:[%s397 + $0x38] sm:$0xf] %v376
  %413 = vst [vmem:[%s397 + $0x3c] sm:$0xf] %v377
  // Predicated region
  $region22: #{_lambda_.7} parent=0 // pred_check
    %p414 = pneg %p18
  $region23: #{_lambda_.7} parent=0 // pred_check_branch
    %416 = sbr.rel (%p414) target = $region25
  $region24: #{_lambda_.7} parent=0 // pred_region
    %v417 = vld [vmem:[#allocation2] sm:$0x1]
    %v418 = vmul.f32 %v417, 0.0078125
    %v419 = vld [vmem:[%s4] sm:$0xf]
    %v420 = vld [vmem:[%s4 + $0x4] sm:$0xf]
    %v421 = vld [vmem:[%s4 + $0x8] sm:$0xf]
    %v422 = vld [vmem:[%s4 + $0xc] sm:$0xf]
    %v423 = vld [vmem:[%s4 + $0x10] sm:$0xf]
    %v424 = vld [vmem:[%s4 + $0x14] sm:$0xf]
    %v425 = vld [vmem:[%s4 + $0x18] sm:$0xf]
    %v426 = vld [vmem:[%s4 + $0x1c] sm:$0xf]
    %v427 = vld [vmem:[%s4 + $0x20] sm:$0xf]
    %v428 = vld [vmem:[%s4 + $0x24] sm:$0xf]
    %v429 = vld [vmem:[%s4 + $0x28] sm:$0xf]
    %v430 = vld [vmem:[%s4 + $0x2c] sm:$0xf]
    %v431 = vld [vmem:[%s4 + $0x30] sm:$0xf]
    %v432 = vld [vmem:[%s4 + $0x34] sm:$0xf]
    %v433 = vld [vmem:[%s4 + $0x38] sm:$0xf]
    %v434 = vld [vmem:[%s4 + $0x3c] sm:$0xf]
    %v435 = vunpack.c.l.bf16 %v419
    %v436 = vunpack.c.l.bf16 %v420
    %v437 = vunpack.c.l.bf16 %v421
    %v438 = vunpack.c.l.bf16 %v422
    %v439 = vunpack.c.l.bf16 %v423
    %v440 = vunpack.c.l.bf16 %v424
    %v441 = vunpack.c.l.bf16 %v425
    %v442 = vunpack.c.l.bf16 %v426
    %v443 = vunpack.c.l.bf16 %v427
    %v444 = vunpack.c.l.bf16 %v428
    %v445 = vunpack.c.l.bf16 %v429
    %v446 = vunpack.c.l.bf16 %v430
    %v447 = vunpack.c.l.bf16 %v431
    %v448 = vunpack.c.l.bf16 %v432
    %v449 = vunpack.c.l.bf16 %v433
    %v450 = vunpack.c.l.bf16 %v434
    %v451 = vlaneseq
    %v452 = vshrl.u32 %v451, 7
    %v453 = vadd.s32 %v452, 8
    %v454 = vadd.s32 %v452, 16
    %v455 = vadd.s32 %v452, 24
    %v456 = vadd.s32 %v452, 32
    %v457 = vadd.s32 %v452, 40
    %v458 = vadd.s32 %v452, 48
    %v459 = vadd.s32 %v452, 56
    %v460 = vadd.s32 %v452, 64
    %v461 = vadd.s32 %v452, 72
    %v462 = vadd.s32 %v452, 80
    %v463 = vadd.s32 %v452, 88
    %v464 = vadd.s32 %v452, 96
    %v465 = vadd.s32 %v452, 104
    %v466 = vadd.s32 %v452, 112
    %v467 = vadd.s32 %v452, 120
    %vm468 = vcmp.lt.s32.totalorder %v452, 128
    %vm469 = vcmp.lt.s32.totalorder %v453, 128
    %vm470 = vcmp.lt.s32.totalorder %v454, 128
    %vm471 = vcmp.lt.s32.totalorder %v455, 128
    %vm472 = vcmp.lt.s32.totalorder %v456, 128
    %vm473 = vcmp.lt.s32.totalorder %v457, 128
    %vm474 = vcmp.lt.s32.totalorder %v458, 128
    %vm475 = vcmp.lt.s32.totalorder %v459, 128
    %vm476 = vcmp.lt.s32.totalorder %v460, 128
    %vm477 = vcmp.lt.s32.totalorder %v461, 128
    %vm478 = vcmp.lt.s32.totalorder %v462, 128
    %vm479 = vcmp.lt.s32.totalorder %v463, 128
    %vm480 = vcmp.lt.s32.totalorder %v464, 128
    %vm481 = vcmp.lt.s32.totalorder %v465, 128
    %vm482 = vcmp.lt.s32.totalorder %v466, 128
    %vm483 = vcmp.lt.s32.totalorder %v467, 128
    %v485 = vlaneseq
    %v486 = vshrl.u32 %v485, 7
    %v487 = vsub.s32 0, %v486
    %v488 = vrot.slane %v418, %v487
    %v490 = vsub.f32 %v435, %v488
    %v491 = vsub.f32 %v436, %v488
    %v492 = vsub.f32 %v437, %v488
    %v493 = vsub.f32 %v438, %v488
    %v494 = vsub.f32 %v439, %v488
    %v495 = vsub.f32 %v440, %v488
    %v496 = vsub.f32 %v441, %v488
    %v497 = vsub.f32 %v442, %v488
    %v498 = vsub.f32 %v443, %v488
    %v499 = vsub.f32 %v444, %v488
    %v500 = vsub.f32 %v445, %v488
    %v501 = vsub.f32 %v446, %v488
    %v502 = vsub.f32 %v447, %v488
    %v503 = vsub.f32 %v448, %v488
    %v504 = vsub.f32 %v449, %v488
    %v505 = vsub.f32 %v450, %v488
    %v506 = vsel %vm468, %v490, 0.0
    %v507 = vsel %vm469, %v491, 0.0
    %v508 = vsel %vm470, %v492, 0.0
    %v509 = vsel %vm471, %v493, 0.0
    %v510 = vsel %vm472, %v494, 0.0
    %v511 = vsel %vm473, %v495, 0.0
    %v512 = vsel %vm474, %v496, 0.0
    %v513 = vsel %vm475, %v497, 0.0
    %v514 = vsel %vm476, %v498, 0.0
    %v515 = vsel %vm477, %v499, 0.0
    %v516 = vsel %vm478, %v500, 0.0
    %v517 = vsel %vm479, %v501, 0.0
    %v518 = vsel %vm480, %v502, 0.0
    %v519 = vsel %vm481, %v503, 0.0
    %v520 = vsel %vm482, %v504, 0.0
    %v521 = vsel %vm483, %v505, 0.0
    %v522 = vmul.f32 %v506, %v506
    %v523 = vmul.f32 %v507, %v507
    %v524 = vmul.f32 %v508, %v508
    %v525 = vmul.f32 %v509, %v509
    %v526 = vmul.f32 %v510, %v510
    %v527 = vmul.f32 %v511, %v511
    %v528 = vmul.f32 %v512, %v512
    %v529 = vmul.f32 %v513, %v513
    %v530 = vmul.f32 %v514, %v514
    %v531 = vmul.f32 %v515, %v515
    %v532 = vmul.f32 %v516, %v516
    %v533 = vmul.f32 %v517, %v517
    %v534 = vmul.f32 %v518, %v518
    %v535 = vmul.f32 %v519, %v519
    %v536 = vmul.f32 %v520, %v520
    %v537 = vmul.f32 %v521, %v521
    %v538 = vadd.f32 %v522, %v523
    %v539 = vadd.f32 %v538, %v524
    %v540 = vadd.f32 %v539, %v525
    %v541 = vadd.f32 %v540, %v526
    %v542 = vadd.f32 %v541, %v527
    %v543 = vadd.f32 %v542, %v528
    %v544 = vadd.f32 %v543, %v529
    %v545 = vadd.f32 %v544, %v530
    %v546 = vadd.f32 %v545, %v531
    %v547 = vadd.f32 %v546, %v532
    %v548 = vadd.f32 %v547, %v533
    %v549 = vadd.f32 %v548, %v534
    %v550 = vadd.f32 %v549, %v535
    %v551 = vadd.f32 %v550, %v536
    %v552 = vadd.f32 %v551, %v537
    %v553 = vrot.slane %v552, 4
    %v554 = vadd.f32 %v552, %v553
    %v555 = vrot.slane %v554, 2
    %v556 = vadd.f32 %v554, %v555
    %v557 = vrot.slane %v556, 1
    %v558 = vadd.f32 %v556, %v557
    %v559 = vmul.f32 %v558, 0.0078125
    %v560 = vld [vmem:[%s2] sm:$0x1]
    %v561 = vadd.f32 %v559, 1e-05
    %v562 = vrsqrt.pop %v561
    %v563 = vmul.f32 %v560, %v562
    %v564 = vld [vmem:[%s3] sm:$0x1]
    %v565 = vmul.f32 %v418, %v563
    %v566 = vsub.f32 %v564, %v565
    %v568 = vlaneseq
    %v569 = vshrl.u32 %v568, 7
    %v570 = vsub.s32 0, %v569
    %v571 = vrot.slane %v563, %v570
    %v573 = vmul.f32 %v435, %v571
    %v574 = vmul.f32 %v436, %v571
    %v575 = vmul.f32 %v437, %v571
    %v576 = vmul.f32 %v438, %v571
    %v577 = vmul.f32 %v439, %v571
    %v578 = vmul.f32 %v440, %v571
    %v579 = vmul.f32 %v441, %v571
    %v580 = vmul.f32 %v442, %v571
    %v581 = vmul.f32 %v443, %v571
    %v582 = vmul.f32 %v444, %v571
    %v583 = vmul.f32 %v445, %v571
    %v584 = vmul.f32 %v446, %v571
    %v585 = vmul.f32 %v447, %v571
    %v586 = vmul.f32 %v448, %v571
    %v587 = vmul.f32 %v449, %v571
    %v588 = vmul.f32 %v450, %v571
    %v590 = vlaneseq
    %v591 = vshrl.u32 %v590, 7
    %v592 = vsub.s32 0, %v591
    %v593 = vrot.slane %v566, %v592
    %v595 = vadd.f32 %v573, %v593
    %v596 = vadd.f32 %v574, %v593
    %v597 = vadd.f32 %v575, %v593
    %v598 = vadd.f32 %v576, %v593
    %v599 = vadd.f32 %v577, %v593
    %v600 = vadd.f32 %v578, %v593
    %v601 = vadd.f32 %v579, %v593
    %v602 = vadd.f32 %v580, %v593
    %v603 = vadd.f32 %v581, %v593
    %v604 = vadd.f32 %v582, %v593
    %v605 = vadd.f32 %v583, %v593
    %v606 = vadd.f32 %v584, %v593
    %v607 = vadd.f32 %v585, %v593
    %v608 = vadd.f32 %v586, %v593
    %v609 = vadd.f32 %v587, %v593
    %v610 = vadd.f32 %v588, %v593
    %vm611 = vcmp.ge.f32.partialorder %v595, 0.0
    %vm612 = vcmp.ge.f32.partialorder %v596, 0.0
    %vm613 = vcmp.ge.f32.partialorder %v597, 0.0
    %vm614 = vcmp.ge.f32.partialorder %v598, 0.0
    %vm615 = vcmp.ge.f32.partialorder %v599, 0.0
    %vm616 = vcmp.ge.f32.partialorder %v600, 0.0
    %vm617 = vcmp.ge.f32.partialorder %v601, 0.0
    %vm618 = vcmp.ge.f32.partialorder %v602, 0.0
    %vm619 = vcmp.ge.f32.partialorder %v603, 0.0
    %vm620 = vcmp.ge.f32.partialorder %v604, 0.0
    %vm621 = vcmp.ge.f32.partialorder %v605, 0.0
    %vm622 = vcmp.ge.f32.partialorder %v606, 0.0
    %vm623 = vcmp.ge.f32.partialorder %v607, 0.0
    %vm624 = vcmp.ge.f32.partialorder %v608, 0.0
    %vm625 = vcmp.ge.f32.partialorder %v609, 0.0
    %vm626 = vcmp.ge.f32.partialorder %v610, 0.0
    %v627 = vmul.f32 %v595, 0.2
    %v628 = vmul.f32 %v596, 0.2
    %v629 = vmul.f32 %v597, 0.2
    %v630 = vmul.f32 %v598, 0.2
    %v631 = vmul.f32 %v599, 0.2
    %v632 = vmul.f32 %v600, 0.2
    %v633 = vmul.f32 %v601, 0.2
    %v634 = vmul.f32 %v602, 0.2
    %v635 = vmul.f32 %v603, 0.2
    %v636 = vmul.f32 %v604, 0.2
    %v637 = vmul.f32 %v605, 0.2
    %v638 = vmul.f32 %v606, 0.2
    %v639 = vmul.f32 %v607, 0.2
    %v640 = vmul.f32 %v608, 0.2
    %v641 = vmul.f32 %v609, 0.2
    %v642 = vmul.f32 %v610, 0.2
    %v643 = vsel %vm611, %v595, %v627
    %v644 = vsel %vm612, %v596, %v628
    %v645 = vsel %vm613, %v597, %v629
    %v646 = vsel %vm614, %v598, %v630
    %v647 = vsel %vm615, %v599, %v631
    %v648 = vsel %vm616, %v600, %v632
    %v649 = vsel %vm617, %v601, %v633
    %v650 = vsel %vm618, %v602, %v634
    %v651 = vsel %vm619, %v603, %v635
    %v652 = vsel %vm620, %v604, %v636
    %v653 = vsel %vm621, %v605, %v637
    %v654 = vsel %vm622, %v606, %v638
    %v655 = vsel %vm623, %v607, %v639
    %v656 = vsel %vm624, %v608, %v640
    %v657 = vsel %vm625, %v609, %v641
    %v658 = vsel %vm626, %v610, %v642
    %v659 = vpack.c.bf16 %v644, %v643
    %v660 = vpack.c.bf16 %v646, %v645
    %v661 = vpack.c.bf16 %v648, %v647
    %v662 = vpack.c.bf16 %v650, %v649
    %v663 = vpack.c.bf16 %v652, %v651
    %v664 = vpack.c.bf16 %v654, %v653
    %v665 = vpack.c.bf16 %v656, %v655
    %v666 = vpack.c.bf16 %v658, %v657
    %v675 = vunpack.c.l.b16 %v659
    %v676 = vunpack.c.h.b16 %v659
    %v677 = vunpack.c.l.b16 %v660
    %v678 = vunpack.c.h.b16 %v660
    %v679 = vunpack.c.l.b16 %v661
    %v680 = vunpack.c.h.b16 %v661
    %v681 = vunpack.c.l.b16 %v662
    %v682 = vunpack.c.h.b16 %v662
    %v683 = vunpack.c.l.b16 %v663
    %v684 = vunpack.c.h.b16 %v663
    %v685 = vunpack.c.l.b16 %v664
    %v686 = vunpack.c.h.b16 %v664
    %v687 = vunpack.c.l.b16 %v665
    %v688 = vunpack.c.h.b16 %v665
    %v689 = vunpack.c.l.b16 %v666
    %v690 = vunpack.c.h.b16 %v666
    %v691 = vpack.c.b16 %v675, %v675
    %v692 = vpack.c.b16 %v676, %v676
    %v693 = vpack.c.b16 %v677, %v677
    %v694 = vpack.c.b16 %v678, %v678
    %v695 = vpack.c.b16 %v679, %v679
    %v696 = vpack.c.b16 %v680, %v680
    %v697 = vpack.c.b16 %v681, %v681
    %v698 = vpack.c.b16 %v682, %v682
    %v699 = vpack.c.b16 %v683, %v683
    %v700 = vpack.c.b16 %v684, %v684
    %v701 = vpack.c.b16 %v685, %v685
    %v702 = vpack.c.b16 %v686, %v686
    %v703 = vpack.c.b16 %v687, %v687
    %v704 = vpack.c.b16 %v688, %v688
    %v705 = vpack.c.b16 %v689, %v689
    %v706 = vpack.c.b16 %v690, %v690
    %723 = vst [vmem:[%s4] sm:$0xf] %v691
    %724 = vst [vmem:[%s4 + $0x4] sm:$0xf] %v692
    %725 = vst [vmem:[%s4 + $0x8] sm:$0xf] %v693
    %726 = vst [vmem:[%s4 + $0xc] sm:$0xf] %v694
    %727 = vst [vmem:[%s4 + $0x10] sm:$0xf] %v695
    %728 = vst [vmem:[%s4 + $0x14] sm:$0xf] %v696
    %729 = vst [vmem:[%s4 + $0x18] sm:$0xf] %v697
    %730 = vst [vmem:[%s4 + $0x1c] sm:$0xf] %v698
    %731 = vst [vmem:[%s4 + $0x20] sm:$0xf] %v699
    %732 = vst [vmem:[%s4 + $0x24] sm:$0xf] %v700
    %733 = vst [vmem:[%s4 + $0x28] sm:$0xf] %v701
    %734 = vst [vmem:[%s4 + $0x2c] sm:$0xf] %v702
    %735 = vst [vmem:[%s4 + $0x30] sm:$0xf] %v703
    %736 = vst [vmem:[%s4 + $0x34] sm:$0xf] %v704
    %737 = vst [vmem:[%s4 + $0x38] sm:$0xf] %v705
    %738 = vst [vmem:[%s4 + $0x3c] sm:$0xf] %v706
  $region25: #{_lambda_.7} parent=0 // pred_fallthru
    _
  // Predicated region
  $region26: #{_lambda_.7} parent=0 // pred_check
    _
  $region27: #{_lambda_.7} parent=0 // pred_check_branch
    %740 = sbr.rel (0) target = $region29
  $region28: #{_lambda_.7} parent=0 // pred_region
    _
  $region29: #{_lambda_.7} parent=0 // pred_fallthru
    _
  // Predicated region
  $region30: #{_lambda_.7} parent=0 // pred_check
    _
  $region31: #{_lambda_.7} parent=0 // pred_check_branch
    %742 = sbr.rel (0) target = $region33
  $region32: #{_lambda_.7} parent=0 // pred_region
    _
  $region33: #{_lambda_.7} parent=0 // pred_fallthru
    _

// kernel: _lambda_.8
$region0: #{_lambda_.8}
  #allocation0 [shape = 'u32[]', space=smem, size = 0x4, offset = 0x4, fixed_abs, tag = 'smem constant byte address 0x4 - core index']
  #allocation1 [shape = 'u32[144,128]{1,0:T(1,128)}', space=vmem, size = 0x12000, scoped, tag = 'internal scratch']
  #allocation2 [shape = 'f32[1,128]{1,0:T(1,128)}', space=vmem, size = 0x200, scoped, tag = 'scratch operand']
  %s0 = inlined_call_operand.vmem [shape: bf16[32,288], index: 0, kind: input, shape index: {}]
  %s1 = inlined_call_operand.vmem [shape: bf16[288,128], index: 1, kind: input, shape index: {}]
  %s2 = inlined_call_operand.vmem [shape: f32[1,128], index: 2, kind: input, shape index: {}]
  %s3 = inlined_call_operand.vmem [shape: f32[1,128], index: 3, kind: input, shape index: {}]
  %s4 = inlined_call_operand.vmem [shape: bf16[32,128], index: 4, kind: output, shape index: {}]
  %s5 = sld [smem:[#allocation0]]
  $region34: #{_lambda_.8} parent=0
    _
  %s7 = ssub.s32 1, %s5
  %s8 = scalar_select 0, %s7, %s5
  // Predicated region
  $region2: #{_lambda_.8} parent=0 // pred_check
    _
  $region3: #{_lambda_.8} parent=0 // pred_check_branch
    %10 = sbr.rel (0) target = $region5
  $region4: #{_lambda_.8} parent=0 // pred_region
    _
  $region5: #{_lambda_.8} parent=0 // pred_fallthru
    _
  // Predicated region
  $region6: #{_lambda_.8} parent=0 // pred_check
    _
  $region7: #{_lambda_.8} parent=0 // pred_check_branch
    %12 = sbr.rel (0) target = $region9
  $region8: #{_lambda_.8} parent=0 // pred_region
    _
  $region9: #{_lambda_.8} parent=0 // pred_fallthru
    _
  // Predicated region
  $region10: #{_lambda_.8} parent=0 // pred_check
    _
  $region11: #{_lambda_.8} parent=0 // pred_check_branch
    %14 = sbr.rel (0) target = $region13
  $region12: #{_lambda_.8} parent=0 // pred_region
    _
  $region13: #{_lambda_.8} parent=0 // pred_fallthru
    _
  // Predicated region
  $region14: #{_lambda_.8} parent=0 // pred_check
    _
  $region15: #{_lambda_.8} parent=0 // pred_check_branch
    %16 = sbr.rel (0) target = $region17
  $region16: #{_lambda_.8} parent=0 // pred_region
    _
  $region17: #{_lambda_.8} parent=0 // pred_fallthru
    _
  %p18 = scmp.eq.s32.totalorder 0, 0
  // Predicated region
  $region18: #{_lambda_.8} parent=0 // pred_check
    %p19 = pneg %p18
  $region19: #{_lambda_.8} parent=0 // pred_check_branch
    %21 = sbr.rel (%p19) target = $region21
  $region20: #{_lambda_.8} parent=0 // pred_region
    %22 = vst [vmem:[#allocation2] sm:$0x1] 0.0
  $region21: #{_lambda_.8} parent=0 // pred_fallthru
    _
  %v23 = vld [vmem:[%s0] sm:$0xff]
  %v24 = vld [vmem:[%s0 + $0x8] sm:$0xf]
  %v25 = vld [vmem:[%s0 + $0xc] sm:$0xff]
  %v26 = vld [vmem:[%s0 + $0x14] sm:$0xf]
  %v27 = vld [vmem:[%s0 + $0x18] sm:$0xff]
  %v28 = vld [vmem:[%s0 + $0x20] sm:$0xf]
  %v29 = vld [vmem:[%s0 + $0x24] sm:$0xff]
  %v30 = vld [vmem:[%s0 + $0x2c] sm:$0xf]
  %v31 = vld [vmem:[%s1] sm:$0xf]
  %v32 = vld [vmem:[%s1 + $0x4] sm:$0xf]
  %v33 = vld [vmem:[%s1 + $0x8] sm:$0xf]
  %v34 = vld [vmem:[%s1 + $0xc] sm:$0xf]
  %v35 = vld [vmem:[%s1 + $0x10] sm:$0xf]
  %v36 = vld [vmem:[%s1 + $0x14] sm:$0xf]
  %v37 = vld [vmem:[%s1 + $0x18] sm:$0xf]
  %v38 = vld [vmem:[%s1 + $0x1c] sm:$0xf]
  %v39 = vld [vmem:[%s1 + $0x20] sm:$0xf]
  %v40 = vld [vmem:[%s1 + $0x24] sm:$0xf]
  %v41 = vld [vmem:[%s1 + $0x28] sm:$0xf]
  %v42 = vld [vmem:[%s1 + $0x2c] sm:$0xf]
  %v43 = vld [vmem:[%s1 + $0x30] sm:$0xf]
  %v44 = vld [vmem:[%s1 + $0x34] sm:$0xf]
  %v45 = vld [vmem:[%s1 + $0x38] sm:$0xf]
  %v46 = vld [vmem:[%s1 + $0x3c] sm:$0xf]
  %v47 = vld [vmem:[%s1 + $0x40] sm:$0xf]
  %v48 = vld [vmem:[%s1 + $0x44] sm:$0xf]
  %v49 = vld [vmem:[%s1 + $0x48] sm:$0xf]
  %v50 = vld [vmem:[%s1 + $0x4c] sm:$0xf]
  %v51 = vld [vmem:[%s1 + $0x50] sm:$0xf]
  %v52 = vld [vmem:[%s1 + $0x54] sm:$0xf]
  %v53 = vld [vmem:[%s1 + $0x58] sm:$0xf]
  %v54 = vld [vmem:[%s1 + $0x5c] sm:$0xf]
  %v55 = vld [vmem:[%s1 + $0x60] sm:$0xf]
  %v56 = vld [vmem:[%s1 + $0x64] sm:$0xf]
  %v57 = vld [vmem:[%s1 + $0x68] sm:$0xf]
  %v58 = vld [vmem:[%s1 + $0x6c] sm:$0xf]
  %v59 = vld [vmem:[%s1 + $0x70] sm:$0xf]
  %v60 = vld [vmem:[%s1 + $0x74] sm:$0xf]
  %v61 = vld [vmem:[%s1 + $0x78] sm:$0xf]
  %v62 = vld [vmem:[%s1 + $0x7c] sm:$0xf]
  %v63 = vld [vmem:[%s1 + $0x80] sm:$0xf]
  %v64 = vld [vmem:[%s1 + $0x84] sm:$0xf]
  %v65 = vld [vmem:[%s1 + $0x88] sm:$0xf]
  %v66 = vld [vmem:[%s1 + $0x8c] sm:$0xf]
  %v75 = vunpack.c.l.b16 %v23
  %v76 = vunpack.c.h.b16 %v23
  %v77 = vunpack.c.l.b16 %v24
  %v78 = vunpack.c.l.b16 %v25
  %v79 = vunpack.c.h.b16 %v25
  %v80 = vunpack.c.l.b16 %v26
  %v81 = vunpack.c.l.b16 %v27
  %v82 = vunpack.c.h.b16 %v27
  %v83 = vunpack.c.l.b16 %v28
  %v84 = vunpack.c.l.b16 %v29
  %v85 = vunpack.c.h.b16 %v29
  %v86 = vunpack.c.l.b16 %v30
  %v87 = vpack.c.b16 %v78, %v75
  %v88 = vpack.c.b16 %v79, %v76
  %v89 = vpack.c.b16 %v80, %v77
  %v90 = vpack.c.b16 %v84, %v81
  %v91 = vpack.c.b16 %v85, %v82
  %v92 = vpack.c.b16 %v86, %v83
  %v133 = vunpack.c.l.b16 %v31
  %v134 = vunpack.c.l.b16 %v32
  %v135 = vunpack.c.l.b16 %v33
  %v136 = vunpack.c.l.b16 %v34
  %v137 = vunpack.c.l.b16 %v35
  %v138 = vunpack.c.l.b16 %v36
  %v139 = vunpack.c.l.b16 %v37
  %v140 = vunpack.c.l.b16 %v38
  %v141 = vunpack.c.l.b16 %v39
  %v142 = vunpack.c.l.b16 %v40
  %v143 = vunpack.c.l.b16 %v41
  %v144 = vunpack.c.l.b16 %v42
  %v145 = vunpack.c.l.b16 %v43
  %v146 = vunpack.c.l.b16 %v44
  %v147 = vunpack.c.l.b16 %v45
  %v148 = vunpack.c.l.b16 %v46
  %v149 = vunpack.c.l.b16 %v47
  %v150 = vunpack.c.l.b16 %v48
  %v151 = vunpack.c.l.b16 %v49
  %v152 = vunpack.c.l.b16 %v50
  %v153 = vunpack.c.l.b16 %v51
  %v154 = vunpack.c.l.b16 %v52
  %v155 = vunpack.c.l.b16 %v53
  %v156 = vunpack.c.l.b16 %v54
  %v157 = vunpack.c.l.b16 %v55
  %v158 = vunpack.c.l.b16 %v56
  %v159 = vunpack.c.l.b16 %v57
  %v160 = vunpack.c.l.b16 %v58
  %v161 = vunpack.c.l.b16 %v59
  %v162 = vunpack.c.l.b16 %v60
  %v163 = vunpack.c.l.b16 %v61
  %v164 = vunpack.c.l.b16 %v62
  %v165 = vunpack.c.l.b16 %v63
  %v166 = vunpack.c.l.b16 %v64
  %v167 = vunpack.c.l.b16 %v65
  %v168 = vunpack.c.l.b16 %v66
  %v169 = vpack.c.b16 %v134, %v133
  %v170 = vpack.c.b16 %v136, %v135
  %v171 = vpack.c.b16 %v138, %v137
  %v172 = vpack.c.b16 %v140, %v139
  %v173 = vpack.c.b16 %v142, %v141
  %v174 = vpack.c.b16 %v144, %v143
  %v175 = vpack.c.b16 %v146, %v145
  %v176 = vpack.c.b16 %v148, %v147
  %v177 = vpack.c.b16 %v150, %v149
  %v178 = vpack.c.b16 %v152, %v151
  %v179 = vpack.c.b16 %v154, %v153
  %v180 = vpack.c.b16 %v156, %v155
  %v181 = vpack.c.b16 %v158, %v157
  %v182 = vpack.c.b16 %v160, %v159
  %v183 = vpack.c.b16 %v162, %v161
  %v184 = vpack.c.b16 %v164, %v163
  %v185 = vpack.c.b16 %v166, %v165
  %v186 = vpack.c.b16 %v168, %v167
  %vm205 = vcmask 261120
  %v207 = vsel %vm205, %v89, 0
  %v210 = vsel %vm205, %v92, 0
  %212 = vmatprep.subr.bf16.mxu0 0
  %213 = vmatpush1.bf16.msra.mxu0 %v169
  %214 = vmatprep.subr.bf16.mxu0 0
  %215 = vmatpush1.bf16.msra.mxu0 %v170
  %216 = vmatprep.subr.bf16.mxu0 0
  %217 = vmatpush1.bf16.msra.mxu0 %v171
  %218 = vmatprep.subr.bf16.mxu0 0
  %219 = vmatpush1.bf16.msra.mxu0 %v172
  %220 = vmatprep.subr.bf16.mxu0 0
  %221 = vmatpush1.bf16.msra.mxu0 %v173
  %222 = vmatprep.subr.bf16.mxu0 0
  %223 = vmatpush1.bf16.msra.mxu0 %v174
  %224 = vmatprep.subr.bf16.mxu0 0
  %225 = vmatpush1.bf16.msra.mxu0 %v175
  %226 = vmatprep.subr.bf16.mxu0 0
  %227 = vmatpush1.bf16.msra.mxu0 %v176
  %228 = vmatprep.subr.bf16.mxu0 0
  %229 = vmatpush1.bf16.msra.mxu0 %v177
  %230 = vmatprep.subr.bf16.mxu0 0
  %231 = vmatpush1.bf16.msra.mxu0 %v178
  %232 = vmatprep.subr.bf16.mxu0 0
  %233 = vmatpush1.bf16.msra.mxu0 %v179
  %234 = vmatprep.subr.bf16.mxu0 0
  %235 = vmatpush1.bf16.msra.mxu0 %v180
  %236 = vmatprep.subr.bf16.mxu0 0
  %237 = vmatpush1.bf16.msra.mxu0 %v181
  %238 = vmatprep.subr.bf16.mxu0 0
  %239 = vmatpush1.bf16.msra.mxu0 %v182
  %240 = vmatprep.subr.bf16.mxu0 0
  %241 = vmatpush1.bf16.msra.mxu0 %v183
  %242 = vmatprep.subr.bf16.mxu0 0
  %243 = vmatpush1.bf16.msra.mxu0 %v184
  %244 = vmatprep.mubr.bf16.mxu0 %v88
  %245 = vmatmul.mubr.bf16.gmra.mrb[0].mxu0 %v87
  %v246 = vpop.f32.mrb[0].mxu0
  %v247 = vadd.f32 0.0, %v246
  %v248 = vpop.f32.mrb[0].mxu0
  %v249 = vpop.f32.mrb[0].mxu0
  %v250 = vadd.f32 0.0, %v249
  %v251 = vpop.f32.mrb[0].mxu0
  %252 = vmatprep.mubr.bf16.mxu0 %v91
  %253 = vmatmul.mubr.bf16.gmra.mrb[0].mxu0 %v90
  %v254 = vpop.f32.mrb[0].mxu0
  %v255 = vadd.f32 0.0, %v254
  %v256 = vpop.f32.mrb[0].mxu0
  %v257 = vpop.f32.mrb[0].mxu0
  %v258 = vadd.f32 0.0, %v257
  %v259 = vpop.f32.mrb[0].mxu0
  %260 = vdwg.mxu0
  %261 = vmatprep.subr.bf16.mxu0 0
  %262 = vmatpush1.bf16.msra.mxu0 %v185
  %263 = vmatprep.subr.bf16.mxu0 0
  %264 = vmatpush1.bf16.msra.mxu0 %v186
  %265 = vmatprep.subr.bf16.mxu0 0
  %266 = vmatpush1.bf16.msra.mxu0 0
  %267 = vmatprep.subr.bf16.mxu0 0
  %268 = vmatpush1.bf16.msra.mxu0 0
  %269 = vmatprep.subr.bf16.mxu0 0
  %270 = vmatpush1.bf16.msra.mxu0 0
  %271 = vmatprep.subr.bf16.mxu0 0
  %272 = vmatpush1.bf16.msra.mxu0 0
  %273 = vmatprep.subr.bf16.mxu0 0
  %274 = vmatpush1.bf16.msra.mxu0 0
  %275 = vmatprep.subr.bf16.mxu0 0
  %276 = vmatpush1.bf16.msra.mxu0 0
  %277 = vmatprep.subr.bf16.mxu0 0
  %278 = vmatpush1.bf16.msra.mxu0 0
  %279 = vmatprep.subr.bf16.mxu0 0
  %280 = vmatpush1.bf16.msra.mxu0 0
  %281 = vmatprep.subr.bf16.mxu0 0
  %282 = vmatpush1.bf16.msra.mxu0 0
  %283 = vmatprep.subr.bf16.mxu0 0
  %284 = vmatpush1.bf16.msra.mxu0 0
  %285 = vmatprep.subr.bf16.mxu0 0
  %286 = vmatpush1.bf16.msra.mxu0 0
  %287 = vmatprep.subr.bf16.mxu0 0
  %288 = vmatpush1.bf16.msra.mxu0 0
  %289 = vmatprep.subr.bf16.mxu0 0
  %290 = vmatpush1.bf16.msra.mxu0 0
  %291 = vmatprep.subr.bf16.mxu0 0
  %292 = vmatpush1.bf16.msra.mxu0 0
  %293 = vmatprep.mubr.bf16.mxu0 0
  %294 = vmatmul.mubr.bf16.gmra.mrb[0].mxu0 %v207
  %v295 = vpop.f32.mrb[0].mxu0
  %v296 = vadd.f32 %v247, %v295
  %v297 = vpop.f32.mrb[0].mxu0
  %v298 = vpop.f32.mrb[0].mxu0
  %v299 = vadd.f32 %v250, %v298
  %v300 = vpop.f32.mrb[0].mxu0
  %301 = vmatprep.mubr.bf16.mxu0 0
  %302 = vmatmul.mubr.bf16.gmra.mrb[0].mxu0 %v210
  %v303 = vpop.f32.mrb[0].mxu0
  %v304 = vadd.f32 %v255, %v303
  %v305 = vpop.f32.mrb[0].mxu0
  %v306 = vpop.f32.mrb[0].mxu0
  %v307 = vadd.f32 %v258, %v306
  %v308 = vpop.f32.mrb[0].mxu0
  %309 = vdwg.mxu0
  %v310 = vld [vmem:[#allocation2] sm:$0x1]
  %v311 = vadd.f32 %v296, %v299
  %v312 = vadd.f32 %v311, %v304
  %v313 = vadd.f32 %v312, %v307
  %v314 = vrot.slane %v313, 4
  %v315 = vadd.f32 %v313, %v314
  %v316 = vrot.slane %v315, 2
  %v317 = vadd.f32 %v315, %v316
  %v318 = vrot.slane %v317, 1
  %v319 = vadd.f32 %v317, %v318
  %v320 = vadd.f32 %v310, %v319
  %321 = vst [vmem:[#allocation2] sm:$0x1] %v320
  %s322 = smul.u32 0, 32
  %v323 = vpack.c.bf16 %v299, %v296
  %v324 = vpack.c.bf16 %v307, %v304
  %v327 = vunpack.c.l.b16 %v323
  %v328 = vunpack.c.h.b16 %v323
  %v329 = vunpack.c.l.b16 %v324
  %v330 = vunpack.c.h.b16 %v324
  %v331 = vpack.c.b16 %v327, %v327
  %v332 = vpack.c.b16 %v328, %v328
  %v333 = vpack.c.b16 %v329, %v329
  %v334 = vpack.c.b16 %v330, %v330
  %s339 = sshra.s32 %s322, 3
  %s340 = sand.u32 %s322, 7
  %s341 = smul.addr %s339, 4
  %s342 = scalar_lea.vmem %s4, %s341
  %343 = vst [vmem:[%s342] sm:$0xf] %v331
  %344 = vst [vmem:[%s342 + $0x4] sm:$0xf] %v332
  %345 = vst [vmem:[%s342 + $0x8] sm:$0xf] %v333
  %346 = vst [vmem:[%s342 + $0xc] sm:$0xf] %v334
  // Predicated region
  $region22: #{_lambda_.8} parent=0 // pred_check
    %p347 = pneg %p18
  $region23: #{_lambda_.8} parent=0 // pred_check_branch
    %349 = sbr.rel (%p347) target = $region25
  $region24: #{_lambda_.8} parent=0 // pred_region
    %v350 = vld [vmem:[#allocation2] sm:$0x1]
    %v351 = vmul.f32 %v350, 0.03125
    %v352 = vld [vmem:[%s4] sm:$0xf]
    %v353 = vld [vmem:[%s4 + $0x4] sm:$0xf]
    %v354 = vld [vmem:[%s4 + $0x8] sm:$0xf]
    %v355 = vld [vmem:[%s4 + $0xc] sm:$0xf]
    %v356 = vunpack.c.l.bf16 %v352
    %v357 = vunpack.c.l.bf16 %v353
    %v358 = vunpack.c.l.bf16 %v354
    %v359 = vunpack.c.l.bf16 %v355
    %v360 = vlaneseq
    %v361 = vshrl.u32 %v360, 7
    %v362 = vadd.s32 %v361, 8
    %v363 = vadd.s32 %v361, 16
    %v364 = vadd.s32 %v361, 24
    %vm365 = vcmp.lt.s32.totalorder %v361, 32
    %vm366 = vcmp.lt.s32.totalorder %v362, 32
    %vm367 = vcmp.lt.s32.totalorder %v363, 32
    %vm368 = vcmp.lt.s32.totalorder %v364, 32
    %v370 = vlaneseq
    %v371 = vshrl.u32 %v370, 7
    %v372 = vsub.s32 0, %v371
    %v373 = vrot.slane %v351, %v372
    %v375 = vsub.f32 %v356, %v373
    %v376 = vsub.f32 %v357, %v373
    %v377 = vsub.f32 %v358, %v373
    %v378 = vsub.f32 %v359, %v373
    %v379 = vsel %vm365, %v375, 0.0
    %v380 = vsel %vm366, %v376, 0.0
    %v381 = vsel %vm367, %v377, 0.0
    %v382 = vsel %vm368, %v378, 0.0
    %v383 = vmul.f32 %v379, %v379
    %v384 = vmul.f32 %v380, %v380
    %v385 = vmul.f32 %v381, %v381
    %v386 = vmul.f32 %v382, %v382
    %v387 = vadd.f32 %v383, %v384
    %v388 = vadd.f32 %v387, %v385
    %v389 = vadd.f32 %v388, %v386
    %v390 = vrot.slane %v389, 4
    %v391 = vadd.f32 %v389, %v390
    %v392 = vrot.slane %v391, 2
    %v393 = vadd.f32 %v391, %v392
    %v394 = vrot.slane %v393, 1
    %v395 = vadd.f32 %v393, %v394
    %v396 = vmul.f32 %v395, 0.03125
    %v397 = vld [vmem:[%s2] sm:$0x1]
    %v398 = vadd.f32 %v396, 1e-05
    %v399 = vrsqrt.pop %v398
    %v400 = vmul.f32 %v397, %v399
    %v401 = vld [vmem:[%s3] sm:$0x1]
    %v402 = vmul.f32 %v351, %v400
    %v403 = vsub.f32 %v401, %v402
    %v405 = vlaneseq
    %v406 = vshrl.u32 %v405, 7
    %v407 = vsub.s32 0, %v406
    %v408 = vrot.slane %v400, %v407
    %v410 = vmul.f32 %v356, %v408
    %v411 = vmul.f32 %v357, %v408
    %v412 = vmul.f32 %v358, %v408
    %v413 = vmul.f32 %v359, %v408
    %v415 = vlaneseq
    %v416 = vshrl.u32 %v415, 7
    %v417 = vsub.s32 0, %v416
    %v418 = vrot.slane %v403, %v417
    %v420 = vadd.f32 %v410, %v418
    %v421 = vadd.f32 %v411, %v418
    %v422 = vadd.f32 %v412, %v418
    %v423 = vadd.f32 %v413, %v418
    %vm424 = vcmp.ge.f32.partialorder %v420, 0.0
    %vm425 = vcmp.ge.f32.partialorder %v421, 0.0
    %vm426 = vcmp.ge.f32.partialorder %v422, 0.0
    %vm427 = vcmp.ge.f32.partialorder %v423, 0.0
    %v428 = vmul.f32 %v420, 0.2
    %v429 = vmul.f32 %v421, 0.2
    %v430 = vmul.f32 %v422, 0.2
    %v431 = vmul.f32 %v423, 0.2
    %v432 = vsel %vm424, %v420, %v428
    %v433 = vsel %vm425, %v421, %v429
    %v434 = vsel %vm426, %v422, %v430
    %v435 = vsel %vm427, %v423, %v431
    %v436 = vpack.c.bf16 %v433, %v432
    %v437 = vpack.c.bf16 %v435, %v434
    %v440 = vunpack.c.l.b16 %v436
    %v441 = vunpack.c.h.b16 %v436
    %v442 = vunpack.c.l.b16 %v437
    %v443 = vunpack.c.h.b16 %v437
    %v444 = vpack.c.b16 %v440, %v440
    %v445 = vpack.c.b16 %v441, %v441
    %v446 = vpack.c.b16 %v442, %v442
    %v447 = vpack.c.b16 %v443, %v443
    %452 = vst [vmem:[%s4] sm:$0xf] %v444
    %453 = vst [vmem:[%s4 + $0x4] sm:$0xf] %v445
    %454 = vst [vmem:[%s4 + $0x8] sm:$0xf] %v446
    %455 = vst [vmem:[%s4 + $0xc] sm:$0xf] %v447
  $region25: #{_lambda_.8} parent=0 // pred_fallthru
    _
  // Predicated region
  $region26: #{_lambda_.8} parent=0 // pred_check
    _
  $region27: #{_lambda_.8} parent=0 // pred_check_branch
    %457 = sbr.rel (0) target = $region29
  $region28: #{_lambda_.8} parent=0 // pred_region
    _
  $region29: #{_lambda_.8} parent=0 // pred_fallthru
    _
  // Predicated region
  $region30: #{_lambda_.8} parent=0 // pred_check
    _
  $region31: #{_lambda_.8} parent=0 // pred_check_branch
    %459 = sbr.rel (0) target = $region33
  $region32: #{_lambda_.8} parent=0 // pred_region
    _
  $region33: #{_lambda_.8} parent=0 // pred_fallthru
    _

// kernel: _lambda_.9
$region0: #{_lambda_.9}
  #allocation0 [shape = 'u32[]', space=smem, size = 0x4, offset = 0x4, fixed_abs, tag = 'smem constant byte address 0x4 - core index']
  #allocation1 [shape = 'u32[144,128]{1,0:T(1,128)}', space=vmem, size = 0x12000, scoped, tag = 'internal scratch']
  %s0 = inlined_call_operand.vmem [shape: bf16[8,1024], index: 0, kind: input, shape index: {}]
  %s1 = inlined_call_operand.vmem [shape: bf16[1024,128], index: 1, kind: input, shape index: {}]
  %s2 = inlined_call_operand.vmem [shape: f32[1,128], index: 2, kind: input, shape index: {}]
  %s3 = inlined_call_operand.vmem [shape: f32[8,128], index: 3, kind: output, shape index: {}]
  %s4 = sld [smem:[#allocation0]]
  $region22: #{_lambda_.9} parent=0
    _
  %s6 = ssub.s32 1, %s4
  %s7 = scalar_select 0, %s6, %s4
  // Predicated region
  $region2: #{_lambda_.9} parent=0 // pred_check
    _
  $region3: #{_lambda_.9} parent=0 // pred_check_branch
    %9 = sbr.rel (0) target = $region5
  $region4: #{_lambda_.9} parent=0 // pred_region
    _
  $region5: #{_lambda_.9} parent=0 // pred_fallthru
    _
  // Predicated region
  $region6: #{_lambda_.9} parent=0 // pred_check
    _
  $region7: #{_lambda_.9} parent=0 // pred_check_branch
    %11 = sbr.rel (0) target = $region9
  $region8: #{_lambda_.9} parent=0 // pred_region
    _
  $region9: #{_lambda_.9} parent=0 // pred_fallthru
    _
  // Predicated region
  $region10: #{_lambda_.9} parent=0 // pred_check
    _
  $region11: #{_lambda_.9} parent=0 // pred_check_branch
    %13 = sbr.rel (0) target = $region13
  $region12: #{_lambda_.9} parent=0 // pred_region
    _
  $region13: #{_lambda_.9} parent=0 // pred_fallthru
    _
  %v15 = vld [vmem:[%s0] sm:$0xff]
  %v16 = vld [vmem:[%s0 + $0x8] sm:$0xff]
  %v17 = vld [vmem:[%s0 + $0x10] sm:$0xff]
  %v18 = vld [vmem:[%s0 + $0x18] sm:$0xff]
  %v19 = vld [vmem:[%s1] sm:$0xf]
  %v20 = vld [vmem:[%s1 + $0x4] sm:$0xf]
  %v21 = vld [vmem:[%s1 + $0x8] sm:$0xf]
  %v22 = vld [vmem:[%s1 + $0xc] sm:$0xf]
  %v23 = vld [vmem:[%s1 + $0x10] sm:$0xf]
  %v24 = vld [vmem:[%s1 + $0x14] sm:$0xf]
  %v25 = vld [vmem:[%s1 + $0x18] sm:$0xf]
  %v26 = vld [vmem:[%s1 + $0x1c] sm:$0xf]
  %v27 = vld [vmem:[%s1 + $0x20] sm:$0xf]
  %v28 = vld [vmem:[%s1 + $0x24] sm:$0xf]
  %v29 = vld [vmem:[%s1 + $0x28] sm:$0xf]
  %v30 = vld [vmem:[%s1 + $0x2c] sm:$0xf]
  %v31 = vld [vmem:[%s1 + $0x30] sm:$0xf]
  %v32 = vld [vmem:[%s1 + $0x34] sm:$0xf]
  %v33 = vld [vmem:[%s1 + $0x38] sm:$0xf]
  %v34 = vld [vmem:[%s1 + $0x3c] sm:$0xf]
  %v35 = vld [vmem:[%s1 + $0x40] sm:$0xf]
  %v36 = vld [vmem:[%s1 + $0x44] sm:$0xf]
  %v37 = vld [vmem:[%s1 + $0x48] sm:$0xf]
  %v38 = vld [vmem:[%s1 + $0x4c] sm:$0xf]
  %v39 = vld [vmem:[%s1 + $0x50] sm:$0xf]
  %v40 = vld [vmem:[%s1 + $0x54] sm:$0xf]
  %v41 = vld [vmem:[%s1 + $0x58] sm:$0xf]
  %v42 = vld [vmem:[%s1 + $0x5c] sm:$0xf]
  %v43 = vld [vmem:[%s1 + $0x60] sm:$0xf]
  %v44 = vld [vmem:[%s1 + $0x64] sm:$0xf]
  %v45 = vld [vmem:[%s1 + $0x68] sm:$0xf]
  %v46 = vld [vmem:[%s1 + $0x6c] sm:$0xf]
  %v47 = vld [vmem:[%s1 + $0x70] sm:$0xf]
  %v48 = vld [vmem:[%s1 + $0x74] sm:$0xf]
  %v49 = vld [vmem:[%s1 + $0x78] sm:$0xf]
  %v50 = vld [vmem:[%s1 + $0x7c] sm:$0xf]
  %v51 = vld [vmem:[%s1 + $0x80] sm:$0xf]
  %v52 = vld [vmem:[%s1 + $0x84] sm:$0xf]
  %v53 = vld [vmem:[%s1 + $0x88] sm:$0xf]
  %v54 = vld [vmem:[%s1 + $0x8c] sm:$0xf]
  %v55 = vld [vmem:[%s1 + $0x90] sm:$0xf]
  %v56 = vld [vmem:[%s1 + $0x94] sm:$0xf]
  %v57 = vld [vmem:[%s1 + $0x98] sm:$0xf]
  %v58 = vld [vmem:[%s1 + $0x9c] sm:$0xf]
  %v59 = vld [vmem:[%s1 + $0xa0] sm:$0xf]
  %v60 = vld [vmem:[%s1 + $0xa4] sm:$0xf]
  %v61 = vld [vmem:[%s1 + $0xa8] sm:$0xf]
  %v62 = vld [vmem:[%s1 + $0xac] sm:$0xf]
  %v63 = vld [vmem:[%s1 + $0xb0] sm:$0xf]
  %v64 = vld [vmem:[%s1 + $0xb4] sm:$0xf]
  %v65 = vld [vmem:[%s1 + $0xb8] sm:$0xf]
  %v66 = vld [vmem:[%s1 + $0xbc] sm:$0xf]
  %v67 = vld [vmem:[%s1 + $0xc0] sm:$0xf]
  %v68 = vld [vmem:[%s1 + $0xc4] sm:$0xf]
  %v69 = vld [vmem:[%s1 + $0xc8] sm:$0xf]
  %v70 = vld [vmem:[%s1 + $0xcc] sm:$0xf]
  %v71 = vld [vmem:[%s1 + $0xd0] sm:$0xf]
  %v72 = vld [vmem:[%s1 + $0xd4] sm:$0xf]
  %v73 = vld [vmem:[%s1 + $0xd8] sm:$0xf]
  %v74 = vld [vmem:[%s1 + $0xdc] sm:$0xf]
  %v75 = vld [vmem:[%s1 + $0xe0] sm:$0xf]
  %v76 = vld [vmem:[%s1 + $0xe4] sm:$0xf]
  %v77 = vld [vmem:[%s1 + $0xe8] sm:$0xf]
  %v78 = vld [vmem:[%s1 + $0xec] sm:$0xf]
  %v79 = vld [vmem:[%s1 + $0xf0] sm:$0xf]
  %v80 = vld [vmem:[%s1 + $0xf4] sm:$0xf]
  %v81 = vld [vmem:[%s1 + $0xf8] sm:$0xf]
  %v82 = vld [vmem:[%s1 + $0xfc] sm:$0xf]
  %v83 = vld [vmem:[%s1 + $0x100] sm:$0xf]
  %v84 = vld [vmem:[%s1 + $0x104] sm:$0xf]
  %v85 = vld [vmem:[%s1 + $0x108] sm:$0xf]
  %v86 = vld [vmem:[%s1 + $0x10c] sm:$0xf]
  %v87 = vld [vmem:[%s1 + $0x110] sm:$0xf]
  %v88 = vld [vmem:[%s1 + $0x114] sm:$0xf]
  %v89 = vld [vmem:[%s1 + $0x118] sm:$0xf]
  %v90 = vld [vmem:[%s1 + $0x11c] sm:$0xf]
  %v91 = vld [vmem:[%s1 + $0x120] sm:$0xf]
  %v92 = vld [vmem:[%s1 + $0x124] sm:$0xf]
  %v93 = vld [vmem:[%s1 + $0x128] sm:$0xf]
  %v94 = vld [vmem:[%s1 + $0x12c] sm:$0xf]
  %v95 = vld [vmem:[%s1 + $0x130] sm:$0xf]
  %v96 = vld [vmem:[%s1 + $0x134] sm:$0xf]
  %v97 = vld [vmem:[%s1 + $0x138] sm:$0xf]
  %v98 = vld [vmem:[%s1 + $0x13c] sm:$0xf]
  %v99 = vld [vmem:[%s1 + $0x140] sm:$0xf]
  %v100 = vld [vmem:[%s1 + $0x144] sm:$0xf]
  %v101 = vld [vmem:[%s1 + $0x148] sm:$0xf]
  %v102 = vld [vmem:[%s1 + $0x14c] sm:$0xf]
  %v103 = vld [vmem:[%s1 + $0x150] sm:$0xf]
  %v104 = vld [vmem:[%s1 + $0x154] sm:$0xf]
  %v105 = vld [vmem:[%s1 + $0x158] sm:$0xf]
  %v106 = vld [vmem:[%s1 + $0x15c] sm:$0xf]
  %v107 = vld [vmem:[%s1 + $0x160] sm:$0xf]
  %v108 = vld [vmem:[%s1 + $0x164] sm:$0xf]
  %v109 = vld [vmem:[%s1 + $0x168] sm:$0xf]
  %v110 = vld [vmem:[%s1 + $0x16c] sm:$0xf]
  %v111 = vld [vmem:[%s1 + $0x170] sm:$0xf]
  %v112 = vld [vmem:[%s1 + $0x174] sm:$0xf]
  %v113 = vld [vmem:[%s1 + $0x178] sm:$0xf]
  %v114 = vld [vmem:[%s1 + $0x17c] sm:$0xf]
  %v115 = vld [vmem:[%s1 + $0x180] sm:$0xf]
  %v116 = vld [vmem:[%s1 + $0x184] sm:$0xf]
  %v117 = vld [vmem:[%s1 + $0x188] sm:$0xf]
  %v118 = vld [vmem:[%s1 + $0x18c] sm:$0xf]
  %v119 = vld [vmem:[%s1 + $0x190] sm:$0xf]
  %v120 = vld [vmem:[%s1 + $0x194] sm:$0xf]
  %v121 = vld [vmem:[%s1 + $0x198] sm:$0xf]
  %v122 = vld [vmem:[%s1 + $0x19c] sm:$0xf]
  %v123 = vld [vmem:[%s1 + $0x1a0] sm:$0xf]
  %v124 = vld [vmem:[%s1 + $0x1a4] sm:$0xf]
  %v125 = vld [vmem:[%s1 + $0x1a8] sm:$0xf]
  %v126 = vld [vmem:[%s1 + $0x1ac] sm:$0xf]
  %v127 = vld [vmem:[%s1 + $0x1b0] sm:$0xf]
  %v128 = vld [vmem:[%s1 + $0x1b4] sm:$0xf]
  %v129 = vld [vmem:[%s1 + $0x1b8] sm:$0xf]
  %v130 = vld [vmem:[%s1 + $0x1bc] sm:$0xf]
  %v131 = vld [vmem:[%s1 + $0x1c0] sm:$0xf]
  %v132 = vld [vmem:[%s1 + $0x1c4] sm:$0xf]
  %v133 = vld [vmem:[%s1 + $0x1c8] sm:$0xf]
  %v134 = vld [vmem:[%s1 + $0x1cc] sm:$0xf]
  %v135 = vld [vmem:[%s1 + $0x1d0] sm:$0xf]
  %v136 = vld [vmem:[%s1 + $0x1d4] sm:$0xf]
  %v137 = vld [vmem:[%s1 + $0x1d8] sm:$0xf]
  %v138 = vld [vmem:[%s1 + $0x1dc] sm:$0xf]
  %v139 = vld [vmem:[%s1 + $0x1e0] sm:$0xf]
  %v140 = vld [vmem:[%s1 + $0x1e4] sm:$0xf]
  %v141 = vld [vmem:[%s1 + $0x1e8] sm:$0xf]
  %v142 = vld [vmem:[%s1 + $0x1ec] sm:$0xf]
  %v143 = vld [vmem:[%s1 + $0x1f0] sm:$0xf]
  %v144 = vld [vmem:[%s1 + $0x1f4] sm:$0xf]
  %v145 = vld [vmem:[%s1 + $0x1f8] sm:$0xf]
  %v146 = vld [vmem:[%s1 + $0x1fc] sm:$0xf]
  %v147 = vld [vmem:[%s2] sm:$0x1]
  %v149 = vlaneseq
  %v150 = vshrl.u32 %v149, 7
  %v151 = vsub.s32 0, %v150
  %v152 = vrot.slane %v147, %v151
  %v158 = vunpack.c.l.b16 %v15
  %v159 = vunpack.c.h.b16 %v15
  %v160 = vunpack.c.l.b16 %v16
  %v161 = vunpack.c.h.b16 %v16
  %v162 = vunpack.c.l.b16 %v17
  %v163 = vunpack.c.h.b16 %v17
  %v164 = vunpack.c.l.b16 %v18
  %v165 = vunpack.c.h.b16 %v18
  %v166 = vpack.c.b16 %v158, %v158
  %v167 = vpack.c.b16 %v159, %v159
  %v168 = vpack.c.b16 %v160, %v160
  %v169 = vpack.c.b16 %v161, %v161
  %v170 = vpack.c.b16 %v162, %v162
  %v171 = vpack.c.b16 %v163, %v163
  %v172 = vpack.c.b16 %v164, %v164
  %v173 = vpack.c.b16 %v165, %v165
  %v310 = vunpack.c.l.b16 %v19
  %v311 = vunpack.c.l.b16 %v20
  %v312 = vunpack.c.l.b16 %v21
  %v313 = vunpack.c.l.b16 %v22
  %v314 = vunpack.c.l.b16 %v23
  %v315 = vunpack.c.l.b16 %v24
  %v316 = vunpack.c.l.b16 %v25
  %v317 = vunpack.c.l.b16 %v26
  %v318 = vunpack.c.l.b16 %v27
  %v319 = vunpack.c.l.b16 %v28
  %v320 = vunpack.c.l.b16 %v29
  %v321 = vunpack.c.l.b16 %v30
  %v322 = vunpack.c.l.b16 %v31
  %v323 = vunpack.c.l.b16 %v32
  %v324 = vunpack.c.l.b16 %v33
  %v325 = vunpack.c.l.b16 %v34
  %v326 = vunpack.c.l.b16 %v35
  %v327 = vunpack.c.l.b16 %v36
  %v328 = vunpack.c.l.b16 %v37
  %v329 = vunpack.c.l.b16 %v38
  %v330 = vunpack.c.l.b16 %v39
  %v331 = vunpack.c.l.b16 %v40
  %v332 = vunpack.c.l.b16 %v41
  %v333 = vunpack.c.l.b16 %v42
  %v334 = vunpack.c.l.b16 %v43
  %v335 = vunpack.c.l.b16 %v44
  %v336 = vunpack.c.l.b16 %v45
  %v337 = vunpack.c.l.b16 %v46
  %v338 = vunpack.c.l.b16 %v47
  %v339 = vunpack.c.l.b16 %v48
  %v340 = vunpack.c.l.b16 %v49
  %v341 = vunpack.c.l.b16 %v50
  %v342 = vunpack.c.l.b16 %v51
  %v343 = vunpack.c.l.b16 %v52
  %v344 = vunpack.c.l.b16 %v53
  %v345 = vunpack.c.l.b16 %v54
  %v346 = vunpack.c.l.b16 %v55
  %v347 = vunpack.c.l.b16 %v56
  %v348 = vunpack.c.l.b16 %v57
  %v349 = vunpack.c.l.b16 %v58
  %v350 = vunpack.c.l.b16 %v59
  %v351 = vunpack.c.l.b16 %v60
  %v352 = vunpack.c.l.b16 %v61
  %v353 = vunpack.c.l.b16 %v62
  %v354 = vunpack.c.l.b16 %v63
  %v355 = vunpack.c.l.b16 %v64
  %v356 = vunpack.c.l.b16 %v65
  %v357 = vunpack.c.l.b16 %v66
  %v358 = vunpack.c.l.b16 %v67
  %v359 = vunpack.c.l.b16 %v68
  %v360 = vunpack.c.l.b16 %v69
  %v361 = vunpack.c.l.b16 %v70
  %v362 = vunpack.c.l.b16 %v71
  %v363 = vunpack.c.l.b16 %v72
  %v364 = vunpack.c.l.b16 %v73
  %v365 = vunpack.c.l.b16 %v74
  %v366 = vunpack.c.l.b16 %v75
  %v367 = vunpack.c.l.b16 %v76
  %v368 = vunpack.c.l.b16 %v77
  %v369 = vunpack.c.l.b16 %v78
  %v370 = vunpack.c.l.b16 %v79
  %v371 = vunpack.c.l.b16 %v80
  %v372 = vunpack.c.l.b16 %v81
  %v373 = vunpack.c.l.b16 %v82
  %v374 = vunpack.c.l.b16 %v83
  %v375 = vunpack.c.l.b16 %v84
  %v376 = vunpack.c.l.b16 %v85
  %v377 = vunpack.c.l.b16 %v86
  %v378 = vunpack.c.l.b16 %v87
  %v379 = vunpack.c.l.b16 %v88
  %v380 = vunpack.c.l.b16 %v89
  %v381 = vunpack.c.l.b16 %v90
  %v382 = vunpack.c.l.b16 %v91
  %v383 = vunpack.c.l.b16 %v92
  %v384 = vunpack.c.l.b16 %v93
  %v385 = vunpack.c.l.b16 %v94
  %v386 = vunpack.c.l.b16 %v95
  %v387 = vunpack.c.l.b16 %v96
  %v388 = vunpack.c.l.b16 %v97
  %v389 = vunpack.c.l.b16 %v98
  %v390 = vunpack.c.l.b16 %v99
  %v391 = vunpack.c.l.b16 %v100
  %v392 = vunpack.c.l.b16 %v101
  %v393 = vunpack.c.l.b16 %v102
  %v394 = vunpack.c.l.b16 %v103
  %v395 = vunpack.c.l.b16 %v104
  %v396 = vunpack.c.l.b16 %v105
  %v397 = vunpack.c.l.b16 %v106
  %v398 = vunpack.c.l.b16 %v107
  %v399 = vunpack.c.l.b16 %v108
  %v400 = vunpack.c.l.b16 %v109
  %v401 = vunpack.c.l.b16 %v110
  %v402 = vunpack.c.l.b16 %v111
  %v403 = vunpack.c.l.b16 %v112
  %v404 = vunpack.c.l.b16 %v113
  %v405 = vunpack.c.l.b16 %v114
  %v406 = vunpack.c.l.b16 %v115
  %v407 = vunpack.c.l.b16 %v116
  %v408 = vunpack.c.l.b16 %v117
  %v409 = vunpack.c.l.b16 %v118
  %v410 = vunpack.c.l.b16 %v119
  %v411 = vunpack.c.l.b16 %v120
  %v412 = vunpack.c.l.b16 %v121
  %v413 = vunpack.c.l.b16 %v122
  %v414 = vunpack.c.l.b16 %v123
  %v415 = vunpack.c.l.b16 %v124
  %v416 = vunpack.c.l.b16 %v125
  %v417 = vunpack.c.l.b16 %v126
  %v418 = vunpack.c.l.b16 %v127
  %v419 = vunpack.c.l.b16 %v128
  %v420 = vunpack.c.l.b16 %v129
  %v421 = vunpack.c.l.b16 %v130
  %v422 = vunpack.c.l.b16 %v131
  %v423 = vunpack.c.l.b16 %v132
  %v424 = vunpack.c.l.b16 %v133
  %v425 = vunpack.c.l.b16 %v134
  %v426 = vunpack.c.l.b16 %v135
  %v427 = vunpack.c.l.b16 %v136
  %v428 = vunpack.c.l.b16 %v137
  %v429 = vunpack.c.l.b16 %v138
  %v430 = vunpack.c.l.b16 %v139
  %v431 = vunpack.c.l.b16 %v140
  %v432 = vunpack.c.l.b16 %v141
  %v433 = vunpack.c.l.b16 %v142
  %v434 = vunpack.c.l.b16 %v143
  %v435 = vunpack.c.l.b16 %v144
  %v436 = vunpack.c.l.b16 %v145
  %v437 = vunpack.c.l.b16 %v146
  %v438 = vpack.c.b16 %v311, %v310
  %v439 = vpack.c.b16 %v313, %v312
  %v440 = vpack.c.b16 %v315, %v314
  %v441 = vpack.c.b16 %v317, %v316
  %v442 = vpack.c.b16 %v319, %v318
  %v443 = vpack.c.b16 %v321, %v320
  %v444 = vpack.c.b16 %v323, %v322
  %v445 = vpack.c.b16 %v325, %v324
  %v446 = vpack.c.b16 %v327, %v326
  %v447 = vpack.c.b16 %v329, %v328
  %v448 = vpack.c.b16 %v331, %v330
  %v449 = vpack.c.b16 %v333, %v332
  %v450 = vpack.c.b16 %v335, %v334
  %v451 = vpack.c.b16 %v337, %v336
  %v452 = vpack.c.b16 %v339, %v338
  %v453 = vpack.c.b16 %v341, %v340
  %v454 = vpack.c.b16 %v343, %v342
  %v455 = vpack.c.b16 %v345, %v344
  %v456 = vpack.c.b16 %v347, %v346
  %v457 = vpack.c.b16 %v349, %v348
  %v458 = vpack.c.b16 %v351, %v350
  %v459 = vpack.c.b16 %v353, %v352
  %v460 = vpack.c.b16 %v355, %v354
  %v461 = vpack.c.b16 %v357, %v356
  %v462 = vpack.c.b16 %v359, %v358
  %v463 = vpack.c.b16 %v361, %v360
  %v464 = vpack.c.b16 %v363, %v362
  %v465 = vpack.c.b16 %v365, %v364
  %v466 = vpack.c.b16 %v367, %v366
  %v467 = vpack.c.b16 %v369, %v368
  %v468 = vpack.c.b16 %v371, %v370
  %v469 = vpack.c.b16 %v373, %v372
  %v470 = vpack.c.b16 %v375, %v374
  %v471 = vpack.c.b16 %v377, %v376
  %v472 = vpack.c.b16 %v379, %v378
  %v473 = vpack.c.b16 %v381, %v380
  %v474 = vpack.c.b16 %v383, %v382
  %v475 = vpack.c.b16 %v385, %v384
  %v476 = vpack.c.b16 %v387, %v386
  %v477 = vpack.c.b16 %v389, %v388
  %v478 = vpack.c.b16 %v391, %v390
  %v479 = vpack.c.b16 %v393, %v392
  %v480 = vpack.c.b16 %v395, %v394
  %v481 = vpack.c.b16 %v397, %v396
  %v482 = vpack.c.b16 %v399, %v398
  %v483 = vpack.c.b16 %v401, %v400
  %v484 = vpack.c.b16 %v403, %v402
  %v485 = vpack.c.b16 %v405, %v404
  %v486 = vpack.c.b16 %v407, %v406
  %v487 = vpack.c.b16 %v409, %v408
  %v488 = vpack.c.b16 %v411, %v410
  %v489 = vpack.c.b16 %v413, %v412
  %v490 = vpack.c.b16 %v415, %v414
  %v491 = vpack.c.b16 %v417, %v416
  %v492 = vpack.c.b16 %v419, %v418
  %v493 = vpack.c.b16 %v421, %v420
  %v494 = vpack.c.b16 %v423, %v422
  %v495 = vpack.c.b16 %v425, %v424
  %v496 = vpack.c.b16 %v427, %v426
  %v497 = vpack.c.b16 %v429, %v428
  %v498 = vpack.c.b16 %v431, %v430
  %v499 = vpack.c.b16 %v433, %v432
  %v500 = vpack.c.b16 %v435, %v434
  %v501 = vpack.c.b16 %v437, %v436
  %566 = vmatprep.subr.bf16.mxu0 0
  %567 = vmatpush1.bf16.msra.mxu0 %v438
  %568 = vmatprep.subr.bf16.mxu0 0
  %569 = vmatpush1.bf16.msra.mxu0 %v439
  %570 = vmatprep.subr.bf16.mxu0 0
  %571 = vmatpush1.bf16.msra.mxu0 %v440
  %572 = vmatprep.subr.bf16.mxu0 0
  %573 = vmatpush1.bf16.msra.mxu0 %v441
  %574 = vmatprep.subr.bf16.mxu0 0
  %575 = vmatpush1.bf16.msra.mxu0 %v442
  %576 = vmatprep.subr.bf16.mxu0 0
  %577 = vmatpush1.bf16.msra.mxu0 %v443
  %578 = vmatprep.subr.bf16.mxu0 0
  %579 = vmatpush1.bf16.msra.mxu0 %v444
  %580 = vmatprep.subr.bf16.mxu0 0
  %581 = vmatpush1.bf16.msra.mxu0 %v445
  %582 = vmatprep.subr.bf16.mxu0 0
  %583 = vmatpush1.bf16.msra.mxu0 %v446
  %584 = vmatprep.subr.bf16.mxu0 0
  %585 = vmatpush1.bf16.msra.mxu0 %v447
  %586 = vmatprep.subr.bf16.mxu0 0
  %587 = vmatpush1.bf16.msra.mxu0 %v448
  %588 = vmatprep.subr.bf16.mxu0 0
  %589 = vmatpush1.bf16.msra.mxu0 %v449
  %590 = vmatprep.subr.bf16.mxu0 0
  %591 = vmatpush1.bf16.msra.mxu0 %v450
  %592 = vmatprep.subr.bf16.mxu0 0
  %593 = vmatpush1.bf16.msra.mxu0 %v451
  %594 = vmatprep.subr.bf16.mxu0 0
  %595 = vmatpush1.bf16.msra.mxu0 %v452
  %596 = vmatprep.subr.bf16.mxu0 0
  %597 = vmatpush1.bf16.msra.mxu0 %v453
  %598 = vmatprep.mubr.bf16.mxu0 %v167
  %599 = vmatmul.mubr.bf16.gmra.mrb[0].mxu0 %v166
  %v600 = vpop.f32.mrb[0].mxu0
  %v601 = vadd.f32 %v152, %v600
  %v602 = vpop.f32.mrb[0].mxu0
  %v603 = vpop.f32.mrb[0].mxu0
  %v604 = vpop.f32.mrb[0].mxu0
  %605 = vdwg.mxu0
  %606 = vmatprep.subr.bf16.mxu0 0
  %607 = vmatpush1.bf16.msra.mxu0 %v454
  %608 = vmatprep.subr.bf16.mxu0 0
  %609 = vmatpush1.bf16.msra.mxu0 %v455
  %610 = vmatprep.subr.bf16.mxu0 0
  %611 = vmatpush1.bf16.msra.mxu0 %v456
  %612 = vmatprep.subr.bf16.mxu0 0
  %613 = vmatpush1.bf16.msra.mxu0 %v457
  %614 = vmatprep.subr.bf16.mxu0 0
  %615 = vmatpush1.bf16.msra.mxu0 %v458
  %616 = vmatprep.subr.bf16.mxu0 0
  %617 = vmatpush1.bf16.msra.mxu0 %v459
  %618 = vmatprep.subr.bf16.mxu0 0
  %619 = vmatpush1.bf16.msra.mxu0 %v460
  %620 = vmatprep.subr.bf16.mxu0 0
  %621 = vmatpush1.bf16.msra.mxu0 %v461
  %622 = vmatprep.subr.bf16.mxu0 0
  %623 = vmatpush1.bf16.msra.mxu0 %v462
  %624 = vmatprep.subr.bf16.mxu0 0
  %625 = vmatpush1.bf16.msra.mxu0 %v463
  %626 = vmatprep.subr.bf16.mxu0 0
  %627 = vmatpush1.bf16.msra.mxu0 %v464
  %628 = vmatprep.subr.bf16.mxu0 0
  %629 = vmatpush1.bf16.msra.mxu0 %v465
  %630 = vmatprep.subr.bf16.mxu0 0
  %631 = vmatpush1.bf16.msra.mxu0 %v466
  %632 = vmatprep.subr.bf16.mxu0 0
  %633 = vmatpush1.bf16.msra.mxu0 %v467
  %634 = vmatprep.subr.bf16.mxu0 0
  %635 = vmatpush1.bf16.msra.mxu0 %v468
  %636 = vmatprep.subr.bf16.mxu0 0
  %637 = vmatpush1.bf16.msra.mxu0 %v469
  %638 = vmatprep.mubr.bf16.mxu0 %v169
  %639 = vmatmul.mubr.bf16.gmra.mrb[0].mxu0 %v168
  %v640 = vpop.f32.mrb[0].mxu0
  %v641 = vadd.f32 %v601, %v640
  %v642 = vpop.f32.mrb[0].mxu0
  %v643 = vpop.f32.mrb[0].mxu0
  %v644 = vpop.f32.mrb[0].mxu0
  %645 = vdwg.mxu0
  %646 = vmatprep.subr.bf16.mxu0 0
  %647 = vmatpush1.bf16.msra.mxu0 %v470
  %648 = vmatprep.subr.bf16.mxu0 0
  %649 = vmatpush1.bf16.msra.mxu0 %v471
  %650 = vmatprep.subr.bf16.mxu0 0
  %651 = vmatpush1.bf16.msra.mxu0 %v472
  %652 = vmatprep.subr.bf16.mxu0 0
  %653 = vmatpush1.bf16.msra.mxu0 %v473
  %654 = vmatprep.subr.bf16.mxu0 0
  %655 = vmatpush1.bf16.msra.mxu0 %v474
  %656 = vmatprep.subr.bf16.mxu0 0
  %657 = vmatpush1.bf16.msra.mxu0 %v475
  %658 = vmatprep.subr.bf16.mxu0 0
  %659 = vmatpush1.bf16.msra.mxu0 %v476
  %660 = vmatprep.subr.bf16.mxu0 0
  %661 = vmatpush1.bf16.msra.mxu0 %v477
  %662 = vmatprep.subr.bf16.mxu0 0
  %663 = vmatpush1.bf16.msra.mxu0 %v478
  %664 = vmatprep.subr.bf16.mxu0 0
  %665 = vmatpush1.bf16.msra.mxu0 %v479
  %666 = vmatprep.subr.bf16.mxu0 0
  %667 = vmatpush1.bf16.msra.mxu0 %v480
  %668 = vmatprep.subr.bf16.mxu0 0
  %669 = vmatpush1.bf16.msra.mxu0 %v481
  %670 = vmatprep.subr.bf16.mxu0 0
  %671 = vmatpush1.bf16.msra.mxu0 %v482
  %672 = vmatprep.subr.bf16.mxu0 0
  %673 = vmatpush1.bf16.msra.mxu0 %v483
  %674 = vmatprep.subr.bf16.mxu0 0
  %675 = vmatpush1.bf16.msra.mxu0 %v484
  %676 = vmatprep.subr.bf16.mxu0 0
  %677 = vmatpush1.bf16.msra.mxu0 %v485
  %678 = vmatprep.mubr.bf16.mxu0 %v171
  %679 = vmatmul.mubr.bf16.gmra.mrb[0].mxu0 %v170
  %v680 = vpop.f32.mrb[0].mxu0
  %v681 = vadd.f32 %v641, %v680
  %v682 = vpop.f32.mrb[0].mxu0
  %v683 = vpop.f32.mrb[0].mxu0
  %v684 = vpop.f32.mrb[0].mxu0
  %685 = vdwg.mxu0
  %686 = vmatprep.subr.bf16.mxu0 0
  %687 = vmatpush1.bf16.msra.mxu0 %v486
  %688 = vmatprep.subr.bf16.mxu0 0
  %689 = vmatpush1.bf16.msra.mxu0 %v487
  %690 = vmatprep.subr.bf16.mxu0 0
  %691 = vmatpush1.bf16.msra.mxu0 %v488
  %692 = vmatprep.subr.bf16.mxu0 0
  %693 = vmatpush1.bf16.msra.mxu0 %v489
  %694 = vmatprep.subr.bf16.mxu0 0
  %695 = vmatpush1.bf16.msra.mxu0 %v490
  %696 = vmatprep.subr.bf16.mxu0 0
  %697 = vmatpush1.bf16.msra.mxu0 %v491
  %698 = vmatprep.subr.bf16.mxu0 0
  %699 = vmatpush1.bf16.msra.mxu0 %v492
  %700 = vmatprep.subr.bf16.mxu0 0
  %701 = vmatpush1.bf16.msra.mxu0 %v493
  %702 = vmatprep.subr.bf16.mxu0 0
  %703 = vmatpush1.bf16.msra.mxu0 %v494
  %704 = vmatprep.subr.bf16.mxu0 0
  %705 = vmatpush1.bf16.msra.mxu0 %v495
  %706 = vmatprep.subr.bf16.mxu0 0
  %707 = vmatpush1.bf16.msra.mxu0 %v496
  %708 = vmatprep.subr.bf16.mxu0 0
  %709 = vmatpush1.bf16.msra.mxu0 %v497
  %710 = vmatprep.subr.bf16.mxu0 0
  %711 = vmatpush1.bf16.msra.mxu0 %v498
  %712 = vmatprep.subr.bf16.mxu0 0
  %713 = vmatpush1.bf16.msra.mxu0 %v499
  %714 = vmatprep.subr.bf16.mxu0 0
  %715 = vmatpush1.bf16.msra.mxu0 %v500
  %716 = vmatprep.subr.bf16.mxu0 0
  %717 = vmatpush1.bf16.msra.mxu0 %v501
  %718 = vmatprep.mubr.bf16.mxu0 %v173
  %719 = vmatmul.mubr.bf16.gmra.mrb[0].mxu0 %v172
  %v720 = vpop.f32.mrb[0].mxu0
  %v721 = vadd.f32 %v681, %v720
  %v722 = vpop.f32.mrb[0].mxu0
  %v723 = vpop.f32.mrb[0].mxu0
  %v724 = vpop.f32.mrb[0].mxu0
  %725 = vdwg.mxu0
  %v726 = vlaneseq
  %v727 = vand.u32 %v726, 127
  %vm728 = vcmp.lt.s32.totalorder %v727, 4
  %v729 = vmul.f32 %v721, 0.5
  %v730 = vmul.f32 %v729, 1.442695
  %v731 = vpow.pop %v730
  %v732 = vsel %vm728, %v721, %v731
  %733 = vst [vmem:[%s3] sm:$0xff] %v732
  // Predicated region
  $region14: #{_lambda_.9} parent=0 // pred_check
    _
  $region15: #{_lambda_.9} parent=0 // pred_check_branch
    %735 = sbr.rel (0) target = $region17
  $region16: #{_lambda_.9} parent=0 // pred_region
    _
  $region17: #{_lambda_.9} parent=0 // pred_fallthru
    _
  // Predicated region
  $region18: #{_lambda_.9} parent=0 // pred_check
    _
  $region19: #{_lambda_.9} parent=0 // pred_check_branch
    %737 = sbr.rel (0) target = $region21
  $region20: #{_lambda_.9} parent=0 // pred_region
    _
  $region21: #{_lambda_.9} parent=0 // pred_fallthru
    _

</llo_original>
